<compile_context>
chip_gen: v7x
topology: tpu7x:2x2x1
jax: 0.10.0
libtpu: 0.0.40
codegen_flags: <defaults>
</compile_context>

<pallas_src>
import functools

import jax
import jax.numpy as jnp
from jax.experimental import pallas as pl
from jax.experimental.pallas import tpu as pltpu

# Full-precision f32 matmuls everywhere (reference AND the kernel trace), so
# the Pallas kernel and the pure-JAX reference agree tightly.
jax.config.update("jax_default_matmul_precision", "highest")


# ----------------------------------------------------------------------------
# Relative positions (same as get_relative_positions in the PyTorch code)
# ----------------------------------------------------------------------------
def get_relative_positions(window_size: int) -> jnp.ndarray:
    coords_h = jnp.arange(window_size)
    coords_w = jnp.arange(window_size)
    coords = jnp.stack(jnp.meshgrid(coords_h, coords_w, indexing="ij"))  # (2, ws, ws)
    coords_flatten = coords.reshape(2, -1)                               # (2, N)
    rel = coords_flatten[:, :, None] - coords_flatten[:, None, :]        # (2, N, N)
    rel = jnp.transpose(rel, (1, 2, 0)).astype(jnp.float32)              # (N, N, 2)
    rel_log = jnp.sign(rel) * jnp.log1p(jnp.abs(rel))
    return rel_log


# ----------------------------------------------------------------------------
# Pallas attention kernel: one block of Bt windows x all heads per grid cell
# ----------------------------------------------------------------------------
def _window_attn_kernel(qkv_ref, bias_ref, o_ref, *, scale, dim, num_heads):
    # qkv_ref : (Bt, N, 3*dim)  native layout, last dim = [q | k | v] (heads inside)
    # bias_ref: (H, N, N)       VMEM-resident across all grid steps
    # o_ref   : (Bt, N, dim)    final layout, no wrapper transpose needed
    head_dim = dim // num_heads

    qkv = qkv_ref[...]                                # one full-tile load
    q_all = qkv[:, :, 0 * dim:1 * dim] * scale        # scale folded into q
    k_all = qkv[:, :, 1 * dim:2 * dim]
    v_all = qkv[:, :, 2 * dim:3 * dim]
    bias = bias_ref[...].astype(jnp.float32)          # (H, N, N)

    for h in range(num_heads):                        # static unroll over heads
        lo, hi = h * head_dim, (h + 1) * head_dim
        q = q_all[:, :, lo:hi]                        # (Bt, N, D)
        k = k_all[:, :, lo:hi]
        v = v_all[:, :, lo:hi]

        # scores = (scale*q) @ k^T + relative_position_bias
        s = jnp.einsum("bqd,bkd->bqk", q, k,
                       preferred_element_type=jnp.float32)               # (Bt, N, N)
        s = s + bias[h][None, :, :]

        # numerically stable softmax over the last axis (exact division)
        s = s - jnp.max(s, axis=-1, keepdims=True)
        p = jnp.exp(s)
        p = p / jnp.sum(p, axis=-1, keepdims=True)

        o_h = jnp.einsum("bqk,bkd->bqd", p.astype(v.dtype), v,
                         preferred_element_type=jnp.float32)              # (Bt, N, D)
        # direct per-head lane-slice store; no concat, no live `outs` list
        o_ref[:, :, lo:hi] = o_h.astype(o_ref.dtype)


# ----------------------------------------------------------------------------
# Generation-aware VMEM budgeting
# ----------------------------------------------------------------------------
def _vmem_budget_bytes():
    """~70% of the chip's physical VMEM, capped; used for both tile sizing and
    vmem_limit_bytes so they stay consistent across v5e/v6e (128 MiB) and
    v7x (64 MiB)."""
    default_cap = 64 * 1024 * 1024  # conservative (v7x-sized) fallback
    try:
        info = pltpu.get_tpu_info()
        cap = int(getattr(info, "vmem_capacity_bytes", default_cap))
    except Exception:
        cap = default_cap
    return min(int(0.70 * cap), 96 * 1024 * 1024)


def _choose_block_windows(B_, N, dim, num_heads, itemsize, vmem_budget):
    """Pick windows-per-grid-step so all tiles + in-kernel intermediates fit."""
    # resident bias block (constant index_map -> single copy, full lifetime)
    resident = num_heads * N * N * 4
    budget = max(vmem_budget - resident, 1 << 20)

    per_window = 2 * N * 3 * dim * itemsize   # qkv tile, double-buffered
    per_window += 2 * N * dim * itemsize      # out tile, double-buffered
    per_window += N * 3 * dim * 4             # loaded / scaled q,k,v values (f32)
    per_window += 4 * N * N * 4               # f32 score / exp / max temporaries
    per_window += N * dim * 4                 # per-head f32 output before cast

    bt = max(1, min(B_, budget // per_window))
    # Keep >= 4 grid steps when possible: on v7x the single "parallel" axis
    # shards over 2 TensorCores (>= 2 steps each for pipelining); on 1-TC
    # chips this still leaves prefetch(i+1)/writeback(i-1) overlap.
    if B_ >= 4:
        bt = min(bt, max(1, B_ // 4))
    while B_ % bt:
        bt -= 1
    return int(bt)


# ----------------------------------------------------------------------------
# Wrapper
# ----------------------------------------------------------------------------
def window_attention_pallas(qkv, meta_params, *, dim, window_size, num_heads,
                            block_windows=None):
    """Forward pass of WindowAttention.

    qkv: (B_, N, 3*dim) with N == window_size**2.
    meta_params: dict with w1 (2,256), b1 (256,), w2 (256,num_heads), b2 (num_heads,)
    returns: (B_, N, dim)
    """
    B_, N, three_dim = qkv.shape
    assert three_dim == 3 * dim
    assert N == window_size * window_size
    head_dim = dim // num_heads
    scale = head_dim ** (-0.5)

    # --- relative position bias via the tiny "meta" MLP (param precompute) --
    rel = get_relative_positions(window_size)                            # (N, N, 2)
    h1 = jnp.maximum(rel @ meta_params["w1"] + meta_params["b1"], 0.0)   # (N, N, 256)
    bias = h1 @ meta_params["w2"] + meta_params["b2"]                    # (N, N, H)
    bias = jnp.transpose(bias, (2, 0, 1)).astype(jnp.float32)            # (H, N, N)

    # --- generation-aware block sizing ---------------------------------------
    vmem_budget = _vmem_budget_bytes()
    if block_windows is None:
        block_windows = _choose_block_windows(
            B_, N, dim, num_heads, qkv.dtype.itemsize, vmem_budget)
    bt = block_windows
    assert B_ % bt == 0, "block_windows must divide the number of windows"
    nb = B_ // bt

    # --- Pallas hot path (no HBM transposes; output already in final layout) -
    kernel = functools.partial(_window_attn_kernel, scale=scale, dim=dim,
                               num_heads=num_heads)
    out = pl.pallas_call(
        kernel,
        out_shape=jax.ShapeDtypeStruct((B_, N, dim), qkv.dtype),
        grid_spec=pltpu.PrefetchScalarGridSpec(
            num_scalar_prefetch=0,
            grid=(nb,),
            in_specs=[
                pl.BlockSpec((bt, N, 3 * dim), lambda b: (b, 0, 0)),
                # constant index_map -> bias fetched once, stays VMEM-resident
                pl.BlockSpec((num_heads, N, N), lambda b: (0, 0, 0)),
            ],
            out_specs=pl.BlockSpec((bt, N, dim), lambda b: (b, 0, 0)),
        ),
        compiler_params=pltpu.CompilerParams(
            dimension_semantics=("parallel",),
            vmem_limit_bytes=int(vmem_budget),
        ),
    )(qkv, bias)

    return out  # already (B_, N, dim)


# ----------------------------------------------------------------------------
# Pure-JAX reference (mirrors the torch forward) for a correctness check
# ----------------------------------------------------------------------------
def window_attention_ref(qkv, meta_params, *, dim, window_size, num_heads):
    B_, N, _ = qkv.shape
    head_dim = dim // num_heads
    scale = head_dim ** (-0.5)
    qkv_r = jnp.transpose(qkv.reshape(B_, N, 3, num_heads, head_dim), (2, 0, 3, 1, 4))
    q, k, v = qkv_r[0], qkv_r[1], qkv_r[2]
    q = q * scale
    attn = jnp.einsum("bhnd,bhmd->bhnm", q, k)
    rel = get_relative_positions(window_size)
    h1 = jnp.maximum(rel @ meta_params["w1"] + meta_params["b1"], 0.0)
    bias = h1 @ meta_params["w2"] + meta_params["b2"]
    bias = jnp.transpose(bias, (2, 0, 1))
    attn = attn + bias[None]
    attn = jax.nn.softmax(attn, axis=-1)
    x = jnp.einsum("bhnm,bhmd->bhnd", attn, v)
    return jnp.transpose(x, (0, 2, 1, 3)).reshape(B_, N, dim)


if __name__ == "__main__":
    # Small, module-consistent shapes: dim=32, window_size=4 (N=16),
    # num_heads=4 (head_dim=8), B_ = 8 windows.
    dim = 32
    window_size = 4
    num_heads = 4
    N = window_size * window_size
    B_ = 8

    key = jax.random.PRNGKey(0)
    k_qkv, k_w1, k_b1, k_w2, k_b2 = jax.random.split(key, 5)

    qkv = jax.random.normal(k_qkv, (B_, N, 3 * dim), dtype=jnp.float32)

    # Deterministic "meta" MLP parameters: Linear(2,256) -> ReLU -> Linear(256,num_heads)
    meta_params = {
        "w1": jax.random.normal(k_w1, (2, 256), dtype=jnp.float32) * 0.1,
        "b1": jax.random.normal(k_b1, (256,), dtype=jnp.float32) * 0.01,
        "w2": jax.random.normal(k_w2, (256, num_heads), dtype=jnp.float32) * 0.1,
        "b2": jax.random.normal(k_b2, (num_heads,), dtype=jnp.float32) * 0.01,
    }

    out = window_attention_pallas(
        qkv, meta_params, dim=dim, window_size=window_size, num_heads=num_heads
    )
    out = jax.block_until_ready(out)

    ref = window_attention_ref(
        qkv, meta_params, dim=dim, window_size=window_size, num_heads=num_heads
    )
    ref = jax.block_until_ready(ref)

    assert out.shape == (B_, N, dim)
    # Both legs run f32 matmuls at HIGHEST precision, so they agree to ~1e-5;
    # the tolerance keeps margin for any DEFAULT-precision (bf16-input MXU)
    # leg while still catching real layout/indexing bugs (errors ~O(1)).
    assert jnp.allclose(out, ref, atol=2e-2, rtol=2e-2), "Pallas output mismatch vs reference"

    print("KERNEL_OK")
</pallas_src>

<mosaic_0001>
module attributes {stable_mosaic.version = 11 : i64} {
  func.func @_window_attn_kernel(%arg0: i32, %arg1: memref<2x16x96xf32, #tpu.memory_space<vmem>>, %arg2: memref<4x16x16xf32, #tpu.memory_space<vmem>>, %arg3: memref<2x16x32xf32, #tpu.memory_space<vmem>>) attributes {dimension_semantics = [#tpu.dimension_semantics<parallel>], iteration_bounds = array<i64: 4>, scalar_prefetch = 0 : i64, scratch_operands = 0 : i64, tpu.core_type = #tpu.core_type<tc>, window_params = [{transform_indices = @transform_0, window_bounds = array<i64: 2, 16, 96>}, {pipeline_mode = #tpu.pipeline_mode<synchronous>, transform_indices = @transform_1, window_bounds = array<i64: 4, 16, 16>}, {transform_indices = @transform_2, window_bounds = array<i64: 2, 16, 32>}]} {
    %c0 = arith.constant 0 : index
    %c0_0 = arith.constant 0 : index
    %c0_1 = arith.constant 0 : index
    %0 = vector.load %arg1[%c0, %c0_0, %c0_1] : memref<2x16x96xf32, #tpu.memory_space<vmem>>, vector<2x16x96xf32>
    %1 = vector.extract_strided_slice %0 {offsets = [0, 0, 0], sizes = [2, 16, 32], strides = [1, 1, 1]} : vector<2x16x96xf32> to vector<2x16x32xf32>
    %cst = arith.constant 0.353553385 : f32
    %2 = vector.broadcast %cst : f32 to vector<2x16x32xf32>
    %3 = arith.mulf %1, %2 : vector<2x16x32xf32>
    %4 = vector.extract_strided_slice %0 {offsets = [0, 0, 32], sizes = [2, 16, 32], strides = [1, 1, 1]} : vector<2x16x96xf32> to vector<2x16x32xf32>
    %5 = vector.extract_strided_slice %0 {offsets = [0, 0, 64], sizes = [2, 16, 32], strides = [1, 1, 1]} : vector<2x16x96xf32> to vector<2x16x32xf32>
    %c0_2 = arith.constant 0 : index
    %c0_3 = arith.constant 0 : index
    %c0_4 = arith.constant 0 : index
    %6 = vector.load %arg2[%c0_2, %c0_3, %c0_4] : memref<4x16x16xf32, #tpu.memory_space<vmem>>, vector<4x16x16xf32>
    %7 = vector.extract_strided_slice %3 {offsets = [0, 0, 0], sizes = [2, 16, 8], strides = [1, 1, 1]} : vector<2x16x32xf32> to vector<2x16x8xf32>
    %8 = vector.extract_strided_slice %4 {offsets = [0, 0, 0], sizes = [2, 16, 8], strides = [1, 1, 1]} : vector<2x16x32xf32> to vector<2x16x8xf32>
    %9 = vector.extract_strided_slice %5 {offsets = [0, 0, 0], sizes = [2, 16, 8], strides = [1, 1, 1]} : vector<2x16x32xf32> to vector<2x16x8xf32>
    "tpu.trace_start"() <{level = 10 : i32, message = "bqd,bkd->bqk"}> : () -> ()
    %cst_5 = arith.constant dense<0.000000e+00> : vector<2x16x16xf32>
    %10 = tpu.matmul %7, %8, %cst_5 {dimension_numbers = #tpu.dot_dimension_numbers<[2], [2], [1], [1], [0, 0, 0, 1, 1, 1], [0], [0]>, precision = #tpu.contract_precision<fp32>} : vector<2x16x8xf32>, vector<2x16x8xf32>, vector<2x16x16xf32> -> vector<2x16x16xf32>
    "tpu.trace_stop"() : () -> ()
    %11 = vector.extract_strided_slice %6 {offsets = [0, 0, 0], sizes = [1, 16, 16], strides = [1, 1, 1]} : vector<4x16x16xf32> to vector<1x16x16xf32>
    %12 = vector.shape_cast %11 : vector<1x16x16xf32> to vector<16x16xf32>
    %13 = vector.shape_cast %12 : vector<16x16xf32> to vector<1x16x16xf32>
    %14 = vector.broadcast %13 : vector<1x16x16xf32> to vector<2x16x16xf32>
    %15 = arith.addf %10, %14 : vector<2x16x16xf32>
    %cst_6 = arith.constant dense<0xFF800000> : vector<2x16xf32>
    %16 = vector.multi_reduction <maximumf>, %15, %cst_6 [2] : vector<2x16x16xf32> to vector<2x16xf32>
    %17 = vector.shape_cast %16 : vector<2x16xf32> to vector<2x16x1xf32>
    %18 = vector.broadcast %17 : vector<2x16x1xf32> to vector<2x16x16xf32>
    %19 = arith.subf %15, %18 : vector<2x16x16xf32>
    %20 = math.exp %19 : vector<2x16x16xf32>
    %cst_7 = arith.constant dense<0.000000e+00> : vector<2x16xf32>
    %21 = vector.multi_reduction <add>, %20, %cst_7 [2] : vector<2x16x16xf32> to vector<2x16xf32>
    %22 = vector.shape_cast %21 : vector<2x16xf32> to vector<2x16x1xf32>
    %23 = vector.broadcast %22 : vector<2x16x1xf32> to vector<2x16x16xf32>
    %24 = arith.divf %20, %23 : vector<2x16x16xf32>
    "tpu.trace_start"() <{level = 10 : i32, message = "bqk,bkd->bqd"}> : () -> ()
    %cst_8 = arith.constant dense<0.000000e+00> : vector<2x16x8xf32>
    %25 = tpu.matmul %24, %9, %cst_8 {dimension_numbers = #tpu.dot_dimension_numbers<[2], [1], [1], [2], [0, 0, 0, 1, 1, 2], [0], [0]>, precision = #tpu.contract_precision<fp32>} : vector<2x16x16xf32>, vector<2x16x8xf32>, vector<2x16x8xf32> -> vector<2x16x8xf32>
    "tpu.trace_stop"() : () -> ()
    %c0_9 = arith.constant 0 : index
    %c0_10 = arith.constant 0 : index
    %c0_11 = arith.constant 0 : index
    %26 = vector.load %arg3[%c0_9, %c0_10, %c0_11] : memref<2x16x32xf32, #tpu.memory_space<vmem>>, vector<2x16x8xf32>
    tpu.vector_store %arg3[%c0_9, %c0_10, %c0_11], %25 {strides = array<i32>} : memref<2x16x32xf32, #tpu.memory_space<vmem>>, vector<2x16x8xf32>,
    %27 = vector.extract_strided_slice %3 {offsets = [0, 0, 8], sizes = [2, 16, 8], strides = [1, 1, 1]} : vector<2x16x32xf32> to vector<2x16x8xf32>
    %28 = vector.extract_strided_slice %4 {offsets = [0, 0, 8], sizes = [2, 16, 8], strides = [1, 1, 1]} : vector<2x16x32xf32> to vector<2x16x8xf32>
    %29 = vector.extract_strided_slice %5 {offsets = [0, 0, 8], sizes = [2, 16, 8], strides = [1, 1, 1]} : vector<2x16x32xf32> to vector<2x16x8xf32>
    "tpu.trace_start"() <{level = 10 : i32, message = "bqd,bkd->bqk"}> : () -> ()
    %cst_12 = arith.constant dense<0.000000e+00> : vector<2x16x16xf32>
    %30 = tpu.matmul %27, %28, %cst_12 {dimension_numbers = #tpu.dot_dimension_numbers<[2], [2], [1], [1], [0, 0, 0, 1, 1, 1], [0], [0]>, precision = #tpu.contract_precision<fp32>} : vector<2x16x8xf32>, vector<2x16x8xf32>, vector<2x16x16xf32> -> vector<2x16x16xf32>
    "tpu.trace_stop"() : () -> ()
    %31 = vector.extract_strided_slice %6 {offsets = [1, 0, 0], sizes = [1, 16, 16], strides = [1, 1, 1]} : vector<4x16x16xf32> to vector<1x16x16xf32>
    %32 = vector.shape_cast %31 : vector<1x16x16xf32> to vector<16x16xf32>
    %33 = vector.shape_cast %32 : vector<16x16xf32> to vector<1x16x16xf32>
    %34 = vector.broadcast %33 : vector<1x16x16xf32> to vector<2x16x16xf32>
    %35 = arith.addf %30, %34 : vector<2x16x16xf32>
    %cst_13 = arith.constant dense<0xFF800000> : vector<2x16xf32>
    %36 = vector.multi_reduction <maximumf>, %35, %cst_13 [2] : vector<2x16x16xf32> to vector<2x16xf32>
    %37 = vector.shape_cast %36 : vector<2x16xf32> to vector<2x16x1xf32>
    %38 = vector.broadcast %37 : vector<2x16x1xf32> to vector<2x16x16xf32>
    %39 = arith.subf %35, %38 : vector<2x16x16xf32>
    %40 = math.exp %39 : vector<2x16x16xf32>
    %cst_14 = arith.constant dense<0.000000e+00> : vector<2x16xf32>
    %41 = vector.multi_reduction <add>, %40, %cst_14 [2] : vector<2x16x16xf32> to vector<2x16xf32>
    %42 = vector.shape_cast %41 : vector<2x16xf32> to vector<2x16x1xf32>
    %43 = vector.broadcast %42 : vector<2x16x1xf32> to vector<2x16x16xf32>
    %44 = arith.divf %40, %43 : vector<2x16x16xf32>
    "tpu.trace_start"() <{level = 10 : i32, message = "bqk,bkd->bqd"}> : () -> ()
    %cst_15 = arith.constant dense<0.000000e+00> : vector<2x16x8xf32>
    %45 = tpu.matmul %44, %29, %cst_15 {dimension_numbers = #tpu.dot_dimension_numbers<[2], [1], [1], [2], [0, 0, 0, 1, 1, 2], [0], [0]>, precision = #tpu.contract_precision<fp32>} : vector<2x16x16xf32>, vector<2x16x8xf32>, vector<2x16x8xf32> -> vector<2x16x8xf32>
    "tpu.trace_stop"() : () -> ()
    %c0_16 = arith.constant 0 : index
    %c0_17 = arith.constant 0 : index
    %c8 = arith.constant 8 : index
    %46 = vector.load %arg3[%c0_16, %c0_17, %c8] : memref<2x16x32xf32, #tpu.memory_space<vmem>>, vector<2x16x8xf32>
    tpu.vector_store %arg3[%c0_16, %c0_17, %c8], %45 {strides = array<i32>} : memref<2x16x32xf32, #tpu.memory_space<vmem>>, vector<2x16x8xf32>,
    %47 = vector.extract_strided_slice %3 {offsets = [0, 0, 16], sizes = [2, 16, 8], strides = [1, 1, 1]} : vector<2x16x32xf32> to vector<2x16x8xf32>
    %48 = vector.extract_strided_slice %4 {offsets = [0, 0, 16], sizes = [2, 16, 8], strides = [1, 1, 1]} : vector<2x16x32xf32> to vector<2x16x8xf32>
    %49 = vector.extract_strided_slice %5 {offsets = [0, 0, 16], sizes = [2, 16, 8], strides = [1, 1, 1]} : vector<2x16x32xf32> to vector<2x16x8xf32>
    "tpu.trace_start"() <{level = 10 : i32, message = "bqd,bkd->bqk"}> : () -> ()
    %cst_18 = arith.constant dense<0.000000e+00> : vector<2x16x16xf32>
    %50 = tpu.matmul %47, %48, %cst_18 {dimension_numbers = #tpu.dot_dimension_numbers<[2], [2], [1], [1], [0, 0, 0, 1, 1, 1], [0], [0]>, precision = #tpu.contract_precision<fp32>} : vector<2x16x8xf32>, vector<2x16x8xf32>, vector<2x16x16xf32> -> vector<2x16x16xf32>
    "tpu.trace_stop"() : () -> ()
    %51 = vector.extract_strided_slice %6 {offsets = [2, 0, 0], sizes = [1, 16, 16], strides = [1, 1, 1]} : vector<4x16x16xf32> to vector<1x16x16xf32>
    %52 = vector.shape_cast %51 : vector<1x16x16xf32> to vector<16x16xf32>
    %53 = vector.shape_cast %52 : vector<16x16xf32> to vector<1x16x16xf32>
    %54 = vector.broadcast %53 : vector<1x16x16xf32> to vector<2x16x16xf32>
    %55 = arith.addf %50, %54 : vector<2x16x16xf32>
    %cst_19 = arith.constant dense<0xFF800000> : vector<2x16xf32>
    %56 = vector.multi_reduction <maximumf>, %55, %cst_19 [2] : vector<2x16x16xf32> to vector<2x16xf32>
    %57 = vector.shape_cast %56 : vector<2x16xf32> to vector<2x16x1xf32>
    %58 = vector.broadcast %57 : vector<2x16x1xf32> to vector<2x16x16xf32>
    %59 = arith.subf %55, %58 : vector<2x16x16xf32>
    %60 = math.exp %59 : vector<2x16x16xf32>
    %cst_20 = arith.constant dense<0.000000e+00> : vector<2x16xf32>
    %61 = vector.multi_reduction <add>, %60, %cst_20 [2] : vector<2x16x16xf32> to vector<2x16xf32>
    %62 = vector.shape_cast %61 : vector<2x16xf32> to vector<2x16x1xf32>
    %63 = vector.broadcast %62 : vector<2x16x1xf32> to vector<2x16x16xf32>
    %64 = arith.divf %60, %63 : vector<2x16x16xf32>
    "tpu.trace_start"() <{level = 10 : i32, message = "bqk,bkd->bqd"}> : () -> ()
    %cst_21 = arith.constant dense<0.000000e+00> : vector<2x16x8xf32>
    %65 = tpu.matmul %64, %49, %cst_21 {dimension_numbers = #tpu.dot_dimension_numbers<[2], [1], [1], [2], [0, 0, 0, 1, 1, 2], [0], [0]>, precision = #tpu.contract_precision<fp32>} : vector<2x16x16xf32>, vector<2x16x8xf32>, vector<2x16x8xf32> -> vector<2x16x8xf32>
    "tpu.trace_stop"() : () -> ()
    %c0_22 = arith.constant 0 : index
    %c0_23 = arith.constant 0 : index
    %c16 = arith.constant 16 : index
    %66 = vector.load %arg3[%c0_22, %c0_23, %c16] : memref<2x16x32xf32, #tpu.memory_space<vmem>>, vector<2x16x8xf32>
    tpu.vector_store %arg3[%c0_22, %c0_23, %c16], %65 {strides = array<i32>} : memref<2x16x32xf32, #tpu.memory_space<vmem>>, vector<2x16x8xf32>,
    %67 = vector.extract_strided_slice %3 {offsets = [0, 0, 24], sizes = [2, 16, 8], strides = [1, 1, 1]} : vector<2x16x32xf32> to vector<2x16x8xf32>
    %68 = vector.extract_strided_slice %4 {offsets = [0, 0, 24], sizes = [2, 16, 8], strides = [1, 1, 1]} : vector<2x16x32xf32> to vector<2x16x8xf32>
    %69 = vector.extract_strided_slice %5 {offsets = [0, 0, 24], sizes = [2, 16, 8], strides = [1, 1, 1]} : vector<2x16x32xf32> to vector<2x16x8xf32>
    "tpu.trace_start"() <{level = 10 : i32, message = "bqd,bkd->bqk"}> : () -> ()
    %cst_24 = arith.constant dense<0.000000e+00> : vector<2x16x16xf32>
    %70 = tpu.matmul %67, %68, %cst_24 {dimension_numbers = #tpu.dot_dimension_numbers<[2], [2], [1], [1], [0, 0, 0, 1, 1, 1], [0], [0]>, precision = #tpu.contract_precision<fp32>} : vector<2x16x8xf32>, vector<2x16x8xf32>, vector<2x16x16xf32> -> vector<2x16x16xf32>
    "tpu.trace_stop"() : () -> ()
    %71 = vector.extract_strided_slice %6 {offsets = [3, 0, 0], sizes = [1, 16, 16], strides = [1, 1, 1]} : vector<4x16x16xf32> to vector<1x16x16xf32>
    %72 = vector.shape_cast %71 : vector<1x16x16xf32> to vector<16x16xf32>
    %73 = vector.shape_cast %72 : vector<16x16xf32> to vector<1x16x16xf32>
    %74 = vector.broadcast %73 : vector<1x16x16xf32> to vector<2x16x16xf32>
    %75 = arith.addf %70, %74 : vector<2x16x16xf32>
    %cst_25 = arith.constant dense<0xFF800000> : vector<2x16xf32>
    %76 = vector.multi_reduction <maximumf>, %75, %cst_25 [2] : vector<2x16x16xf32> to vector<2x16xf32>
    %77 = vector.shape_cast %76 : vector<2x16xf32> to vector<2x16x1xf32>
    %78 = vector.broadcast %77 : vector<2x16x1xf32> to vector<2x16x16xf32>
    %79 = arith.subf %75, %78 : vector<2x16x16xf32>
    %80 = math.exp %79 : vector<2x16x16xf32>
    %cst_26 = arith.constant dense<0.000000e+00> : vector<2x16xf32>
    %81 = vector.multi_reduction <add>, %80, %cst_26 [2] : vector<2x16x16xf32> to vector<2x16xf32>
    %82 = vector.shape_cast %81 : vector<2x16xf32> to vector<2x16x1xf32>
    %83 = vector.broadcast %82 : vector<2x16x1xf32> to vector<2x16x16xf32>
    %84 = arith.divf %80, %83 : vector<2x16x16xf32>
    "tpu.trace_start"() <{level = 10 : i32, message = "bqk,bkd->bqd"}> : () -> ()
    %cst_27 = arith.constant dense<0.000000e+00> : vector<2x16x8xf32>
    %85 = tpu.matmul %84, %69, %cst_27 {dimension_numbers = #tpu.dot_dimension_numbers<[2], [1], [1], [2], [0, 0, 0, 1, 1, 2], [0], [0]>, precision = #tpu.contract_precision<fp32>} : vector<2x16x16xf32>, vector<2x16x8xf32>, vector<2x16x8xf32> -> vector<2x16x8xf32>
    "tpu.trace_stop"() : () -> ()
    %c0_28 = arith.constant 0 : index
    %c0_29 = arith.constant 0 : index
    %c24 = arith.constant 24 : index
    %86 = vector.load %arg3[%c0_28, %c0_29, %c24] : memref<2x16x32xf32, #tpu.memory_space<vmem>>, vector<2x16x8xf32>
    tpu.vector_store %arg3[%c0_28, %c0_29, %c24], %85 {strides = array<i32>} : memref<2x16x32xf32, #tpu.memory_space<vmem>>, vector<2x16x8xf32>,
    return
  }
  func.func @transform_0(%arg0: i32) -> (i32, i32, i32) {
    %c0_i32 = arith.constant 0 : i32
    %c0_i32_0 = arith.constant 0 : i32
    %c0_i32_1 = arith.constant 0 : i32
    return %arg0, %c0_i32, %c0_i32_0 : i32, i32, i32
  }
  func.func @transform_1(%arg0: i32) -> (i32, i32, i32) {
    %c0_i32 = arith.constant 0 : i32
    %c0_i32_0 = arith.constant 0 : i32
    %c0_i32_1 = arith.constant 0 : i32
    %c0_i32_2 = arith.constant 0 : i32
    return %c0_i32, %c0_i32_0, %c0_i32_1 : i32, i32, i32
  }
  func.func @transform_2(%arg0: i32) -> (i32, i32, i32) {
    %c0_i32 = arith.constant 0 : i32
    %c0_i32_0 = arith.constant 0 : i32
    %c0_i32_1 = arith.constant 0 : i32
    return %arg0, %c0_i32, %c0_i32_0 : i32, i32, i32
  }
}

</mosaic_0001>

<llo_original>
// kernel: tpu_custom_call.1
$region0: #{tpu_custom_call.1}
  #allocation0 [shape = 'u32[]', space=smem, size = 0x4, offset = 0x4, fixed_abs, tag = 'smem constant byte address 0x4 - core index']
  #allocation1 [shape = 'u32[144,128]{1,0:T(1,128)}', space=vmem, size = 0x12000, scoped, tag = 'internal scratch']
  %s0 = inlined_call_operand.hbm [shape: f32[8,16,96], index: 0, kind: input, shape index: {}]
  %s1 = inlined_call_operand.hbm [shape: f32[4,16,16], index: 1, kind: input, shape index: {}]
  %s2 = inlined_call_operand.hbm [shape: f32[8,16,32], index: 2, kind: output, shape index: {}]
  %s3 = sld [smem:[#allocation0]]
  $region49: #{tpu_custom_call.1} parent=0
    _
  %s5 = ssub.s32 1, %s3
  %s6 = scalar_select 0, %s5, %s3
  $region1: #{tpu_custom_call.1} parent=0
    #allocation2 [shape = 'u8[32768]{0}', space=vmem, size = 0x8000, scoped, tag = 'input window, operand 0']
    #allocation3 [shape = 's32[2]{0}', space=sflag, size = 0x8, scoped, tag = 'scoped memory for tpu_custom_call.1']
    #allocation4 [shape = 's32[2]{0}', space=sflag, size = 0x8, scoped, tag = 'scoped memory for tpu_custom_call.1']
    #allocation5 [shape = 'u8[32768]{0}', space=vmem, size = 0x8000, scoped, tag = 'input window, operand 1, single buffered']
    #allocation6 [shape = 's32[1]{0}', space=sflag, size = 0x4, scoped, tag = 'scoped memory for tpu_custom_call.1']
    #allocation7 [shape = 'u8[32768]{0}', space=vmem, size = 0x8000, scoped, tag = 'output window, operand 0']
    %7 = vsyncpa [#allocation3], 0
    %s8 = scalar_lea.sflag [#allocation3], 1
    %9 = vsyncpa %s8, 0
    %10 = vsyncpa [#allocation6], 0
    %11 = vsyncpa [#allocation4], 0
    %s12 = scalar_lea.sflag [#allocation4], 1
    %13 = vsyncpa %s12, 0
    loop: start=0, step=1, limit=6
    $region2: #{tpu_custom_call.1} parent=1 // loop_pre_header
      _
    $region3: #{tpu_custom_call.1} parent=1 // loop_header
      %s15 = sphi 0, %s19
      %p16 = scmp.ge.s32.totalorder %s15, 6
      %s25 = sphi 0, %s27
      %s28 = sphi 0, %s25
      %s29 = sphi 0, %s28
      %s45 = sphi 0, %s29
      %s49 = sphi 0, %s49
      %s51 = sphi 0, %s49
      %s52 = sphi 0, %s51
      %s66 = sphi 0, %s52
      %s72 = sphi 0, %s74
      %s75 = sphi 0, %s72
      %s76 = sphi 0, %s75
      %s92 = sphi 0, %s76
    $region4: #{tpu_custom_call.1} parent=1 // loop_header_branch
      %18 = sbr.rel (%p16) target = $region8
    $region5: #{tpu_custom_call.1} parent=1 // loop_body
      %s20 = ssub.s32 %s15, 1
      %s21 = ssub.s32 %s15, 2
      %s22 = sadd.s32 %s15, 1
      %s23 = ssub.s32 %s15, %s22
      %p24 = scmp.eq.s32.totalorder %s23, 0
      %s26 = sadd.s32 %s25, 1
      %s27 = scalar_select %p24, %s25, %s26
      %p30 = pneg %p24
      %p31 = scmp.eq.s32.totalorder %s15, 3
      %p32 = por %p30, %p31
      %p33 = scmp.ne.s32.totalorder %s25, %s28
      %p34 = scmp.eq.s32.totalorder %s15, 0
      %p35 = por %p33, %p34
      %p36 = scmp.ne.s32.totalorder %s25, %s28
      %p37 = scmp.eq.s32.totalorder %s20, 3
      %p38 = por %p36, %p37
      %p39 = scmp.ne.s32.totalorder %s28, %s29
      %p40 = scmp.eq.s32.totalorder %s20, 0
      %p41 = por %p39, %p40
      %p42 = scmp.ne.s32.totalorder %s28, %s29
      %p43 = scmp.eq.s32.totalorder %s21, 3
      %p44 = por %p42, %p43
      %p46 = scmp.ne.s32.totalorder %s29, %s45
      %p47 = scmp.eq.s32.totalorder %s21, 0
      %p48 = por %p46, %p47
      %s50 = sadd.s32 %s49, 1
      %p53 = scmp.eq.s32.totalorder %s15, 3
      %p54 = scmp.ne.s32.totalorder %s49, %s51
      %p55 = scmp.eq.s32.totalorder %s15, 0
      %p56 = por %p54, %p55
      %p57 = scmp.ne.s32.totalorder %s49, %s51
      %p58 = scmp.eq.s32.totalorder %s20, 3
      %p59 = por %p57, %p58
      %p60 = scmp.ne.s32.totalorder %s51, %s52
      %p61 = scmp.eq.s32.totalorder %s20, 0
      %p62 = por %p60, %p61
      %p63 = scmp.ne.s32.totalorder %s51, %s52
      %p64 = scmp.eq.s32.totalorder %s21, 3
      %p65 = por %p63, %p64
      %p67 = scmp.ne.s32.totalorder %s52, %s66
      %p68 = scmp.eq.s32.totalorder %s21, 0
      %p69 = por %p67, %p68
      %s70 = ssub.s32 %s15, %s22
      %p71 = scmp.eq.s32.totalorder %s70, 0
      %s73 = sadd.s32 %s72, 1
      %s74 = scalar_select %p71, %s72, %s73
      %p77 = pneg %p71
      %p78 = scmp.eq.s32.totalorder %s15, 3
      %p79 = por %p77, %p78
      %p80 = scmp.ne.s32.totalorder %s72, %s75
      %p81 = scmp.eq.s32.totalorder %s15, 0
      %p82 = por %p80, %p81
      %p83 = scmp.ne.s32.totalorder %s72, %s75
      %p84 = scmp.eq.s32.totalorder %s20, 3
      %p85 = por %p83, %p84
      %p86 = scmp.ne.s32.totalorder %s75, %s76
      %p87 = scmp.eq.s32.totalorder %s20, 0
      %p88 = por %p86, %p87
      %p89 = scmp.ne.s32.totalorder %s75, %s76
      %p90 = scmp.eq.s32.totalorder %s21, 3
      %p91 = por %p89, %p90
      %p93 = scmp.ne.s32.totalorder %s76, %s92
      %p94 = scmp.eq.s32.totalorder %s21, 0
      %p95 = por %p93, %p94
      %p96 = scmp.le.s32.totalorder 1, %s15
      %p97 = scmp.lt.s32.totalorder %s15, 5
      %p98 = pnand %p96, %p97
      %p99 = pneg %p98
      // Predicated region
      $region9: #{tpu_custom_call.1} parent=5 // pred_check
        _
      $region10: #{tpu_custom_call.1} parent=5 // pred_check_branch
        %101 = sbr.rel (%p98) target = $region12
      $region11: #{tpu_custom_call.1} parent=5 // pred_region
        %s102 = ssub.s32 %s15, 1
        // Predicated region
        $region13: #{tpu_custom_call.1} parent=11 // pred_check
          %p103 = pneg %p62
        $region14: #{tpu_custom_call.1} parent=11 // pred_check_branch
          %105 = sbr.rel (%p103) target = $region16
        $region15: #{tpu_custom_call.1} parent=11 // pred_region
          %s107 = ssub.s32 1024, 1024
          %108 = vsyncadd [#allocation6], %s107
          %s109 = sshll.u32 [#allocation5], 4
          %s110 = int_to_ptr.vmem [resolvable:$true] %s109
          %115 = dma.hbm_to_vmem [thread:$0]  %s1, 1024, %s110, [#allocation6], 128, 128, 8
        $region16: #{tpu_custom_call.1} parent=11 // pred_fallthru
          _
      $region12: #{tpu_custom_call.1} parent=5 // pred_fallthru
        _
      %p116 = scmp.lt.s32.totalorder %s15, 4
      // Predicated region
      $region17: #{tpu_custom_call.1} parent=5 // pred_check
        %p117 = pneg %p116
      $region18: #{tpu_custom_call.1} parent=5 // pred_check_branch
        %119 = sbr.rel (%p117) target = $region20
      $region19: #{tpu_custom_call.1} parent=5 // pred_region
        // Predicated region
        $region21: #{tpu_custom_call.1} parent=19 // pred_check
          %p120 = pneg %p35
        $region22: #{tpu_custom_call.1} parent=19 // pred_check_branch
          %122 = sbr.rel (%p120) target = $region24
        $region23: #{tpu_custom_call.1} parent=19 // pred_region
          %s123 = sand.u32 %s25, 1
          %s124 = scalar_lea.sflag [#allocation3], %s123
          %s125 = sand.u32 %s25, 1
          %s126 = smul.addr %s125, 32
          %s127 = scalar_lea.vmem [#allocation2], %s126
          %s128 = smul.u32 2, %s15
          %s130 = ssub.s32 512, 512
          %131 = vsyncadd %s124, %s130
          %s132 = smul.addr %s128, 2
          %s133 = smul.addr %s132, 128
          %s134 = scalar_lea.hbm %s0, %s133
          %s135 = sshll.u32 %s127, 4
          %s136 = int_to_ptr.vmem [resolvable:$true] %s135
          %141 = dma.hbm_to_vmem [thread:$0]  %s134, 512, %s136, %s124, 128, 128, 8
        $region24: #{tpu_custom_call.1} parent=19 // pred_fallthru
          _
      $region20: #{tpu_custom_call.1} parent=5 // pred_fallthru
        _
      %p142 = scmp.le.s32.totalorder 1, %s15
      %p143 = scmp.lt.s32.totalorder %s15, 5
      %p144 = pnand %p142, %p143
      %p145 = pneg %p144
      // Predicated region
      $region25: #{tpu_custom_call.1} parent=5 // pred_check
        _
      $region26: #{tpu_custom_call.1} parent=5 // pred_check_branch
        %147 = sbr.rel (%p144) target = $region28
      $region27: #{tpu_custom_call.1} parent=5 // pred_region
        %s148 = ssub.s32 %s15, 1
        %s149 = sand.u32 %s28, 1
        %s150 = scalar_lea.sflag [#allocation3], %s149
        %s151 = sand.u32 %s28, 1
        %s152 = smul.addr %s151, 32
        %s153 = scalar_lea.vmem [#allocation2], %s152
        // Predicated region
        $region29: #{tpu_custom_call.1} parent=27 // pred_check
          %p154 = pneg %p41
        $region30: #{tpu_custom_call.1} parent=27 // pred_check_branch
          %156 = sbr.rel (%p154) target = $region32
        $region31: #{tpu_custom_call.1} parent=27 // pred_region
          %157 = dma.done %s150, 512
        $region32: #{tpu_custom_call.1} parent=27 // pred_fallthru
          _
        // Predicated region
        $region33: #{tpu_custom_call.1} parent=27 // pred_check
          %p158 = pneg %p62
        $region34: #{tpu_custom_call.1} parent=27 // pred_check_branch
          %160 = sbr.rel (%p158) target = $region36
        $region35: #{tpu_custom_call.1} parent=27 // pred_region
          %161 = dma.done [#allocation6], 1024
        $region36: #{tpu_custom_call.1} parent=27 // pred_fallthru
          _
        %s162 = sand.u32 %s28, 1
        %s163 = scalar_lea.sflag [#allocation3], %s162
        %s164 = sand.u32 %s28, 1
        %s165 = smul.addr %s164, 32
        %s166 = scalar_lea.vmem [#allocation2], %s165
        %p167 = pneg %p41
        %p168 = pneg %p38
        %p169 = pneg %p62
        %p170 = pneg %p59
        %p171 = pneg %p88
        %p172 = pneg %p85
        %s173 = sand.u32 %s75, 1
        %s174 = scalar_lea.sflag [#allocation4], %s173
        %s175 = sand.u32 %s75, 1
        %s176 = smul.addr %s175, 32
        %s177 = scalar_lea.vmem [#allocation7], %s176
        %s178 = smul.u32 2, %s20
        %s179 = smul.u32 2, %s20
        %v180 = vld [vmem:[%s153] sm:$0xff]
        %v181 = vld [vmem:[%s153 + $0x8] sm:$0xff]
        %v182 = vld [vmem:[%s153 + $0x10] sm:$0xff]
        %v183 = vld [vmem:[%s153 + $0x18] sm:$0xff]
        %v184 = vmul.f32 %v180, 0.35355338
        %v185 = vmul.f32 %v181, 0.35355338
        %v186 = vmul.f32 %v182, 0.35355338
        %v187 = vmul.f32 %v183, 0.35355338
        %v188 = vld [vmem:[#allocation5] sm:$0xff]
        %v189 = vld [vmem:[#allocation5 + $0x8] sm:$0xff]
        %v190 = vld [vmem:[#allocation5 + $0x10] sm:$0xff]
        %v191 = vld [vmem:[#allocation5 + $0x18] sm:$0xff]
        %v192 = vld [vmem:[#allocation5 + $0x20] sm:$0xff]
        %v193 = vld [vmem:[#allocation5 + $0x28] sm:$0xff]
        %v194 = vld [vmem:[#allocation5 + $0x30] sm:$0xff]
        %v195 = vld [vmem:[#allocation5 + $0x38] sm:$0xff]
        %198 = vrot.lane.b32.xlu0 %v180, 96
        %v199 = vpop.permute.xlu0 %198
        %200 = vrot.lane.b32.xlu0 %v181, 96
        %v201 = vpop.permute.xlu0 %200
        %vm202 = vcmask 64512
        %v204 = vsel %vm202, %v184, 0
        %v207 = vsel %vm202, %v185, 0
        %v209 = vsel %vm202, %v199, 0
        %v211 = vsel %vm202, %v201, 0
        %213 = vmatprep.subr.mxu0 0.0
        %v214 = vand.u32 %v209, 4294901760
        %215 = vmatpush1.xpose.msra.mxu0 %v214
        %216 = vmatprep.subr.mxu0 0.0
        %v217 = vand.u32 %v211, 4294901760
        %218 = vmatpush1.xpose.msra.mxu0 %v217
        %219 = vmatprep.subr.mxu0 0.0
        %220 = vmatpush1.xpose.msra.mxu0 0.0
        %221 = vmatprep.subr.mxu0 0.0
        %222 = vmatpush1.xpose.msra.mxu0 0.0
        %223 = vmatprep.subr.mxu0 0.0
        %224 = vmatpush1.xpose.msra.mxu0 0.0
        %225 = vmatprep.subr.mxu0 0.0
        %226 = vmatpush1.xpose.msra.mxu0 0.0
        %227 = vmatprep.subr.mxu0 0.0
        %228 = vmatpush1.xpose.msra.mxu0 0.0
        %229 = vmatprep.subr.mxu0 0.0
        %230 = vmatpush1.xpose.msra.mxu0 0.0
        %231 = vmatprep.subr.mxu0 0.0
        %232 = vmatpush1.xpose.msra.mxu0 0.0
        %233 = vmatprep.subr.mxu0 0.0
        %234 = vmatpush1.xpose.msra.mxu0 0.0
        %235 = vmatprep.subr.mxu0 0.0
        %236 = vmatpush1.xpose.msra.mxu0 0.0
        %237 = vmatprep.subr.mxu0 0.0
        %238 = vmatpush1.xpose.msra.mxu0 0.0
        %239 = vmatprep.subr.mxu0 0.0
        %240 = vmatpush1.xpose.msra.mxu0 0.0
        %241 = vmatprep.subr.mxu0 0.0
        %242 = vmatpush1.xpose.msra.mxu0 0.0
        %243 = vmatprep.subr.mxu0 0.0
        %244 = vmatpush1.xpose.msra.mxu0 0.0
        %245 = vmatprep.subr.mxu0 0.0
        %246 = vmatpush1.xpose.msra.mxu0 0.0
        %247 = vmatprep.subr.mxu0 0.0
        %248 = vmatpush1.xpose.msra.mxu0 0.0
        %249 = vmatprep.subr.mxu0 0.0
        %250 = vmatpush1.xpose.msra.mxu0 0.0
        %251 = vmatprep.subr.mxu0 0.0
        %252 = vmatpush1.xpose.msra.mxu0 0.0
        %253 = vmatprep.subr.mxu0 0.0
        %254 = vmatpush1.xpose.msra.mxu0 0.0
        %255 = vmatprep.subr.mxu0 0.0
        %256 = vmatpush1.xpose.msra.mxu0 0.0
        %257 = vmatprep.subr.mxu0 0.0
        %258 = vmatpush1.xpose.msra.mxu0 0.0
        %259 = vmatprep.subr.mxu0 0.0
        %260 = vmatpush1.xpose.msra.mxu0 0.0
        %261 = vmatprep.subr.mxu0 0.0
        %262 = vmatpush1.xpose.msra.mxu0 0.0
        %263 = vmatprep.subr.mxu0 0.0
        %264 = vmatpush1.xpose.msra.mxu0 0.0
        %265 = vmatprep.subr.mxu0 0.0
        %266 = vmatpush1.xpose.msra.mxu0 0.0
        %267 = vmatprep.subr.mxu0 0.0
        %268 = vmatpush1.xpose.msra.mxu0 0.0
        %269 = vmatprep.subr.mxu0 0.0
        %270 = vmatpush1.xpose.msra.mxu0 0.0
        %271 = vmatprep.subr.mxu0 0.0
        %272 = vmatpush1.xpose.msra.mxu0 0.0
        %273 = vmatprep.subr.mxu0 0.0
        %274 = vmatpush1.xpose.msra.mxu0 0.0
        %275 = vmatprep.subr.mxu0 0.0
        %276 = vmatpush1.xpose.msra.mxu0 0.0
        %277 = vmatprep.subr.mxu0 0.0
        %278 = vmatpush1.xpose.msra.mxu0 0.0
        %279 = vmatprep.mubr.f32.mxu0 0.0
        %v280 = vand.u32 %v204, 4294901760
        %v281 = vsub.f32 %v204, %v280
        %v282 = vand.u32 %v281, 4294901760
        %v283 = vsub.f32 %v281, %v282
        %v284 = vand.u32 %v283, 4294901760
        %285 = vmatmul.mubr.f32.gmra.mrb[0].mxu0 %v284
        %v286 = vpop.f32.mrb[0].mxu0
        %v287 = vadd.f32 %v188, %v286
        %v288 = vpop.f32.mrb[0].mxu0
        %289 = vmatprep.mubr.f32.mxu0 0.0
        %v290 = vand.u32 %v207, 4294901760
        %v291 = vsub.f32 %v207, %v290
        %v292 = vand.u32 %v291, 4294901760
        %v293 = vsub.f32 %v291, %v292
        %v294 = vand.u32 %v293, 4294901760
        %295 = vmatmul.mubr.f32.gmra.mrb[0].mxu0 %v294
        %v296 = vpop.f32.mrb[0].mxu0
        %v297 = vadd.f32 %v189, %v296
        %v298 = vpop.f32.mrb[0].mxu0
        %299 = vdwg.mxu0
        %300 = vmatprep.subr.mxu0 0.0
        %v301 = vand.u32 %v209, 4294901760
        %v302 = vsub.f32 %v209, %v301
        %v303 = vand.u32 %v302, 4294901760
        %v304 = vsub.f32 %v302, %v303
        %v305 = vand.u32 %v304, 4294901760
        %306 = vmatpush1.xpose.msra.mxu0 %v305
        %307 = vmatprep.subr.mxu0 0.0
        %v308 = vand.u32 %v211, 4294901760
        %v309 = vsub.f32 %v211, %v308
        %v310 = vand.u32 %v309, 4294901760
        %v311 = vsub.f32 %v309, %v310
        %v312 = vand.u32 %v311, 4294901760
        %313 = vmatpush1.xpose.msra.mxu0 %v312
        %314 = vmatprep.subr.mxu0 0.0
        %315 = vmatpush1.xpose.msra.mxu0 0.0
        %316 = vmatprep.subr.mxu0 0.0
        %317 = vmatpush1.xpose.msra.mxu0 0.0
        %318 = vmatprep.subr.mxu0 0.0
        %319 = vmatpush1.xpose.msra.mxu0 0.0
        %320 = vmatprep.subr.mxu0 0.0
        %321 = vmatpush1.xpose.msra.mxu0 0.0
        %322 = vmatprep.subr.mxu0 0.0
        %323 = vmatpush1.xpose.msra.mxu0 0.0
        %324 = vmatprep.subr.mxu0 0.0
        %325 = vmatpush1.xpose.msra.mxu0 0.0
        %326 = vmatprep.subr.mxu0 0.0
        %327 = vmatpush1.xpose.msra.mxu0 0.0
        %328 = vmatprep.subr.mxu0 0.0
        %329 = vmatpush1.xpose.msra.mxu0 0.0
        %330 = vmatprep.subr.mxu0 0.0
        %331 = vmatpush1.xpose.msra.mxu0 0.0
        %332 = vmatprep.subr.mxu0 0.0
        %333 = vmatpush1.xpose.msra.mxu0 0.0
        %334 = vmatprep.subr.mxu0 0.0
        %335 = vmatpush1.xpose.msra.mxu0 0.0
        %336 = vmatprep.subr.mxu0 0.0
        %337 = vmatpush1.xpose.msra.mxu0 0.0
        %338 = vmatprep.subr.mxu0 0.0
        %339 = vmatpush1.xpose.msra.mxu0 0.0
        %340 = vmatprep.subr.mxu0 0.0
        %341 = vmatpush1.xpose.msra.mxu0 0.0
        %342 = vmatprep.subr.mxu0 0.0
        %343 = vmatpush1.xpose.msra.mxu0 0.0
        %344 = vmatprep.subr.mxu0 0.0
        %345 = vmatpush1.xpose.msra.mxu0 0.0
        %346 = vmatprep.subr.mxu0 0.0
        %347 = vmatpush1.xpose.msra.mxu0 0.0
        %348 = vmatprep.subr.mxu0 0.0
        %349 = vmatpush1.xpose.msra.mxu0 0.0
        %350 = vmatprep.subr.mxu0 0.0
        %351 = vmatpush1.xpose.msra.mxu0 0.0
        %352 = vmatprep.subr.mxu0 0.0
        %353 = vmatpush1.xpose.msra.mxu0 0.0
        %354 = vmatprep.subr.mxu0 0.0
        %355 = vmatpush1.xpose.msra.mxu0 0.0
        %356 = vmatprep.subr.mxu0 0.0
        %357 = vmatpush1.xpose.msra.mxu0 0.0
        %358 = vmatprep.subr.mxu0 0.0
        %359 = vmatpush1.xpose.msra.mxu0 0.0
        %360 = vmatprep.subr.mxu0 0.0
        %361 = vmatpush1.xpose.msra.mxu0 0.0
        %362 = vmatprep.subr.mxu0 0.0
        %363 = vmatpush1.xpose.msra.mxu0 0.0
        %364 = vmatprep.subr.mxu0 0.0
        %365 = vmatpush1.xpose.msra.mxu0 0.0
        %366 = vmatprep.subr.mxu0 0.0
        %367 = vmatpush1.xpose.msra.mxu0 0.0
        %368 = vmatprep.subr.mxu0 0.0
        %369 = vmatpush1.xpose.msra.mxu0 0.0
        %370 = vmatprep.subr.mxu0 0.0
        %371 = vmatpush1.xpose.msra.mxu0 0.0
        %372 = vmatprep.subr.mxu0 0.0
        %373 = vmatpush1.xpose.msra.mxu0 0.0
        %374 = vmatprep.mubr.f32.mxu0 0.0
        %v375 = vand.u32 %v204, 4294901760
        %376 = vmatmul.mubr.f32.gmra.mrb[0].mxu0 %v375
        %v377 = vpop.f32.mrb[0].mxu0
        %v378 = vadd.f32 %v287, %v377
        %v379 = vpop.f32.mrb[0].mxu0
        %380 = vmatprep.mubr.f32.mxu0 0.0
        %v381 = vand.u32 %v207, 4294901760
        %382 = vmatmul.mubr.f32.gmra.mrb[0].mxu0 %v381
        %v383 = vpop.f32.mrb[0].mxu0
        %v384 = vadd.f32 %v297, %v383
        %v385 = vpop.f32.mrb[0].mxu0
        %386 = vdwg.mxu0
        %387 = vmatprep.subr.mxu0 0.0
        %v388 = vand.u32 %v209, 4294901760
        %v389 = vsub.f32 %v209, %v388
        %390 = vmatpush1.xpose.msra.mxu0 %v389
        %391 = vmatprep.subr.mxu0 0.0
        %v392 = vand.u32 %v211, 4294901760
        %v393 = vsub.f32 %v211, %v392
        %394 = vmatpush1.xpose.msra.mxu0 %v393
        %395 = vmatprep.subr.mxu0 0.0
        %396 = vmatpush1.xpose.msra.mxu0 0.0
        %397 = vmatprep.subr.mxu0 0.0
        %398 = vmatpush1.xpose.msra.mxu0 0.0
        %399 = vmatprep.subr.mxu0 0.0
        %400 = vmatpush1.xpose.msra.mxu0 0.0
        %401 = vmatprep.subr.mxu0 0.0
        %402 = vmatpush1.xpose.msra.mxu0 0.0
        %403 = vmatprep.subr.mxu0 0.0
        %404 = vmatpush1.xpose.msra.mxu0 0.0
        %405 = vmatprep.subr.mxu0 0.0
        %406 = vmatpush1.xpose.msra.mxu0 0.0
        %407 = vmatprep.subr.mxu0 0.0
        %408 = vmatpush1.xpose.msra.mxu0 0.0
        %409 = vmatprep.subr.mxu0 0.0
        %410 = vmatpush1.xpose.msra.mxu0 0.0
        %411 = vmatprep.subr.mxu0 0.0
        %412 = vmatpush1.xpose.msra.mxu0 0.0
        %413 = vmatprep.subr.mxu0 0.0
        %414 = vmatpush1.xpose.msra.mxu0 0.0
        %415 = vmatprep.subr.mxu0 0.0
        %416 = vmatpush1.xpose.msra.mxu0 0.0
        %417 = vmatprep.subr.mxu0 0.0
        %418 = vmatpush1.xpose.msra.mxu0 0.0
        %419 = vmatprep.subr.mxu0 0.0
        %420 = vmatpush1.xpose.msra.mxu0 0.0
        %421 = vmatprep.subr.mxu0 0.0
        %422 = vmatpush1.xpose.msra.mxu0 0.0
        %423 = vmatprep.subr.mxu0 0.0
        %424 = vmatpush1.xpose.msra.mxu0 0.0
        %425 = vmatprep.subr.mxu0 0.0
        %426 = vmatpush1.xpose.msra.mxu0 0.0
        %427 = vmatprep.subr.mxu0 0.0
        %428 = vmatpush1.xpose.msra.mxu0 0.0
        %429 = vmatprep.subr.mxu0 0.0
        %430 = vmatpush1.xpose.msra.mxu0 0.0
        %431 = vmatprep.subr.mxu0 0.0
        %432 = vmatpush1.xpose.msra.mxu0 0.0
        %433 = vmatprep.subr.mxu0 0.0
        %434 = vmatpush1.xpose.msra.mxu0 0.0
        %435 = vmatprep.subr.mxu0 0.0
        %436 = vmatpush1.xpose.msra.mxu0 0.0
        %437 = vmatprep.subr.mxu0 0.0
        %438 = vmatpush1.xpose.msra.mxu0 0.0
        %439 = vmatprep.subr.mxu0 0.0
        %440 = vmatpush1.xpose.msra.mxu0 0.0
        %441 = vmatprep.subr.mxu0 0.0
        %442 = vmatpush1.xpose.msra.mxu0 0.0
        %443 = vmatprep.subr.mxu0 0.0
        %444 = vmatpush1.xpose.msra.mxu0 0.0
        %445 = vmatprep.subr.mxu0 0.0
        %446 = vmatpush1.xpose.msra.mxu0 0.0
        %447 = vmatprep.subr.mxu0 0.0
        %448 = vmatpush1.xpose.msra.mxu0 0.0
        %449 = vmatprep.subr.mxu0 0.0
        %450 = vmatpush1.xpose.msra.mxu0 0.0
        %451 = vmatprep.subr.mxu0 0.0
        %452 = vmatpush1.xpose.msra.mxu0 0.0
        %453 = vmatprep.subr.mxu0 0.0
        %454 = vmatpush1.xpose.msra.mxu0 0.0
        %455 = vmatprep.mubr.f32.mxu0 0.0
        %v456 = vand.u32 %v204, 4294901760
        %v457 = vsub.f32 %v204, %v456
        %458 = vmatmul.mubr.f32.gmra.mrb[0].mxu0 %v457
        %v459 = vpop.f32.mrb[0].mxu0
        %v460 = vadd.f32 %v378, %v459
        %v461 = vpop.f32.mrb[0].mxu0
        %462 = vmatprep.mubr.f32.mxu0 0.0
        %v463 = vand.u32 %v207, 4294901760
        %v464 = vsub.f32 %v207, %v463
        %465 = vmatmul.mubr.f32.gmra.mrb[0].mxu0 %v464
        %v466 = vpop.f32.mrb[0].mxu0
        %v467 = vadd.f32 %v384, %v466
        %v468 = vpop.f32.mrb[0].mxu0
        %469 = vdwg.mxu0
        %470 = vmatprep.subr.mxu0 0.0
        %v471 = vand.u32 %v209, 4294901760
        %472 = vmatpush1.xpose.msra.mxu0 %v471
        %473 = vmatprep.subr.mxu0 0.0
        %v474 = vand.u32 %v211, 4294901760
        %475 = vmatpush1.xpose.msra.mxu0 %v474
        %476 = vmatprep.subr.mxu0 0.0
        %477 = vmatpush1.xpose.msra.mxu0 0.0
        %478 = vmatprep.subr.mxu0 0.0
        %479 = vmatpush1.xpose.msra.mxu0 0.0
        %480 = vmatprep.subr.mxu0 0.0
        %481 = vmatpush1.xpose.msra.mxu0 0.0
        %482 = vmatprep.subr.mxu0 0.0
        %483 = vmatpush1.xpose.msra.mxu0 0.0
        %484 = vmatprep.subr.mxu0 0.0
        %485 = vmatpush1.xpose.msra.mxu0 0.0
        %486 = vmatprep.subr.mxu0 0.0
        %487 = vmatpush1.xpose.msra.mxu0 0.0
        %488 = vmatprep.subr.mxu0 0.0
        %489 = vmatpush1.xpose.msra.mxu0 0.0
        %490 = vmatprep.subr.mxu0 0.0
        %491 = vmatpush1.xpose.msra.mxu0 0.0
        %492 = vmatprep.subr.mxu0 0.0
        %493 = vmatpush1.xpose.msra.mxu0 0.0
        %494 = vmatprep.subr.mxu0 0.0
        %495 = vmatpush1.xpose.msra.mxu0 0.0
        %496 = vmatprep.subr.mxu0 0.0
        %497 = vmatpush1.xpose.msra.mxu0 0.0
        %498 = vmatprep.subr.mxu0 0.0
        %499 = vmatpush1.xpose.msra.mxu0 0.0
        %500 = vmatprep.subr.mxu0 0.0
        %501 = vmatpush1.xpose.msra.mxu0 0.0
        %502 = vmatprep.subr.mxu0 0.0
        %503 = vmatpush1.xpose.msra.mxu0 0.0
        %504 = vmatprep.subr.mxu0 0.0
        %505 = vmatpush1.xpose.msra.mxu0 0.0
        %506 = vmatprep.subr.mxu0 0.0
        %507 = vmatpush1.xpose.msra.mxu0 0.0
        %508 = vmatprep.subr.mxu0 0.0
        %509 = vmatpush1.xpose.msra.mxu0 0.0
        %510 = vmatprep.subr.mxu0 0.0
        %511 = vmatpush1.xpose.msra.mxu0 0.0
        %512 = vmatprep.subr.mxu0 0.0
        %513 = vmatpush1.xpose.msra.mxu0 0.0
        %514 = vmatprep.subr.mxu0 0.0
        %515 = vmatpush1.xpose.msra.mxu0 0.0
        %516 = vmatprep.subr.mxu0 0.0
        %517 = vmatpush1.xpose.msra.mxu0 0.0
        %518 = vmatprep.subr.mxu0 0.0
        %519 = vmatpush1.xpose.msra.mxu0 0.0
        %520 = vmatprep.subr.mxu0 0.0
        %521 = vmatpush1.xpose.msra.mxu0 0.0
        %522 = vmatprep.subr.mxu0 0.0
        %523 = vmatpush1.xpose.msra.mxu0 0.0
        %524 = vmatprep.subr.mxu0 0.0
        %525 = vmatpush1.xpose.msra.mxu0 0.0
        %526 = vmatprep.subr.mxu0 0.0
        %527 = vmatpush1.xpose.msra.mxu0 0.0
        %528 = vmatprep.subr.mxu0 0.0
        %529 = vmatpush1.xpose.msra.mxu0 0.0
        %530 = vmatprep.subr.mxu0 0.0
        %531 = vmatpush1.xpose.msra.mxu0 0.0
        %532 = vmatprep.subr.mxu0 0.0
        %533 = vmatpush1.xpose.msra.mxu0 0.0
        %534 = vmatprep.subr.mxu0 0.0
        %535 = vmatpush1.xpose.msra.mxu0 0.0
        %536 = vmatprep.mubr.f32.mxu0 0.0
        %v537 = vand.u32 %v204, 4294901760
        %v538 = vsub.f32 %v204, %v537
        %v539 = vand.u32 %v538, 4294901760
        %540 = vmatmul.mubr.f32.gmra.mrb[0].mxu0 %v539
        %v541 = vpop.f32.mrb[0].mxu0
        %v542 = vadd.f32 %v460, %v541
        %v543 = vpop.f32.mrb[0].mxu0
        %544 = vmatprep.mubr.f32.mxu0 0.0
        %v545 = vand.u32 %v207, 4294901760
        %v546 = vsub.f32 %v207, %v545
        %v547 = vand.u32 %v546, 4294901760
        %548 = vmatmul.mubr.f32.gmra.mrb[0].mxu0 %v547
        %v549 = vpop.f32.mrb[0].mxu0
        %v550 = vadd.f32 %v467, %v549
        %v551 = vpop.f32.mrb[0].mxu0
        %552 = vdwg.mxu0
        %553 = vmatprep.subr.mxu0 0.0
        %v554 = vand.u32 %v209, 4294901760
        %v555 = vsub.f32 %v209, %v554
        %v556 = vand.u32 %v555, 4294901760
        %557 = vmatpush1.xpose.msra.mxu0 %v556
        %558 = vmatprep.subr.mxu0 0.0
        %v559 = vand.u32 %v211, 4294901760
        %v560 = vsub.f32 %v211, %v559
        %v561 = vand.u32 %v560, 4294901760
        %562 = vmatpush1.xpose.msra.mxu0 %v561
        %563 = vmatprep.subr.mxu0 0.0
        %564 = vmatpush1.xpose.msra.mxu0 0.0
        %565 = vmatprep.subr.mxu0 0.0
        %566 = vmatpush1.xpose.msra.mxu0 0.0
        %567 = vmatprep.subr.mxu0 0.0
        %568 = vmatpush1.xpose.msra.mxu0 0.0
        %569 = vmatprep.subr.mxu0 0.0
        %570 = vmatpush1.xpose.msra.mxu0 0.0
        %571 = vmatprep.subr.mxu0 0.0
        %572 = vmatpush1.xpose.msra.mxu0 0.0
        %573 = vmatprep.subr.mxu0 0.0
        %574 = vmatpush1.xpose.msra.mxu0 0.0
        %575 = vmatprep.subr.mxu0 0.0
        %576 = vmatpush1.xpose.msra.mxu0 0.0
        %577 = vmatprep.subr.mxu0 0.0
        %578 = vmatpush1.xpose.msra.mxu0 0.0
        %579 = vmatprep.subr.mxu0 0.0
        %580 = vmatpush1.xpose.msra.mxu0 0.0
        %581 = vmatprep.subr.mxu0 0.0
        %582 = vmatpush1.xpose.msra.mxu0 0.0
        %583 = vmatprep.subr.mxu0 0.0
        %584 = vmatpush1.xpose.msra.mxu0 0.0
        %585 = vmatprep.subr.mxu0 0.0
        %586 = vmatpush1.xpose.msra.mxu0 0.0
        %587 = vmatprep.subr.mxu0 0.0
        %588 = vmatpush1.xpose.msra.mxu0 0.0
        %589 = vmatprep.subr.mxu0 0.0
        %590 = vmatpush1.xpose.msra.mxu0 0.0
        %591 = vmatprep.subr.mxu0 0.0
        %592 = vmatpush1.xpose.msra.mxu0 0.0
        %593 = vmatprep.subr.mxu0 0.0
        %594 = vmatpush1.xpose.msra.mxu0 0.0
        %595 = vmatprep.subr.mxu0 0.0
        %596 = vmatpush1.xpose.msra.mxu0 0.0
        %597 = vmatprep.subr.mxu0 0.0
        %598 = vmatpush1.xpose.msra.mxu0 0.0
        %599 = vmatprep.subr.mxu0 0.0
        %600 = vmatpush1.xpose.msra.mxu0 0.0
        %601 = vmatprep.subr.mxu0 0.0
        %602 = vmatpush1.xpose.msra.mxu0 0.0
        %603 = vmatprep.subr.mxu0 0.0
        %604 = vmatpush1.xpose.msra.mxu0 0.0
        %605 = vmatprep.subr.mxu0 0.0
        %606 = vmatpush1.xpose.msra.mxu0 0.0
        %607 = vmatprep.subr.mxu0 0.0
        %608 = vmatpush1.xpose.msra.mxu0 0.0
        %609 = vmatprep.subr.mxu0 0.0
        %610 = vmatpush1.xpose.msra.mxu0 0.0
        %611 = vmatprep.subr.mxu0 0.0
        %612 = vmatpush1.xpose.msra.mxu0 0.0
        %613 = vmatprep.subr.mxu0 0.0
        %614 = vmatpush1.xpose.msra.mxu0 0.0
        %615 = vmatprep.subr.mxu0 0.0
        %616 = vmatpush1.xpose.msra.mxu0 0.0
        %617 = vmatprep.subr.mxu0 0.0
        %618 = vmatpush1.xpose.msra.mxu0 0.0
        %619 = vmatprep.subr.mxu0 0.0
        %620 = vmatpush1.xpose.msra.mxu0 0.0
        %621 = vmatprep.subr.mxu0 0.0
        %622 = vmatpush1.xpose.msra.mxu0 0.0
        %623 = vmatprep.mubr.f32.mxu0 0.0
        %v624 = vand.u32 %v204, 4294901760
        %625 = vmatmul.mubr.f32.gmra.mrb[0].mxu0 %v624
        %v626 = vpop.f32.mrb[0].mxu0
        %v627 = vadd.f32 %v542, %v626
        %v628 = vpop.f32.mrb[0].mxu0
        %629 = vmatprep.mubr.f32.mxu0 0.0
        %v630 = vand.u32 %v207, 4294901760
        %631 = vmatmul.mubr.f32.gmra.mrb[0].mxu0 %v630
        %v632 = vpop.f32.mrb[0].mxu0
        %v633 = vadd.f32 %v550, %v632
        %v634 = vpop.f32.mrb[0].mxu0
        %635 = vdwg.mxu0
        %636 = vmatprep.subr.mxu0 0.0
        %v637 = vand.u32 %v209, 4294901760
        %638 = vmatpush1.xpose.msra.mxu0 %v637
        %639 = vmatprep.subr.mxu0 0.0
        %v640 = vand.u32 %v211, 4294901760
        %641 = vmatpush1.xpose.msra.mxu0 %v640
        %642 = vmatprep.subr.mxu0 0.0
        %643 = vmatpush1.xpose.msra.mxu0 0.0
        %644 = vmatprep.subr.mxu0 0.0
        %645 = vmatpush1.xpose.msra.mxu0 0.0
        %646 = vmatprep.subr.mxu0 0.0
        %647 = vmatpush1.xpose.msra.mxu0 0.0
        %648 = vmatprep.subr.mxu0 0.0
        %649 = vmatpush1.xpose.msra.mxu0 0.0
        %650 = vmatprep.subr.mxu0 0.0
        %651 = vmatpush1.xpose.msra.mxu0 0.0
        %652 = vmatprep.subr.mxu0 0.0
        %653 = vmatpush1.xpose.msra.mxu0 0.0
        %654 = vmatprep.subr.mxu0 0.0
        %655 = vmatpush1.xpose.msra.mxu0 0.0
        %656 = vmatprep.subr.mxu0 0.0
        %657 = vmatpush1.xpose.msra.mxu0 0.0
        %658 = vmatprep.subr.mxu0 0.0
        %659 = vmatpush1.xpose.msra.mxu0 0.0
        %660 = vmatprep.subr.mxu0 0.0
        %661 = vmatpush1.xpose.msra.mxu0 0.0
        %662 = vmatprep.subr.mxu0 0.0
        %663 = vmatpush1.xpose.msra.mxu0 0.0
        %664 = vmatprep.subr.mxu0 0.0
        %665 = vmatpush1.xpose.msra.mxu0 0.0
        %666 = vmatprep.subr.mxu0 0.0
        %667 = vmatpush1.xpose.msra.mxu0 0.0
        %668 = vmatprep.subr.mxu0 0.0
        %669 = vmatpush1.xpose.msra.mxu0 0.0
        %670 = vmatprep.subr.mxu0 0.0
        %671 = vmatpush1.xpose.msra.mxu0 0.0
        %672 = vmatprep.subr.mxu0 0.0
        %673 = vmatpush1.xpose.msra.mxu0 0.0
        %674 = vmatprep.subr.mxu0 0.0
        %675 = vmatpush1.xpose.msra.mxu0 0.0
        %676 = vmatprep.subr.mxu0 0.0
        %677 = vmatpush1.xpose.msra.mxu0 0.0
        %678 = vmatprep.subr.mxu0 0.0
        %679 = vmatpush1.xpose.msra.mxu0 0.0
        %680 = vmatprep.subr.mxu0 0.0
        %681 = vmatpush1.xpose.msra.mxu0 0.0
        %682 = vmatprep.subr.mxu0 0.0
        %683 = vmatpush1.xpose.msra.mxu0 0.0
        %684 = vmatprep.subr.mxu0 0.0
        %685 = vmatpush1.xpose.msra.mxu0 0.0
        %686 = vmatprep.subr.mxu0 0.0
        %687 = vmatpush1.xpose.msra.mxu0 0.0
        %688 = vmatprep.subr.mxu0 0.0
        %689 = vmatpush1.xpose.msra.mxu0 0.0
        %690 = vmatprep.subr.mxu0 0.0
        %691 = vmatpush1.xpose.msra.mxu0 0.0
        %692 = vmatprep.subr.mxu0 0.0
        %693 = vmatpush1.xpose.msra.mxu0 0.0
        %694 = vmatprep.subr.mxu0 0.0
        %695 = vmatpush1.xpose.msra.mxu0 0.0
        %696 = vmatprep.subr.mxu0 0.0
        %697 = vmatpush1.xpose.msra.mxu0 0.0
        %698 = vmatprep.subr.mxu0 0.0
        %699 = vmatpush1.xpose.msra.mxu0 0.0
        %700 = vmatprep.subr.mxu0 0.0
        %701 = vmatpush1.xpose.msra.mxu0 0.0
        %702 = vmatprep.mubr.f32.mxu0 0.0
        %v703 = vand.u32 %v204, 4294901760
        %704 = vmatmul.mubr.f32.gmra.mrb[0].mxu0 %v703
        %v705 = vpop.f32.mrb[0].mxu0
        %v706 = vadd.f32 %v627, %v705
        %v707 = vpop.f32.mrb[0].mxu0
        %708 = vmatprep.mubr.f32.mxu0 0.0
        %v709 = vand.u32 %v207, 4294901760
        %710 = vmatmul.mubr.f32.gmra.mrb[0].mxu0 %v709
        %v711 = vpop.f32.mrb[0].mxu0
        %v712 = vadd.f32 %v633, %v711
        %v713 = vpop.f32.mrb[0].mxu0
        %714 = vdwg.mxu0
        %717 = vrot.lane.b32.xlu0 %v182, 96
        %v718 = vpop.permute.xlu0 %717
        %719 = vrot.lane.b32.xlu0 %v183, 96
        %v720 = vpop.permute.xlu0 %719
        %v722 = vsel %vm202, %v186, 0
        %v725 = vsel %vm202, %v187, 0
        %v727 = vsel %vm202, %v718, 0
        %v729 = vsel %vm202, %v720, 0
        %731 = vmatprep.subr.mxu0 0.0
        %v732 = vand.u32 %v727, 4294901760
        %733 = vmatpush1.xpose.msra.mxu0 %v732
        %734 = vmatprep.subr.mxu0 0.0
        %v735 = vand.u32 %v729, 4294901760
        %736 = vmatpush1.xpose.msra.mxu0 %v735
        %737 = vmatprep.subr.mxu0 0.0
        %738 = vmatpush1.xpose.msra.mxu0 0.0
        %739 = vmatprep.subr.mxu0 0.0
        %740 = vmatpush1.xpose.msra.mxu0 0.0
        %741 = vmatprep.subr.mxu0 0.0
        %742 = vmatpush1.xpose.msra.mxu0 0.0
        %743 = vmatprep.subr.mxu0 0.0
        %744 = vmatpush1.xpose.msra.mxu0 0.0
        %745 = vmatprep.subr.mxu0 0.0
        %746 = vmatpush1.xpose.msra.mxu0 0.0
        %747 = vmatprep.subr.mxu0 0.0
        %748 = vmatpush1.xpose.msra.mxu0 0.0
        %749 = vmatprep.subr.mxu0 0.0
        %750 = vmatpush1.xpose.msra.mxu0 0.0
        %751 = vmatprep.subr.mxu0 0.0
        %752 = vmatpush1.xpose.msra.mxu0 0.0
        %753 = vmatprep.subr.mxu0 0.0
        %754 = vmatpush1.xpose.msra.mxu0 0.0
        %755 = vmatprep.subr.mxu0 0.0
        %756 = vmatpush1.xpose.msra.mxu0 0.0
        %757 = vmatprep.subr.mxu0 0.0
        %758 = vmatpush1.xpose.msra.mxu0 0.0
        %759 = vmatprep.subr.mxu0 0.0
        %760 = vmatpush1.xpose.msra.mxu0 0.0
        %761 = vmatprep.subr.mxu0 0.0
        %762 = vmatpush1.xpose.msra.mxu0 0.0
        %763 = vmatprep.subr.mxu0 0.0
        %764 = vmatpush1.xpose.msra.mxu0 0.0
        %765 = vmatprep.subr.mxu0 0.0
        %766 = vmatpush1.xpose.msra.mxu0 0.0
        %767 = vmatprep.subr.mxu0 0.0
        %768 = vmatpush1.xpose.msra.mxu0 0.0
        %769 = vmatprep.subr.mxu0 0.0
        %770 = vmatpush1.xpose.msra.mxu0 0.0
        %771 = vmatprep.subr.mxu0 0.0
        %772 = vmatpush1.xpose.msra.mxu0 0.0
        %773 = vmatprep.subr.mxu0 0.0
        %774 = vmatpush1.xpose.msra.mxu0 0.0
        %775 = vmatprep.subr.mxu0 0.0
        %776 = vmatpush1.xpose.msra.mxu0 0.0
        %777 = vmatprep.subr.mxu0 0.0
        %778 = vmatpush1.xpose.msra.mxu0 0.0
        %779 = vmatprep.subr.mxu0 0.0
        %780 = vmatpush1.xpose.msra.mxu0 0.0
        %781 = vmatprep.subr.mxu0 0.0
        %782 = vmatpush1.xpose.msra.mxu0 0.0
        %783 = vmatprep.subr.mxu0 0.0
        %784 = vmatpush1.xpose.msra.mxu0 0.0
        %785 = vmatprep.subr.mxu0 0.0
        %786 = vmatpush1.xpose.msra.mxu0 0.0
        %787 = vmatprep.subr.mxu0 0.0
        %788 = vmatpush1.xpose.msra.mxu0 0.0
        %789 = vmatprep.subr.mxu0 0.0
        %790 = vmatpush1.xpose.msra.mxu0 0.0
        %791 = vmatprep.subr.mxu0 0.0
        %792 = vmatpush1.xpose.msra.mxu0 0.0
        %793 = vmatprep.subr.mxu0 0.0
        %794 = vmatpush1.xpose.msra.mxu0 0.0
        %795 = vmatprep.subr.mxu0 0.0
        %796 = vmatpush1.xpose.msra.mxu0 0.0
        %797 = vmatprep.mubr.f32.mxu0 0.0
        %v798 = vand.u32 %v722, 4294901760
        %v799 = vsub.f32 %v722, %v798
        %v800 = vand.u32 %v799, 4294901760
        %v801 = vsub.f32 %v799, %v800
        %v802 = vand.u32 %v801, 4294901760
        %803 = vmatmul.mubr.f32.gmra.mrb[0].mxu0 %v802
        %v804 = vpop.f32.mrb[0].mxu0
        %v805 = vadd.f32 %v188, %v804
        %v806 = vpop.f32.mrb[0].mxu0
        %807 = vmatprep.mubr.f32.mxu0 0.0
        %v808 = vand.u32 %v725, 4294901760
        %v809 = vsub.f32 %v725, %v808
        %v810 = vand.u32 %v809, 4294901760
        %v811 = vsub.f32 %v809, %v810
        %v812 = vand.u32 %v811, 4294901760
        %813 = vmatmul.mubr.f32.gmra.mrb[0].mxu0 %v812
        %v814 = vpop.f32.mrb[0].mxu0
        %v815 = vadd.f32 %v189, %v814
        %v816 = vpop.f32.mrb[0].mxu0
        %817 = vdwg.mxu0
        %818 = vmatprep.subr.mxu0 0.0
        %v819 = vand.u32 %v727, 4294901760
        %v820 = vsub.f32 %v727, %v819
        %v821 = vand.u32 %v820, 4294901760
        %v822 = vsub.f32 %v820, %v821
        %v823 = vand.u32 %v822, 4294901760
        %824 = vmatpush1.xpose.msra.mxu0 %v823
        %825 = vmatprep.subr.mxu0 0.0
        %v826 = vand.u32 %v729, 4294901760
        %v827 = vsub.f32 %v729, %v826
        %v828 = vand.u32 %v827, 4294901760
        %v829 = vsub.f32 %v827, %v828
        %v830 = vand.u32 %v829, 4294901760
        %831 = vmatpush1.xpose.msra.mxu0 %v830
        %832 = vmatprep.subr.mxu0 0.0
        %833 = vmatpush1.xpose.msra.mxu0 0.0
        %834 = vmatprep.subr.mxu0 0.0
        %835 = vmatpush1.xpose.msra.mxu0 0.0
        %836 = vmatprep.subr.mxu0 0.0
        %837 = vmatpush1.xpose.msra.mxu0 0.0
        %838 = vmatprep.subr.mxu0 0.0
        %839 = vmatpush1.xpose.msra.mxu0 0.0
        %840 = vmatprep.subr.mxu0 0.0
        %841 = vmatpush1.xpose.msra.mxu0 0.0
        %842 = vmatprep.subr.mxu0 0.0
        %843 = vmatpush1.xpose.msra.mxu0 0.0
        %844 = vmatprep.subr.mxu0 0.0
        %845 = vmatpush1.xpose.msra.mxu0 0.0
        %846 = vmatprep.subr.mxu0 0.0
        %847 = vmatpush1.xpose.msra.mxu0 0.0
        %848 = vmatprep.subr.mxu0 0.0
        %849 = vmatpush1.xpose.msra.mxu0 0.0
        %850 = vmatprep.subr.mxu0 0.0
        %851 = vmatpush1.xpose.msra.mxu0 0.0
        %852 = vmatprep.subr.mxu0 0.0
        %853 = vmatpush1.xpose.msra.mxu0 0.0
        %854 = vmatprep.subr.mxu0 0.0
        %855 = vmatpush1.xpose.msra.mxu0 0.0
        %856 = vmatprep.subr.mxu0 0.0
        %857 = vmatpush1.xpose.msra.mxu0 0.0
        %858 = vmatprep.subr.mxu0 0.0
        %859 = vmatpush1.xpose.msra.mxu0 0.0
        %860 = vmatprep.subr.mxu0 0.0
        %861 = vmatpush1.xpose.msra.mxu0 0.0
        %862 = vmatprep.subr.mxu0 0.0
        %863 = vmatpush1.xpose.msra.mxu0 0.0
        %864 = vmatprep.subr.mxu0 0.0
        %865 = vmatpush1.xpose.msra.mxu0 0.0
        %866 = vmatprep.subr.mxu0 0.0
        %867 = vmatpush1.xpose.msra.mxu0 0.0
        %868 = vmatprep.subr.mxu0 0.0
        %869 = vmatpush1.xpose.msra.mxu0 0.0
        %870 = vmatprep.subr.mxu0 0.0
        %871 = vmatpush1.xpose.msra.mxu0 0.0
        %872 = vmatprep.subr.mxu0 0.0
        %873 = vmatpush1.xpose.msra.mxu0 0.0
        %874 = vmatprep.subr.mxu0 0.0
        %875 = vmatpush1.xpose.msra.mxu0 0.0
        %876 = vmatprep.subr.mxu0 0.0
        %877 = vmatpush1.xpose.msra.mxu0 0.0
        %878 = vmatprep.subr.mxu0 0.0
        %879 = vmatpush1.xpose.msra.mxu0 0.0
        %880 = vmatprep.subr.mxu0 0.0
        %881 = vmatpush1.xpose.msra.mxu0 0.0
        %882 = vmatprep.subr.mxu0 0.0
        %883 = vmatpush1.xpose.msra.mxu0 0.0
        %884 = vmatprep.subr.mxu0 0.0
        %885 = vmatpush1.xpose.msra.mxu0 0.0
        %886 = vmatprep.subr.mxu0 0.0
        %887 = vmatpush1.xpose.msra.mxu0 0.0
        %888 = vmatprep.subr.mxu0 0.0
        %889 = vmatpush1.xpose.msra.mxu0 0.0
        %890 = vmatprep.subr.mxu0 0.0
        %891 = vmatpush1.xpose.msra.mxu0 0.0
        %892 = vmatprep.mubr.f32.mxu0 0.0
        %v893 = vand.u32 %v722, 4294901760
        %894 = vmatmul.mubr.f32.gmra.mrb[0].mxu0 %v893
        %v895 = vpop.f32.mrb[0].mxu0
        %v896 = vadd.f32 %v805, %v895
        %v897 = vpop.f32.mrb[0].mxu0
        %898 = vmatprep.mubr.f32.mxu0 0.0
        %v899 = vand.u32 %v725, 4294901760
        %900 = vmatmul.mubr.f32.gmra.mrb[0].mxu0 %v899
        %v901 = vpop.f32.mrb[0].mxu0
        %v902 = vadd.f32 %v815, %v901
        %v903 = vpop.f32.mrb[0].mxu0
        %904 = vdwg.mxu0
        %905 = vmatprep.subr.mxu0 0.0
        %v906 = vand.u32 %v727, 4294901760
        %v907 = vsub.f32 %v727, %v906
        %908 = vmatpush1.xpose.msra.mxu0 %v907
        %909 = vmatprep.subr.mxu0 0.0
        %v910 = vand.u32 %v729, 4294901760
        %v911 = vsub.f32 %v729, %v910
        %912 = vmatpush1.xpose.msra.mxu0 %v911
        %913 = vmatprep.subr.mxu0 0.0
        %914 = vmatpush1.xpose.msra.mxu0 0.0
        %915 = vmatprep.subr.mxu0 0.0
        %916 = vmatpush1.xpose.msra.mxu0 0.0
        %917 = vmatprep.subr.mxu0 0.0
        %918 = vmatpush1.xpose.msra.mxu0 0.0
        %919 = vmatprep.subr.mxu0 0.0
        %920 = vmatpush1.xpose.msra.mxu0 0.0
        %921 = vmatprep.subr.mxu0 0.0
        %922 = vmatpush1.xpose.msra.mxu0 0.0
        %923 = vmatprep.subr.mxu0 0.0
        %924 = vmatpush1.xpose.msra.mxu0 0.0
        %925 = vmatprep.subr.mxu0 0.0
        %926 = vmatpush1.xpose.msra.mxu0 0.0
        %927 = vmatprep.subr.mxu0 0.0
        %928 = vmatpush1.xpose.msra.mxu0 0.0
        %929 = vmatprep.subr.mxu0 0.0
        %930 = vmatpush1.xpose.msra.mxu0 0.0
        %931 = vmatprep.subr.mxu0 0.0
        %932 = vmatpush1.xpose.msra.mxu0 0.0
        %933 = vmatprep.subr.mxu0 0.0
        %934 = vmatpush1.xpose.msra.mxu0 0.0
        %935 = vmatprep.subr.mxu0 0.0
        %936 = vmatpush1.xpose.msra.mxu0 0.0
        %937 = vmatprep.subr.mxu0 0.0
        %938 = vmatpush1.xpose.msra.mxu0 0.0
        %939 = vmatprep.subr.mxu0 0.0
        %940 = vmatpush1.xpose.msra.mxu0 0.0
        %941 = vmatprep.subr.mxu0 0.0
        %942 = vmatpush1.xpose.msra.mxu0 0.0
        %943 = vmatprep.subr.mxu0 0.0
        %944 = vmatpush1.xpose.msra.mxu0 0.0
        %945 = vmatprep.subr.mxu0 0.0
        %946 = vmatpush1.xpose.msra.mxu0 0.0
        %947 = vmatprep.subr.mxu0 0.0
        %948 = vmatpush1.xpose.msra.mxu0 0.0
        %949 = vmatprep.subr.mxu0 0.0
        %950 = vmatpush1.xpose.msra.mxu0 0.0
        %951 = vmatprep.subr.mxu0 0.0
        %952 = vmatpush1.xpose.msra.mxu0 0.0
        %953 = vmatprep.subr.mxu0 0.0
        %954 = vmatpush1.xpose.msra.mxu0 0.0
        %955 = vmatprep.subr.mxu0 0.0
        %956 = vmatpush1.xpose.msra.mxu0 0.0
        %957 = vmatprep.subr.mxu0 0.0
        %958 = vmatpush1.xpose.msra.mxu0 0.0
        %959 = vmatprep.subr.mxu0 0.0
        %960 = vmatpush1.xpose.msra.mxu0 0.0
        %961 = vmatprep.subr.mxu0 0.0
        %962 = vmatpush1.xpose.msra.mxu0 0.0
        %963 = vmatprep.subr.mxu0 0.0
        %964 = vmatpush1.xpose.msra.mxu0 0.0
        %965 = vmatprep.subr.mxu0 0.0
        %966 = vmatpush1.xpose.msra.mxu0 0.0
        %967 = vmatprep.subr.mxu0 0.0
        %968 = vmatpush1.xpose.msra.mxu0 0.0
        %969 = vmatprep.subr.mxu0 0.0
        %970 = vmatpush1.xpose.msra.mxu0 0.0
        %971 = vmatprep.subr.mxu0 0.0
        %972 = vmatpush1.xpose.msra.mxu0 0.0
        %973 = vmatprep.mubr.f32.mxu0 0.0
        %v974 = vand.u32 %v722, 4294901760
        %v975 = vsub.f32 %v722, %v974
        %976 = vmatmul.mubr.f32.gmra.mrb[0].mxu0 %v975
        %v977 = vpop.f32.mrb[0].mxu0
        %v978 = vadd.f32 %v896, %v977
        %v979 = vpop.f32.mrb[0].mxu0
        %980 = vmatprep.mubr.f32.mxu0 0.0
        %v981 = vand.u32 %v725, 4294901760
        %v982 = vsub.f32 %v725, %v981
        %983 = vmatmul.mubr.f32.gmra.mrb[0].mxu0 %v982
        %v984 = vpop.f32.mrb[0].mxu0
        %v985 = vadd.f32 %v902, %v984
        %v986 = vpop.f32.mrb[0].mxu0
        %987 = vdwg.mxu0
        %988 = vmatprep.subr.mxu0 0.0
        %v989 = vand.u32 %v727, 4294901760
        %990 = vmatpush1.xpose.msra.mxu0 %v989
        %991 = vmatprep.subr.mxu0 0.0
        %v992 = vand.u32 %v729, 4294901760
        %993 = vmatpush1.xpose.msra.mxu0 %v992
        %994 = vmatprep.subr.mxu0 0.0
        %995 = vmatpush1.xpose.msra.mxu0 0.0
        %996 = vmatprep.subr.mxu0 0.0
        %997 = vmatpush1.xpose.msra.mxu0 0.0
        %998 = vmatprep.subr.mxu0 0.0
        %999 = vmatpush1.xpose.msra.mxu0 0.0
        %1000 = vmatprep.subr.mxu0 0.0
        %1001 = vmatpush1.xpose.msra.mxu0 0.0
        %1002 = vmatprep.subr.mxu0 0.0
        %1003 = vmatpush1.xpose.msra.mxu0 0.0
        %1004 = vmatprep.subr.mxu0 0.0
        %1005 = vmatpush1.xpose.msra.mxu0 0.0
        %1006 = vmatprep.subr.mxu0 0.0
        %1007 = vmatpush1.xpose.msra.mxu0 0.0
        %1008 = vmatprep.subr.mxu0 0.0
        %1009 = vmatpush1.xpose.msra.mxu0 0.0
        %1010 = vmatprep.subr.mxu0 0.0
        %1011 = vmatpush1.xpose.msra.mxu0 0.0
        %1012 = vmatprep.subr.mxu0 0.0
        %1013 = vmatpush1.xpose.msra.mxu0 0.0
        %1014 = vmatprep.subr.mxu0 0.0
        %1015 = vmatpush1.xpose.msra.mxu0 0.0
        %1016 = vmatprep.subr.mxu0 0.0
        %1017 = vmatpush1.xpose.msra.mxu0 0.0
        %1018 = vmatprep.subr.mxu0 0.0
        %1019 = vmatpush1.xpose.msra.mxu0 0.0
        %1020 = vmatprep.subr.mxu0 0.0
        %1021 = vmatpush1.xpose.msra.mxu0 0.0
        %1022 = vmatprep.subr.mxu0 0.0
        %1023 = vmatpush1.xpose.msra.mxu0 0.0
        %1024 = vmatprep.subr.mxu0 0.0
        %1025 = vmatpush1.xpose.msra.mxu0 0.0
        %1026 = vmatprep.subr.mxu0 0.0
        %1027 = vmatpush1.xpose.msra.mxu0 0.0
        %1028 = vmatprep.subr.mxu0 0.0
        %1029 = vmatpush1.xpose.msra.mxu0 0.0
        %1030 = vmatprep.subr.mxu0 0.0
        %1031 = vmatpush1.xpose.msra.mxu0 0.0
        %1032 = vmatprep.subr.mxu0 0.0
        %1033 = vmatpush1.xpose.msra.mxu0 0.0
        %1034 = vmatprep.subr.mxu0 0.0
        %1035 = vmatpush1.xpose.msra.mxu0 0.0
        %1036 = vmatprep.subr.mxu0 0.0
        %1037 = vmatpush1.xpose.msra.mxu0 0.0
        %1038 = vmatprep.subr.mxu0 0.0
        %1039 = vmatpush1.xpose.msra.mxu0 0.0
        %1040 = vmatprep.subr.mxu0 0.0
        %1041 = vmatpush1.xpose.msra.mxu0 0.0
        %1042 = vmatprep.subr.mxu0 0.0
        %1043 = vmatpush1.xpose.msra.mxu0 0.0
        %1044 = vmatprep.subr.mxu0 0.0
        %1045 = vmatpush1.xpose.msra.mxu0 0.0
        %1046 = vmatprep.subr.mxu0 0.0
        %1047 = vmatpush1.xpose.msra.mxu0 0.0
        %1048 = vmatprep.subr.mxu0 0.0
        %1049 = vmatpush1.xpose.msra.mxu0 0.0
        %1050 = vmatprep.subr.mxu0 0.0
        %1051 = vmatpush1.xpose.msra.mxu0 0.0
        %1052 = vmatprep.subr.mxu0 0.0
        %1053 = vmatpush1.xpose.msra.mxu0 0.0
        %1054 = vmatprep.mubr.f32.mxu0 0.0
        %v1055 = vand.u32 %v722, 4294901760
        %v1056 = vsub.f32 %v722, %v1055
        %v1057 = vand.u32 %v1056, 4294901760
        %1058 = vmatmul.mubr.f32.gmra.mrb[0].mxu0 %v1057
        %v1059 = vpop.f32.mrb[0].mxu0
        %v1060 = vadd.f32 %v978, %v1059
        %v1061 = vpop.f32.mrb[0].mxu0
        %1062 = vmatprep.mubr.f32.mxu0 0.0
        %v1063 = vand.u32 %v725, 4294901760
        %v1064 = vsub.f32 %v725, %v1063
        %v1065 = vand.u32 %v1064, 4294901760
        %1066 = vmatmul.mubr.f32.gmra.mrb[0].mxu0 %v1065
        %v1067 = vpop.f32.mrb[0].mxu0
        %v1068 = vadd.f32 %v985, %v1067
        %v1069 = vpop.f32.mrb[0].mxu0
        %1070 = vdwg.mxu0
        %1071 = vmatprep.subr.mxu0 0.0
        %v1072 = vand.u32 %v727, 4294901760
        %v1073 = vsub.f32 %v727, %v1072
        %v1074 = vand.u32 %v1073, 4294901760
        %1075 = vmatpush1.xpose.msra.mxu0 %v1074
        %1076 = vmatprep.subr.mxu0 0.0
        %v1077 = vand.u32 %v729, 4294901760
        %v1078 = vsub.f32 %v729, %v1077
        %v1079 = vand.u32 %v1078, 4294901760
        %1080 = vmatpush1.xpose.msra.mxu0 %v1079
        %1081 = vmatprep.subr.mxu0 0.0
        %1082 = vmatpush1.xpose.msra.mxu0 0.0
        %1083 = vmatprep.subr.mxu0 0.0
        %1084 = vmatpush1.xpose.msra.mxu0 0.0
        %1085 = vmatprep.subr.mxu0 0.0
        %1086 = vmatpush1.xpose.msra.mxu0 0.0
        %1087 = vmatprep.subr.mxu0 0.0
        %1088 = vmatpush1.xpose.msra.mxu0 0.0
        %1089 = vmatprep.subr.mxu0 0.0
        %1090 = vmatpush1.xpose.msra.mxu0 0.0
        %1091 = vmatprep.subr.mxu0 0.0
        %1092 = vmatpush1.xpose.msra.mxu0 0.0
        %1093 = vmatprep.subr.mxu0 0.0
        %1094 = vmatpush1.xpose.msra.mxu0 0.0
        %1095 = vmatprep.subr.mxu0 0.0
        %1096 = vmatpush1.xpose.msra.mxu0 0.0
        %1097 = vmatprep.subr.mxu0 0.0
        %1098 = vmatpush1.xpose.msra.mxu0 0.0
        %1099 = vmatprep.subr.mxu0 0.0
        %1100 = vmatpush1.xpose.msra.mxu0 0.0
        %1101 = vmatprep.subr.mxu0 0.0
        %1102 = vmatpush1.xpose.msra.mxu0 0.0
        %1103 = vmatprep.subr.mxu0 0.0
        %1104 = vmatpush1.xpose.msra.mxu0 0.0
        %1105 = vmatprep.subr.mxu0 0.0
        %1106 = vmatpush1.xpose.msra.mxu0 0.0
        %1107 = vmatprep.subr.mxu0 0.0
        %1108 = vmatpush1.xpose.msra.mxu0 0.0
        %1109 = vmatprep.subr.mxu0 0.0
        %1110 = vmatpush1.xpose.msra.mxu0 0.0
        %1111 = vmatprep.subr.mxu0 0.0
        %1112 = vmatpush1.xpose.msra.mxu0 0.0
        %1113 = vmatprep.subr.mxu0 0.0
        %1114 = vmatpush1.xpose.msra.mxu0 0.0
        %1115 = vmatprep.subr.mxu0 0.0
        %1116 = vmatpush1.xpose.msra.mxu0 0.0
        %1117 = vmatprep.subr.mxu0 0.0
        %1118 = vmatpush1.xpose.msra.mxu0 0.0
        %1119 = vmatprep.subr.mxu0 0.0
        %1120 = vmatpush1.xpose.msra.mxu0 0.0
        %1121 = vmatprep.subr.mxu0 0.0
        %1122 = vmatpush1.xpose.msra.mxu0 0.0
        %1123 = vmatprep.subr.mxu0 0.0
        %1124 = vmatpush1.xpose.msra.mxu0 0.0
        %1125 = vmatprep.subr.mxu0 0.0
        %1126 = vmatpush1.xpose.msra.mxu0 0.0
        %1127 = vmatprep.subr.mxu0 0.0
        %1128 = vmatpush1.xpose.msra.mxu0 0.0
        %1129 = vmatprep.subr.mxu0 0.0
        %1130 = vmatpush1.xpose.msra.mxu0 0.0
        %1131 = vmatprep.subr.mxu0 0.0
        %1132 = vmatpush1.xpose.msra.mxu0 0.0
        %1133 = vmatprep.subr.mxu0 0.0
        %1134 = vmatpush1.xpose.msra.mxu0 0.0
        %1135 = vmatprep.subr.mxu0 0.0
        %1136 = vmatpush1.xpose.msra.mxu0 0.0
        %1137 = vmatprep.subr.mxu0 0.0
        %1138 = vmatpush1.xpose.msra.mxu0 0.0
        %1139 = vmatprep.subr.mxu0 0.0
        %1140 = vmatpush1.xpose.msra.mxu0 0.0
        %1141 = vmatprep.mubr.f32.mxu0 0.0
        %v1142 = vand.u32 %v722, 4294901760
        %1143 = vmatmul.mubr.f32.gmra.mrb[0].mxu0 %v1142
        %v1144 = vpop.f32.mrb[0].mxu0
        %v1145 = vadd.f32 %v1060, %v1144
        %v1146 = vpop.f32.mrb[0].mxu0
        %1147 = vmatprep.mubr.f32.mxu0 0.0
        %v1148 = vand.u32 %v725, 4294901760
        %1149 = vmatmul.mubr.f32.gmra.mrb[0].mxu0 %v1148
        %v1150 = vpop.f32.mrb[0].mxu0
        %v1151 = vadd.f32 %v1068, %v1150
        %v1152 = vpop.f32.mrb[0].mxu0
        %1153 = vdwg.mxu0
        %1154 = vmatprep.subr.mxu0 0.0
        %v1155 = vand.u32 %v727, 4294901760
        %1156 = vmatpush1.xpose.msra.mxu0 %v1155
        %1157 = vmatprep.subr.mxu0 0.0
        %v1158 = vand.u32 %v729, 4294901760
        %1159 = vmatpush1.xpose.msra.mxu0 %v1158
        %1160 = vmatprep.subr.mxu0 0.0
        %1161 = vmatpush1.xpose.msra.mxu0 0.0
        %1162 = vmatprep.subr.mxu0 0.0
        %1163 = vmatpush1.xpose.msra.mxu0 0.0
        %1164 = vmatprep.subr.mxu0 0.0
        %1165 = vmatpush1.xpose.msra.mxu0 0.0
        %1166 = vmatprep.subr.mxu0 0.0
        %1167 = vmatpush1.xpose.msra.mxu0 0.0
        %1168 = vmatprep.subr.mxu0 0.0
        %1169 = vmatpush1.xpose.msra.mxu0 0.0
        %1170 = vmatprep.subr.mxu0 0.0
        %1171 = vmatpush1.xpose.msra.mxu0 0.0
        %1172 = vmatprep.subr.mxu0 0.0
        %1173 = vmatpush1.xpose.msra.mxu0 0.0
        %1174 = vmatprep.subr.mxu0 0.0
        %1175 = vmatpush1.xpose.msra.mxu0 0.0
        %1176 = vmatprep.subr.mxu0 0.0
        %1177 = vmatpush1.xpose.msra.mxu0 0.0
        %1178 = vmatprep.subr.mxu0 0.0
        %1179 = vmatpush1.xpose.msra.mxu0 0.0
        %1180 = vmatprep.subr.mxu0 0.0
        %1181 = vmatpush1.xpose.msra.mxu0 0.0
        %1182 = vmatprep.subr.mxu0 0.0
        %1183 = vmatpush1.xpose.msra.mxu0 0.0
        %1184 = vmatprep.subr.mxu0 0.0
        %1185 = vmatpush1.xpose.msra.mxu0 0.0
        %1186 = vmatprep.subr.mxu0 0.0
        %1187 = vmatpush1.xpose.msra.mxu0 0.0
        %1188 = vmatprep.subr.mxu0 0.0
        %1189 = vmatpush1.xpose.msra.mxu0 0.0
        %1190 = vmatprep.subr.mxu0 0.0
        %1191 = vmatpush1.xpose.msra.mxu0 0.0
        %1192 = vmatprep.subr.mxu0 0.0
        %1193 = vmatpush1.xpose.msra.mxu0 0.0
        %1194 = vmatprep.subr.mxu0 0.0
        %1195 = vmatpush1.xpose.msra.mxu0 0.0
        %1196 = vmatprep.subr.mxu0 0.0
        %1197 = vmatpush1.xpose.msra.mxu0 0.0
        %1198 = vmatprep.subr.mxu0 0.0
        %1199 = vmatpush1.xpose.msra.mxu0 0.0
        %1200 = vmatprep.subr.mxu0 0.0
        %1201 = vmatpush1.xpose.msra.mxu0 0.0
        %1202 = vmatprep.subr.mxu0 0.0
        %1203 = vmatpush1.xpose.msra.mxu0 0.0
        %1204 = vmatprep.subr.mxu0 0.0
        %1205 = vmatpush1.xpose.msra.mxu0 0.0
        %1206 = vmatprep.subr.mxu0 0.0
        %1207 = vmatpush1.xpose.msra.mxu0 0.0
        %1208 = vmatprep.subr.mxu0 0.0
        %1209 = vmatpush1.xpose.msra.mxu0 0.0
        %1210 = vmatprep.subr.mxu0 0.0
        %1211 = vmatpush1.xpose.msra.mxu0 0.0
        %1212 = vmatprep.subr.mxu0 0.0
        %1213 = vmatpush1.xpose.msra.mxu0 0.0
        %1214 = vmatprep.subr.mxu0 0.0
        %1215 = vmatpush1.xpose.msra.mxu0 0.0
        %1216 = vmatprep.subr.mxu0 0.0
        %1217 = vmatpush1.xpose.msra.mxu0 0.0
        %1218 = vmatprep.subr.mxu0 0.0
        %1219 = vmatpush1.xpose.msra.mxu0 0.0
        %1220 = vmatprep.mubr.f32.mxu0 0.0
        %v1221 = vand.u32 %v722, 4294901760
        %1222 = vmatmul.mubr.f32.gmra.mrb[0].mxu0 %v1221
        %v1223 = vpop.f32.mrb[0].mxu0
        %v1224 = vadd.f32 %v1145, %v1223
        %v1225 = vpop.f32.mrb[0].mxu0
        %1226 = vmatprep.mubr.f32.mxu0 0.0
        %v1227 = vand.u32 %v725, 4294901760
        %1228 = vmatmul.mubr.f32.gmra.mrb[0].mxu0 %v1227
        %v1229 = vpop.f32.mrb[0].mxu0
        %v1230 = vadd.f32 %v1151, %v1229
        %v1231 = vpop.f32.mrb[0].mxu0
        %1232 = vdwg.mxu0
        %vm1233 = vcmask 130048
        %v1234 = vsel %vm1233, %v706, -inf
        %1235 = vmax.xlane.f32.xlu0 %v1234
        %v1236 = vpop.xlane.xlu0 %1235
        %v1237 = vsel %vm1233, %v712, -inf
        %1238 = vmax.xlane.f32.xlu0 %v1237
        %v1239 = vpop.xlane.xlu0 %1238
        %v1240 = vsel %vm1233, %v1224, -inf
        %1241 = vmax.xlane.f32.xlu0 %v1240
        %v1242 = vpop.xlane.xlu0 %1241
        %v1243 = vsel %vm1233, %v1230, -inf
        %1244 = vmax.xlane.f32.xlu0 %v1243
        %v1245 = vpop.xlane.xlu0 %1244
        %v1246 = vsub.f32 %v706, %v1236
        %v1247 = vsub.f32 %v712, %v1239
        %v1248 = vsub.f32 %v1224, %v1242
        %v1249 = vsub.f32 %v1230, %v1245
        %v1250 = vmul.f32 %v1246, 1.442695
        %v1251 = vpow.pop %v1250
        %v1252 = vmul.f32 %v1247, 1.442695
        %v1253 = vpow.pop %v1252
        %v1254 = vmul.f32 %v1248, 1.442695
        %v1255 = vpow.pop %v1254
        %v1256 = vmul.f32 %v1249, 1.442695
        %v1257 = vpow.pop %v1256
        %v1258 = vsel %vm1233, %v1251, 0.0
        %1259 = vadd.xlane.f32.xlu0 %v1258
        %v1260 = vpop.xlane.xlu0 %1259
        %v1261 = vsel %vm1233, %v1253, 0.0
        %1262 = vadd.xlane.f32.xlu0 %v1261
        %v1263 = vpop.xlane.xlu0 %1262
        %v1264 = vsel %vm1233, %v1255, 0.0
        %1265 = vadd.xlane.f32.xlu0 %v1264
        %v1266 = vpop.xlane.xlu0 %1265
        %v1267 = vsel %vm1233, %v1257, 0.0
        %1268 = vadd.xlane.f32.xlu0 %v1267
        %v1269 = vpop.xlane.xlu0 %1268
        %v1270 = vrcp.pop %v1260
        %v1271 = vmul.f32 %v1251, %v1270
        %v1272 = vrcp.pop %v1263
        %v1273 = vmul.f32 %v1253, %v1272
        %v1274 = vrcp.pop %v1266
        %v1275 = vmul.f32 %v1255, %v1274
        %v1276 = vrcp.pop %v1269
        %v1277 = vmul.f32 %v1257, %v1276
        %1278 = vrot.lane.b32.xlu0 %v180, 64
        %v1279 = vpop.permute.xlu0 %1278
        %1280 = vrot.lane.b32.xlu0 %v181, 64
        %v1281 = vpop.permute.xlu0 %1280
        %v1285 = vsel %vm1233, %v1271, 0
        %v1288 = vsel %vm1233, %v1273, 0
        %1290 = vmatprep.subr.mxu0 0.0
        %v1291 = vand.u32 %v1279, 4294901760
        %1292 = vmatpush1.msra.mxu0 %v1291
        %1293 = vmatprep.subr.mxu0 0.0
        %v1294 = vand.u32 %v1281, 4294901760
        %1295 = vmatpush1.msra.mxu0 %v1294
        %1296 = vmatprep.subr.mxu0 0.0
        %1297 = vmatpush1.msra.mxu0 0.0
        %1298 = vmatprep.subr.mxu0 0.0
        %1299 = vmatpush1.msra.mxu0 0.0
        %1300 = vmatprep.subr.mxu0 0.0
        %1301 = vmatpush1.msra.mxu0 0.0
        %1302 = vmatprep.subr.mxu0 0.0
        %1303 = vmatpush1.msra.mxu0 0.0
        %1304 = vmatprep.subr.mxu0 0.0
        %1305 = vmatpush1.msra.mxu0 0.0
        %1306 = vmatprep.subr.mxu0 0.0
        %1307 = vmatpush1.msra.mxu0 0.0
        %1308 = vmatprep.subr.mxu0 0.0
        %1309 = vmatpush1.msra.mxu0 0.0
        %1310 = vmatprep.subr.mxu0 0.0
        %1311 = vmatpush1.msra.mxu0 0.0
        %1312 = vmatprep.subr.mxu0 0.0
        %1313 = vmatpush1.msra.mxu0 0.0
        %1314 = vmatprep.subr.mxu0 0.0
        %1315 = vmatpush1.msra.mxu0 0.0
        %1316 = vmatprep.subr.mxu0 0.0
        %1317 = vmatpush1.msra.mxu0 0.0
        %1318 = vmatprep.subr.mxu0 0.0
        %1319 = vmatpush1.msra.mxu0 0.0
        %1320 = vmatprep.subr.mxu0 0.0
        %1321 = vmatpush1.msra.mxu0 0.0
        %1322 = vmatprep.subr.mxu0 0.0
        %1323 = vmatpush1.msra.mxu0 0.0
        %1324 = vmatprep.subr.mxu0 0.0
        %1325 = vmatpush1.msra.mxu0 0.0
        %1326 = vmatprep.subr.mxu0 0.0
        %1327 = vmatpush1.msra.mxu0 0.0
        %1328 = vmatprep.subr.mxu0 0.0
        %1329 = vmatpush1.msra.mxu0 0.0
        %1330 = vmatprep.subr.mxu0 0.0
        %1331 = vmatpush1.msra.mxu0 0.0
        %1332 = vmatprep.subr.mxu0 0.0
        %1333 = vmatpush1.msra.mxu0 0.0
        %1334 = vmatprep.subr.mxu0 0.0
        %1335 = vmatpush1.msra.mxu0 0.0
        %1336 = vmatprep.subr.mxu0 0.0
        %1337 = vmatpush1.msra.mxu0 0.0
        %1338 = vmatprep.subr.mxu0 0.0
        %1339 = vmatpush1.msra.mxu0 0.0
        %1340 = vmatprep.subr.mxu0 0.0
        %1341 = vmatpush1.msra.mxu0 0.0
        %1342 = vmatprep.subr.mxu0 0.0
        %1343 = vmatpush1.msra.mxu0 0.0
        %1344 = vmatprep.subr.mxu0 0.0
        %1345 = vmatpush1.msra.mxu0 0.0
        %1346 = vmatprep.subr.mxu0 0.0
        %1347 = vmatpush1.msra.mxu0 0.0
        %1348 = vmatprep.subr.mxu0 0.0
        %1349 = vmatpush1.msra.mxu0 0.0
        %1350 = vmatprep.subr.mxu0 0.0
        %1351 = vmatpush1.msra.mxu0 0.0
        %1352 = vmatprep.subr.mxu0 0.0
        %1353 = vmatpush1.msra.mxu0 0.0
        %1354 = vmatprep.subr.mxu0 0.0
        %1355 = vmatpush1.msra.mxu0 0.0
        %1356 = vmatprep.mubr.f32.mxu0 0.0
        %v1357 = vand.u32 %v1285, 4294901760
        %v1358 = vsub.f32 %v1285, %v1357
        %v1359 = vand.u32 %v1358, 4294901760
        %v1360 = vsub.f32 %v1358, %v1359
        %v1361 = vand.u32 %v1360, 4294901760
        %1362 = vmatmul.mubr.f32.gmra.mrb[0].mxu0 %v1361
        %v1363 = vpop.f32.mrb[0].mxu0
        %v1364 = vadd.f32 0.0, %v1363
        %v1365 = vpop.f32.mrb[0].mxu0
        %1366 = vmatprep.mubr.f32.mxu0 0.0
        %v1367 = vand.u32 %v1288, 4294901760
        %v1368 = vsub.f32 %v1288, %v1367
        %v1369 = vand.u32 %v1368, 4294901760
        %v1370 = vsub.f32 %v1368, %v1369
        %v1371 = vand.u32 %v1370, 4294901760
        %1372 = vmatmul.mubr.f32.gmra.mrb[0].mxu0 %v1371
        %v1373 = vpop.f32.mrb[0].mxu0
        %v1374 = vadd.f32 0.0, %v1373
        %v1375 = vpop.f32.mrb[0].mxu0
        %1376 = vdwg.mxu0
        %1377 = vmatprep.subr.mxu0 0.0
        %v1378 = vand.u32 %v1279, 4294901760
        %v1379 = vsub.f32 %v1279, %v1378
        %v1380 = vand.u32 %v1379, 4294901760
        %v1381 = vsub.f32 %v1379, %v1380
        %v1382 = vand.u32 %v1381, 4294901760
        %1383 = vmatpush1.msra.mxu0 %v1382
        %1384 = vmatprep.subr.mxu0 0.0
        %v1385 = vand.u32 %v1281, 4294901760
        %v1386 = vsub.f32 %v1281, %v1385
        %v1387 = vand.u32 %v1386, 4294901760
        %v1388 = vsub.f32 %v1386, %v1387
        %v1389 = vand.u32 %v1388, 4294901760
        %1390 = vmatpush1.msra.mxu0 %v1389
        %1391 = vmatprep.subr.mxu0 0.0
        %1392 = vmatpush1.msra.mxu0 0.0
        %1393 = vmatprep.subr.mxu0 0.0
        %1394 = vmatpush1.msra.mxu0 0.0
        %1395 = vmatprep.subr.mxu0 0.0
        %1396 = vmatpush1.msra.mxu0 0.0
        %1397 = vmatprep.subr.mxu0 0.0
        %1398 = vmatpush1.msra.mxu0 0.0
        %1399 = vmatprep.subr.mxu0 0.0
        %1400 = vmatpush1.msra.mxu0 0.0
        %1401 = vmatprep.subr.mxu0 0.0
        %1402 = vmatpush1.msra.mxu0 0.0
        %1403 = vmatprep.subr.mxu0 0.0
        %1404 = vmatpush1.msra.mxu0 0.0
        %1405 = vmatprep.subr.mxu0 0.0
        %1406 = vmatpush1.msra.mxu0 0.0
        %1407 = vmatprep.subr.mxu0 0.0
        %1408 = vmatpush1.msra.mxu0 0.0
        %1409 = vmatprep.subr.mxu0 0.0
        %1410 = vmatpush1.msra.mxu0 0.0
        %1411 = vmatprep.subr.mxu0 0.0
        %1412 = vmatpush1.msra.mxu0 0.0
        %1413 = vmatprep.subr.mxu0 0.0
        %1414 = vmatpush1.msra.mxu0 0.0
        %1415 = vmatprep.subr.mxu0 0.0
        %1416 = vmatpush1.msra.mxu0 0.0
        %1417 = vmatprep.subr.mxu0 0.0
        %1418 = vmatpush1.msra.mxu0 0.0
        %1419 = vmatprep.subr.mxu0 0.0
        %1420 = vmatpush1.msra.mxu0 0.0
        %1421 = vmatprep.subr.mxu0 0.0
        %1422 = vmatpush1.msra.mxu0 0.0
        %1423 = vmatprep.subr.mxu0 0.0
        %1424 = vmatpush1.msra.mxu0 0.0
        %1425 = vmatprep.subr.mxu0 0.0
        %1426 = vmatpush1.msra.mxu0 0.0
        %1427 = vmatprep.subr.mxu0 0.0
        %1428 = vmatpush1.msra.mxu0 0.0
        %1429 = vmatprep.subr.mxu0 0.0
        %1430 = vmatpush1.msra.mxu0 0.0
        %1431 = vmatprep.subr.mxu0 0.0
        %1432 = vmatpush1.msra.mxu0 0.0
        %1433 = vmatprep.subr.mxu0 0.0
        %1434 = vmatpush1.msra.mxu0 0.0
        %1435 = vmatprep.subr.mxu0 0.0
        %1436 = vmatpush1.msra.mxu0 0.0
        %1437 = vmatprep.subr.mxu0 0.0
        %1438 = vmatpush1.msra.mxu0 0.0
        %1439 = vmatprep.subr.mxu0 0.0
        %1440 = vmatpush1.msra.mxu0 0.0
        %1441 = vmatprep.subr.mxu0 0.0
        %1442 = vmatpush1.msra.mxu0 0.0
        %1443 = vmatprep.subr.mxu0 0.0
        %1444 = vmatpush1.msra.mxu0 0.0
        %1445 = vmatprep.subr.mxu0 0.0
        %1446 = vmatpush1.msra.mxu0 0.0
        %1447 = vmatprep.subr.mxu0 0.0
        %1448 = vmatpush1.msra.mxu0 0.0
        %1449 = vmatprep.subr.mxu0 0.0
        %1450 = vmatpush1.msra.mxu0 0.0
        %1451 = vmatprep.mubr.f32.mxu0 0.0
        %v1452 = vand.u32 %v1285, 4294901760
        %1453 = vmatmul.mubr.f32.gmra.mrb[0].mxu0 %v1452
        %v1454 = vpop.f32.mrb[0].mxu0
        %v1455 = vadd.f32 %v1364, %v1454
        %v1456 = vpop.f32.mrb[0].mxu0
        %1457 = vmatprep.mubr.f32.mxu0 0.0
        %v1458 = vand.u32 %v1288, 4294901760
        %1459 = vmatmul.mubr.f32.gmra.mrb[0].mxu0 %v1458
        %v1460 = vpop.f32.mrb[0].mxu0
        %v1461 = vadd.f32 %v1374, %v1460
        %v1462 = vpop.f32.mrb[0].mxu0
        %1463 = vdwg.mxu0
        %1464 = vmatprep.subr.mxu0 0.0
        %v1465 = vand.u32 %v1279, 4294901760
        %v1466 = vsub.f32 %v1279, %v1465
        %1467 = vmatpush1.msra.mxu0 %v1466
        %1468 = vmatprep.subr.mxu0 0.0
        %v1469 = vand.u32 %v1281, 4294901760
        %v1470 = vsub.f32 %v1281, %v1469
        %1471 = vmatpush1.msra.mxu0 %v1470
        %1472 = vmatprep.subr.mxu0 0.0
        %1473 = vmatpush1.msra.mxu0 0.0
        %1474 = vmatprep.subr.mxu0 0.0
        %1475 = vmatpush1.msra.mxu0 0.0
        %1476 = vmatprep.subr.mxu0 0.0
        %1477 = vmatpush1.msra.mxu0 0.0
        %1478 = vmatprep.subr.mxu0 0.0
        %1479 = vmatpush1.msra.mxu0 0.0
        %1480 = vmatprep.subr.mxu0 0.0
        %1481 = vmatpush1.msra.mxu0 0.0
        %1482 = vmatprep.subr.mxu0 0.0
        %1483 = vmatpush1.msra.mxu0 0.0
        %1484 = vmatprep.subr.mxu0 0.0
        %1485 = vmatpush1.msra.mxu0 0.0
        %1486 = vmatprep.subr.mxu0 0.0
        %1487 = vmatpush1.msra.mxu0 0.0
        %1488 = vmatprep.subr.mxu0 0.0
        %1489 = vmatpush1.msra.mxu0 0.0
        %1490 = vmatprep.subr.mxu0 0.0
        %1491 = vmatpush1.msra.mxu0 0.0
        %1492 = vmatprep.subr.mxu0 0.0
        %1493 = vmatpush1.msra.mxu0 0.0
        %1494 = vmatprep.subr.mxu0 0.0
        %1495 = vmatpush1.msra.mxu0 0.0
        %1496 = vmatprep.subr.mxu0 0.0
        %1497 = vmatpush1.msra.mxu0 0.0
        %1498 = vmatprep.subr.mxu0 0.0
        %1499 = vmatpush1.msra.mxu0 0.0
        %1500 = vmatprep.subr.mxu0 0.0
        %1501 = vmatpush1.msra.mxu0 0.0
        %1502 = vmatprep.subr.mxu0 0.0
        %1503 = vmatpush1.msra.mxu0 0.0
        %1504 = vmatprep.subr.mxu0 0.0
        %1505 = vmatpush1.msra.mxu0 0.0
        %1506 = vmatprep.subr.mxu0 0.0
        %1507 = vmatpush1.msra.mxu0 0.0
        %1508 = vmatprep.subr.mxu0 0.0
        %1509 = vmatpush1.msra.mxu0 0.0
        %1510 = vmatprep.subr.mxu0 0.0
        %1511 = vmatpush1.msra.mxu0 0.0
        %1512 = vmatprep.subr.mxu0 0.0
        %1513 = vmatpush1.msra.mxu0 0.0
        %1514 = vmatprep.subr.mxu0 0.0
        %1515 = vmatpush1.msra.mxu0 0.0
        %1516 = vmatprep.subr.mxu0 0.0
        %1517 = vmatpush1.msra.mxu0 0.0
        %1518 = vmatprep.subr.mxu0 0.0
        %1519 = vmatpush1.msra.mxu0 0.0
        %1520 = vmatprep.subr.mxu0 0.0
        %1521 = vmatpush1.msra.mxu0 0.0
        %1522 = vmatprep.subr.mxu0 0.0
        %1523 = vmatpush1.msra.mxu0 0.0
        %1524 = vmatprep.subr.mxu0 0.0
        %1525 = vmatpush1.msra.mxu0 0.0
        %1526 = vmatprep.subr.mxu0 0.0
        %1527 = vmatpush1.msra.mxu0 0.0
        %1528 = vmatprep.subr.mxu0 0.0
        %1529 = vmatpush1.msra.mxu0 0.0
        %1530 = vmatprep.subr.mxu0 0.0
        %1531 = vmatpush1.msra.mxu0 0.0
        %1532 = vmatprep.mubr.f32.mxu0 0.0
        %v1533 = vand.u32 %v1285, 4294901760
        %v1534 = vsub.f32 %v1285, %v1533
        %1535 = vmatmul.mubr.f32.gmra.mrb[0].mxu0 %v1534
        %v1536 = vpop.f32.mrb[0].mxu0
        %v1537 = vadd.f32 %v1455, %v1536
        %v1538 = vpop.f32.mrb[0].mxu0
        %1539 = vmatprep.mubr.f32.mxu0 0.0
        %v1540 = vand.u32 %v1288, 4294901760
        %v1541 = vsub.f32 %v1288, %v1540
        %1542 = vmatmul.mubr.f32.gmra.mrb[0].mxu0 %v1541
        %v1543 = vpop.f32.mrb[0].mxu0
        %v1544 = vadd.f32 %v1461, %v1543
        %v1545 = vpop.f32.mrb[0].mxu0
        %1546 = vdwg.mxu0
        %1547 = vmatprep.subr.mxu0 0.0
        %v1548 = vand.u32 %v1279, 4294901760
        %1549 = vmatpush1.msra.mxu0 %v1548
        %1550 = vmatprep.subr.mxu0 0.0
        %v1551 = vand.u32 %v1281, 4294901760
        %1552 = vmatpush1.msra.mxu0 %v1551
        %1553 = vmatprep.subr.mxu0 0.0
        %1554 = vmatpush1.msra.mxu0 0.0
        %1555 = vmatprep.subr.mxu0 0.0
        %1556 = vmatpush1.msra.mxu0 0.0
        %1557 = vmatprep.subr.mxu0 0.0
        %1558 = vmatpush1.msra.mxu0 0.0
        %1559 = vmatprep.subr.mxu0 0.0
        %1560 = vmatpush1.msra.mxu0 0.0
        %1561 = vmatprep.subr.mxu0 0.0
        %1562 = vmatpush1.msra.mxu0 0.0
        %1563 = vmatprep.subr.mxu0 0.0
        %1564 = vmatpush1.msra.mxu0 0.0
        %1565 = vmatprep.subr.mxu0 0.0
        %1566 = vmatpush1.msra.mxu0 0.0
        %1567 = vmatprep.subr.mxu0 0.0
        %1568 = vmatpush1.msra.mxu0 0.0
        %1569 = vmatprep.subr.mxu0 0.0
        %1570 = vmatpush1.msra.mxu0 0.0
        %1571 = vmatprep.subr.mxu0 0.0
        %1572 = vmatpush1.msra.mxu0 0.0
        %1573 = vmatprep.subr.mxu0 0.0
        %1574 = vmatpush1.msra.mxu0 0.0
        %1575 = vmatprep.subr.mxu0 0.0
        %1576 = vmatpush1.msra.mxu0 0.0
        %1577 = vmatprep.subr.mxu0 0.0
        %1578 = vmatpush1.msra.mxu0 0.0
        %1579 = vmatprep.subr.mxu0 0.0
        %1580 = vmatpush1.msra.mxu0 0.0
        %1581 = vmatprep.subr.mxu0 0.0
        %1582 = vmatpush1.msra.mxu0 0.0
        %1583 = vmatprep.subr.mxu0 0.0
        %1584 = vmatpush1.msra.mxu0 0.0
        %1585 = vmatprep.subr.mxu0 0.0
        %1586 = vmatpush1.msra.mxu0 0.0
        %1587 = vmatprep.subr.mxu0 0.0
        %1588 = vmatpush1.msra.mxu0 0.0
        %1589 = vmatprep.subr.mxu0 0.0
        %1590 = vmatpush1.msra.mxu0 0.0
        %1591 = vmatprep.subr.mxu0 0.0
        %1592 = vmatpush1.msra.mxu0 0.0
        %1593 = vmatprep.subr.mxu0 0.0
        %1594 = vmatpush1.msra.mxu0 0.0
        %1595 = vmatprep.subr.mxu0 0.0
        %1596 = vmatpush1.msra.mxu0 0.0
        %1597 = vmatprep.subr.mxu0 0.0
        %1598 = vmatpush1.msra.mxu0 0.0
        %1599 = vmatprep.subr.mxu0 0.0
        %1600 = vmatpush1.msra.mxu0 0.0
        %1601 = vmatprep.subr.mxu0 0.0
        %1602 = vmatpush1.msra.mxu0 0.0
        %1603 = vmatprep.subr.mxu0 0.0
        %1604 = vmatpush1.msra.mxu0 0.0
        %1605 = vmatprep.subr.mxu0 0.0
        %1606 = vmatpush1.msra.mxu0 0.0
        %1607 = vmatprep.subr.mxu0 0.0
        %1608 = vmatpush1.msra.mxu0 0.0
        %1609 = vmatprep.subr.mxu0 0.0
        %1610 = vmatpush1.msra.mxu0 0.0
        %1611 = vmatprep.subr.mxu0 0.0
        %1612 = vmatpush1.msra.mxu0 0.0
        %1613 = vmatprep.mubr.f32.mxu0 0.0
        %v1614 = vand.u32 %v1285, 4294901760
        %v1615 = vsub.f32 %v1285, %v1614
        %v1616 = vand.u32 %v1615, 4294901760
        %1617 = vmatmul.mubr.f32.gmra.mrb[0].mxu0 %v1616
        %v1618 = vpop.f32.mrb[0].mxu0
        %v1619 = vadd.f32 %v1537, %v1618
        %v1620 = vpop.f32.mrb[0].mxu0
        %1621 = vmatprep.mubr.f32.mxu0 0.0
        %v1622 = vand.u32 %v1288, 4294901760
        %v1623 = vsub.f32 %v1288, %v1622
        %v1624 = vand.u32 %v1623, 4294901760
        %1625 = vmatmul.mubr.f32.gmra.mrb[0].mxu0 %v1624
        %v1626 = vpop.f32.mrb[0].mxu0
        %v1627 = vadd.f32 %v1544, %v1626
        %v1628 = vpop.f32.mrb[0].mxu0
        %1629 = vdwg.mxu0
        %1630 = vmatprep.subr.mxu0 0.0
        %v1631 = vand.u32 %v1279, 4294901760
        %v1632 = vsub.f32 %v1279, %v1631
        %v1633 = vand.u32 %v1632, 4294901760
        %1634 = vmatpush1.msra.mxu0 %v1633
        %1635 = vmatprep.subr.mxu0 0.0
        %v1636 = vand.u32 %v1281, 4294901760
        %v1637 = vsub.f32 %v1281, %v1636
        %v1638 = vand.u32 %v1637, 4294901760
        %1639 = vmatpush1.msra.mxu0 %v1638
        %1640 = vmatprep.subr.mxu0 0.0
        %1641 = vmatpush1.msra.mxu0 0.0
        %1642 = vmatprep.subr.mxu0 0.0
        %1643 = vmatpush1.msra.mxu0 0.0
        %1644 = vmatprep.subr.mxu0 0.0
        %1645 = vmatpush1.msra.mxu0 0.0
        %1646 = vmatprep.subr.mxu0 0.0
        %1647 = vmatpush1.msra.mxu0 0.0
        %1648 = vmatprep.subr.mxu0 0.0
        %1649 = vmatpush1.msra.mxu0 0.0
        %1650 = vmatprep.subr.mxu0 0.0
        %1651 = vmatpush1.msra.mxu0 0.0
        %1652 = vmatprep.subr.mxu0 0.0
        %1653 = vmatpush1.msra.mxu0 0.0
        %1654 = vmatprep.subr.mxu0 0.0
        %1655 = vmatpush1.msra.mxu0 0.0
        %1656 = vmatprep.subr.mxu0 0.0
        %1657 = vmatpush1.msra.mxu0 0.0
        %1658 = vmatprep.subr.mxu0 0.0
        %1659 = vmatpush1.msra.mxu0 0.0
        %1660 = vmatprep.subr.mxu0 0.0
        %1661 = vmatpush1.msra.mxu0 0.0
        %1662 = vmatprep.subr.mxu0 0.0
        %1663 = vmatpush1.msra.mxu0 0.0
        %1664 = vmatprep.subr.mxu0 0.0
        %1665 = vmatpush1.msra.mxu0 0.0
        %1666 = vmatprep.subr.mxu0 0.0
        %1667 = vmatpush1.msra.mxu0 0.0
        %1668 = vmatprep.subr.mxu0 0.0
        %1669 = vmatpush1.msra.mxu0 0.0
        %1670 = vmatprep.subr.mxu0 0.0
        %1671 = vmatpush1.msra.mxu0 0.0
        %1672 = vmatprep.subr.mxu0 0.0
        %1673 = vmatpush1.msra.mxu0 0.0
        %1674 = vmatprep.subr.mxu0 0.0
        %1675 = vmatpush1.msra.mxu0 0.0
        %1676 = vmatprep.subr.mxu0 0.0
        %1677 = vmatpush1.msra.mxu0 0.0
        %1678 = vmatprep.subr.mxu0 0.0
        %1679 = vmatpush1.msra.mxu0 0.0
        %1680 = vmatprep.subr.mxu0 0.0
        %1681 = vmatpush1.msra.mxu0 0.0
        %1682 = vmatprep.subr.mxu0 0.0
        %1683 = vmatpush1.msra.mxu0 0.0
        %1684 = vmatprep.subr.mxu0 0.0
        %1685 = vmatpush1.msra.mxu0 0.0
        %1686 = vmatprep.subr.mxu0 0.0
        %1687 = vmatpush1.msra.mxu0 0.0
        %1688 = vmatprep.subr.mxu0 0.0
        %1689 = vmatpush1.msra.mxu0 0.0
        %1690 = vmatprep.subr.mxu0 0.0
        %1691 = vmatpush1.msra.mxu0 0.0
        %1692 = vmatprep.subr.mxu0 0.0
        %1693 = vmatpush1.msra.mxu0 0.0
        %1694 = vmatprep.subr.mxu0 0.0
        %1695 = vmatpush1.msra.mxu0 0.0
        %1696 = vmatprep.subr.mxu0 0.0
        %1697 = vmatpush1.msra.mxu0 0.0
        %1698 = vmatprep.subr.mxu0 0.0
        %1699 = vmatpush1.msra.mxu0 0.0
        %1700 = vmatprep.mubr.f32.mxu0 0.0
        %v1701 = vand.u32 %v1285, 4294901760
        %1702 = vmatmul.mubr.f32.gmra.mrb[0].mxu0 %v1701
        %v1703 = vpop.f32.mrb[0].mxu0
        %v1704 = vadd.f32 %v1619, %v1703
        %v1705 = vpop.f32.mrb[0].mxu0
        %1706 = vmatprep.mubr.f32.mxu0 0.0
        %v1707 = vand.u32 %v1288, 4294901760
        %1708 = vmatmul.mubr.f32.gmra.mrb[0].mxu0 %v1707
        %v1709 = vpop.f32.mrb[0].mxu0
        %v1710 = vadd.f32 %v1627, %v1709
        %v1711 = vpop.f32.mrb[0].mxu0
        %1712 = vdwg.mxu0
        %1713 = vmatprep.subr.mxu0 0.0
        %v1714 = vand.u32 %v1279, 4294901760
        %1715 = vmatpush1.msra.mxu0 %v1714
        %1716 = vmatprep.subr.mxu0 0.0
        %v1717 = vand.u32 %v1281, 4294901760
        %1718 = vmatpush1.msra.mxu0 %v1717
        %1719 = vmatprep.subr.mxu0 0.0
        %1720 = vmatpush1.msra.mxu0 0.0
        %1721 = vmatprep.subr.mxu0 0.0
        %1722 = vmatpush1.msra.mxu0 0.0
        %1723 = vmatprep.subr.mxu0 0.0
        %1724 = vmatpush1.msra.mxu0 0.0
        %1725 = vmatprep.subr.mxu0 0.0
        %1726 = vmatpush1.msra.mxu0 0.0
        %1727 = vmatprep.subr.mxu0 0.0
        %1728 = vmatpush1.msra.mxu0 0.0
        %1729 = vmatprep.subr.mxu0 0.0
        %1730 = vmatpush1.msra.mxu0 0.0
        %1731 = vmatprep.subr.mxu0 0.0
        %1732 = vmatpush1.msra.mxu0 0.0
        %1733 = vmatprep.subr.mxu0 0.0
        %1734 = vmatpush1.msra.mxu0 0.0
        %1735 = vmatprep.subr.mxu0 0.0
        %1736 = vmatpush1.msra.mxu0 0.0
        %1737 = vmatprep.subr.mxu0 0.0
        %1738 = vmatpush1.msra.mxu0 0.0
        %1739 = vmatprep.subr.mxu0 0.0
        %1740 = vmatpush1.msra.mxu0 0.0
        %1741 = vmatprep.subr.mxu0 0.0
        %1742 = vmatpush1.msra.mxu0 0.0
        %1743 = vmatprep.subr.mxu0 0.0
        %1744 = vmatpush1.msra.mxu0 0.0
        %1745 = vmatprep.subr.mxu0 0.0
        %1746 = vmatpush1.msra.mxu0 0.0
        %1747 = vmatprep.subr.mxu0 0.0
        %1748 = vmatpush1.msra.mxu0 0.0
        %1749 = vmatprep.subr.mxu0 0.0
        %1750 = vmatpush1.msra.mxu0 0.0
        %1751 = vmatprep.subr.mxu0 0.0
        %1752 = vmatpush1.msra.mxu0 0.0
        %1753 = vmatprep.subr.mxu0 0.0
        %1754 = vmatpush1.msra.mxu0 0.0
        %1755 = vmatprep.subr.mxu0 0.0
        %1756 = vmatpush1.msra.mxu0 0.0
        %1757 = vmatprep.subr.mxu0 0.0
        %1758 = vmatpush1.msra.mxu0 0.0
        %1759 = vmatprep.subr.mxu0 0.0
        %1760 = vmatpush1.msra.mxu0 0.0
        %1761 = vmatprep.subr.mxu0 0.0
        %1762 = vmatpush1.msra.mxu0 0.0
        %1763 = vmatprep.subr.mxu0 0.0
        %1764 = vmatpush1.msra.mxu0 0.0
        %1765 = vmatprep.subr.mxu0 0.0
        %1766 = vmatpush1.msra.mxu0 0.0
        %1767 = vmatprep.subr.mxu0 0.0
        %1768 = vmatpush1.msra.mxu0 0.0
        %1769 = vmatprep.subr.mxu0 0.0
        %1770 = vmatpush1.msra.mxu0 0.0
        %1771 = vmatprep.subr.mxu0 0.0
        %1772 = vmatpush1.msra.mxu0 0.0
        %1773 = vmatprep.subr.mxu0 0.0
        %1774 = vmatpush1.msra.mxu0 0.0
        %1775 = vmatprep.subr.mxu0 0.0
        %1776 = vmatpush1.msra.mxu0 0.0
        %1777 = vmatprep.subr.mxu0 0.0
        %1778 = vmatpush1.msra.mxu0 0.0
        %1779 = vmatprep.mubr.f32.mxu0 0.0
        %v1780 = vand.u32 %v1285, 4294901760
        %1781 = vmatmul.mubr.f32.gmra.mrb[0].mxu0 %v1780
        %v1782 = vpop.f32.mrb[0].mxu0
        %v1783 = vadd.f32 %v1704, %v1782
        %v1784 = vpop.f32.mrb[0].mxu0
        %1785 = vmatprep.mubr.f32.mxu0 0.0
        %v1786 = vand.u32 %v1288, 4294901760
        %1787 = vmatmul.mubr.f32.gmra.mrb[0].mxu0 %v1786
        %v1788 = vpop.f32.mrb[0].mxu0
        %v1789 = vadd.f32 %v1710, %v1788
        %v1790 = vpop.f32.mrb[0].mxu0
        %1791 = vdwg.mxu0
        %1792 = vrot.lane.b32.xlu0 %v182, 64
        %v1793 = vpop.permute.xlu0 %1792
        %1794 = vrot.lane.b32.xlu0 %v183, 64
        %v1795 = vpop.permute.xlu0 %1794
        %v1799 = vsel %vm1233, %v1275, 0
        %v1802 = vsel %vm1233, %v1277, 0
        %1804 = vmatprep.subr.mxu0 0.0
        %v1805 = vand.u32 %v1793, 4294901760
        %1806 = vmatpush1.msra.mxu0 %v1805
        %1807 = vmatprep.subr.mxu0 0.0
        %v1808 = vand.u32 %v1795, 4294901760
        %1809 = vmatpush1.msra.mxu0 %v1808
        %1810 = vmatprep.subr.mxu0 0.0
        %1811 = vmatpush1.msra.mxu0 0.0
        %1812 = vmatprep.subr.mxu0 0.0
        %1813 = vmatpush1.msra.mxu0 0.0
        %1814 = vmatprep.subr.mxu0 0.0
        %1815 = vmatpush1.msra.mxu0 0.0
        %1816 = vmatprep.subr.mxu0 0.0
        %1817 = vmatpush1.msra.mxu0 0.0
        %1818 = vmatprep.subr.mxu0 0.0
        %1819 = vmatpush1.msra.mxu0 0.0
        %1820 = vmatprep.subr.mxu0 0.0
        %1821 = vmatpush1.msra.mxu0 0.0
        %1822 = vmatprep.subr.mxu0 0.0
        %1823 = vmatpush1.msra.mxu0 0.0
        %1824 = vmatprep.subr.mxu0 0.0
        %1825 = vmatpush1.msra.mxu0 0.0
        %1826 = vmatprep.subr.mxu0 0.0
        %1827 = vmatpush1.msra.mxu0 0.0
        %1828 = vmatprep.subr.mxu0 0.0
        %1829 = vmatpush1.msra.mxu0 0.0
        %1830 = vmatprep.subr.mxu0 0.0
        %1831 = vmatpush1.msra.mxu0 0.0
        %1832 = vmatprep.subr.mxu0 0.0
        %1833 = vmatpush1.msra.mxu0 0.0
        %1834 = vmatprep.subr.mxu0 0.0
        %1835 = vmatpush1.msra.mxu0 0.0
        %1836 = vmatprep.subr.mxu0 0.0
        %1837 = vmatpush1.msra.mxu0 0.0
        %1838 = vmatprep.subr.mxu0 0.0
        %1839 = vmatpush1.msra.mxu0 0.0
        %1840 = vmatprep.subr.mxu0 0.0
        %1841 = vmatpush1.msra.mxu0 0.0
        %1842 = vmatprep.subr.mxu0 0.0
        %1843 = vmatpush1.msra.mxu0 0.0
        %1844 = vmatprep.subr.mxu0 0.0
        %1845 = vmatpush1.msra.mxu0 0.0
        %1846 = vmatprep.subr.mxu0 0.0
        %1847 = vmatpush1.msra.mxu0 0.0
        %1848 = vmatprep.subr.mxu0 0.0
        %1849 = vmatpush1.msra.mxu0 0.0
        %1850 = vmatprep.subr.mxu0 0.0
        %1851 = vmatpush1.msra.mxu0 0.0
        %1852 = vmatprep.subr.mxu0 0.0
        %1853 = vmatpush1.msra.mxu0 0.0
        %1854 = vmatprep.subr.mxu0 0.0
        %1855 = vmatpush1.msra.mxu0 0.0
        %1856 = vmatprep.subr.mxu0 0.0
        %1857 = vmatpush1.msra.mxu0 0.0
        %1858 = vmatprep.subr.mxu0 0.0
        %1859 = vmatpush1.msra.mxu0 0.0
        %1860 = vmatprep.subr.mxu0 0.0
        %1861 = vmatpush1.msra.mxu0 0.0
        %1862 = vmatprep.subr.mxu0 0.0
        %1863 = vmatpush1.msra.mxu0 0.0
        %1864 = vmatprep.subr.mxu0 0.0
        %1865 = vmatpush1.msra.mxu0 0.0
        %1866 = vmatprep.subr.mxu0 0.0
        %1867 = vmatpush1.msra.mxu0 0.0
        %1868 = vmatprep.subr.mxu0 0.0
        %1869 = vmatpush1.msra.mxu0 0.0
        %1870 = vmatprep.mubr.f32.mxu0 0.0
        %v1871 = vand.u32 %v1799, 4294901760
        %v1872 = vsub.f32 %v1799, %v1871
        %v1873 = vand.u32 %v1872, 4294901760
        %v1874 = vsub.f32 %v1872, %v1873
        %v1875 = vand.u32 %v1874, 4294901760
        %1876 = vmatmul.mubr.f32.gmra.mrb[0].mxu0 %v1875
        %v1877 = vpop.f32.mrb[0].mxu0
        %v1878 = vadd.f32 0.0, %v1877
        %v1879 = vpop.f32.mrb[0].mxu0
        %1880 = vmatprep.mubr.f32.mxu0 0.0
        %v1881 = vand.u32 %v1802, 4294901760
        %v1882 = vsub.f32 %v1802, %v1881
        %v1883 = vand.u32 %v1882, 4294901760
        %v1884 = vsub.f32 %v1882, %v1883
        %v1885 = vand.u32 %v1884, 4294901760
        %1886 = vmatmul.mubr.f32.gmra.mrb[0].mxu0 %v1885
        %v1887 = vpop.f32.mrb[0].mxu0
        %v1888 = vadd.f32 0.0, %v1887
        %v1889 = vpop.f32.mrb[0].mxu0
        %1890 = vdwg.mxu0
        %1891 = vmatprep.subr.mxu0 0.0
        %v1892 = vand.u32 %v1793, 4294901760
        %v1893 = vsub.f32 %v1793, %v1892
        %v1894 = vand.u32 %v1893, 4294901760
        %v1895 = vsub.f32 %v1893, %v1894
        %v1896 = vand.u32 %v1895, 4294901760
        %1897 = vmatpush1.msra.mxu0 %v1896
        %1898 = vmatprep.subr.mxu0 0.0
        %v1899 = vand.u32 %v1795, 4294901760
        %v1900 = vsub.f32 %v1795, %v1899
        %v1901 = vand.u32 %v1900, 4294901760
        %v1902 = vsub.f32 %v1900, %v1901
        %v1903 = vand.u32 %v1902, 4294901760
        %1904 = vmatpush1.msra.mxu0 %v1903
        %1905 = vmatprep.subr.mxu0 0.0
        %1906 = vmatpush1.msra.mxu0 0.0
        %1907 = vmatprep.subr.mxu0 0.0
        %1908 = vmatpush1.msra.mxu0 0.0
        %1909 = vmatprep.subr.mxu0 0.0
        %1910 = vmatpush1.msra.mxu0 0.0
        %1911 = vmatprep.subr.mxu0 0.0
        %1912 = vmatpush1.msra.mxu0 0.0
        %1913 = vmatprep.subr.mxu0 0.0
        %1914 = vmatpush1.msra.mxu0 0.0
        %1915 = vmatprep.subr.mxu0 0.0
        %1916 = vmatpush1.msra.mxu0 0.0
        %1917 = vmatprep.subr.mxu0 0.0
        %1918 = vmatpush1.msra.mxu0 0.0
        %1919 = vmatprep.subr.mxu0 0.0
        %1920 = vmatpush1.msra.mxu0 0.0
        %1921 = vmatprep.subr.mxu0 0.0
        %1922 = vmatpush1.msra.mxu0 0.0
        %1923 = vmatprep.subr.mxu0 0.0
        %1924 = vmatpush1.msra.mxu0 0.0
        %1925 = vmatprep.subr.mxu0 0.0
        %1926 = vmatpush1.msra.mxu0 0.0
        %1927 = vmatprep.subr.mxu0 0.0
        %1928 = vmatpush1.msra.mxu0 0.0
        %1929 = vmatprep.subr.mxu0 0.0
        %1930 = vmatpush1.msra.mxu0 0.0
        %1931 = vmatprep.subr.mxu0 0.0
        %1932 = vmatpush1.msra.mxu0 0.0
        %1933 = vmatprep.subr.mxu0 0.0
        %1934 = vmatpush1.msra.mxu0 0.0
        %1935 = vmatprep.subr.mxu0 0.0
        %1936 = vmatpush1.msra.mxu0 0.0
        %1937 = vmatprep.subr.mxu0 0.0
        %1938 = vmatpush1.msra.mxu0 0.0
        %1939 = vmatprep.subr.mxu0 0.0
        %1940 = vmatpush1.msra.mxu0 0.0
        %1941 = vmatprep.subr.mxu0 0.0
        %1942 = vmatpush1.msra.mxu0 0.0
        %1943 = vmatprep.subr.mxu0 0.0
        %1944 = vmatpush1.msra.mxu0 0.0
        %1945 = vmatprep.subr.mxu0 0.0
        %1946 = vmatpush1.msra.mxu0 0.0
        %1947 = vmatprep.subr.mxu0 0.0
        %1948 = vmatpush1.msra.mxu0 0.0
        %1949 = vmatprep.subr.mxu0 0.0
        %1950 = vmatpush1.msra.mxu0 0.0
        %1951 = vmatprep.subr.mxu0 0.0
        %1952 = vmatpush1.msra.mxu0 0.0
        %1953 = vmatprep.subr.mxu0 0.0
        %1954 = vmatpush1.msra.mxu0 0.0
        %1955 = vmatprep.subr.mxu0 0.0
        %1956 = vmatpush1.msra.mxu0 0.0
        %1957 = vmatprep.subr.mxu0 0.0
        %1958 = vmatpush1.msra.mxu0 0.0
        %1959 = vmatprep.subr.mxu0 0.0
        %1960 = vmatpush1.msra.mxu0 0.0
        %1961 = vmatprep.subr.mxu0 0.0
        %1962 = vmatpush1.msra.mxu0 0.0
        %1963 = vmatprep.subr.mxu0 0.0
        %1964 = vmatpush1.msra.mxu0 0.0
        %1965 = vmatprep.mubr.f32.mxu0 0.0
        %v1966 = vand.u32 %v1799, 4294901760
        %1967 = vmatmul.mubr.f32.gmra.mrb[0].mxu0 %v1966
        %v1968 = vpop.f32.mrb[0].mxu0
        %v1969 = vadd.f32 %v1878, %v1968
        %v1970 = vpop.f32.mrb[0].mxu0
        %1971 = vmatprep.mubr.f32.mxu0 0.0
        %v1972 = vand.u32 %v1802, 4294901760
        %1973 = vmatmul.mubr.f32.gmra.mrb[0].mxu0 %v1972
        %v1974 = vpop.f32.mrb[0].mxu0
        %v1975 = vadd.f32 %v1888, %v1974
        %v1976 = vpop.f32.mrb[0].mxu0
        %1977 = vdwg.mxu0
        %1978 = vmatprep.subr.mxu0 0.0
        %v1979 = vand.u32 %v1793, 4294901760
        %v1980 = vsub.f32 %v1793, %v1979
        %1981 = vmatpush1.msra.mxu0 %v1980
        %1982 = vmatprep.subr.mxu0 0.0
        %v1983 = vand.u32 %v1795, 4294901760
        %v1984 = vsub.f32 %v1795, %v1983
        %1985 = vmatpush1.msra.mxu0 %v1984
        %1986 = vmatprep.subr.mxu0 0.0
        %1987 = vmatpush1.msra.mxu0 0.0
        %1988 = vmatprep.subr.mxu0 0.0
        %1989 = vmatpush1.msra.mxu0 0.0
        %1990 = vmatprep.subr.mxu0 0.0
        %1991 = vmatpush1.msra.mxu0 0.0
        %1992 = vmatprep.subr.mxu0 0.0
        %1993 = vmatpush1.msra.mxu0 0.0
        %1994 = vmatprep.subr.mxu0 0.0
        %1995 = vmatpush1.msra.mxu0 0.0
        %1996 = vmatprep.subr.mxu0 0.0
        %1997 = vmatpush1.msra.mxu0 0.0
        %1998 = vmatprep.subr.mxu0 0.0
        %1999 = vmatpush1.msra.mxu0 0.0
        %2000 = vmatprep.subr.mxu0 0.0
        %2001 = vmatpush1.msra.mxu0 0.0
        %2002 = vmatprep.subr.mxu0 0.0
        %2003 = vmatpush1.msra.mxu0 0.0
        %2004 = vmatprep.subr.mxu0 0.0
        %2005 = vmatpush1.msra.mxu0 0.0
        %2006 = vmatprep.subr.mxu0 0.0
        %2007 = vmatpush1.msra.mxu0 0.0
        %2008 = vmatprep.subr.mxu0 0.0
        %2009 = vmatpush1.msra.mxu0 0.0
        %2010 = vmatprep.subr.mxu0 0.0
        %2011 = vmatpush1.msra.mxu0 0.0
        %2012 = vmatprep.subr.mxu0 0.0
        %2013 = vmatpush1.msra.mxu0 0.0
        %2014 = vmatprep.subr.mxu0 0.0
        %2015 = vmatpush1.msra.mxu0 0.0
        %2016 = vmatprep.subr.mxu0 0.0
        %2017 = vmatpush1.msra.mxu0 0.0
        %2018 = vmatprep.subr.mxu0 0.0
        %2019 = vmatpush1.msra.mxu0 0.0
        %2020 = vmatprep.subr.mxu0 0.0
        %2021 = vmatpush1.msra.mxu0 0.0
        %2022 = vmatprep.subr.mxu0 0.0
        %2023 = vmatpush1.msra.mxu0 0.0
        %2024 = vmatprep.subr.mxu0 0.0
        %2025 = vmatpush1.msra.mxu0 0.0
        %2026 = vmatprep.subr.mxu0 0.0
        %2027 = vmatpush1.msra.mxu0 0.0
        %2028 = vmatprep.subr.mxu0 0.0
        %2029 = vmatpush1.msra.mxu0 0.0
        %2030 = vmatprep.subr.mxu0 0.0
        %2031 = vmatpush1.msra.mxu0 0.0
        %2032 = vmatprep.subr.mxu0 0.0
        %2033 = vmatpush1.msra.mxu0 0.0
        %2034 = vmatprep.subr.mxu0 0.0
        %2035 = vmatpush1.msra.mxu0 0.0
        %2036 = vmatprep.subr.mxu0 0.0
        %2037 = vmatpush1.msra.mxu0 0.0
        %2038 = vmatprep.subr.mxu0 0.0
        %2039 = vmatpush1.msra.mxu0 0.0
        %2040 = vmatprep.subr.mxu0 0.0
        %2041 = vmatpush1.msra.mxu0 0.0
        %2042 = vmatprep.subr.mxu0 0.0
        %2043 = vmatpush1.msra.mxu0 0.0
        %2044 = vmatprep.subr.mxu0 0.0
        %2045 = vmatpush1.msra.mxu0 0.0
        %2046 = vmatprep.mubr.f32.mxu0 0.0
        %v2047 = vand.u32 %v1799, 4294901760
        %v2048 = vsub.f32 %v1799, %v2047
        %2049 = vmatmul.mubr.f32.gmra.mrb[0].mxu0 %v2048
        %v2050 = vpop.f32.mrb[0].mxu0
        %v2051 = vadd.f32 %v1969, %v2050
        %v2052 = vpop.f32.mrb[0].mxu0
        %2053 = vmatprep.mubr.f32.mxu0 0.0
        %v2054 = vand.u32 %v1802, 4294901760
        %v2055 = vsub.f32 %v1802, %v2054
        %2056 = vmatmul.mubr.f32.gmra.mrb[0].mxu0 %v2055
        %v2057 = vpop.f32.mrb[0].mxu0
        %v2058 = vadd.f32 %v1975, %v2057
        %v2059 = vpop.f32.mrb[0].mxu0
        %2060 = vdwg.mxu0
        %2061 = vmatprep.subr.mxu0 0.0
        %v2062 = vand.u32 %v1793, 4294901760
        %2063 = vmatpush1.msra.mxu0 %v2062
        %2064 = vmatprep.subr.mxu0 0.0
        %v2065 = vand.u32 %v1795, 4294901760
        %2066 = vmatpush1.msra.mxu0 %v2065
        %2067 = vmatprep.subr.mxu0 0.0
        %2068 = vmatpush1.msra.mxu0 0.0
        %2069 = vmatprep.subr.mxu0 0.0
        %2070 = vmatpush1.msra.mxu0 0.0
        %2071 = vmatprep.subr.mxu0 0.0
        %2072 = vmatpush1.msra.mxu0 0.0
        %2073 = vmatprep.subr.mxu0 0.0
        %2074 = vmatpush1.msra.mxu0 0.0
        %2075 = vmatprep.subr.mxu0 0.0
        %2076 = vmatpush1.msra.mxu0 0.0
        %2077 = vmatprep.subr.mxu0 0.0
        %2078 = vmatpush1.msra.mxu0 0.0
        %2079 = vmatprep.subr.mxu0 0.0
        %2080 = vmatpush1.msra.mxu0 0.0
        %2081 = vmatprep.subr.mxu0 0.0
        %2082 = vmatpush1.msra.mxu0 0.0
        %2083 = vmatprep.subr.mxu0 0.0
        %2084 = vmatpush1.msra.mxu0 0.0
        %2085 = vmatprep.subr.mxu0 0.0
        %2086 = vmatpush1.msra.mxu0 0.0
        %2087 = vmatprep.subr.mxu0 0.0
        %2088 = vmatpush1.msra.mxu0 0.0
        %2089 = vmatprep.subr.mxu0 0.0
        %2090 = vmatpush1.msra.mxu0 0.0
        %2091 = vmatprep.subr.mxu0 0.0
        %2092 = vmatpush1.msra.mxu0 0.0
        %2093 = vmatprep.subr.mxu0 0.0
        %2094 = vmatpush1.msra.mxu0 0.0
        %2095 = vmatprep.subr.mxu0 0.0
        %2096 = vmatpush1.msra.mxu0 0.0
        %2097 = vmatprep.subr.mxu0 0.0
        %2098 = vmatpush1.msra.mxu0 0.0
        %2099 = vmatprep.subr.mxu0 0.0
        %2100 = vmatpush1.msra.mxu0 0.0
        %2101 = vmatprep.subr.mxu0 0.0
        %2102 = vmatpush1.msra.mxu0 0.0
        %2103 = vmatprep.subr.mxu0 0.0
        %2104 = vmatpush1.msra.mxu0 0.0
        %2105 = vmatprep.subr.mxu0 0.0
        %2106 = vmatpush1.msra.mxu0 0.0
        %2107 = vmatprep.subr.mxu0 0.0
        %2108 = vmatpush1.msra.mxu0 0.0
        %2109 = vmatprep.subr.mxu0 0.0
        %2110 = vmatpush1.msra.mxu0 0.0
        %2111 = vmatprep.subr.mxu0 0.0
        %2112 = vmatpush1.msra.mxu0 0.0
        %2113 = vmatprep.subr.mxu0 0.0
        %2114 = vmatpush1.msra.mxu0 0.0
        %2115 = vmatprep.subr.mxu0 0.0
        %2116 = vmatpush1.msra.mxu0 0.0
        %2117 = vmatprep.subr.mxu0 0.0
        %2118 = vmatpush1.msra.mxu0 0.0
        %2119 = vmatprep.subr.mxu0 0.0
        %2120 = vmatpush1.msra.mxu0 0.0
        %2121 = vmatprep.subr.mxu0 0.0
        %2122 = vmatpush1.msra.mxu0 0.0
        %2123 = vmatprep.subr.mxu0 0.0
        %2124 = vmatpush1.msra.mxu0 0.0
        %2125 = vmatprep.subr.mxu0 0.0
        %2126 = vmatpush1.msra.mxu0 0.0
        %2127 = vmatprep.mubr.f32.mxu0 0.0
        %v2128 = vand.u32 %v1799, 4294901760
        %v2129 = vsub.f32 %v1799, %v2128
        %v2130 = vand.u32 %v2129, 4294901760
        %2131 = vmatmul.mubr.f32.gmra.mrb[0].mxu0 %v2130
        %v2132 = vpop.f32.mrb[0].mxu0
        %v2133 = vadd.f32 %v2051, %v2132
        %v2134 = vpop.f32.mrb[0].mxu0
        %2135 = vmatprep.mubr.f32.mxu0 0.0
        %v2136 = vand.u32 %v1802, 4294901760
        %v2137 = vsub.f32 %v1802, %v2136
        %v2138 = vand.u32 %v2137, 4294901760
        %2139 = vmatmul.mubr.f32.gmra.mrb[0].mxu0 %v2138
        %v2140 = vpop.f32.mrb[0].mxu0
        %v2141 = vadd.f32 %v2058, %v2140
        %v2142 = vpop.f32.mrb[0].mxu0
        %2143 = vdwg.mxu0
        %2144 = vmatprep.subr.mxu0 0.0
        %v2145 = vand.u32 %v1793, 4294901760
        %v2146 = vsub.f32 %v1793, %v2145
        %v2147 = vand.u32 %v2146, 4294901760
        %2148 = vmatpush1.msra.mxu0 %v2147
        %2149 = vmatprep.subr.mxu0 0.0
        %v2150 = vand.u32 %v1795, 4294901760
        %v2151 = vsub.f32 %v1795, %v2150
        %v2152 = vand.u32 %v2151, 4294901760
        %2153 = vmatpush1.msra.mxu0 %v2152
        %2154 = vmatprep.subr.mxu0 0.0
        %2155 = vmatpush1.msra.mxu0 0.0
        %2156 = vmatprep.subr.mxu0 0.0
        %2157 = vmatpush1.msra.mxu0 0.0
        %2158 = vmatprep.subr.mxu0 0.0
        %2159 = vmatpush1.msra.mxu0 0.0
        %2160 = vmatprep.subr.mxu0 0.0
        %2161 = vmatpush1.msra.mxu0 0.0
        %2162 = vmatprep.subr.mxu0 0.0
        %2163 = vmatpush1.msra.mxu0 0.0
        %2164 = vmatprep.subr.mxu0 0.0
        %2165 = vmatpush1.msra.mxu0 0.0
        %2166 = vmatprep.subr.mxu0 0.0
        %2167 = vmatpush1.msra.mxu0 0.0
        %2168 = vmatprep.subr.mxu0 0.0
        %2169 = vmatpush1.msra.mxu0 0.0
        %2170 = vmatprep.subr.mxu0 0.0
        %2171 = vmatpush1.msra.mxu0 0.0
        %2172 = vmatprep.subr.mxu0 0.0
        %2173 = vmatpush1.msra.mxu0 0.0
        %2174 = vmatprep.subr.mxu0 0.0
        %2175 = vmatpush1.msra.mxu0 0.0
        %2176 = vmatprep.subr.mxu0 0.0
        %2177 = vmatpush1.msra.mxu0 0.0
        %2178 = vmatprep.subr.mxu0 0.0
        %2179 = vmatpush1.msra.mxu0 0.0
        %2180 = vmatprep.subr.mxu0 0.0
        %2181 = vmatpush1.msra.mxu0 0.0
        %2182 = vmatprep.subr.mxu0 0.0
        %2183 = vmatpush1.msra.mxu0 0.0
        %2184 = vmatprep.subr.mxu0 0.0
        %2185 = vmatpush1.msra.mxu0 0.0
        %2186 = vmatprep.subr.mxu0 0.0
        %2187 = vmatpush1.msra.mxu0 0.0
        %2188 = vmatprep.subr.mxu0 0.0
        %2189 = vmatpush1.msra.mxu0 0.0
        %2190 = vmatprep.subr.mxu0 0.0
        %2191 = vmatpush1.msra.mxu0 0.0
        %2192 = vmatprep.subr.mxu0 0.0
        %2193 = vmatpush1.msra.mxu0 0.0
        %2194 = vmatprep.subr.mxu0 0.0
        %2195 = vmatpush1.msra.mxu0 0.0
        %2196 = vmatprep.subr.mxu0 0.0
        %2197 = vmatpush1.msra.mxu0 0.0
        %2198 = vmatprep.subr.mxu0 0.0
        %2199 = vmatpush1.msra.mxu0 0.0
        %2200 = vmatprep.subr.mxu0 0.0
        %2201 = vmatpush1.msra.mxu0 0.0
        %2202 = vmatprep.subr.mxu0 0.0
        %2203 = vmatpush1.msra.mxu0 0.0
        %2204 = vmatprep.subr.mxu0 0.0
        %2205 = vmatpush1.msra.mxu0 0.0
        %2206 = vmatprep.subr.mxu0 0.0
        %2207 = vmatpush1.msra.mxu0 0.0
        %2208 = vmatprep.subr.mxu0 0.0
        %2209 = vmatpush1.msra.mxu0 0.0
        %2210 = vmatprep.subr.mxu0 0.0
        %2211 = vmatpush1.msra.mxu0 0.0
        %2212 = vmatprep.subr.mxu0 0.0
        %2213 = vmatpush1.msra.mxu0 0.0
        %2214 = vmatprep.mubr.f32.mxu0 0.0
        %v2215 = vand.u32 %v1799, 4294901760
        %2216 = vmatmul.mubr.f32.gmra.mrb[0].mxu0 %v2215
        %v2217 = vpop.f32.mrb[0].mxu0
        %v2218 = vadd.f32 %v2133, %v2217
        %v2219 = vpop.f32.mrb[0].mxu0
        %2220 = vmatprep.mubr.f32.mxu0 0.0
        %v2221 = vand.u32 %v1802, 4294901760
        %2222 = vmatmul.mubr.f32.gmra.mrb[0].mxu0 %v2221
        %v2223 = vpop.f32.mrb[0].mxu0
        %v2224 = vadd.f32 %v2141, %v2223
        %v2225 = vpop.f32.mrb[0].mxu0
        %2226 = vdwg.mxu0
        %2227 = vmatprep.subr.mxu0 0.0
        %v2228 = vand.u32 %v1793, 4294901760
        %2229 = vmatpush1.msra.mxu0 %v2228
        %2230 = vmatprep.subr.mxu0 0.0
        %v2231 = vand.u32 %v1795, 4294901760
        %2232 = vmatpush1.msra.mxu0 %v2231
        %2233 = vmatprep.subr.mxu0 0.0
        %2234 = vmatpush1.msra.mxu0 0.0
        %2235 = vmatprep.subr.mxu0 0.0
        %2236 = vmatpush1.msra.mxu0 0.0
        %2237 = vmatprep.subr.mxu0 0.0
        %2238 = vmatpush1.msra.mxu0 0.0
        %2239 = vmatprep.subr.mxu0 0.0
        %2240 = vmatpush1.msra.mxu0 0.0
        %2241 = vmatprep.subr.mxu0 0.0
        %2242 = vmatpush1.msra.mxu0 0.0
        %2243 = vmatprep.subr.mxu0 0.0
        %2244 = vmatpush1.msra.mxu0 0.0
        %2245 = vmatprep.subr.mxu0 0.0
        %2246 = vmatpush1.msra.mxu0 0.0
        %2247 = vmatprep.subr.mxu0 0.0
        %2248 = vmatpush1.msra.mxu0 0.0
        %2249 = vmatprep.subr.mxu0 0.0
        %2250 = vmatpush1.msra.mxu0 0.0
        %2251 = vmatprep.subr.mxu0 0.0
        %2252 = vmatpush1.msra.mxu0 0.0
        %2253 = vmatprep.subr.mxu0 0.0
        %2254 = vmatpush1.msra.mxu0 0.0
        %2255 = vmatprep.subr.mxu0 0.0
        %2256 = vmatpush1.msra.mxu0 0.0
        %2257 = vmatprep.subr.mxu0 0.0
        %2258 = vmatpush1.msra.mxu0 0.0
        %2259 = vmatprep.subr.mxu0 0.0
        %2260 = vmatpush1.msra.mxu0 0.0
        %2261 = vmatprep.subr.mxu0 0.0
        %2262 = vmatpush1.msra.mxu0 0.0
        %2263 = vmatprep.subr.mxu0 0.0
        %2264 = vmatpush1.msra.mxu0 0.0
        %2265 = vmatprep.subr.mxu0 0.0
        %2266 = vmatpush1.msra.mxu0 0.0
        %2267 = vmatprep.subr.mxu0 0.0
        %2268 = vmatpush1.msra.mxu0 0.0
        %2269 = vmatprep.subr.mxu0 0.0
        %2270 = vmatpush1.msra.mxu0 0.0
        %2271 = vmatprep.subr.mxu0 0.0
        %2272 = vmatpush1.msra.mxu0 0.0
        %2273 = vmatprep.subr.mxu0 0.0
        %2274 = vmatpush1.msra.mxu0 0.0
        %2275 = vmatprep.subr.mxu0 0.0
        %2276 = vmatpush1.msra.mxu0 0.0
        %2277 = vmatprep.subr.mxu0 0.0
        %2278 = vmatpush1.msra.mxu0 0.0
        %2279 = vmatprep.subr.mxu0 0.0
        %2280 = vmatpush1.msra.mxu0 0.0
        %2281 = vmatprep.subr.mxu0 0.0
        %2282 = vmatpush1.msra.mxu0 0.0
        %2283 = vmatprep.subr.mxu0 0.0
        %2284 = vmatpush1.msra.mxu0 0.0
        %2285 = vmatprep.subr.mxu0 0.0
        %2286 = vmatpush1.msra.mxu0 0.0
        %2287 = vmatprep.subr.mxu0 0.0
        %2288 = vmatpush1.msra.mxu0 0.0
        %2289 = vmatprep.subr.mxu0 0.0
        %2290 = vmatpush1.msra.mxu0 0.0
        %2291 = vmatprep.subr.mxu0 0.0
        %2292 = vmatpush1.msra.mxu0 0.0
        %2293 = vmatprep.mubr.f32.mxu0 0.0
        %v2294 = vand.u32 %v1799, 4294901760
        %2295 = vmatmul.mubr.f32.gmra.mrb[0].mxu0 %v2294
        %v2296 = vpop.f32.mrb[0].mxu0
        %v2297 = vadd.f32 %v2218, %v2296
        %v2298 = vpop.f32.mrb[0].mxu0
        %2299 = vmatprep.mubr.f32.mxu0 0.0
        %v2300 = vand.u32 %v1802, 4294901760
        %2301 = vmatmul.mubr.f32.gmra.mrb[0].mxu0 %v2300
        %v2302 = vpop.f32.mrb[0].mxu0
        %v2303 = vadd.f32 %v2224, %v2302
        %v2304 = vpop.f32.mrb[0].mxu0
        %2305 = vdwg.mxu0
        %2306 = vst.msk [vmem:[%s177] sm:$0xff] %vm202, %v1783
        %2307 = vst.msk [vmem:[%s177 + $0x8] sm:$0xff] %vm202, %v1789
        %2308 = vst.msk [vmem:[%s177 + $0x10] sm:$0xff] %vm202, %v2297
        %2309 = vst.msk [vmem:[%s177 + $0x18] sm:$0xff] %vm202, %v2303
        %2310 = vrot.lane.b32.xlu0 %v184, 120
        %v2311 = vpop.permute.xlu0 %2310
        %2312 = vrot.lane.b32.xlu0 %v185, 120
        %v2313 = vpop.permute.xlu0 %2312
        %2314 = vrot.lane.b32.xlu0 %v180, 88
        %v2315 = vpop.permute.xlu0 %2314
        %2316 = vrot.lane.b32.xlu0 %v181, 88
        %v2317 = vpop.permute.xlu0 %2316
        %v2318 = vsel %vm202, %v2311, 0
        %v2320 = vsel %vm202, %v2313, 0
        %v2322 = vsel %vm202, %v2315, 0
        %v2324 = vsel %vm202, %v2317, 0
        %2326 = vmatprep.subr.mxu0 0.0
        %v2327 = vand.u32 %v2322, 4294901760
        %2328 = vmatpush1.xpose.msra.mxu0 %v2327
        %2329 = vmatprep.subr.mxu0 0.0
        %v2330 = vand.u32 %v2324, 4294901760
        %2331 = vmatpush1.xpose.msra.mxu0 %v2330
        %2332 = vmatprep.subr.mxu0 0.0
        %2333 = vmatpush1.xpose.msra.mxu0 0.0
        %2334 = vmatprep.subr.mxu0 0.0
        %2335 = vmatpush1.xpose.msra.mxu0 0.0
        %2336 = vmatprep.subr.mxu0 0.0
        %2337 = vmatpush1.xpose.msra.mxu0 0.0
        %2338 = vmatprep.subr.mxu0 0.0
        %2339 = vmatpush1.xpose.msra.mxu0 0.0
        %2340 = vmatprep.subr.mxu0 0.0
        %2341 = vmatpush1.xpose.msra.mxu0 0.0
        %2342 = vmatprep.subr.mxu0 0.0
        %2343 = vmatpush1.xpose.msra.mxu0 0.0
        %2344 = vmatprep.subr.mxu0 0.0
        %2345 = vmatpush1.xpose.msra.mxu0 0.0
        %2346 = vmatprep.subr.mxu0 0.0
        %2347 = vmatpush1.xpose.msra.mxu0 0.0
        %2348 = vmatprep.subr.mxu0 0.0
        %2349 = vmatpush1.xpose.msra.mxu0 0.0
        %2350 = vmatprep.subr.mxu0 0.0
        %2351 = vmatpush1.xpose.msra.mxu0 0.0
        %2352 = vmatprep.subr.mxu0 0.0
        %2353 = vmatpush1.xpose.msra.mxu0 0.0
        %2354 = vmatprep.subr.mxu0 0.0
        %2355 = vmatpush1.xpose.msra.mxu0 0.0
        %2356 = vmatprep.subr.mxu0 0.0
        %2357 = vmatpush1.xpose.msra.mxu0 0.0
        %2358 = vmatprep.subr.mxu0 0.0
        %2359 = vmatpush1.xpose.msra.mxu0 0.0
        %2360 = vmatprep.subr.mxu0 0.0
        %2361 = vmatpush1.xpose.msra.mxu0 0.0
        %2362 = vmatprep.subr.mxu0 0.0
        %2363 = vmatpush1.xpose.msra.mxu0 0.0
        %2364 = vmatprep.subr.mxu0 0.0
        %2365 = vmatpush1.xpose.msra.mxu0 0.0
        %2366 = vmatprep.subr.mxu0 0.0
        %2367 = vmatpush1.xpose.msra.mxu0 0.0
        %2368 = vmatprep.subr.mxu0 0.0
        %2369 = vmatpush1.xpose.msra.mxu0 0.0
        %2370 = vmatprep.subr.mxu0 0.0
        %2371 = vmatpush1.xpose.msra.mxu0 0.0
        %2372 = vmatprep.subr.mxu0 0.0
        %2373 = vmatpush1.xpose.msra.mxu0 0.0
        %2374 = vmatprep.subr.mxu0 0.0
        %2375 = vmatpush1.xpose.msra.mxu0 0.0
        %2376 = vmatprep.subr.mxu0 0.0
        %2377 = vmatpush1.xpose.msra.mxu0 0.0
        %2378 = vmatprep.subr.mxu0 0.0
        %2379 = vmatpush1.xpose.msra.mxu0 0.0
        %2380 = vmatprep.subr.mxu0 0.0
        %2381 = vmatpush1.xpose.msra.mxu0 0.0
        %2382 = vmatprep.subr.mxu0 0.0
        %2383 = vmatpush1.xpose.msra.mxu0 0.0
        %2384 = vmatprep.subr.mxu0 0.0
        %2385 = vmatpush1.xpose.msra.mxu0 0.0
        %2386 = vmatprep.subr.mxu0 0.0
        %2387 = vmatpush1.xpose.msra.mxu0 0.0
        %2388 = vmatprep.subr.mxu0 0.0
        %2389 = vmatpush1.xpose.msra.mxu0 0.0
        %2390 = vmatprep.subr.mxu0 0.0
        %2391 = vmatpush1.xpose.msra.mxu0 0.0
        %2392 = vmatprep.mubr.f32.mxu0 0.0
        %v2393 = vand.u32 %v2318, 4294901760
        %v2394 = vsub.f32 %v2318, %v2393
        %v2395 = vand.u32 %v2394, 4294901760
        %v2396 = vsub.f32 %v2394, %v2395
        %v2397 = vand.u32 %v2396, 4294901760
        %2398 = vmatmul.mubr.f32.gmra.mrb[0].mxu0 %v2397
        %v2399 = vpop.f32.mrb[0].mxu0
        %v2400 = vadd.f32 %v190, %v2399
        %v2401 = vpop.f32.mrb[0].mxu0
        %2402 = vmatprep.mubr.f32.mxu0 0.0
        %v2403 = vand.u32 %v2320, 4294901760
        %v2404 = vsub.f32 %v2320, %v2403
        %v2405 = vand.u32 %v2404, 4294901760
        %v2406 = vsub.f32 %v2404, %v2405
        %v2407 = vand.u32 %v2406, 4294901760
        %2408 = vmatmul.mubr.f32.gmra.mrb[0].mxu0 %v2407
        %v2409 = vpop.f32.mrb[0].mxu0
        %v2410 = vadd.f32 %v191, %v2409
        %v2411 = vpop.f32.mrb[0].mxu0
        %2412 = vdwg.mxu0
        %2413 = vmatprep.subr.mxu0 0.0
        %v2414 = vand.u32 %v2322, 4294901760
        %v2415 = vsub.f32 %v2322, %v2414
        %v2416 = vand.u32 %v2415, 4294901760
        %v2417 = vsub.f32 %v2415, %v2416
        %v2418 = vand.u32 %v2417, 4294901760
        %2419 = vmatpush1.xpose.msra.mxu0 %v2418
        %2420 = vmatprep.subr.mxu0 0.0
        %v2421 = vand.u32 %v2324, 4294901760
        %v2422 = vsub.f32 %v2324, %v2421
        %v2423 = vand.u32 %v2422, 4294901760
        %v2424 = vsub.f32 %v2422, %v2423
        %v2425 = vand.u32 %v2424, 4294901760
        %2426 = vmatpush1.xpose.msra.mxu0 %v2425
        %2427 = vmatprep.subr.mxu0 0.0
        %2428 = vmatpush1.xpose.msra.mxu0 0.0
        %2429 = vmatprep.subr.mxu0 0.0
        %2430 = vmatpush1.xpose.msra.mxu0 0.0
        %2431 = vmatprep.subr.mxu0 0.0
        %2432 = vmatpush1.xpose.msra.mxu0 0.0
        %2433 = vmatprep.subr.mxu0 0.0
        %2434 = vmatpush1.xpose.msra.mxu0 0.0
        %2435 = vmatprep.subr.mxu0 0.0
        %2436 = vmatpush1.xpose.msra.mxu0 0.0
        %2437 = vmatprep.subr.mxu0 0.0
        %2438 = vmatpush1.xpose.msra.mxu0 0.0
        %2439 = vmatprep.subr.mxu0 0.0
        %2440 = vmatpush1.xpose.msra.mxu0 0.0
        %2441 = vmatprep.subr.mxu0 0.0
        %2442 = vmatpush1.xpose.msra.mxu0 0.0
        %2443 = vmatprep.subr.mxu0 0.0
        %2444 = vmatpush1.xpose.msra.mxu0 0.0
        %2445 = vmatprep.subr.mxu0 0.0
        %2446 = vmatpush1.xpose.msra.mxu0 0.0
        %2447 = vmatprep.subr.mxu0 0.0
        %2448 = vmatpush1.xpose.msra.mxu0 0.0
        %2449 = vmatprep.subr.mxu0 0.0
        %2450 = vmatpush1.xpose.msra.mxu0 0.0
        %2451 = vmatprep.subr.mxu0 0.0
        %2452 = vmatpush1.xpose.msra.mxu0 0.0
        %2453 = vmatprep.subr.mxu0 0.0
        %2454 = vmatpush1.xpose.msra.mxu0 0.0
        %2455 = vmatprep.subr.mxu0 0.0
        %2456 = vmatpush1.xpose.msra.mxu0 0.0
        %2457 = vmatprep.subr.mxu0 0.0
        %2458 = vmatpush1.xpose.msra.mxu0 0.0
        %2459 = vmatprep.subr.mxu0 0.0
        %2460 = vmatpush1.xpose.msra.mxu0 0.0
        %2461 = vmatprep.subr.mxu0 0.0
        %2462 = vmatpush1.xpose.msra.mxu0 0.0
        %2463 = vmatprep.subr.mxu0 0.0
        %2464 = vmatpush1.xpose.msra.mxu0 0.0
        %2465 = vmatprep.subr.mxu0 0.0
        %2466 = vmatpush1.xpose.msra.mxu0 0.0
        %2467 = vmatprep.subr.mxu0 0.0
        %2468 = vmatpush1.xpose.msra.mxu0 0.0
        %2469 = vmatprep.subr.mxu0 0.0
        %2470 = vmatpush1.xpose.msra.mxu0 0.0
        %2471 = vmatprep.subr.mxu0 0.0
        %2472 = vmatpush1.xpose.msra.mxu0 0.0
        %2473 = vmatprep.subr.mxu0 0.0
        %2474 = vmatpush1.xpose.msra.mxu0 0.0
        %2475 = vmatprep.subr.mxu0 0.0
        %2476 = vmatpush1.xpose.msra.mxu0 0.0
        %2477 = vmatprep.subr.mxu0 0.0
        %2478 = vmatpush1.xpose.msra.mxu0 0.0
        %2479 = vmatprep.subr.mxu0 0.0
        %2480 = vmatpush1.xpose.msra.mxu0 0.0
        %2481 = vmatprep.subr.mxu0 0.0
        %2482 = vmatpush1.xpose.msra.mxu0 0.0
        %2483 = vmatprep.subr.mxu0 0.0
        %2484 = vmatpush1.xpose.msra.mxu0 0.0
        %2485 = vmatprep.subr.mxu0 0.0
        %2486 = vmatpush1.xpose.msra.mxu0 0.0
        %2487 = vmatprep.mubr.f32.mxu0 0.0
        %v2488 = vand.u32 %v2318, 4294901760
        %2489 = vmatmul.mubr.f32.gmra.mrb[0].mxu0 %v2488
        %v2490 = vpop.f32.mrb[0].mxu0
        %v2491 = vadd.f32 %v2400, %v2490
        %v2492 = vpop.f32.mrb[0].mxu0
        %2493 = vmatprep.mubr.f32.mxu0 0.0
        %v2494 = vand.u32 %v2320, 4294901760
        %2495 = vmatmul.mubr.f32.gmra.mrb[0].mxu0 %v2494
        %v2496 = vpop.f32.mrb[0].mxu0
        %v2497 = vadd.f32 %v2410, %v2496
        %v2498 = vpop.f32.mrb[0].mxu0
        %2499 = vdwg.mxu0
        %2500 = vmatprep.subr.mxu0 0.0
        %v2501 = vand.u32 %v2322, 4294901760
        %v2502 = vsub.f32 %v2322, %v2501
        %2503 = vmatpush1.xpose.msra.mxu0 %v2502
        %2504 = vmatprep.subr.mxu0 0.0
        %v2505 = vand.u32 %v2324, 4294901760
        %v2506 = vsub.f32 %v2324, %v2505
        %2507 = vmatpush1.xpose.msra.mxu0 %v2506
        %2508 = vmatprep.subr.mxu0 0.0
        %2509 = vmatpush1.xpose.msra.mxu0 0.0
        %2510 = vmatprep.subr.mxu0 0.0
        %2511 = vmatpush1.xpose.msra.mxu0 0.0
        %2512 = vmatprep.subr.mxu0 0.0
        %2513 = vmatpush1.xpose.msra.mxu0 0.0
        %2514 = vmatprep.subr.mxu0 0.0
        %2515 = vmatpush1.xpose.msra.mxu0 0.0
        %2516 = vmatprep.subr.mxu0 0.0
        %2517 = vmatpush1.xpose.msra.mxu0 0.0
        %2518 = vmatprep.subr.mxu0 0.0
        %2519 = vmatpush1.xpose.msra.mxu0 0.0
        %2520 = vmatprep.subr.mxu0 0.0
        %2521 = vmatpush1.xpose.msra.mxu0 0.0
        %2522 = vmatprep.subr.mxu0 0.0
        %2523 = vmatpush1.xpose.msra.mxu0 0.0
        %2524 = vmatprep.subr.mxu0 0.0
        %2525 = vmatpush1.xpose.msra.mxu0 0.0
        %2526 = vmatprep.subr.mxu0 0.0
        %2527 = vmatpush1.xpose.msra.mxu0 0.0
        %2528 = vmatprep.subr.mxu0 0.0
        %2529 = vmatpush1.xpose.msra.mxu0 0.0
        %2530 = vmatprep.subr.mxu0 0.0
        %2531 = vmatpush1.xpose.msra.mxu0 0.0
        %2532 = vmatprep.subr.mxu0 0.0
        %2533 = vmatpush1.xpose.msra.mxu0 0.0
        %2534 = vmatprep.subr.mxu0 0.0
        %2535 = vmatpush1.xpose.msra.mxu0 0.0
        %2536 = vmatprep.subr.mxu0 0.0
        %2537 = vmatpush1.xpose.msra.mxu0 0.0
        %2538 = vmatprep.subr.mxu0 0.0
        %2539 = vmatpush1.xpose.msra.mxu0 0.0
        %2540 = vmatprep.subr.mxu0 0.0
        %2541 = vmatpush1.xpose.msra.mxu0 0.0
        %2542 = vmatprep.subr.mxu0 0.0
        %2543 = vmatpush1.xpose.msra.mxu0 0.0
        %2544 = vmatprep.subr.mxu0 0.0
        %2545 = vmatpush1.xpose.msra.mxu0 0.0
        %2546 = vmatprep.subr.mxu0 0.0
        %2547 = vmatpush1.xpose.msra.mxu0 0.0
        %2548 = vmatprep.subr.mxu0 0.0
        %2549 = vmatpush1.xpose.msra.mxu0 0.0
        %2550 = vmatprep.subr.mxu0 0.0
        %2551 = vmatpush1.xpose.msra.mxu0 0.0
        %2552 = vmatprep.subr.mxu0 0.0
        %2553 = vmatpush1.xpose.msra.mxu0 0.0
        %2554 = vmatprep.subr.mxu0 0.0
        %2555 = vmatpush1.xpose.msra.mxu0 0.0
        %2556 = vmatprep.subr.mxu0 0.0
        %2557 = vmatpush1.xpose.msra.mxu0 0.0
        %2558 = vmatprep.subr.mxu0 0.0
        %2559 = vmatpush1.xpose.msra.mxu0 0.0
        %2560 = vmatprep.subr.mxu0 0.0
        %2561 = vmatpush1.xpose.msra.mxu0 0.0
        %2562 = vmatprep.subr.mxu0 0.0
        %2563 = vmatpush1.xpose.msra.mxu0 0.0
        %2564 = vmatprep.subr.mxu0 0.0
        %2565 = vmatpush1.xpose.msra.mxu0 0.0
        %2566 = vmatprep.subr.mxu0 0.0
        %2567 = vmatpush1.xpose.msra.mxu0 0.0
        %2568 = vmatprep.mubr.f32.mxu0 0.0
        %v2569 = vand.u32 %v2318, 4294901760
        %v2570 = vsub.f32 %v2318, %v2569
        %2571 = vmatmul.mubr.f32.gmra.mrb[0].mxu0 %v2570
        %v2572 = vpop.f32.mrb[0].mxu0
        %v2573 = vadd.f32 %v2491, %v2572
        %v2574 = vpop.f32.mrb[0].mxu0
        %2575 = vmatprep.mubr.f32.mxu0 0.0
        %v2576 = vand.u32 %v2320, 4294901760
        %v2577 = vsub.f32 %v2320, %v2576
        %2578 = vmatmul.mubr.f32.gmra.mrb[0].mxu0 %v2577
        %v2579 = vpop.f32.mrb[0].mxu0
        %v2580 = vadd.f32 %v2497, %v2579
        %v2581 = vpop.f32.mrb[0].mxu0
        %2582 = vdwg.mxu0
        %2583 = vmatprep.subr.mxu0 0.0
        %v2584 = vand.u32 %v2322, 4294901760
        %2585 = vmatpush1.xpose.msra.mxu0 %v2584
        %2586 = vmatprep.subr.mxu0 0.0
        %v2587 = vand.u32 %v2324, 4294901760
        %2588 = vmatpush1.xpose.msra.mxu0 %v2587
        %2589 = vmatprep.subr.mxu0 0.0
        %2590 = vmatpush1.xpose.msra.mxu0 0.0
        %2591 = vmatprep.subr.mxu0 0.0
        %2592 = vmatpush1.xpose.msra.mxu0 0.0
        %2593 = vmatprep.subr.mxu0 0.0
        %2594 = vmatpush1.xpose.msra.mxu0 0.0
        %2595 = vmatprep.subr.mxu0 0.0
        %2596 = vmatpush1.xpose.msra.mxu0 0.0
        %2597 = vmatprep.subr.mxu0 0.0
        %2598 = vmatpush1.xpose.msra.mxu0 0.0
        %2599 = vmatprep.subr.mxu0 0.0
        %2600 = vmatpush1.xpose.msra.mxu0 0.0
        %2601 = vmatprep.subr.mxu0 0.0
        %2602 = vmatpush1.xpose.msra.mxu0 0.0
        %2603 = vmatprep.subr.mxu0 0.0
        %2604 = vmatpush1.xpose.msra.mxu0 0.0
        %2605 = vmatprep.subr.mxu0 0.0
        %2606 = vmatpush1.xpose.msra.mxu0 0.0
        %2607 = vmatprep.subr.mxu0 0.0
        %2608 = vmatpush1.xpose.msra.mxu0 0.0
        %2609 = vmatprep.subr.mxu0 0.0
        %2610 = vmatpush1.xpose.msra.mxu0 0.0
        %2611 = vmatprep.subr.mxu0 0.0
        %2612 = vmatpush1.xpose.msra.mxu0 0.0
        %2613 = vmatprep.subr.mxu0 0.0
        %2614 = vmatpush1.xpose.msra.mxu0 0.0
        %2615 = vmatprep.subr.mxu0 0.0
        %2616 = vmatpush1.xpose.msra.mxu0 0.0
        %2617 = vmatprep.subr.mxu0 0.0
        %2618 = vmatpush1.xpose.msra.mxu0 0.0
        %2619 = vmatprep.subr.mxu0 0.0
        %2620 = vmatpush1.xpose.msra.mxu0 0.0
        %2621 = vmatprep.subr.mxu0 0.0
        %2622 = vmatpush1.xpose.msra.mxu0 0.0
        %2623 = vmatprep.subr.mxu0 0.0
        %2624 = vmatpush1.xpose.msra.mxu0 0.0
        %2625 = vmatprep.subr.mxu0 0.0
        %2626 = vmatpush1.xpose.msra.mxu0 0.0
        %2627 = vmatprep.subr.mxu0 0.0
        %2628 = vmatpush1.xpose.msra.mxu0 0.0
        %2629 = vmatprep.subr.mxu0 0.0
        %2630 = vmatpush1.xpose.msra.mxu0 0.0
        %2631 = vmatprep.subr.mxu0 0.0
        %2632 = vmatpush1.xpose.msra.mxu0 0.0
        %2633 = vmatprep.subr.mxu0 0.0
        %2634 = vmatpush1.xpose.msra.mxu0 0.0
        %2635 = vmatprep.subr.mxu0 0.0
        %2636 = vmatpush1.xpose.msra.mxu0 0.0
        %2637 = vmatprep.subr.mxu0 0.0
        %2638 = vmatpush1.xpose.msra.mxu0 0.0
        %2639 = vmatprep.subr.mxu0 0.0
        %2640 = vmatpush1.xpose.msra.mxu0 0.0
        %2641 = vmatprep.subr.mxu0 0.0
        %2642 = vmatpush1.xpose.msra.mxu0 0.0
        %2643 = vmatprep.subr.mxu0 0.0
        %2644 = vmatpush1.xpose.msra.mxu0 0.0
        %2645 = vmatprep.subr.mxu0 0.0
        %2646 = vmatpush1.xpose.msra.mxu0 0.0
        %2647 = vmatprep.subr.mxu0 0.0
        %2648 = vmatpush1.xpose.msra.mxu0 0.0
        %2649 = vmatprep.mubr.f32.mxu0 0.0
        %v2650 = vand.u32 %v2318, 4294901760
        %v2651 = vsub.f32 %v2318, %v2650
        %v2652 = vand.u32 %v2651, 4294901760
        %2653 = vmatmul.mubr.f32.gmra.mrb[0].mxu0 %v2652
        %v2654 = vpop.f32.mrb[0].mxu0
        %v2655 = vadd.f32 %v2573, %v2654
        %v2656 = vpop.f32.mrb[0].mxu0
        %2657 = vmatprep.mubr.f32.mxu0 0.0
        %v2658 = vand.u32 %v2320, 4294901760
        %v2659 = vsub.f32 %v2320, %v2658
        %v2660 = vand.u32 %v2659, 4294901760
        %2661 = vmatmul.mubr.f32.gmra.mrb[0].mxu0 %v2660
        %v2662 = vpop.f32.mrb[0].mxu0
        %v2663 = vadd.f32 %v2580, %v2662
        %v2664 = vpop.f32.mrb[0].mxu0
        %2665 = vdwg.mxu0
        %2666 = vmatprep.subr.mxu0 0.0
        %v2667 = vand.u32 %v2322, 4294901760
        %v2668 = vsub.f32 %v2322, %v2667
        %v2669 = vand.u32 %v2668, 4294901760
        %2670 = vmatpush1.xpose.msra.mxu0 %v2669
        %2671 = vmatprep.subr.mxu0 0.0
        %v2672 = vand.u32 %v2324, 4294901760
        %v2673 = vsub.f32 %v2324, %v2672
        %v2674 = vand.u32 %v2673, 4294901760
        %2675 = vmatpush1.xpose.msra.mxu0 %v2674
        %2676 = vmatprep.subr.mxu0 0.0
        %2677 = vmatpush1.xpose.msra.mxu0 0.0
        %2678 = vmatprep.subr.mxu0 0.0
        %2679 = vmatpush1.xpose.msra.mxu0 0.0
        %2680 = vmatprep.subr.mxu0 0.0
        %2681 = vmatpush1.xpose.msra.mxu0 0.0
        %2682 = vmatprep.subr.mxu0 0.0
        %2683 = vmatpush1.xpose.msra.mxu0 0.0
        %2684 = vmatprep.subr.mxu0 0.0
        %2685 = vmatpush1.xpose.msra.mxu0 0.0
        %2686 = vmatprep.subr.mxu0 0.0
        %2687 = vmatpush1.xpose.msra.mxu0 0.0
        %2688 = vmatprep.subr.mxu0 0.0
        %2689 = vmatpush1.xpose.msra.mxu0 0.0
        %2690 = vmatprep.subr.mxu0 0.0
        %2691 = vmatpush1.xpose.msra.mxu0 0.0
        %2692 = vmatprep.subr.mxu0 0.0
        %2693 = vmatpush1.xpose.msra.mxu0 0.0
        %2694 = vmatprep.subr.mxu0 0.0
        %2695 = vmatpush1.xpose.msra.mxu0 0.0
        %2696 = vmatprep.subr.mxu0 0.0
        %2697 = vmatpush1.xpose.msra.mxu0 0.0
        %2698 = vmatprep.subr.mxu0 0.0
        %2699 = vmatpush1.xpose.msra.mxu0 0.0
        %2700 = vmatprep.subr.mxu0 0.0
        %2701 = vmatpush1.xpose.msra.mxu0 0.0
        %2702 = vmatprep.subr.mxu0 0.0
        %2703 = vmatpush1.xpose.msra.mxu0 0.0
        %2704 = vmatprep.subr.mxu0 0.0
        %2705 = vmatpush1.xpose.msra.mxu0 0.0
        %2706 = vmatprep.subr.mxu0 0.0
        %2707 = vmatpush1.xpose.msra.mxu0 0.0
        %2708 = vmatprep.subr.mxu0 0.0
        %2709 = vmatpush1.xpose.msra.mxu0 0.0
        %2710 = vmatprep.subr.mxu0 0.0
        %2711 = vmatpush1.xpose.msra.mxu0 0.0
        %2712 = vmatprep.subr.mxu0 0.0
        %2713 = vmatpush1.xpose.msra.mxu0 0.0
        %2714 = vmatprep.subr.mxu0 0.0
        %2715 = vmatpush1.xpose.msra.mxu0 0.0
        %2716 = vmatprep.subr.mxu0 0.0
        %2717 = vmatpush1.xpose.msra.mxu0 0.0
        %2718 = vmatprep.subr.mxu0 0.0
        %2719 = vmatpush1.xpose.msra.mxu0 0.0
        %2720 = vmatprep.subr.mxu0 0.0
        %2721 = vmatpush1.xpose.msra.mxu0 0.0
        %2722 = vmatprep.subr.mxu0 0.0
        %2723 = vmatpush1.xpose.msra.mxu0 0.0
        %2724 = vmatprep.subr.mxu0 0.0
        %2725 = vmatpush1.xpose.msra.mxu0 0.0
        %2726 = vmatprep.subr.mxu0 0.0
        %2727 = vmatpush1.xpose.msra.mxu0 0.0
        %2728 = vmatprep.subr.mxu0 0.0
        %2729 = vmatpush1.xpose.msra.mxu0 0.0
        %2730 = vmatprep.subr.mxu0 0.0
        %2731 = vmatpush1.xpose.msra.mxu0 0.0
        %2732 = vmatprep.subr.mxu0 0.0
        %2733 = vmatpush1.xpose.msra.mxu0 0.0
        %2734 = vmatprep.subr.mxu0 0.0
        %2735 = vmatpush1.xpose.msra.mxu0 0.0
        %2736 = vmatprep.mubr.f32.mxu0 0.0
        %v2737 = vand.u32 %v2318, 4294901760
        %2738 = vmatmul.mubr.f32.gmra.mrb[0].mxu0 %v2737
        %v2739 = vpop.f32.mrb[0].mxu0
        %v2740 = vadd.f32 %v2655, %v2739
        %v2741 = vpop.f32.mrb[0].mxu0
        %2742 = vmatprep.mubr.f32.mxu0 0.0
        %v2743 = vand.u32 %v2320, 4294901760
        %2744 = vmatmul.mubr.f32.gmra.mrb[0].mxu0 %v2743
        %v2745 = vpop.f32.mrb[0].mxu0
        %v2746 = vadd.f32 %v2663, %v2745
        %v2747 = vpop.f32.mrb[0].mxu0
        %2748 = vdwg.mxu0
        %2749 = vmatprep.subr.mxu0 0.0
        %v2750 = vand.u32 %v2322, 4294901760
        %2751 = vmatpush1.xpose.msra.mxu0 %v2750
        %2752 = vmatprep.subr.mxu0 0.0
        %v2753 = vand.u32 %v2324, 4294901760
        %2754 = vmatpush1.xpose.msra.mxu0 %v2753
        %2755 = vmatprep.subr.mxu0 0.0
        %2756 = vmatpush1.xpose.msra.mxu0 0.0
        %2757 = vmatprep.subr.mxu0 0.0
        %2758 = vmatpush1.xpose.msra.mxu0 0.0
        %2759 = vmatprep.subr.mxu0 0.0
        %2760 = vmatpush1.xpose.msra.mxu0 0.0
        %2761 = vmatprep.subr.mxu0 0.0
        %2762 = vmatpush1.xpose.msra.mxu0 0.0
        %2763 = vmatprep.subr.mxu0 0.0
        %2764 = vmatpush1.xpose.msra.mxu0 0.0
        %2765 = vmatprep.subr.mxu0 0.0
        %2766 = vmatpush1.xpose.msra.mxu0 0.0
        %2767 = vmatprep.subr.mxu0 0.0
        %2768 = vmatpush1.xpose.msra.mxu0 0.0
        %2769 = vmatprep.subr.mxu0 0.0
        %2770 = vmatpush1.xpose.msra.mxu0 0.0
        %2771 = vmatprep.subr.mxu0 0.0
        %2772 = vmatpush1.xpose.msra.mxu0 0.0
        %2773 = vmatprep.subr.mxu0 0.0
        %2774 = vmatpush1.xpose.msra.mxu0 0.0
        %2775 = vmatprep.subr.mxu0 0.0
        %2776 = vmatpush1.xpose.msra.mxu0 0.0
        %2777 = vmatprep.subr.mxu0 0.0
        %2778 = vmatpush1.xpose.msra.mxu0 0.0
        %2779 = vmatprep.subr.mxu0 0.0
        %2780 = vmatpush1.xpose.msra.mxu0 0.0
        %2781 = vmatprep.subr.mxu0 0.0
        %2782 = vmatpush1.xpose.msra.mxu0 0.0
        %2783 = vmatprep.subr.mxu0 0.0
        %2784 = vmatpush1.xpose.msra.mxu0 0.0
        %2785 = vmatprep.subr.mxu0 0.0
        %2786 = vmatpush1.xpose.msra.mxu0 0.0
        %2787 = vmatprep.subr.mxu0 0.0
        %2788 = vmatpush1.xpose.msra.mxu0 0.0
        %2789 = vmatprep.subr.mxu0 0.0
        %2790 = vmatpush1.xpose.msra.mxu0 0.0
        %2791 = vmatprep.subr.mxu0 0.0
        %2792 = vmatpush1.xpose.msra.mxu0 0.0
        %2793 = vmatprep.subr.mxu0 0.0
        %2794 = vmatpush1.xpose.msra.mxu0 0.0
        %2795 = vmatprep.subr.mxu0 0.0
        %2796 = vmatpush1.xpose.msra.mxu0 0.0
        %2797 = vmatprep.subr.mxu0 0.0
        %2798 = vmatpush1.xpose.msra.mxu0 0.0
        %2799 = vmatprep.subr.mxu0 0.0
        %2800 = vmatpush1.xpose.msra.mxu0 0.0
        %2801 = vmatprep.subr.mxu0 0.0
        %2802 = vmatpush1.xpose.msra.mxu0 0.0
        %2803 = vmatprep.subr.mxu0 0.0
        %2804 = vmatpush1.xpose.msra.mxu0 0.0
        %2805 = vmatprep.subr.mxu0 0.0
        %2806 = vmatpush1.xpose.msra.mxu0 0.0
        %2807 = vmatprep.subr.mxu0 0.0
        %2808 = vmatpush1.xpose.msra.mxu0 0.0
        %2809 = vmatprep.subr.mxu0 0.0
        %2810 = vmatpush1.xpose.msra.mxu0 0.0
        %2811 = vmatprep.subr.mxu0 0.0
        %2812 = vmatpush1.xpose.msra.mxu0 0.0
        %2813 = vmatprep.subr.mxu0 0.0
        %2814 = vmatpush1.xpose.msra.mxu0 0.0
        %2815 = vmatprep.mubr.f32.mxu0 0.0
        %v2816 = vand.u32 %v2318, 4294901760
        %2817 = vmatmul.mubr.f32.gmra.mrb[0].mxu0 %v2816
        %v2818 = vpop.f32.mrb[0].mxu0
        %v2819 = vadd.f32 %v2740, %v2818
        %v2820 = vpop.f32.mrb[0].mxu0
        %2821 = vmatprep.mubr.f32.mxu0 0.0
        %v2822 = vand.u32 %v2320, 4294901760
        %2823 = vmatmul.mubr.f32.gmra.mrb[0].mxu0 %v2822
        %v2824 = vpop.f32.mrb[0].mxu0
        %v2825 = vadd.f32 %v2746, %v2824
        %v2826 = vpop.f32.mrb[0].mxu0
        %2827 = vdwg.mxu0
        %2828 = vrot.lane.b32.xlu0 %v186, 120
        %v2829 = vpop.permute.xlu0 %2828
        %2830 = vrot.lane.b32.xlu0 %v187, 120
        %v2831 = vpop.permute.xlu0 %2830
        %2832 = vrot.lane.b32.xlu0 %v182, 88
        %v2833 = vpop.permute.xlu0 %2832
        %2834 = vrot.lane.b32.xlu0 %v183, 88
        %v2835 = vpop.permute.xlu0 %2834
        %v2836 = vsel %vm202, %v2829, 0
        %v2838 = vsel %vm202, %v2831, 0
        %v2840 = vsel %vm202, %v2833, 0
        %v2842 = vsel %vm202, %v2835, 0
        %2844 = vmatprep.subr.mxu0 0.0
        %v2845 = vand.u32 %v2840, 4294901760
        %2846 = vmatpush1.xpose.msra.mxu0 %v2845
        %2847 = vmatprep.subr.mxu0 0.0
        %v2848 = vand.u32 %v2842, 4294901760
        %2849 = vmatpush1.xpose.msra.mxu0 %v2848
        %2850 = vmatprep.subr.mxu0 0.0
        %2851 = vmatpush1.xpose.msra.mxu0 0.0
        %2852 = vmatprep.subr.mxu0 0.0
        %2853 = vmatpush1.xpose.msra.mxu0 0.0
        %2854 = vmatprep.subr.mxu0 0.0
        %2855 = vmatpush1.xpose.msra.mxu0 0.0
        %2856 = vmatprep.subr.mxu0 0.0
        %2857 = vmatpush1.xpose.msra.mxu0 0.0
        %2858 = vmatprep.subr.mxu0 0.0
        %2859 = vmatpush1.xpose.msra.mxu0 0.0
        %2860 = vmatprep.subr.mxu0 0.0
        %2861 = vmatpush1.xpose.msra.mxu0 0.0
        %2862 = vmatprep.subr.mxu0 0.0
        %2863 = vmatpush1.xpose.msra.mxu0 0.0
        %2864 = vmatprep.subr.mxu0 0.0
        %2865 = vmatpush1.xpose.msra.mxu0 0.0
        %2866 = vmatprep.subr.mxu0 0.0
        %2867 = vmatpush1.xpose.msra.mxu0 0.0
        %2868 = vmatprep.subr.mxu0 0.0
        %2869 = vmatpush1.xpose.msra.mxu0 0.0
        %2870 = vmatprep.subr.mxu0 0.0
        %2871 = vmatpush1.xpose.msra.mxu0 0.0
        %2872 = vmatprep.subr.mxu0 0.0
        %2873 = vmatpush1.xpose.msra.mxu0 0.0
        %2874 = vmatprep.subr.mxu0 0.0
        %2875 = vmatpush1.xpose.msra.mxu0 0.0
        %2876 = vmatprep.subr.mxu0 0.0
        %2877 = vmatpush1.xpose.msra.mxu0 0.0
        %2878 = vmatprep.subr.mxu0 0.0
        %2879 = vmatpush1.xpose.msra.mxu0 0.0
        %2880 = vmatprep.subr.mxu0 0.0
        %2881 = vmatpush1.xpose.msra.mxu0 0.0
        %2882 = vmatprep.subr.mxu0 0.0
        %2883 = vmatpush1.xpose.msra.mxu0 0.0
        %2884 = vmatprep.subr.mxu0 0.0
        %2885 = vmatpush1.xpose.msra.mxu0 0.0
        %2886 = vmatprep.subr.mxu0 0.0
        %2887 = vmatpush1.xpose.msra.mxu0 0.0
        %2888 = vmatprep.subr.mxu0 0.0
        %2889 = vmatpush1.xpose.msra.mxu0 0.0
        %2890 = vmatprep.subr.mxu0 0.0
        %2891 = vmatpush1.xpose.msra.mxu0 0.0
        %2892 = vmatprep.subr.mxu0 0.0
        %2893 = vmatpush1.xpose.msra.mxu0 0.0
        %2894 = vmatprep.subr.mxu0 0.0
        %2895 = vmatpush1.xpose.msra.mxu0 0.0
        %2896 = vmatprep.subr.mxu0 0.0
        %2897 = vmatpush1.xpose.msra.mxu0 0.0
        %2898 = vmatprep.subr.mxu0 0.0
        %2899 = vmatpush1.xpose.msra.mxu0 0.0
        %2900 = vmatprep.subr.mxu0 0.0
        %2901 = vmatpush1.xpose.msra.mxu0 0.0
        %2902 = vmatprep.subr.mxu0 0.0
        %2903 = vmatpush1.xpose.msra.mxu0 0.0
        %2904 = vmatprep.subr.mxu0 0.0
        %2905 = vmatpush1.xpose.msra.mxu0 0.0
        %2906 = vmatprep.subr.mxu0 0.0
        %2907 = vmatpush1.xpose.msra.mxu0 0.0
        %2908 = vmatprep.subr.mxu0 0.0
        %2909 = vmatpush1.xpose.msra.mxu0 0.0
        %2910 = vmatprep.mubr.f32.mxu0 0.0
        %v2911 = vand.u32 %v2836, 4294901760
        %v2912 = vsub.f32 %v2836, %v2911
        %v2913 = vand.u32 %v2912, 4294901760
        %v2914 = vsub.f32 %v2912, %v2913
        %v2915 = vand.u32 %v2914, 4294901760
        %2916 = vmatmul.mubr.f32.gmra.mrb[0].mxu0 %v2915
        %v2917 = vpop.f32.mrb[0].mxu0
        %v2918 = vadd.f32 %v190, %v2917
        %v2919 = vpop.f32.mrb[0].mxu0
        %2920 = vmatprep.mubr.f32.mxu0 0.0
        %v2921 = vand.u32 %v2838, 4294901760
        %v2922 = vsub.f32 %v2838, %v2921
        %v2923 = vand.u32 %v2922, 4294901760
        %v2924 = vsub.f32 %v2922, %v2923
        %v2925 = vand.u32 %v2924, 4294901760
        %2926 = vmatmul.mubr.f32.gmra.mrb[0].mxu0 %v2925
        %v2927 = vpop.f32.mrb[0].mxu0
        %v2928 = vadd.f32 %v191, %v2927
        %v2929 = vpop.f32.mrb[0].mxu0
        %2930 = vdwg.mxu0
        %2931 = vmatprep.subr.mxu0 0.0
        %v2932 = vand.u32 %v2840, 4294901760
        %v2933 = vsub.f32 %v2840, %v2932
        %v2934 = vand.u32 %v2933, 4294901760
        %v2935 = vsub.f32 %v2933, %v2934
        %v2936 = vand.u32 %v2935, 4294901760
        %2937 = vmatpush1.xpose.msra.mxu0 %v2936
        %2938 = vmatprep.subr.mxu0 0.0
        %v2939 = vand.u32 %v2842, 4294901760
        %v2940 = vsub.f32 %v2842, %v2939
        %v2941 = vand.u32 %v2940, 4294901760
        %v2942 = vsub.f32 %v2940, %v2941
        %v2943 = vand.u32 %v2942, 4294901760
        %2944 = vmatpush1.xpose.msra.mxu0 %v2943
        %2945 = vmatprep.subr.mxu0 0.0
        %2946 = vmatpush1.xpose.msra.mxu0 0.0
        %2947 = vmatprep.subr.mxu0 0.0
        %2948 = vmatpush1.xpose.msra.mxu0 0.0
        %2949 = vmatprep.subr.mxu0 0.0
        %2950 = vmatpush1.xpose.msra.mxu0 0.0
        %2951 = vmatprep.subr.mxu0 0.0
        %2952 = vmatpush1.xpose.msra.mxu0 0.0
        %2953 = vmatprep.subr.mxu0 0.0
        %2954 = vmatpush1.xpose.msra.mxu0 0.0
        %2955 = vmatprep.subr.mxu0 0.0
        %2956 = vmatpush1.xpose.msra.mxu0 0.0
        %2957 = vmatprep.subr.mxu0 0.0
        %2958 = vmatpush1.xpose.msra.mxu0 0.0
        %2959 = vmatprep.subr.mxu0 0.0
        %2960 = vmatpush1.xpose.msra.mxu0 0.0
        %2961 = vmatprep.subr.mxu0 0.0
        %2962 = vmatpush1.xpose.msra.mxu0 0.0
        %2963 = vmatprep.subr.mxu0 0.0
        %2964 = vmatpush1.xpose.msra.mxu0 0.0
        %2965 = vmatprep.subr.mxu0 0.0
        %2966 = vmatpush1.xpose.msra.mxu0 0.0
        %2967 = vmatprep.subr.mxu0 0.0
        %2968 = vmatpush1.xpose.msra.mxu0 0.0
        %2969 = vmatprep.subr.mxu0 0.0
        %2970 = vmatpush1.xpose.msra.mxu0 0.0
        %2971 = vmatprep.subr.mxu0 0.0
        %2972 = vmatpush1.xpose.msra.mxu0 0.0
        %2973 = vmatprep.subr.mxu0 0.0
        %2974 = vmatpush1.xpose.msra.mxu0 0.0
        %2975 = vmatprep.subr.mxu0 0.0
        %2976 = vmatpush1.xpose.msra.mxu0 0.0
        %2977 = vmatprep.subr.mxu0 0.0
        %2978 = vmatpush1.xpose.msra.mxu0 0.0
        %2979 = vmatprep.subr.mxu0 0.0
        %2980 = vmatpush1.xpose.msra.mxu0 0.0
        %2981 = vmatprep.subr.mxu0 0.0
        %2982 = vmatpush1.xpose.msra.mxu0 0.0
        %2983 = vmatprep.subr.mxu0 0.0
        %2984 = vmatpush1.xpose.msra.mxu0 0.0
        %2985 = vmatprep.subr.mxu0 0.0
        %2986 = vmatpush1.xpose.msra.mxu0 0.0
        %2987 = vmatprep.subr.mxu0 0.0
        %2988 = vmatpush1.xpose.msra.mxu0 0.0
        %2989 = vmatprep.subr.mxu0 0.0
        %2990 = vmatpush1.xpose.msra.mxu0 0.0
        %2991 = vmatprep.subr.mxu0 0.0
        %2992 = vmatpush1.xpose.msra.mxu0 0.0
        %2993 = vmatprep.subr.mxu0 0.0
        %2994 = vmatpush1.xpose.msra.mxu0 0.0
        %2995 = vmatprep.subr.mxu0 0.0
        %2996 = vmatpush1.xpose.msra.mxu0 0.0
        %2997 = vmatprep.subr.mxu0 0.0
        %2998 = vmatpush1.xpose.msra.mxu0 0.0
        %2999 = vmatprep.subr.mxu0 0.0
        %3000 = vmatpush1.xpose.msra.mxu0 0.0
        %3001 = vmatprep.subr.mxu0 0.0
        %3002 = vmatpush1.xpose.msra.mxu0 0.0
        %3003 = vmatprep.subr.mxu0 0.0
        %3004 = vmatpush1.xpose.msra.mxu0 0.0
        %3005 = vmatprep.mubr.f32.mxu0 0.0
        %v3006 = vand.u32 %v2836, 4294901760
        %3007 = vmatmul.mubr.f32.gmra.mrb[0].mxu0 %v3006
        %v3008 = vpop.f32.mrb[0].mxu0
        %v3009 = vadd.f32 %v2918, %v3008
        %v3010 = vpop.f32.mrb[0].mxu0
        %3011 = vmatprep.mubr.f32.mxu0 0.0
        %v3012 = vand.u32 %v2838, 4294901760
        %3013 = vmatmul.mubr.f32.gmra.mrb[0].mxu0 %v3012
        %v3014 = vpop.f32.mrb[0].mxu0
        %v3015 = vadd.f32 %v2928, %v3014
        %v3016 = vpop.f32.mrb[0].mxu0
        %3017 = vdwg.mxu0
        %3018 = vmatprep.subr.mxu0 0.0
        %v3019 = vand.u32 %v2840, 4294901760
        %v3020 = vsub.f32 %v2840, %v3019
        %3021 = vmatpush1.xpose.msra.mxu0 %v3020
        %3022 = vmatprep.subr.mxu0 0.0
        %v3023 = vand.u32 %v2842, 4294901760
        %v3024 = vsub.f32 %v2842, %v3023
        %3025 = vmatpush1.xpose.msra.mxu0 %v3024
        %3026 = vmatprep.subr.mxu0 0.0
        %3027 = vmatpush1.xpose.msra.mxu0 0.0
        %3028 = vmatprep.subr.mxu0 0.0
        %3029 = vmatpush1.xpose.msra.mxu0 0.0
        %3030 = vmatprep.subr.mxu0 0.0
        %3031 = vmatpush1.xpose.msra.mxu0 0.0
        %3032 = vmatprep.subr.mxu0 0.0
        %3033 = vmatpush1.xpose.msra.mxu0 0.0
        %3034 = vmatprep.subr.mxu0 0.0
        %3035 = vmatpush1.xpose.msra.mxu0 0.0
        %3036 = vmatprep.subr.mxu0 0.0
        %3037 = vmatpush1.xpose.msra.mxu0 0.0
        %3038 = vmatprep.subr.mxu0 0.0
        %3039 = vmatpush1.xpose.msra.mxu0 0.0
        %3040 = vmatprep.subr.mxu0 0.0
        %3041 = vmatpush1.xpose.msra.mxu0 0.0
        %3042 = vmatprep.subr.mxu0 0.0
        %3043 = vmatpush1.xpose.msra.mxu0 0.0
        %3044 = vmatprep.subr.mxu0 0.0
        %3045 = vmatpush1.xpose.msra.mxu0 0.0
        %3046 = vmatprep.subr.mxu0 0.0
        %3047 = vmatpush1.xpose.msra.mxu0 0.0
        %3048 = vmatprep.subr.mxu0 0.0
        %3049 = vmatpush1.xpose.msra.mxu0 0.0
        %3050 = vmatprep.subr.mxu0 0.0
        %3051 = vmatpush1.xpose.msra.mxu0 0.0
        %3052 = vmatprep.subr.mxu0 0.0
        %3053 = vmatpush1.xpose.msra.mxu0 0.0
        %3054 = vmatprep.subr.mxu0 0.0
        %3055 = vmatpush1.xpose.msra.mxu0 0.0
        %3056 = vmatprep.subr.mxu0 0.0
        %3057 = vmatpush1.xpose.msra.mxu0 0.0
        %3058 = vmatprep.subr.mxu0 0.0
        %3059 = vmatpush1.xpose.msra.mxu0 0.0
        %3060 = vmatprep.subr.mxu0 0.0
        %3061 = vmatpush1.xpose.msra.mxu0 0.0
        %3062 = vmatprep.subr.mxu0 0.0
        %3063 = vmatpush1.xpose.msra.mxu0 0.0
        %3064 = vmatprep.subr.mxu0 0.0
        %3065 = vmatpush1.xpose.msra.mxu0 0.0
        %3066 = vmatprep.subr.mxu0 0.0
        %3067 = vmatpush1.xpose.msra.mxu0 0.0
        %3068 = vmatprep.subr.mxu0 0.0
        %3069 = vmatpush1.xpose.msra.mxu0 0.0
        %3070 = vmatprep.subr.mxu0 0.0
        %3071 = vmatpush1.xpose.msra.mxu0 0.0
        %3072 = vmatprep.subr.mxu0 0.0
        %3073 = vmatpush1.xpose.msra.mxu0 0.0
        %3074 = vmatprep.subr.mxu0 0.0
        %3075 = vmatpush1.xpose.msra.mxu0 0.0
        %3076 = vmatprep.subr.mxu0 0.0
        %3077 = vmatpush1.xpose.msra.mxu0 0.0
        %3078 = vmatprep.subr.mxu0 0.0
        %3079 = vmatpush1.xpose.msra.mxu0 0.0
        %3080 = vmatprep.subr.mxu0 0.0
        %3081 = vmatpush1.xpose.msra.mxu0 0.0
        %3082 = vmatprep.subr.mxu0 0.0
        %3083 = vmatpush1.xpose.msra.mxu0 0.0
        %3084 = vmatprep.subr.mxu0 0.0
        %3085 = vmatpush1.xpose.msra.mxu0 0.0
        %3086 = vmatprep.mubr.f32.mxu0 0.0
        %v3087 = vand.u32 %v2836, 4294901760
        %v3088 = vsub.f32 %v2836, %v3087
        %3089 = vmatmul.mubr.f32.gmra.mrb[0].mxu0 %v3088
        %v3090 = vpop.f32.mrb[0].mxu0
        %v3091 = vadd.f32 %v3009, %v3090
        %v3092 = vpop.f32.mrb[0].mxu0
        %3093 = vmatprep.mubr.f32.mxu0 0.0
        %v3094 = vand.u32 %v2838, 4294901760
        %v3095 = vsub.f32 %v2838, %v3094
        %3096 = vmatmul.mubr.f32.gmra.mrb[0].mxu0 %v3095
        %v3097 = vpop.f32.mrb[0].mxu0
        %v3098 = vadd.f32 %v3015, %v3097
        %v3099 = vpop.f32.mrb[0].mxu0
        %3100 = vdwg.mxu0
        %3101 = vmatprep.subr.mxu0 0.0
        %v3102 = vand.u32 %v2840, 4294901760
        %3103 = vmatpush1.xpose.msra.mxu0 %v3102
        %3104 = vmatprep.subr.mxu0 0.0
        %v3105 = vand.u32 %v2842, 4294901760
        %3106 = vmatpush1.xpose.msra.mxu0 %v3105
        %3107 = vmatprep.subr.mxu0 0.0
        %3108 = vmatpush1.xpose.msra.mxu0 0.0
        %3109 = vmatprep.subr.mxu0 0.0
        %3110 = vmatpush1.xpose.msra.mxu0 0.0
        %3111 = vmatprep.subr.mxu0 0.0
        %3112 = vmatpush1.xpose.msra.mxu0 0.0
        %3113 = vmatprep.subr.mxu0 0.0
        %3114 = vmatpush1.xpose.msra.mxu0 0.0
        %3115 = vmatprep.subr.mxu0 0.0
        %3116 = vmatpush1.xpose.msra.mxu0 0.0
        %3117 = vmatprep.subr.mxu0 0.0
        %3118 = vmatpush1.xpose.msra.mxu0 0.0
        %3119 = vmatprep.subr.mxu0 0.0
        %3120 = vmatpush1.xpose.msra.mxu0 0.0
        %3121 = vmatprep.subr.mxu0 0.0
        %3122 = vmatpush1.xpose.msra.mxu0 0.0
        %3123 = vmatprep.subr.mxu0 0.0
        %3124 = vmatpush1.xpose.msra.mxu0 0.0
        %3125 = vmatprep.subr.mxu0 0.0
        %3126 = vmatpush1.xpose.msra.mxu0 0.0
        %3127 = vmatprep.subr.mxu0 0.0
        %3128 = vmatpush1.xpose.msra.mxu0 0.0
        %3129 = vmatprep.subr.mxu0 0.0
        %3130 = vmatpush1.xpose.msra.mxu0 0.0
        %3131 = vmatprep.subr.mxu0 0.0
        %3132 = vmatpush1.xpose.msra.mxu0 0.0
        %3133 = vmatprep.subr.mxu0 0.0
        %3134 = vmatpush1.xpose.msra.mxu0 0.0
        %3135 = vmatprep.subr.mxu0 0.0
        %3136 = vmatpush1.xpose.msra.mxu0 0.0
        %3137 = vmatprep.subr.mxu0 0.0
        %3138 = vmatpush1.xpose.msra.mxu0 0.0
        %3139 = vmatprep.subr.mxu0 0.0
        %3140 = vmatpush1.xpose.msra.mxu0 0.0
        %3141 = vmatprep.subr.mxu0 0.0
        %3142 = vmatpush1.xpose.msra.mxu0 0.0
        %3143 = vmatprep.subr.mxu0 0.0
        %3144 = vmatpush1.xpose.msra.mxu0 0.0
        %3145 = vmatprep.subr.mxu0 0.0
        %3146 = vmatpush1.xpose.msra.mxu0 0.0
        %3147 = vmatprep.subr.mxu0 0.0
        %3148 = vmatpush1.xpose.msra.mxu0 0.0
        %3149 = vmatprep.subr.mxu0 0.0
        %3150 = vmatpush1.xpose.msra.mxu0 0.0
        %3151 = vmatprep.subr.mxu0 0.0
        %3152 = vmatpush1.xpose.msra.mxu0 0.0
        %3153 = vmatprep.subr.mxu0 0.0
        %3154 = vmatpush1.xpose.msra.mxu0 0.0
        %3155 = vmatprep.subr.mxu0 0.0
        %3156 = vmatpush1.xpose.msra.mxu0 0.0
        %3157 = vmatprep.subr.mxu0 0.0
        %3158 = vmatpush1.xpose.msra.mxu0 0.0
        %3159 = vmatprep.subr.mxu0 0.0
        %3160 = vmatpush1.xpose.msra.mxu0 0.0
        %3161 = vmatprep.subr.mxu0 0.0
        %3162 = vmatpush1.xpose.msra.mxu0 0.0
        %3163 = vmatprep.subr.mxu0 0.0
        %3164 = vmatpush1.xpose.msra.mxu0 0.0
        %3165 = vmatprep.subr.mxu0 0.0
        %3166 = vmatpush1.xpose.msra.mxu0 0.0
        %3167 = vmatprep.mubr.f32.mxu0 0.0
        %v3168 = vand.u32 %v2836, 4294901760
        %v3169 = vsub.f32 %v2836, %v3168
        %v3170 = vand.u32 %v3169, 4294901760
        %3171 = vmatmul.mubr.f32.gmra.mrb[0].mxu0 %v3170
        %v3172 = vpop.f32.mrb[0].mxu0
        %v3173 = vadd.f32 %v3091, %v3172
        %v3174 = vpop.f32.mrb[0].mxu0
        %3175 = vmatprep.mubr.f32.mxu0 0.0
        %v3176 = vand.u32 %v2838, 4294901760
        %v3177 = vsub.f32 %v2838, %v3176
        %v3178 = vand.u32 %v3177, 4294901760
        %3179 = vmatmul.mubr.f32.gmra.mrb[0].mxu0 %v3178
        %v3180 = vpop.f32.mrb[0].mxu0
        %v3181 = vadd.f32 %v3098, %v3180
        %v3182 = vpop.f32.mrb[0].mxu0
        %3183 = vdwg.mxu0
        %3184 = vmatprep.subr.mxu0 0.0
        %v3185 = vand.u32 %v2840, 4294901760
        %v3186 = vsub.f32 %v2840, %v3185
        %v3187 = vand.u32 %v3186, 4294901760
        %3188 = vmatpush1.xpose.msra.mxu0 %v3187
        %3189 = vmatprep.subr.mxu0 0.0
        %v3190 = vand.u32 %v2842, 4294901760
        %v3191 = vsub.f32 %v2842, %v3190
        %v3192 = vand.u32 %v3191, 4294901760
        %3193 = vmatpush1.xpose.msra.mxu0 %v3192
        %3194 = vmatprep.subr.mxu0 0.0
        %3195 = vmatpush1.xpose.msra.mxu0 0.0
        %3196 = vmatprep.subr.mxu0 0.0
        %3197 = vmatpush1.xpose.msra.mxu0 0.0
        %3198 = vmatprep.subr.mxu0 0.0
        %3199 = vmatpush1.xpose.msra.mxu0 0.0
        %3200 = vmatprep.subr.mxu0 0.0
        %3201 = vmatpush1.xpose.msra.mxu0 0.0
        %3202 = vmatprep.subr.mxu0 0.0
        %3203 = vmatpush1.xpose.msra.mxu0 0.0
        %3204 = vmatprep.subr.mxu0 0.0
        %3205 = vmatpush1.xpose.msra.mxu0 0.0
        %3206 = vmatprep.subr.mxu0 0.0
        %3207 = vmatpush1.xpose.msra.mxu0 0.0
        %3208 = vmatprep.subr.mxu0 0.0
        %3209 = vmatpush1.xpose.msra.mxu0 0.0
        %3210 = vmatprep.subr.mxu0 0.0
        %3211 = vmatpush1.xpose.msra.mxu0 0.0
        %3212 = vmatprep.subr.mxu0 0.0
        %3213 = vmatpush1.xpose.msra.mxu0 0.0
        %3214 = vmatprep.subr.mxu0 0.0
        %3215 = vmatpush1.xpose.msra.mxu0 0.0
        %3216 = vmatprep.subr.mxu0 0.0
        %3217 = vmatpush1.xpose.msra.mxu0 0.0
        %3218 = vmatprep.subr.mxu0 0.0
        %3219 = vmatpush1.xpose.msra.mxu0 0.0
        %3220 = vmatprep.subr.mxu0 0.0
        %3221 = vmatpush1.xpose.msra.mxu0 0.0
        %3222 = vmatprep.subr.mxu0 0.0
        %3223 = vmatpush1.xpose.msra.mxu0 0.0
        %3224 = vmatprep.subr.mxu0 0.0
        %3225 = vmatpush1.xpose.msra.mxu0 0.0
        %3226 = vmatprep.subr.mxu0 0.0
        %3227 = vmatpush1.xpose.msra.mxu0 0.0
        %3228 = vmatprep.subr.mxu0 0.0
        %3229 = vmatpush1.xpose.msra.mxu0 0.0
        %3230 = vmatprep.subr.mxu0 0.0
        %3231 = vmatpush1.xpose.msra.mxu0 0.0
        %3232 = vmatprep.subr.mxu0 0.0
        %3233 = vmatpush1.xpose.msra.mxu0 0.0
        %3234 = vmatprep.subr.mxu0 0.0
        %3235 = vmatpush1.xpose.msra.mxu0 0.0
        %3236 = vmatprep.subr.mxu0 0.0
        %3237 = vmatpush1.xpose.msra.mxu0 0.0
        %3238 = vmatprep.subr.mxu0 0.0
        %3239 = vmatpush1.xpose.msra.mxu0 0.0
        %3240 = vmatprep.subr.mxu0 0.0
        %3241 = vmatpush1.xpose.msra.mxu0 0.0
        %3242 = vmatprep.subr.mxu0 0.0
        %3243 = vmatpush1.xpose.msra.mxu0 0.0
        %3244 = vmatprep.subr.mxu0 0.0
        %3245 = vmatpush1.xpose.msra.mxu0 0.0
        %3246 = vmatprep.subr.mxu0 0.0
        %3247 = vmatpush1.xpose.msra.mxu0 0.0
        %3248 = vmatprep.subr.mxu0 0.0
        %3249 = vmatpush1.xpose.msra.mxu0 0.0
        %3250 = vmatprep.subr.mxu0 0.0
        %3251 = vmatpush1.xpose.msra.mxu0 0.0
        %3252 = vmatprep.subr.mxu0 0.0
        %3253 = vmatpush1.xpose.msra.mxu0 0.0
        %3254 = vmatprep.mubr.f32.mxu0 0.0
        %v3255 = vand.u32 %v2836, 4294901760
        %3256 = vmatmul.mubr.f32.gmra.mrb[0].mxu0 %v3255
        %v3257 = vpop.f32.mrb[0].mxu0
        %v3258 = vadd.f32 %v3173, %v3257
        %v3259 = vpop.f32.mrb[0].mxu0
        %3260 = vmatprep.mubr.f32.mxu0 0.0
        %v3261 = vand.u32 %v2838, 4294901760
        %3262 = vmatmul.mubr.f32.gmra.mrb[0].mxu0 %v3261
        %v3263 = vpop.f32.mrb[0].mxu0
        %v3264 = vadd.f32 %v3181, %v3263
        %v3265 = vpop.f32.mrb[0].mxu0
        %3266 = vdwg.mxu0
        %3267 = vmatprep.subr.mxu0 0.0
        %v3268 = vand.u32 %v2840, 4294901760
        %3269 = vmatpush1.xpose.msra.mxu0 %v3268
        %3270 = vmatprep.subr.mxu0 0.0
        %v3271 = vand.u32 %v2842, 4294901760
        %3272 = vmatpush1.xpose.msra.mxu0 %v3271
        %3273 = vmatprep.subr.mxu0 0.0
        %3274 = vmatpush1.xpose.msra.mxu0 0.0
        %3275 = vmatprep.subr.mxu0 0.0
        %3276 = vmatpush1.xpose.msra.mxu0 0.0
        %3277 = vmatprep.subr.mxu0 0.0
        %3278 = vmatpush1.xpose.msra.mxu0 0.0
        %3279 = vmatprep.subr.mxu0 0.0
        %3280 = vmatpush1.xpose.msra.mxu0 0.0
        %3281 = vmatprep.subr.mxu0 0.0
        %3282 = vmatpush1.xpose.msra.mxu0 0.0
        %3283 = vmatprep.subr.mxu0 0.0
        %3284 = vmatpush1.xpose.msra.mxu0 0.0
        %3285 = vmatprep.subr.mxu0 0.0
        %3286 = vmatpush1.xpose.msra.mxu0 0.0
        %3287 = vmatprep.subr.mxu0 0.0
        %3288 = vmatpush1.xpose.msra.mxu0 0.0
        %3289 = vmatprep.subr.mxu0 0.0
        %3290 = vmatpush1.xpose.msra.mxu0 0.0
        %3291 = vmatprep.subr.mxu0 0.0
        %3292 = vmatpush1.xpose.msra.mxu0 0.0
        %3293 = vmatprep.subr.mxu0 0.0
        %3294 = vmatpush1.xpose.msra.mxu0 0.0
        %3295 = vmatprep.subr.mxu0 0.0
        %3296 = vmatpush1.xpose.msra.mxu0 0.0
        %3297 = vmatprep.subr.mxu0 0.0
        %3298 = vmatpush1.xpose.msra.mxu0 0.0
        %3299 = vmatprep.subr.mxu0 0.0
        %3300 = vmatpush1.xpose.msra.mxu0 0.0
        %3301 = vmatprep.subr.mxu0 0.0
        %3302 = vmatpush1.xpose.msra.mxu0 0.0
        %3303 = vmatprep.subr.mxu0 0.0
        %3304 = vmatpush1.xpose.msra.mxu0 0.0
        %3305 = vmatprep.subr.mxu0 0.0
        %3306 = vmatpush1.xpose.msra.mxu0 0.0
        %3307 = vmatprep.subr.mxu0 0.0
        %3308 = vmatpush1.xpose.msra.mxu0 0.0
        %3309 = vmatprep.subr.mxu0 0.0
        %3310 = vmatpush1.xpose.msra.mxu0 0.0
        %3311 = vmatprep.subr.mxu0 0.0
        %3312 = vmatpush1.xpose.msra.mxu0 0.0
        %3313 = vmatprep.subr.mxu0 0.0
        %3314 = vmatpush1.xpose.msra.mxu0 0.0
        %3315 = vmatprep.subr.mxu0 0.0
        %3316 = vmatpush1.xpose.msra.mxu0 0.0
        %3317 = vmatprep.subr.mxu0 0.0
        %3318 = vmatpush1.xpose.msra.mxu0 0.0
        %3319 = vmatprep.subr.mxu0 0.0
        %3320 = vmatpush1.xpose.msra.mxu0 0.0
        %3321 = vmatprep.subr.mxu0 0.0
        %3322 = vmatpush1.xpose.msra.mxu0 0.0
        %3323 = vmatprep.subr.mxu0 0.0
        %3324 = vmatpush1.xpose.msra.mxu0 0.0
        %3325 = vmatprep.subr.mxu0 0.0
        %3326 = vmatpush1.xpose.msra.mxu0 0.0
        %3327 = vmatprep.subr.mxu0 0.0
        %3328 = vmatpush1.xpose.msra.mxu0 0.0
        %3329 = vmatprep.subr.mxu0 0.0
        %3330 = vmatpush1.xpose.msra.mxu0 0.0
        %3331 = vmatprep.subr.mxu0 0.0
        %3332 = vmatpush1.xpose.msra.mxu0 0.0
        %3333 = vmatprep.mubr.f32.mxu0 0.0
        %v3334 = vand.u32 %v2836, 4294901760
        %3335 = vmatmul.mubr.f32.gmra.mrb[0].mxu0 %v3334
        %v3336 = vpop.f32.mrb[0].mxu0
        %v3337 = vadd.f32 %v3258, %v3336
        %v3338 = vpop.f32.mrb[0].mxu0
        %3339 = vmatprep.mubr.f32.mxu0 0.0
        %v3340 = vand.u32 %v2838, 4294901760
        %3341 = vmatmul.mubr.f32.gmra.mrb[0].mxu0 %v3340
        %v3342 = vpop.f32.mrb[0].mxu0
        %v3343 = vadd.f32 %v3264, %v3342
        %v3344 = vpop.f32.mrb[0].mxu0
        %3345 = vdwg.mxu0
        %v3346 = vsel %vm1233, %v2819, -inf
        %3347 = vmax.xlane.f32.xlu0 %v3346
        %v3348 = vpop.xlane.xlu0 %3347
        %v3349 = vsel %vm1233, %v2825, -inf
        %3350 = vmax.xlane.f32.xlu0 %v3349
        %v3351 = vpop.xlane.xlu0 %3350
        %v3352 = vsel %vm1233, %v3337, -inf
        %3353 = vmax.xlane.f32.xlu0 %v3352
        %v3354 = vpop.xlane.xlu0 %3353
        %v3355 = vsel %vm1233, %v3343, -inf
        %3356 = vmax.xlane.f32.xlu0 %v3355
        %v3357 = vpop.xlane.xlu0 %3356
        %v3358 = vsub.f32 %v2819, %v3348
        %v3359 = vsub.f32 %v2825, %v3351
        %v3360 = vsub.f32 %v3337, %v3354
        %v3361 = vsub.f32 %v3343, %v3357
        %v3362 = vmul.f32 %v3358, 1.442695
        %v3363 = vpow.pop %v3362
        %v3364 = vmul.f32 %v3359, 1.442695
        %v3365 = vpow.pop %v3364
        %v3366 = vmul.f32 %v3360, 1.442695
        %v3367 = vpow.pop %v3366
        %v3368 = vmul.f32 %v3361, 1.442695
        %v3369 = vpow.pop %v3368
        %v3370 = vsel %vm1233, %v3363, 0.0
        %3371 = vadd.xlane.f32.xlu0 %v3370
        %v3372 = vpop.xlane.xlu0 %3371
        %v3373 = vsel %vm1233, %v3365, 0.0
        %3374 = vadd.xlane.f32.xlu0 %v3373
        %v3375 = vpop.xlane.xlu0 %3374
        %v3376 = vsel %vm1233, %v3367, 0.0
        %3377 = vadd.xlane.f32.xlu0 %v3376
        %v3378 = vpop.xlane.xlu0 %3377
        %v3379 = vsel %vm1233, %v3369, 0.0
        %3380 = vadd.xlane.f32.xlu0 %v3379
        %v3381 = vpop.xlane.xlu0 %3380
        %v3382 = vrcp.pop %v3372
        %v3383 = vmul.f32 %v3363, %v3382
        %v3384 = vrcp.pop %v3375
        %v3385 = vmul.f32 %v3365, %v3384
        %v3386 = vrcp.pop %v3378
        %v3387 = vmul.f32 %v3367, %v3386
        %v3388 = vrcp.pop %v3381
        %v3389 = vmul.f32 %v3369, %v3388
        %3390 = vrot.lane.b32.xlu0 %v180, 56
        %v3391 = vpop.permute.xlu0 %3390
        %3392 = vrot.lane.b32.xlu0 %v181, 56
        %v3393 = vpop.permute.xlu0 %3392
        %v3397 = vsel %vm1233, %v3383, 0
        %v3400 = vsel %vm1233, %v3385, 0
        %3402 = vmatprep.subr.mxu0 0.0
        %v3403 = vand.u32 %v3391, 4294901760
        %3404 = vmatpush1.msra.mxu0 %v3403
        %3405 = vmatprep.subr.mxu0 0.0
        %v3406 = vand.u32 %v3393, 4294901760
        %3407 = vmatpush1.msra.mxu0 %v3406
        %3408 = vmatprep.subr.mxu0 0.0
        %3409 = vmatpush1.msra.mxu0 0.0
        %3410 = vmatprep.subr.mxu0 0.0
        %3411 = vmatpush1.msra.mxu0 0.0
        %3412 = vmatprep.subr.mxu0 0.0
        %3413 = vmatpush1.msra.mxu0 0.0
        %3414 = vmatprep.subr.mxu0 0.0
        %3415 = vmatpush1.msra.mxu0 0.0
        %3416 = vmatprep.subr.mxu0 0.0
        %3417 = vmatpush1.msra.mxu0 0.0
        %3418 = vmatprep.subr.mxu0 0.0
        %3419 = vmatpush1.msra.mxu0 0.0
        %3420 = vmatprep.subr.mxu0 0.0
        %3421 = vmatpush1.msra.mxu0 0.0
        %3422 = vmatprep.subr.mxu0 0.0
        %3423 = vmatpush1.msra.mxu0 0.0
        %3424 = vmatprep.subr.mxu0 0.0
        %3425 = vmatpush1.msra.mxu0 0.0
        %3426 = vmatprep.subr.mxu0 0.0
        %3427 = vmatpush1.msra.mxu0 0.0
        %3428 = vmatprep.subr.mxu0 0.0
        %3429 = vmatpush1.msra.mxu0 0.0
        %3430 = vmatprep.subr.mxu0 0.0
        %3431 = vmatpush1.msra.mxu0 0.0
        %3432 = vmatprep.subr.mxu0 0.0
        %3433 = vmatpush1.msra.mxu0 0.0
        %3434 = vmatprep.subr.mxu0 0.0
        %3435 = vmatpush1.msra.mxu0 0.0
        %3436 = vmatprep.subr.mxu0 0.0
        %3437 = vmatpush1.msra.mxu0 0.0
        %3438 = vmatprep.subr.mxu0 0.0
        %3439 = vmatpush1.msra.mxu0 0.0
        %3440 = vmatprep.subr.mxu0 0.0
        %3441 = vmatpush1.msra.mxu0 0.0
        %3442 = vmatprep.subr.mxu0 0.0
        %3443 = vmatpush1.msra.mxu0 0.0
        %3444 = vmatprep.subr.mxu0 0.0
        %3445 = vmatpush1.msra.mxu0 0.0
        %3446 = vmatprep.subr.mxu0 0.0
        %3447 = vmatpush1.msra.mxu0 0.0
        %3448 = vmatprep.subr.mxu0 0.0
        %3449 = vmatpush1.msra.mxu0 0.0
        %3450 = vmatprep.subr.mxu0 0.0
        %3451 = vmatpush1.msra.mxu0 0.0
        %3452 = vmatprep.subr.mxu0 0.0
        %3453 = vmatpush1.msra.mxu0 0.0
        %3454 = vmatprep.subr.mxu0 0.0
        %3455 = vmatpush1.msra.mxu0 0.0
        %3456 = vmatprep.subr.mxu0 0.0
        %3457 = vmatpush1.msra.mxu0 0.0
        %3458 = vmatprep.subr.mxu0 0.0
        %3459 = vmatpush1.msra.mxu0 0.0
        %3460 = vmatprep.subr.mxu0 0.0
        %3461 = vmatpush1.msra.mxu0 0.0
        %3462 = vmatprep.subr.mxu0 0.0
        %3463 = vmatpush1.msra.mxu0 0.0
        %3464 = vmatprep.subr.mxu0 0.0
        %3465 = vmatpush1.msra.mxu0 0.0
        %3466 = vmatprep.subr.mxu0 0.0
        %3467 = vmatpush1.msra.mxu0 0.0
        %3468 = vmatprep.mubr.f32.mxu0 0.0
        %v3469 = vand.u32 %v3397, 4294901760
        %v3470 = vsub.f32 %v3397, %v3469
        %v3471 = vand.u32 %v3470, 4294901760
        %v3472 = vsub.f32 %v3470, %v3471
        %v3473 = vand.u32 %v3472, 4294901760
        %3474 = vmatmul.mubr.f32.gmra.mrb[0].mxu0 %v3473
        %v3475 = vpop.f32.mrb[0].mxu0
        %v3476 = vadd.f32 0.0, %v3475
        %v3477 = vpop.f32.mrb[0].mxu0
        %3478 = vmatprep.mubr.f32.mxu0 0.0
        %v3479 = vand.u32 %v3400, 4294901760
        %v3480 = vsub.f32 %v3400, %v3479
        %v3481 = vand.u32 %v3480, 4294901760
        %v3482 = vsub.f32 %v3480, %v3481
        %v3483 = vand.u32 %v3482, 4294901760
        %3484 = vmatmul.mubr.f32.gmra.mrb[0].mxu0 %v3483
        %v3485 = vpop.f32.mrb[0].mxu0
        %v3486 = vadd.f32 0.0, %v3485
        %v3487 = vpop.f32.mrb[0].mxu0
        %3488 = vdwg.mxu0
        %3489 = vmatprep.subr.mxu0 0.0
        %v3490 = vand.u32 %v3391, 4294901760
        %v3491 = vsub.f32 %v3391, %v3490
        %v3492 = vand.u32 %v3491, 4294901760
        %v3493 = vsub.f32 %v3491, %v3492
        %v3494 = vand.u32 %v3493, 4294901760
        %3495 = vmatpush1.msra.mxu0 %v3494
        %3496 = vmatprep.subr.mxu0 0.0
        %v3497 = vand.u32 %v3393, 4294901760
        %v3498 = vsub.f32 %v3393, %v3497
        %v3499 = vand.u32 %v3498, 4294901760
        %v3500 = vsub.f32 %v3498, %v3499
        %v3501 = vand.u32 %v3500, 4294901760
        %3502 = vmatpush1.msra.mxu0 %v3501
        %3503 = vmatprep.subr.mxu0 0.0
        %3504 = vmatpush1.msra.mxu0 0.0
        %3505 = vmatprep.subr.mxu0 0.0
        %3506 = vmatpush1.msra.mxu0 0.0
        %3507 = vmatprep.subr.mxu0 0.0
        %3508 = vmatpush1.msra.mxu0 0.0
        %3509 = vmatprep.subr.mxu0 0.0
        %3510 = vmatpush1.msra.mxu0 0.0
        %3511 = vmatprep.subr.mxu0 0.0
        %3512 = vmatpush1.msra.mxu0 0.0
        %3513 = vmatprep.subr.mxu0 0.0
        %3514 = vmatpush1.msra.mxu0 0.0
        %3515 = vmatprep.subr.mxu0 0.0
        %3516 = vmatpush1.msra.mxu0 0.0
        %3517 = vmatprep.subr.mxu0 0.0
        %3518 = vmatpush1.msra.mxu0 0.0
        %3519 = vmatprep.subr.mxu0 0.0
        %3520 = vmatpush1.msra.mxu0 0.0
        %3521 = vmatprep.subr.mxu0 0.0
        %3522 = vmatpush1.msra.mxu0 0.0
        %3523 = vmatprep.subr.mxu0 0.0
        %3524 = vmatpush1.msra.mxu0 0.0
        %3525 = vmatprep.subr.mxu0 0.0
        %3526 = vmatpush1.msra.mxu0 0.0
        %3527 = vmatprep.subr.mxu0 0.0
        %3528 = vmatpush1.msra.mxu0 0.0
        %3529 = vmatprep.subr.mxu0 0.0
        %3530 = vmatpush1.msra.mxu0 0.0
        %3531 = vmatprep.subr.mxu0 0.0
        %3532 = vmatpush1.msra.mxu0 0.0
        %3533 = vmatprep.subr.mxu0 0.0
        %3534 = vmatpush1.msra.mxu0 0.0
        %3535 = vmatprep.subr.mxu0 0.0
        %3536 = vmatpush1.msra.mxu0 0.0
        %3537 = vmatprep.subr.mxu0 0.0
        %3538 = vmatpush1.msra.mxu0 0.0
        %3539 = vmatprep.subr.mxu0 0.0
        %3540 = vmatpush1.msra.mxu0 0.0
        %3541 = vmatprep.subr.mxu0 0.0
        %3542 = vmatpush1.msra.mxu0 0.0
        %3543 = vmatprep.subr.mxu0 0.0
        %3544 = vmatpush1.msra.mxu0 0.0
        %3545 = vmatprep.subr.mxu0 0.0
        %3546 = vmatpush1.msra.mxu0 0.0
        %3547 = vmatprep.subr.mxu0 0.0
        %3548 = vmatpush1.msra.mxu0 0.0
        %3549 = vmatprep.subr.mxu0 0.0
        %3550 = vmatpush1.msra.mxu0 0.0
        %3551 = vmatprep.subr.mxu0 0.0
        %3552 = vmatpush1.msra.mxu0 0.0
        %3553 = vmatprep.subr.mxu0 0.0
        %3554 = vmatpush1.msra.mxu0 0.0
        %3555 = vmatprep.subr.mxu0 0.0
        %3556 = vmatpush1.msra.mxu0 0.0
        %3557 = vmatprep.subr.mxu0 0.0
        %3558 = vmatpush1.msra.mxu0 0.0
        %3559 = vmatprep.subr.mxu0 0.0
        %3560 = vmatpush1.msra.mxu0 0.0
        %3561 = vmatprep.subr.mxu0 0.0
        %3562 = vmatpush1.msra.mxu0 0.0
        %3563 = vmatprep.mubr.f32.mxu0 0.0
        %v3564 = vand.u32 %v3397, 4294901760
        %3565 = vmatmul.mubr.f32.gmra.mrb[0].mxu0 %v3564
        %v3566 = vpop.f32.mrb[0].mxu0
        %v3567 = vadd.f32 %v3476, %v3566
        %v3568 = vpop.f32.mrb[0].mxu0
        %3569 = vmatprep.mubr.f32.mxu0 0.0
        %v3570 = vand.u32 %v3400, 4294901760
        %3571 = vmatmul.mubr.f32.gmra.mrb[0].mxu0 %v3570
        %v3572 = vpop.f32.mrb[0].mxu0
        %v3573 = vadd.f32 %v3486, %v3572
        %v3574 = vpop.f32.mrb[0].mxu0
        %3575 = vdwg.mxu0
        %3576 = vmatprep.subr.mxu0 0.0
        %v3577 = vand.u32 %v3391, 4294901760
        %v3578 = vsub.f32 %v3391, %v3577
        %3579 = vmatpush1.msra.mxu0 %v3578
        %3580 = vmatprep.subr.mxu0 0.0
        %v3581 = vand.u32 %v3393, 4294901760
        %v3582 = vsub.f32 %v3393, %v3581
        %3583 = vmatpush1.msra.mxu0 %v3582
        %3584 = vmatprep.subr.mxu0 0.0
        %3585 = vmatpush1.msra.mxu0 0.0
        %3586 = vmatprep.subr.mxu0 0.0
        %3587 = vmatpush1.msra.mxu0 0.0
        %3588 = vmatprep.subr.mxu0 0.0
        %3589 = vmatpush1.msra.mxu0 0.0
        %3590 = vmatprep.subr.mxu0 0.0
        %3591 = vmatpush1.msra.mxu0 0.0
        %3592 = vmatprep.subr.mxu0 0.0
        %3593 = vmatpush1.msra.mxu0 0.0
        %3594 = vmatprep.subr.mxu0 0.0
        %3595 = vmatpush1.msra.mxu0 0.0
        %3596 = vmatprep.subr.mxu0 0.0
        %3597 = vmatpush1.msra.mxu0 0.0
        %3598 = vmatprep.subr.mxu0 0.0
        %3599 = vmatpush1.msra.mxu0 0.0
        %3600 = vmatprep.subr.mxu0 0.0
        %3601 = vmatpush1.msra.mxu0 0.0
        %3602 = vmatprep.subr.mxu0 0.0
        %3603 = vmatpush1.msra.mxu0 0.0
        %3604 = vmatprep.subr.mxu0 0.0
        %3605 = vmatpush1.msra.mxu0 0.0
        %3606 = vmatprep.subr.mxu0 0.0
        %3607 = vmatpush1.msra.mxu0 0.0
        %3608 = vmatprep.subr.mxu0 0.0
        %3609 = vmatpush1.msra.mxu0 0.0
        %3610 = vmatprep.subr.mxu0 0.0
        %3611 = vmatpush1.msra.mxu0 0.0
        %3612 = vmatprep.subr.mxu0 0.0
        %3613 = vmatpush1.msra.mxu0 0.0
        %3614 = vmatprep.subr.mxu0 0.0
        %3615 = vmatpush1.msra.mxu0 0.0
        %3616 = vmatprep.subr.mxu0 0.0
        %3617 = vmatpush1.msra.mxu0 0.0
        %3618 = vmatprep.subr.mxu0 0.0
        %3619 = vmatpush1.msra.mxu0 0.0
        %3620 = vmatprep.subr.mxu0 0.0
        %3621 = vmatpush1.msra.mxu0 0.0
        %3622 = vmatprep.subr.mxu0 0.0
        %3623 = vmatpush1.msra.mxu0 0.0
        %3624 = vmatprep.subr.mxu0 0.0
        %3625 = vmatpush1.msra.mxu0 0.0
        %3626 = vmatprep.subr.mxu0 0.0
        %3627 = vmatpush1.msra.mxu0 0.0
        %3628 = vmatprep.subr.mxu0 0.0
        %3629 = vmatpush1.msra.mxu0 0.0
        %3630 = vmatprep.subr.mxu0 0.0
        %3631 = vmatpush1.msra.mxu0 0.0
        %3632 = vmatprep.subr.mxu0 0.0
        %3633 = vmatpush1.msra.mxu0 0.0
        %3634 = vmatprep.subr.mxu0 0.0
        %3635 = vmatpush1.msra.mxu0 0.0
        %3636 = vmatprep.subr.mxu0 0.0
        %3637 = vmatpush1.msra.mxu0 0.0
        %3638 = vmatprep.subr.mxu0 0.0
        %3639 = vmatpush1.msra.mxu0 0.0
        %3640 = vmatprep.subr.mxu0 0.0
        %3641 = vmatpush1.msra.mxu0 0.0
        %3642 = vmatprep.subr.mxu0 0.0
        %3643 = vmatpush1.msra.mxu0 0.0
        %3644 = vmatprep.mubr.f32.mxu0 0.0
        %v3645 = vand.u32 %v3397, 4294901760
        %v3646 = vsub.f32 %v3397, %v3645
        %3647 = vmatmul.mubr.f32.gmra.mrb[0].mxu0 %v3646
        %v3648 = vpop.f32.mrb[0].mxu0
        %v3649 = vadd.f32 %v3567, %v3648
        %v3650 = vpop.f32.mrb[0].mxu0
        %3651 = vmatprep.mubr.f32.mxu0 0.0
        %v3652 = vand.u32 %v3400, 4294901760
        %v3653 = vsub.f32 %v3400, %v3652
        %3654 = vmatmul.mubr.f32.gmra.mrb[0].mxu0 %v3653
        %v3655 = vpop.f32.mrb[0].mxu0
        %v3656 = vadd.f32 %v3573, %v3655
        %v3657 = vpop.f32.mrb[0].mxu0
        %3658 = vdwg.mxu0
        %3659 = vmatprep.subr.mxu0 0.0
        %v3660 = vand.u32 %v3391, 4294901760
        %3661 = vmatpush1.msra.mxu0 %v3660
        %3662 = vmatprep.subr.mxu0 0.0
        %v3663 = vand.u32 %v3393, 4294901760
        %3664 = vmatpush1.msra.mxu0 %v3663
        %3665 = vmatprep.subr.mxu0 0.0
        %3666 = vmatpush1.msra.mxu0 0.0
        %3667 = vmatprep.subr.mxu0 0.0
        %3668 = vmatpush1.msra.mxu0 0.0
        %3669 = vmatprep.subr.mxu0 0.0
        %3670 = vmatpush1.msra.mxu0 0.0
        %3671 = vmatprep.subr.mxu0 0.0
        %3672 = vmatpush1.msra.mxu0 0.0
        %3673 = vmatprep.subr.mxu0 0.0
        %3674 = vmatpush1.msra.mxu0 0.0
        %3675 = vmatprep.subr.mxu0 0.0
        %3676 = vmatpush1.msra.mxu0 0.0
        %3677 = vmatprep.subr.mxu0 0.0
        %3678 = vmatpush1.msra.mxu0 0.0
        %3679 = vmatprep.subr.mxu0 0.0
        %3680 = vmatpush1.msra.mxu0 0.0
        %3681 = vmatprep.subr.mxu0 0.0
        %3682 = vmatpush1.msra.mxu0 0.0
        %3683 = vmatprep.subr.mxu0 0.0
        %3684 = vmatpush1.msra.mxu0 0.0
        %3685 = vmatprep.subr.mxu0 0.0
        %3686 = vmatpush1.msra.mxu0 0.0
        %3687 = vmatprep.subr.mxu0 0.0
        %3688 = vmatpush1.msra.mxu0 0.0
        %3689 = vmatprep.subr.mxu0 0.0
        %3690 = vmatpush1.msra.mxu0 0.0
        %3691 = vmatprep.subr.mxu0 0.0
        %3692 = vmatpush1.msra.mxu0 0.0
        %3693 = vmatprep.subr.mxu0 0.0
        %3694 = vmatpush1.msra.mxu0 0.0
        %3695 = vmatprep.subr.mxu0 0.0
        %3696 = vmatpush1.msra.mxu0 0.0
        %3697 = vmatprep.subr.mxu0 0.0
        %3698 = vmatpush1.msra.mxu0 0.0
        %3699 = vmatprep.subr.mxu0 0.0
        %3700 = vmatpush1.msra.mxu0 0.0
        %3701 = vmatprep.subr.mxu0 0.0
        %3702 = vmatpush1.msra.mxu0 0.0
        %3703 = vmatprep.subr.mxu0 0.0
        %3704 = vmatpush1.msra.mxu0 0.0
        %3705 = vmatprep.subr.mxu0 0.0
        %3706 = vmatpush1.msra.mxu0 0.0
        %3707 = vmatprep.subr.mxu0 0.0
        %3708 = vmatpush1.msra.mxu0 0.0
        %3709 = vmatprep.subr.mxu0 0.0
        %3710 = vmatpush1.msra.mxu0 0.0
        %3711 = vmatprep.subr.mxu0 0.0
        %3712 = vmatpush1.msra.mxu0 0.0
        %3713 = vmatprep.subr.mxu0 0.0
        %3714 = vmatpush1.msra.mxu0 0.0
        %3715 = vmatprep.subr.mxu0 0.0
        %3716 = vmatpush1.msra.mxu0 0.0
        %3717 = vmatprep.subr.mxu0 0.0
        %3718 = vmatpush1.msra.mxu0 0.0
        %3719 = vmatprep.subr.mxu0 0.0
        %3720 = vmatpush1.msra.mxu0 0.0
        %3721 = vmatprep.subr.mxu0 0.0
        %3722 = vmatpush1.msra.mxu0 0.0
        %3723 = vmatprep.subr.mxu0 0.0
        %3724 = vmatpush1.msra.mxu0 0.0
        %3725 = vmatprep.mubr.f32.mxu0 0.0
        %v3726 = vand.u32 %v3397, 4294901760
        %v3727 = vsub.f32 %v3397, %v3726
        %v3728 = vand.u32 %v3727, 4294901760
        %3729 = vmatmul.mubr.f32.gmra.mrb[0].mxu0 %v3728
        %v3730 = vpop.f32.mrb[0].mxu0
        %v3731 = vadd.f32 %v3649, %v3730
        %v3732 = vpop.f32.mrb[0].mxu0
        %3733 = vmatprep.mubr.f32.mxu0 0.0
        %v3734 = vand.u32 %v3400, 4294901760
        %v3735 = vsub.f32 %v3400, %v3734
        %v3736 = vand.u32 %v3735, 4294901760
        %3737 = vmatmul.mubr.f32.gmra.mrb[0].mxu0 %v3736
        %v3738 = vpop.f32.mrb[0].mxu0
        %v3739 = vadd.f32 %v3656, %v3738
        %v3740 = vpop.f32.mrb[0].mxu0
        %3741 = vdwg.mxu0
        %3742 = vmatprep.subr.mxu0 0.0
        %v3743 = vand.u32 %v3391, 4294901760
        %v3744 = vsub.f32 %v3391, %v3743
        %v3745 = vand.u32 %v3744, 4294901760
        %3746 = vmatpush1.msra.mxu0 %v3745
        %3747 = vmatprep.subr.mxu0 0.0
        %v3748 = vand.u32 %v3393, 4294901760
        %v3749 = vsub.f32 %v3393, %v3748
        %v3750 = vand.u32 %v3749, 4294901760
        %3751 = vmatpush1.msra.mxu0 %v3750
        %3752 = vmatprep.subr.mxu0 0.0
        %3753 = vmatpush1.msra.mxu0 0.0
        %3754 = vmatprep.subr.mxu0 0.0
        %3755 = vmatpush1.msra.mxu0 0.0
        %3756 = vmatprep.subr.mxu0 0.0
        %3757 = vmatpush1.msra.mxu0 0.0
        %3758 = vmatprep.subr.mxu0 0.0
        %3759 = vmatpush1.msra.mxu0 0.0
        %3760 = vmatprep.subr.mxu0 0.0
        %3761 = vmatpush1.msra.mxu0 0.0
        %3762 = vmatprep.subr.mxu0 0.0
        %3763 = vmatpush1.msra.mxu0 0.0
        %3764 = vmatprep.subr.mxu0 0.0
        %3765 = vmatpush1.msra.mxu0 0.0
        %3766 = vmatprep.subr.mxu0 0.0
        %3767 = vmatpush1.msra.mxu0 0.0
        %3768 = vmatprep.subr.mxu0 0.0
        %3769 = vmatpush1.msra.mxu0 0.0
        %3770 = vmatprep.subr.mxu0 0.0
        %3771 = vmatpush1.msra.mxu0 0.0
        %3772 = vmatprep.subr.mxu0 0.0
        %3773 = vmatpush1.msra.mxu0 0.0
        %3774 = vmatprep.subr.mxu0 0.0
        %3775 = vmatpush1.msra.mxu0 0.0
        %3776 = vmatprep.subr.mxu0 0.0
        %3777 = vmatpush1.msra.mxu0 0.0
        %3778 = vmatprep.subr.mxu0 0.0
        %3779 = vmatpush1.msra.mxu0 0.0
        %3780 = vmatprep.subr.mxu0 0.0
        %3781 = vmatpush1.msra.mxu0 0.0
        %3782 = vmatprep.subr.mxu0 0.0
        %3783 = vmatpush1.msra.mxu0 0.0
        %3784 = vmatprep.subr.mxu0 0.0
        %3785 = vmatpush1.msra.mxu0 0.0
        %3786 = vmatprep.subr.mxu0 0.0
        %3787 = vmatpush1.msra.mxu0 0.0
        %3788 = vmatprep.subr.mxu0 0.0
        %3789 = vmatpush1.msra.mxu0 0.0
        %3790 = vmatprep.subr.mxu0 0.0
        %3791 = vmatpush1.msra.mxu0 0.0
        %3792 = vmatprep.subr.mxu0 0.0
        %3793 = vmatpush1.msra.mxu0 0.0
        %3794 = vmatprep.subr.mxu0 0.0
        %3795 = vmatpush1.msra.mxu0 0.0
        %3796 = vmatprep.subr.mxu0 0.0
        %3797 = vmatpush1.msra.mxu0 0.0
        %3798 = vmatprep.subr.mxu0 0.0
        %3799 = vmatpush1.msra.mxu0 0.0
        %3800 = vmatprep.subr.mxu0 0.0
        %3801 = vmatpush1.msra.mxu0 0.0
        %3802 = vmatprep.subr.mxu0 0.0
        %3803 = vmatpush1.msra.mxu0 0.0
        %3804 = vmatprep.subr.mxu0 0.0
        %3805 = vmatpush1.msra.mxu0 0.0
        %3806 = vmatprep.subr.mxu0 0.0
        %3807 = vmatpush1.msra.mxu0 0.0
        %3808 = vmatprep.subr.mxu0 0.0
        %3809 = vmatpush1.msra.mxu0 0.0
        %3810 = vmatprep.subr.mxu0 0.0
        %3811 = vmatpush1.msra.mxu0 0.0
        %3812 = vmatprep.mubr.f32.mxu0 0.0
        %v3813 = vand.u32 %v3397, 4294901760
        %3814 = vmatmul.mubr.f32.gmra.mrb[0].mxu0 %v3813
        %v3815 = vpop.f32.mrb[0].mxu0
        %v3816 = vadd.f32 %v3731, %v3815
        %v3817 = vpop.f32.mrb[0].mxu0
        %3818 = vmatprep.mubr.f32.mxu0 0.0
        %v3819 = vand.u32 %v3400, 4294901760
        %3820 = vmatmul.mubr.f32.gmra.mrb[0].mxu0 %v3819
        %v3821 = vpop.f32.mrb[0].mxu0
        %v3822 = vadd.f32 %v3739, %v3821
        %v3823 = vpop.f32.mrb[0].mxu0
        %3824 = vdwg.mxu0
        %3825 = vmatprep.subr.mxu0 0.0
        %v3826 = vand.u32 %v3391, 4294901760
        %3827 = vmatpush1.msra.mxu0 %v3826
        %3828 = vmatprep.subr.mxu0 0.0
        %v3829 = vand.u32 %v3393, 4294901760
        %3830 = vmatpush1.msra.mxu0 %v3829
        %3831 = vmatprep.subr.mxu0 0.0
        %3832 = vmatpush1.msra.mxu0 0.0
        %3833 = vmatprep.subr.mxu0 0.0
        %3834 = vmatpush1.msra.mxu0 0.0
        %3835 = vmatprep.subr.mxu0 0.0
        %3836 = vmatpush1.msra.mxu0 0.0
        %3837 = vmatprep.subr.mxu0 0.0
        %3838 = vmatpush1.msra.mxu0 0.0
        %3839 = vmatprep.subr.mxu0 0.0
        %3840 = vmatpush1.msra.mxu0 0.0
        %3841 = vmatprep.subr.mxu0 0.0
        %3842 = vmatpush1.msra.mxu0 0.0
        %3843 = vmatprep.subr.mxu0 0.0
        %3844 = vmatpush1.msra.mxu0 0.0
        %3845 = vmatprep.subr.mxu0 0.0
        %3846 = vmatpush1.msra.mxu0 0.0
        %3847 = vmatprep.subr.mxu0 0.0
        %3848 = vmatpush1.msra.mxu0 0.0
        %3849 = vmatprep.subr.mxu0 0.0
        %3850 = vmatpush1.msra.mxu0 0.0
        %3851 = vmatprep.subr.mxu0 0.0
        %3852 = vmatpush1.msra.mxu0 0.0
        %3853 = vmatprep.subr.mxu0 0.0
        %3854 = vmatpush1.msra.mxu0 0.0
        %3855 = vmatprep.subr.mxu0 0.0
        %3856 = vmatpush1.msra.mxu0 0.0
        %3857 = vmatprep.subr.mxu0 0.0
        %3858 = vmatpush1.msra.mxu0 0.0
        %3859 = vmatprep.subr.mxu0 0.0
        %3860 = vmatpush1.msra.mxu0 0.0
        %3861 = vmatprep.subr.mxu0 0.0
        %3862 = vmatpush1.msra.mxu0 0.0
        %3863 = vmatprep.subr.mxu0 0.0
        %3864 = vmatpush1.msra.mxu0 0.0
        %3865 = vmatprep.subr.mxu0 0.0
        %3866 = vmatpush1.msra.mxu0 0.0
        %3867 = vmatprep.subr.mxu0 0.0
        %3868 = vmatpush1.msra.mxu0 0.0
        %3869 = vmatprep.subr.mxu0 0.0
        %3870 = vmatpush1.msra.mxu0 0.0
        %3871 = vmatprep.subr.mxu0 0.0
        %3872 = vmatpush1.msra.mxu0 0.0
        %3873 = vmatprep.subr.mxu0 0.0
        %3874 = vmatpush1.msra.mxu0 0.0
        %3875 = vmatprep.subr.mxu0 0.0
        %3876 = vmatpush1.msra.mxu0 0.0
        %3877 = vmatprep.subr.mxu0 0.0
        %3878 = vmatpush1.msra.mxu0 0.0
        %3879 = vmatprep.subr.mxu0 0.0
        %3880 = vmatpush1.msra.mxu0 0.0
        %3881 = vmatprep.subr.mxu0 0.0
        %3882 = vmatpush1.msra.mxu0 0.0
        %3883 = vmatprep.subr.mxu0 0.0
        %3884 = vmatpush1.msra.mxu0 0.0
        %3885 = vmatprep.subr.mxu0 0.0
        %3886 = vmatpush1.msra.mxu0 0.0
        %3887 = vmatprep.subr.mxu0 0.0
        %3888 = vmatpush1.msra.mxu0 0.0
        %3889 = vmatprep.subr.mxu0 0.0
        %3890 = vmatpush1.msra.mxu0 0.0
        %3891 = vmatprep.mubr.f32.mxu0 0.0
        %v3892 = vand.u32 %v3397, 4294901760
        %3893 = vmatmul.mubr.f32.gmra.mrb[0].mxu0 %v3892
        %v3894 = vpop.f32.mrb[0].mxu0
        %v3895 = vadd.f32 %v3816, %v3894
        %v3896 = vpop.f32.mrb[0].mxu0
        %3897 = vmatprep.mubr.f32.mxu0 0.0
        %v3898 = vand.u32 %v3400, 4294901760
        %3899 = vmatmul.mubr.f32.gmra.mrb[0].mxu0 %v3898
        %v3900 = vpop.f32.mrb[0].mxu0
        %v3901 = vadd.f32 %v3822, %v3900
        %v3902 = vpop.f32.mrb[0].mxu0
        %3903 = vdwg.mxu0
        %3904 = vrot.lane.b32.xlu0 %v182, 56
        %v3905 = vpop.permute.xlu0 %3904
        %3906 = vrot.lane.b32.xlu0 %v183, 56
        %v3907 = vpop.permute.xlu0 %3906
        %v3911 = vsel %vm1233, %v3387, 0
        %v3914 = vsel %vm1233, %v3389, 0
        %3916 = vmatprep.subr.mxu0 0.0
        %v3917 = vand.u32 %v3905, 4294901760
        %3918 = vmatpush1.msra.mxu0 %v3917
        %3919 = vmatprep.subr.mxu0 0.0
        %v3920 = vand.u32 %v3907, 4294901760
        %3921 = vmatpush1.msra.mxu0 %v3920
        %3922 = vmatprep.subr.mxu0 0.0
        %3923 = vmatpush1.msra.mxu0 0.0
        %3924 = vmatprep.subr.mxu0 0.0
        %3925 = vmatpush1.msra.mxu0 0.0
        %3926 = vmatprep.subr.mxu0 0.0
        %3927 = vmatpush1.msra.mxu0 0.0
        %3928 = vmatprep.subr.mxu0 0.0
        %3929 = vmatpush1.msra.mxu0 0.0
        %3930 = vmatprep.subr.mxu0 0.0
        %3931 = vmatpush1.msra.mxu0 0.0
        %3932 = vmatprep.subr.mxu0 0.0
        %3933 = vmatpush1.msra.mxu0 0.0
        %3934 = vmatprep.subr.mxu0 0.0
        %3935 = vmatpush1.msra.mxu0 0.0
        %3936 = vmatprep.subr.mxu0 0.0
        %3937 = vmatpush1.msra.mxu0 0.0
        %3938 = vmatprep.subr.mxu0 0.0
        %3939 = vmatpush1.msra.mxu0 0.0
        %3940 = vmatprep.subr.mxu0 0.0
        %3941 = vmatpush1.msra.mxu0 0.0
        %3942 = vmatprep.subr.mxu0 0.0
        %3943 = vmatpush1.msra.mxu0 0.0
        %3944 = vmatprep.subr.mxu0 0.0
        %3945 = vmatpush1.msra.mxu0 0.0
        %3946 = vmatprep.subr.mxu0 0.0
        %3947 = vmatpush1.msra.mxu0 0.0
        %3948 = vmatprep.subr.mxu0 0.0
        %3949 = vmatpush1.msra.mxu0 0.0
        %3950 = vmatprep.subr.mxu0 0.0
        %3951 = vmatpush1.msra.mxu0 0.0
        %3952 = vmatprep.subr.mxu0 0.0
        %3953 = vmatpush1.msra.mxu0 0.0
        %3954 = vmatprep.subr.mxu0 0.0
        %3955 = vmatpush1.msra.mxu0 0.0
        %3956 = vmatprep.subr.mxu0 0.0
        %3957 = vmatpush1.msra.mxu0 0.0
        %3958 = vmatprep.subr.mxu0 0.0
        %3959 = vmatpush1.msra.mxu0 0.0
        %3960 = vmatprep.subr.mxu0 0.0
        %3961 = vmatpush1.msra.mxu0 0.0
        %3962 = vmatprep.subr.mxu0 0.0
        %3963 = vmatpush1.msra.mxu0 0.0
        %3964 = vmatprep.subr.mxu0 0.0
        %3965 = vmatpush1.msra.mxu0 0.0
        %3966 = vmatprep.subr.mxu0 0.0
        %3967 = vmatpush1.msra.mxu0 0.0
        %3968 = vmatprep.subr.mxu0 0.0
        %3969 = vmatpush1.msra.mxu0 0.0
        %3970 = vmatprep.subr.mxu0 0.0
        %3971 = vmatpush1.msra.mxu0 0.0
        %3972 = vmatprep.subr.mxu0 0.0
        %3973 = vmatpush1.msra.mxu0 0.0
        %3974 = vmatprep.subr.mxu0 0.0
        %3975 = vmatpush1.msra.mxu0 0.0
        %3976 = vmatprep.subr.mxu0 0.0
        %3977 = vmatpush1.msra.mxu0 0.0
        %3978 = vmatprep.subr.mxu0 0.0
        %3979 = vmatpush1.msra.mxu0 0.0
        %3980 = vmatprep.subr.mxu0 0.0
        %3981 = vmatpush1.msra.mxu0 0.0
        %3982 = vmatprep.mubr.f32.mxu0 0.0
        %v3983 = vand.u32 %v3911, 4294901760
        %v3984 = vsub.f32 %v3911, %v3983
        %v3985 = vand.u32 %v3984, 4294901760
        %v3986 = vsub.f32 %v3984, %v3985
        %v3987 = vand.u32 %v3986, 4294901760
        %3988 = vmatmul.mubr.f32.gmra.mrb[0].mxu0 %v3987
        %v3989 = vpop.f32.mrb[0].mxu0
        %v3990 = vadd.f32 0.0, %v3989
        %v3991 = vpop.f32.mrb[0].mxu0
        %3992 = vmatprep.mubr.f32.mxu0 0.0
        %v3993 = vand.u32 %v3914, 4294901760
        %v3994 = vsub.f32 %v3914, %v3993
        %v3995 = vand.u32 %v3994, 4294901760
        %v3996 = vsub.f32 %v3994, %v3995
        %v3997 = vand.u32 %v3996, 4294901760
        %3998 = vmatmul.mubr.f32.gmra.mrb[0].mxu0 %v3997
        %v3999 = vpop.f32.mrb[0].mxu0
        %v4000 = vadd.f32 0.0, %v3999
        %v4001 = vpop.f32.mrb[0].mxu0
        %4002 = vdwg.mxu0
        %4003 = vmatprep.subr.mxu0 0.0
        %v4004 = vand.u32 %v3905, 4294901760
        %v4005 = vsub.f32 %v3905, %v4004
        %v4006 = vand.u32 %v4005, 4294901760
        %v4007 = vsub.f32 %v4005, %v4006
        %v4008 = vand.u32 %v4007, 4294901760
        %4009 = vmatpush1.msra.mxu0 %v4008
        %4010 = vmatprep.subr.mxu0 0.0
        %v4011 = vand.u32 %v3907, 4294901760
        %v4012 = vsub.f32 %v3907, %v4011
        %v4013 = vand.u32 %v4012, 4294901760
        %v4014 = vsub.f32 %v4012, %v4013
        %v4015 = vand.u32 %v4014, 4294901760
        %4016 = vmatpush1.msra.mxu0 %v4015
        %4017 = vmatprep.subr.mxu0 0.0
        %4018 = vmatpush1.msra.mxu0 0.0
        %4019 = vmatprep.subr.mxu0 0.0
        %4020 = vmatpush1.msra.mxu0 0.0
        %4021 = vmatprep.subr.mxu0 0.0
        %4022 = vmatpush1.msra.mxu0 0.0
        %4023 = vmatprep.subr.mxu0 0.0
        %4024 = vmatpush1.msra.mxu0 0.0
        %4025 = vmatprep.subr.mxu0 0.0
        %4026 = vmatpush1.msra.mxu0 0.0
        %4027 = vmatprep.subr.mxu0 0.0
        %4028 = vmatpush1.msra.mxu0 0.0
        %4029 = vmatprep.subr.mxu0 0.0
        %4030 = vmatpush1.msra.mxu0 0.0
        %4031 = vmatprep.subr.mxu0 0.0
        %4032 = vmatpush1.msra.mxu0 0.0
        %4033 = vmatprep.subr.mxu0 0.0
        %4034 = vmatpush1.msra.mxu0 0.0
        %4035 = vmatprep.subr.mxu0 0.0
        %4036 = vmatpush1.msra.mxu0 0.0
        %4037 = vmatprep.subr.mxu0 0.0
        %4038 = vmatpush1.msra.mxu0 0.0
        %4039 = vmatprep.subr.mxu0 0.0
        %4040 = vmatpush1.msra.mxu0 0.0
        %4041 = vmatprep.subr.mxu0 0.0
        %4042 = vmatpush1.msra.mxu0 0.0
        %4043 = vmatprep.subr.mxu0 0.0
        %4044 = vmatpush1.msra.mxu0 0.0
        %4045 = vmatprep.subr.mxu0 0.0
        %4046 = vmatpush1.msra.mxu0 0.0
        %4047 = vmatprep.subr.mxu0 0.0
        %4048 = vmatpush1.msra.mxu0 0.0
        %4049 = vmatprep.subr.mxu0 0.0
        %4050 = vmatpush1.msra.mxu0 0.0
        %4051 = vmatprep.subr.mxu0 0.0
        %4052 = vmatpush1.msra.mxu0 0.0
        %4053 = vmatprep.subr.mxu0 0.0
        %4054 = vmatpush1.msra.mxu0 0.0
        %4055 = vmatprep.subr.mxu0 0.0
        %4056 = vmatpush1.msra.mxu0 0.0
        %4057 = vmatprep.subr.mxu0 0.0
        %4058 = vmatpush1.msra.mxu0 0.0
        %4059 = vmatprep.subr.mxu0 0.0
        %4060 = vmatpush1.msra.mxu0 0.0
        %4061 = vmatprep.subr.mxu0 0.0
        %4062 = vmatpush1.msra.mxu0 0.0
        %4063 = vmatprep.subr.mxu0 0.0
        %4064 = vmatpush1.msra.mxu0 0.0
        %4065 = vmatprep.subr.mxu0 0.0
        %4066 = vmatpush1.msra.mxu0 0.0
        %4067 = vmatprep.subr.mxu0 0.0
        %4068 = vmatpush1.msra.mxu0 0.0
        %4069 = vmatprep.subr.mxu0 0.0
        %4070 = vmatpush1.msra.mxu0 0.0
        %4071 = vmatprep.subr.mxu0 0.0
        %4072 = vmatpush1.msra.mxu0 0.0
        %4073 = vmatprep.subr.mxu0 0.0
        %4074 = vmatpush1.msra.mxu0 0.0
        %4075 = vmatprep.subr.mxu0 0.0
        %4076 = vmatpush1.msra.mxu0 0.0
        %4077 = vmatprep.mubr.f32.mxu0 0.0
        %v4078 = vand.u32 %v3911, 4294901760
        %4079 = vmatmul.mubr.f32.gmra.mrb[0].mxu0 %v4078
        %v4080 = vpop.f32.mrb[0].mxu0
        %v4081 = vadd.f32 %v3990, %v4080
        %v4082 = vpop.f32.mrb[0].mxu0
        %4083 = vmatprep.mubr.f32.mxu0 0.0
        %v4084 = vand.u32 %v3914, 4294901760
        %4085 = vmatmul.mubr.f32.gmra.mrb[0].mxu0 %v4084
        %v4086 = vpop.f32.mrb[0].mxu0
        %v4087 = vadd.f32 %v4000, %v4086
        %v4088 = vpop.f32.mrb[0].mxu0
        %4089 = vdwg.mxu0
        %4090 = vmatprep.subr.mxu0 0.0
        %v4091 = vand.u32 %v3905, 4294901760
        %v4092 = vsub.f32 %v3905, %v4091
        %4093 = vmatpush1.msra.mxu0 %v4092
        %4094 = vmatprep.subr.mxu0 0.0
        %v4095 = vand.u32 %v3907, 4294901760
        %v4096 = vsub.f32 %v3907, %v4095
        %4097 = vmatpush1.msra.mxu0 %v4096
        %4098 = vmatprep.subr.mxu0 0.0
        %4099 = vmatpush1.msra.mxu0 0.0
        %4100 = vmatprep.subr.mxu0 0.0
        %4101 = vmatpush1.msra.mxu0 0.0
        %4102 = vmatprep.subr.mxu0 0.0
        %4103 = vmatpush1.msra.mxu0 0.0
        %4104 = vmatprep.subr.mxu0 0.0
        %4105 = vmatpush1.msra.mxu0 0.0
        %4106 = vmatprep.subr.mxu0 0.0
        %4107 = vmatpush1.msra.mxu0 0.0
        %4108 = vmatprep.subr.mxu0 0.0
        %4109 = vmatpush1.msra.mxu0 0.0
        %4110 = vmatprep.subr.mxu0 0.0
        %4111 = vmatpush1.msra.mxu0 0.0
        %4112 = vmatprep.subr.mxu0 0.0
        %4113 = vmatpush1.msra.mxu0 0.0
        %4114 = vmatprep.subr.mxu0 0.0
        %4115 = vmatpush1.msra.mxu0 0.0
        %4116 = vmatprep.subr.mxu0 0.0
        %4117 = vmatpush1.msra.mxu0 0.0
        %4118 = vmatprep.subr.mxu0 0.0
        %4119 = vmatpush1.msra.mxu0 0.0
        %4120 = vmatprep.subr.mxu0 0.0
        %4121 = vmatpush1.msra.mxu0 0.0
        %4122 = vmatprep.subr.mxu0 0.0
        %4123 = vmatpush1.msra.mxu0 0.0
        %4124 = vmatprep.subr.mxu0 0.0
        %4125 = vmatpush1.msra.mxu0 0.0
        %4126 = vmatprep.subr.mxu0 0.0
        %4127 = vmatpush1.msra.mxu0 0.0
        %4128 = vmatprep.subr.mxu0 0.0
        %4129 = vmatpush1.msra.mxu0 0.0
        %4130 = vmatprep.subr.mxu0 0.0
        %4131 = vmatpush1.msra.mxu0 0.0
        %4132 = vmatprep.subr.mxu0 0.0
        %4133 = vmatpush1.msra.mxu0 0.0
        %4134 = vmatprep.subr.mxu0 0.0
        %4135 = vmatpush1.msra.mxu0 0.0
        %4136 = vmatprep.subr.mxu0 0.0
        %4137 = vmatpush1.msra.mxu0 0.0
        %4138 = vmatprep.subr.mxu0 0.0
        %4139 = vmatpush1.msra.mxu0 0.0
        %4140 = vmatprep.subr.mxu0 0.0
        %4141 = vmatpush1.msra.mxu0 0.0
        %4142 = vmatprep.subr.mxu0 0.0
        %4143 = vmatpush1.msra.mxu0 0.0
        %4144 = vmatprep.subr.mxu0 0.0
        %4145 = vmatpush1.msra.mxu0 0.0
        %4146 = vmatprep.subr.mxu0 0.0
        %4147 = vmatpush1.msra.mxu0 0.0
        %4148 = vmatprep.subr.mxu0 0.0
        %4149 = vmatpush1.msra.mxu0 0.0
        %4150 = vmatprep.subr.mxu0 0.0
        %4151 = vmatpush1.msra.mxu0 0.0
        %4152 = vmatprep.subr.mxu0 0.0
        %4153 = vmatpush1.msra.mxu0 0.0
        %4154 = vmatprep.subr.mxu0 0.0
        %4155 = vmatpush1.msra.mxu0 0.0
        %4156 = vmatprep.subr.mxu0 0.0
        %4157 = vmatpush1.msra.mxu0 0.0
        %4158 = vmatprep.mubr.f32.mxu0 0.0
        %v4159 = vand.u32 %v3911, 4294901760
        %v4160 = vsub.f32 %v3911, %v4159
        %4161 = vmatmul.mubr.f32.gmra.mrb[0].mxu0 %v4160
        %v4162 = vpop.f32.mrb[0].mxu0
        %v4163 = vadd.f32 %v4081, %v4162
        %v4164 = vpop.f32.mrb[0].mxu0
        %4165 = vmatprep.mubr.f32.mxu0 0.0
        %v4166 = vand.u32 %v3914, 4294901760
        %v4167 = vsub.f32 %v3914, %v4166
        %4168 = vmatmul.mubr.f32.gmra.mrb[0].mxu0 %v4167
        %v4169 = vpop.f32.mrb[0].mxu0
        %v4170 = vadd.f32 %v4087, %v4169
        %v4171 = vpop.f32.mrb[0].mxu0
        %4172 = vdwg.mxu0
        %4173 = vmatprep.subr.mxu0 0.0
        %v4174 = vand.u32 %v3905, 4294901760
        %4175 = vmatpush1.msra.mxu0 %v4174
        %4176 = vmatprep.subr.mxu0 0.0
        %v4177 = vand.u32 %v3907, 4294901760
        %4178 = vmatpush1.msra.mxu0 %v4177
        %4179 = vmatprep.subr.mxu0 0.0
        %4180 = vmatpush1.msra.mxu0 0.0
        %4181 = vmatprep.subr.mxu0 0.0
        %4182 = vmatpush1.msra.mxu0 0.0
        %4183 = vmatprep.subr.mxu0 0.0
        %4184 = vmatpush1.msra.mxu0 0.0
        %4185 = vmatprep.subr.mxu0 0.0
        %4186 = vmatpush1.msra.mxu0 0.0
        %4187 = vmatprep.subr.mxu0 0.0
        %4188 = vmatpush1.msra.mxu0 0.0
        %4189 = vmatprep.subr.mxu0 0.0
        %4190 = vmatpush1.msra.mxu0 0.0
        %4191 = vmatprep.subr.mxu0 0.0
        %4192 = vmatpush1.msra.mxu0 0.0
        %4193 = vmatprep.subr.mxu0 0.0
        %4194 = vmatpush1.msra.mxu0 0.0
        %4195 = vmatprep.subr.mxu0 0.0
        %4196 = vmatpush1.msra.mxu0 0.0
        %4197 = vmatprep.subr.mxu0 0.0
        %4198 = vmatpush1.msra.mxu0 0.0
        %4199 = vmatprep.subr.mxu0 0.0
        %4200 = vmatpush1.msra.mxu0 0.0
        %4201 = vmatprep.subr.mxu0 0.0
        %4202 = vmatpush1.msra.mxu0 0.0
        %4203 = vmatprep.subr.mxu0 0.0
        %4204 = vmatpush1.msra.mxu0 0.0
        %4205 = vmatprep.subr.mxu0 0.0
        %4206 = vmatpush1.msra.mxu0 0.0
        %4207 = vmatprep.subr.mxu0 0.0
        %4208 = vmatpush1.msra.mxu0 0.0
        %4209 = vmatprep.subr.mxu0 0.0
        %4210 = vmatpush1.msra.mxu0 0.0
        %4211 = vmatprep.subr.mxu0 0.0
        %4212 = vmatpush1.msra.mxu0 0.0
        %4213 = vmatprep.subr.mxu0 0.0
        %4214 = vmatpush1.msra.mxu0 0.0
        %4215 = vmatprep.subr.mxu0 0.0
        %4216 = vmatpush1.msra.mxu0 0.0
        %4217 = vmatprep.subr.mxu0 0.0
        %4218 = vmatpush1.msra.mxu0 0.0
        %4219 = vmatprep.subr.mxu0 0.0
        %4220 = vmatpush1.msra.mxu0 0.0
        %4221 = vmatprep.subr.mxu0 0.0
        %4222 = vmatpush1.msra.mxu0 0.0
        %4223 = vmatprep.subr.mxu0 0.0
        %4224 = vmatpush1.msra.mxu0 0.0
        %4225 = vmatprep.subr.mxu0 0.0
        %4226 = vmatpush1.msra.mxu0 0.0
        %4227 = vmatprep.subr.mxu0 0.0
        %4228 = vmatpush1.msra.mxu0 0.0
        %4229 = vmatprep.subr.mxu0 0.0
        %4230 = vmatpush1.msra.mxu0 0.0
        %4231 = vmatprep.subr.mxu0 0.0
        %4232 = vmatpush1.msra.mxu0 0.0
        %4233 = vmatprep.subr.mxu0 0.0
        %4234 = vmatpush1.msra.mxu0 0.0
        %4235 = vmatprep.subr.mxu0 0.0
        %4236 = vmatpush1.msra.mxu0 0.0
        %4237 = vmatprep.subr.mxu0 0.0
        %4238 = vmatpush1.msra.mxu0 0.0
        %4239 = vmatprep.mubr.f32.mxu0 0.0
        %v4240 = vand.u32 %v3911, 4294901760
        %v4241 = vsub.f32 %v3911, %v4240
        %v4242 = vand.u32 %v4241, 4294901760
        %4243 = vmatmul.mubr.f32.gmra.mrb[0].mxu0 %v4242
        %v4244 = vpop.f32.mrb[0].mxu0
        %v4245 = vadd.f32 %v4163, %v4244
        %v4246 = vpop.f32.mrb[0].mxu0
        %4247 = vmatprep.mubr.f32.mxu0 0.0
        %v4248 = vand.u32 %v3914, 4294901760
        %v4249 = vsub.f32 %v3914, %v4248
        %v4250 = vand.u32 %v4249, 4294901760
        %4251 = vmatmul.mubr.f32.gmra.mrb[0].mxu0 %v4250
        %v4252 = vpop.f32.mrb[0].mxu0
        %v4253 = vadd.f32 %v4170, %v4252
        %v4254 = vpop.f32.mrb[0].mxu0
        %4255 = vdwg.mxu0
        %4256 = vmatprep.subr.mxu0 0.0
        %v4257 = vand.u32 %v3905, 4294901760
        %v4258 = vsub.f32 %v3905, %v4257
        %v4259 = vand.u32 %v4258, 4294901760
        %4260 = vmatpush1.msra.mxu0 %v4259
        %4261 = vmatprep.subr.mxu0 0.0
        %v4262 = vand.u32 %v3907, 4294901760
        %v4263 = vsub.f32 %v3907, %v4262
        %v4264 = vand.u32 %v4263, 4294901760
        %4265 = vmatpush1.msra.mxu0 %v4264
        %4266 = vmatprep.subr.mxu0 0.0
        %4267 = vmatpush1.msra.mxu0 0.0
        %4268 = vmatprep.subr.mxu0 0.0
        %4269 = vmatpush1.msra.mxu0 0.0
        %4270 = vmatprep.subr.mxu0 0.0
        %4271 = vmatpush1.msra.mxu0 0.0
        %4272 = vmatprep.subr.mxu0 0.0
        %4273 = vmatpush1.msra.mxu0 0.0
        %4274 = vmatprep.subr.mxu0 0.0
        %4275 = vmatpush1.msra.mxu0 0.0
        %4276 = vmatprep.subr.mxu0 0.0
        %4277 = vmatpush1.msra.mxu0 0.0
        %4278 = vmatprep.subr.mxu0 0.0
        %4279 = vmatpush1.msra.mxu0 0.0
        %4280 = vmatprep.subr.mxu0 0.0
        %4281 = vmatpush1.msra.mxu0 0.0
        %4282 = vmatprep.subr.mxu0 0.0
        %4283 = vmatpush1.msra.mxu0 0.0
        %4284 = vmatprep.subr.mxu0 0.0
        %4285 = vmatpush1.msra.mxu0 0.0
        %4286 = vmatprep.subr.mxu0 0.0
        %4287 = vmatpush1.msra.mxu0 0.0
        %4288 = vmatprep.subr.mxu0 0.0
        %4289 = vmatpush1.msra.mxu0 0.0
        %4290 = vmatprep.subr.mxu0 0.0
        %4291 = vmatpush1.msra.mxu0 0.0
        %4292 = vmatprep.subr.mxu0 0.0
        %4293 = vmatpush1.msra.mxu0 0.0
        %4294 = vmatprep.subr.mxu0 0.0
        %4295 = vmatpush1.msra.mxu0 0.0
        %4296 = vmatprep.subr.mxu0 0.0
        %4297 = vmatpush1.msra.mxu0 0.0
        %4298 = vmatprep.subr.mxu0 0.0
        %4299 = vmatpush1.msra.mxu0 0.0
        %4300 = vmatprep.subr.mxu0 0.0
        %4301 = vmatpush1.msra.mxu0 0.0
        %4302 = vmatprep.subr.mxu0 0.0
        %4303 = vmatpush1.msra.mxu0 0.0
        %4304 = vmatprep.subr.mxu0 0.0
        %4305 = vmatpush1.msra.mxu0 0.0
        %4306 = vmatprep.subr.mxu0 0.0
        %4307 = vmatpush1.msra.mxu0 0.0
        %4308 = vmatprep.subr.mxu0 0.0
        %4309 = vmatpush1.msra.mxu0 0.0
        %4310 = vmatprep.subr.mxu0 0.0
        %4311 = vmatpush1.msra.mxu0 0.0
        %4312 = vmatprep.subr.mxu0 0.0
        %4313 = vmatpush1.msra.mxu0 0.0
        %4314 = vmatprep.subr.mxu0 0.0
        %4315 = vmatpush1.msra.mxu0 0.0
        %4316 = vmatprep.subr.mxu0 0.0
        %4317 = vmatpush1.msra.mxu0 0.0
        %4318 = vmatprep.subr.mxu0 0.0
        %4319 = vmatpush1.msra.mxu0 0.0
        %4320 = vmatprep.subr.mxu0 0.0
        %4321 = vmatpush1.msra.mxu0 0.0
        %4322 = vmatprep.subr.mxu0 0.0
        %4323 = vmatpush1.msra.mxu0 0.0
        %4324 = vmatprep.subr.mxu0 0.0
        %4325 = vmatpush1.msra.mxu0 0.0
        %4326 = vmatprep.mubr.f32.mxu0 0.0
        %v4327 = vand.u32 %v3911, 4294901760
        %4328 = vmatmul.mubr.f32.gmra.mrb[0].mxu0 %v4327
        %v4329 = vpop.f32.mrb[0].mxu0
        %v4330 = vadd.f32 %v4245, %v4329
        %v4331 = vpop.f32.mrb[0].mxu0
        %4332 = vmatprep.mubr.f32.mxu0 0.0
        %v4333 = vand.u32 %v3914, 4294901760
        %4334 = vmatmul.mubr.f32.gmra.mrb[0].mxu0 %v4333
        %v4335 = vpop.f32.mrb[0].mxu0
        %v4336 = vadd.f32 %v4253, %v4335
        %v4337 = vpop.f32.mrb[0].mxu0
        %4338 = vdwg.mxu0
        %4339 = vmatprep.subr.mxu0 0.0
        %v4340 = vand.u32 %v3905, 4294901760
        %4341 = vmatpush1.msra.mxu0 %v4340
        %4342 = vmatprep.subr.mxu0 0.0
        %v4343 = vand.u32 %v3907, 4294901760
        %4344 = vmatpush1.msra.mxu0 %v4343
        %4345 = vmatprep.subr.mxu0 0.0
        %4346 = vmatpush1.msra.mxu0 0.0
        %4347 = vmatprep.subr.mxu0 0.0
        %4348 = vmatpush1.msra.mxu0 0.0
        %4349 = vmatprep.subr.mxu0 0.0
        %4350 = vmatpush1.msra.mxu0 0.0
        %4351 = vmatprep.subr.mxu0 0.0
        %4352 = vmatpush1.msra.mxu0 0.0
        %4353 = vmatprep.subr.mxu0 0.0
        %4354 = vmatpush1.msra.mxu0 0.0
        %4355 = vmatprep.subr.mxu0 0.0
        %4356 = vmatpush1.msra.mxu0 0.0
        %4357 = vmatprep.subr.mxu0 0.0
        %4358 = vmatpush1.msra.mxu0 0.0
        %4359 = vmatprep.subr.mxu0 0.0
        %4360 = vmatpush1.msra.mxu0 0.0
        %4361 = vmatprep.subr.mxu0 0.0
        %4362 = vmatpush1.msra.mxu0 0.0
        %4363 = vmatprep.subr.mxu0 0.0
        %4364 = vmatpush1.msra.mxu0 0.0
        %4365 = vmatprep.subr.mxu0 0.0
        %4366 = vmatpush1.msra.mxu0 0.0
        %4367 = vmatprep.subr.mxu0 0.0
        %4368 = vmatpush1.msra.mxu0 0.0
        %4369 = vmatprep.subr.mxu0 0.0
        %4370 = vmatpush1.msra.mxu0 0.0
        %4371 = vmatprep.subr.mxu0 0.0
        %4372 = vmatpush1.msra.mxu0 0.0
        %4373 = vmatprep.subr.mxu0 0.0
        %4374 = vmatpush1.msra.mxu0 0.0
        %4375 = vmatprep.subr.mxu0 0.0
        %4376 = vmatpush1.msra.mxu0 0.0
        %4377 = vmatprep.subr.mxu0 0.0
        %4378 = vmatpush1.msra.mxu0 0.0
        %4379 = vmatprep.subr.mxu0 0.0
        %4380 = vmatpush1.msra.mxu0 0.0
        %4381 = vmatprep.subr.mxu0 0.0
        %4382 = vmatpush1.msra.mxu0 0.0
        %4383 = vmatprep.subr.mxu0 0.0
        %4384 = vmatpush1.msra.mxu0 0.0
        %4385 = vmatprep.subr.mxu0 0.0
        %4386 = vmatpush1.msra.mxu0 0.0
        %4387 = vmatprep.subr.mxu0 0.0
        %4388 = vmatpush1.msra.mxu0 0.0
        %4389 = vmatprep.subr.mxu0 0.0
        %4390 = vmatpush1.msra.mxu0 0.0
        %4391 = vmatprep.subr.mxu0 0.0
        %4392 = vmatpush1.msra.mxu0 0.0
        %4393 = vmatprep.subr.mxu0 0.0
        %4394 = vmatpush1.msra.mxu0 0.0
        %4395 = vmatprep.subr.mxu0 0.0
        %4396 = vmatpush1.msra.mxu0 0.0
        %4397 = vmatprep.subr.mxu0 0.0
        %4398 = vmatpush1.msra.mxu0 0.0
        %4399 = vmatprep.subr.mxu0 0.0
        %4400 = vmatpush1.msra.mxu0 0.0
        %4401 = vmatprep.subr.mxu0 0.0
        %4402 = vmatpush1.msra.mxu0 0.0
        %4403 = vmatprep.subr.mxu0 0.0
        %4404 = vmatpush1.msra.mxu0 0.0
        %4405 = vmatprep.mubr.f32.mxu0 0.0
        %v4406 = vand.u32 %v3911, 4294901760
        %4407 = vmatmul.mubr.f32.gmra.mrb[0].mxu0 %v4406
        %v4408 = vpop.f32.mrb[0].mxu0
        %v4409 = vadd.f32 %v4330, %v4408
        %v4410 = vpop.f32.mrb[0].mxu0
        %4411 = vmatprep.mubr.f32.mxu0 0.0
        %v4412 = vand.u32 %v3914, 4294901760
        %4413 = vmatmul.mubr.f32.gmra.mrb[0].mxu0 %v4412
        %v4414 = vpop.f32.mrb[0].mxu0
        %v4415 = vadd.f32 %v4336, %v4414
        %v4416 = vpop.f32.mrb[0].mxu0
        %4417 = vdwg.mxu0
        %4422 = vrot.lane.b32.xlu0 %v3895, 8
        %v4423 = vpop.permute.xlu0 %4422
        %4424 = vrot.lane.b32.xlu0 %v3901, 8
        %v4425 = vpop.permute.xlu0 %4424
        %4426 = vrot.lane.b32.xlu0 %v4409, 8
        %v4427 = vpop.permute.xlu0 %4426
        %4428 = vrot.lane.b32.xlu0 %v4415, 8
        %v4429 = vpop.permute.xlu0 %4428
        %vm4434 = vcmask 130112
        %4435 = vst.msk [vmem:[%s177] sm:$0xff] %vm4434, %v4423
        %4436 = vst.msk [vmem:[%s177 + $0x8] sm:$0xff] %vm4434, %v4425
        %4437 = vst.msk [vmem:[%s177 + $0x10] sm:$0xff] %vm4434, %v4427
        %4438 = vst.msk [vmem:[%s177 + $0x18] sm:$0xff] %vm4434, %v4429
        %4439 = vrot.lane.b32.xlu0 %v184, 112
        %v4440 = vpop.permute.xlu0 %4439
        %4441 = vrot.lane.b32.xlu0 %v185, 112
        %v4442 = vpop.permute.xlu0 %4441
        %4443 = vrot.lane.b32.xlu0 %v180, 80
        %v4444 = vpop.permute.xlu0 %4443
        %4445 = vrot.lane.b32.xlu0 %v181, 80
        %v4446 = vpop.permute.xlu0 %4445
        %v4447 = vsel %vm202, %v4440, 0
        %v4449 = vsel %vm202, %v4442, 0
        %v4451 = vsel %vm202, %v4444, 0
        %v4453 = vsel %vm202, %v4446, 0
        %4455 = vmatprep.subr.mxu0 0.0
        %v4456 = vand.u32 %v4451, 4294901760
        %4457 = vmatpush1.xpose.msra.mxu0 %v4456
        %4458 = vmatprep.subr.mxu0 0.0
        %v4459 = vand.u32 %v4453, 4294901760
        %4460 = vmatpush1.xpose.msra.mxu0 %v4459
        %4461 = vmatprep.subr.mxu0 0.0
        %4462 = vmatpush1.xpose.msra.mxu0 0.0
        %4463 = vmatprep.subr.mxu0 0.0
        %4464 = vmatpush1.xpose.msra.mxu0 0.0
        %4465 = vmatprep.subr.mxu0 0.0
        %4466 = vmatpush1.xpose.msra.mxu0 0.0
        %4467 = vmatprep.subr.mxu0 0.0
        %4468 = vmatpush1.xpose.msra.mxu0 0.0
        %4469 = vmatprep.subr.mxu0 0.0
        %4470 = vmatpush1.xpose.msra.mxu0 0.0
        %4471 = vmatprep.subr.mxu0 0.0
        %4472 = vmatpush1.xpose.msra.mxu0 0.0
        %4473 = vmatprep.subr.mxu0 0.0
        %4474 = vmatpush1.xpose.msra.mxu0 0.0
        %4475 = vmatprep.subr.mxu0 0.0
        %4476 = vmatpush1.xpose.msra.mxu0 0.0
        %4477 = vmatprep.subr.mxu0 0.0
        %4478 = vmatpush1.xpose.msra.mxu0 0.0
        %4479 = vmatprep.subr.mxu0 0.0
        %4480 = vmatpush1.xpose.msra.mxu0 0.0
        %4481 = vmatprep.subr.mxu0 0.0
        %4482 = vmatpush1.xpose.msra.mxu0 0.0
        %4483 = vmatprep.subr.mxu0 0.0
        %4484 = vmatpush1.xpose.msra.mxu0 0.0
        %4485 = vmatprep.subr.mxu0 0.0
        %4486 = vmatpush1.xpose.msra.mxu0 0.0
        %4487 = vmatprep.subr.mxu0 0.0
        %4488 = vmatpush1.xpose.msra.mxu0 0.0
        %4489 = vmatprep.subr.mxu0 0.0
        %4490 = vmatpush1.xpose.msra.mxu0 0.0
        %4491 = vmatprep.subr.mxu0 0.0
        %4492 = vmatpush1.xpose.msra.mxu0 0.0
        %4493 = vmatprep.subr.mxu0 0.0
        %4494 = vmatpush1.xpose.msra.mxu0 0.0
        %4495 = vmatprep.subr.mxu0 0.0
        %4496 = vmatpush1.xpose.msra.mxu0 0.0
        %4497 = vmatprep.subr.mxu0 0.0
        %4498 = vmatpush1.xpose.msra.mxu0 0.0
        %4499 = vmatprep.subr.mxu0 0.0
        %4500 = vmatpush1.xpose.msra.mxu0 0.0
        %4501 = vmatprep.subr.mxu0 0.0
        %4502 = vmatpush1.xpose.msra.mxu0 0.0
        %4503 = vmatprep.subr.mxu0 0.0
        %4504 = vmatpush1.xpose.msra.mxu0 0.0
        %4505 = vmatprep.subr.mxu0 0.0
        %4506 = vmatpush1.xpose.msra.mxu0 0.0
        %4507 = vmatprep.subr.mxu0 0.0
        %4508 = vmatpush1.xpose.msra.mxu0 0.0
        %4509 = vmatprep.subr.mxu0 0.0
        %4510 = vmatpush1.xpose.msra.mxu0 0.0
        %4511 = vmatprep.subr.mxu0 0.0
        %4512 = vmatpush1.xpose.msra.mxu0 0.0
        %4513 = vmatprep.subr.mxu0 0.0
        %4514 = vmatpush1.xpose.msra.mxu0 0.0
        %4515 = vmatprep.subr.mxu0 0.0
        %4516 = vmatpush1.xpose.msra.mxu0 0.0
        %4517 = vmatprep.subr.mxu0 0.0
        %4518 = vmatpush1.xpose.msra.mxu0 0.0
        %4519 = vmatprep.subr.mxu0 0.0
        %4520 = vmatpush1.xpose.msra.mxu0 0.0
        %4521 = vmatprep.mubr.f32.mxu0 0.0
        %v4522 = vand.u32 %v4447, 4294901760
        %v4523 = vsub.f32 %v4447, %v4522
        %v4524 = vand.u32 %v4523, 4294901760
        %v4525 = vsub.f32 %v4523, %v4524
        %v4526 = vand.u32 %v4525, 4294901760
        %4527 = vmatmul.mubr.f32.gmra.mrb[0].mxu0 %v4526
        %v4528 = vpop.f32.mrb[0].mxu0
        %v4529 = vadd.f32 %v192, %v4528
        %v4530 = vpop.f32.mrb[0].mxu0
        %4531 = vmatprep.mubr.f32.mxu0 0.0
        %v4532 = vand.u32 %v4449, 4294901760
        %v4533 = vsub.f32 %v4449, %v4532
        %v4534 = vand.u32 %v4533, 4294901760
        %v4535 = vsub.f32 %v4533, %v4534
        %v4536 = vand.u32 %v4535, 4294901760
        %4537 = vmatmul.mubr.f32.gmra.mrb[0].mxu0 %v4536
        %v4538 = vpop.f32.mrb[0].mxu0
        %v4539 = vadd.f32 %v193, %v4538
        %v4540 = vpop.f32.mrb[0].mxu0
        %4541 = vdwg.mxu0
        %4542 = vmatprep.subr.mxu0 0.0
        %v4543 = vand.u32 %v4451, 4294901760
        %v4544 = vsub.f32 %v4451, %v4543
        %v4545 = vand.u32 %v4544, 4294901760
        %v4546 = vsub.f32 %v4544, %v4545
        %v4547 = vand.u32 %v4546, 4294901760
        %4548 = vmatpush1.xpose.msra.mxu0 %v4547
        %4549 = vmatprep.subr.mxu0 0.0
        %v4550 = vand.u32 %v4453, 4294901760
        %v4551 = vsub.f32 %v4453, %v4550
        %v4552 = vand.u32 %v4551, 4294901760
        %v4553 = vsub.f32 %v4551, %v4552
        %v4554 = vand.u32 %v4553, 4294901760
        %4555 = vmatpush1.xpose.msra.mxu0 %v4554
        %4556 = vmatprep.subr.mxu0 0.0
        %4557 = vmatpush1.xpose.msra.mxu0 0.0
        %4558 = vmatprep.subr.mxu0 0.0
        %4559 = vmatpush1.xpose.msra.mxu0 0.0
        %4560 = vmatprep.subr.mxu0 0.0
        %4561 = vmatpush1.xpose.msra.mxu0 0.0
        %4562 = vmatprep.subr.mxu0 0.0
        %4563 = vmatpush1.xpose.msra.mxu0 0.0
        %4564 = vmatprep.subr.mxu0 0.0
        %4565 = vmatpush1.xpose.msra.mxu0 0.0
        %4566 = vmatprep.subr.mxu0 0.0
        %4567 = vmatpush1.xpose.msra.mxu0 0.0
        %4568 = vmatprep.subr.mxu0 0.0
        %4569 = vmatpush1.xpose.msra.mxu0 0.0
        %4570 = vmatprep.subr.mxu0 0.0
        %4571 = vmatpush1.xpose.msra.mxu0 0.0
        %4572 = vmatprep.subr.mxu0 0.0
        %4573 = vmatpush1.xpose.msra.mxu0 0.0
        %4574 = vmatprep.subr.mxu0 0.0
        %4575 = vmatpush1.xpose.msra.mxu0 0.0
        %4576 = vmatprep.subr.mxu0 0.0
        %4577 = vmatpush1.xpose.msra.mxu0 0.0
        %4578 = vmatprep.subr.mxu0 0.0
        %4579 = vmatpush1.xpose.msra.mxu0 0.0
        %4580 = vmatprep.subr.mxu0 0.0
        %4581 = vmatpush1.xpose.msra.mxu0 0.0
        %4582 = vmatprep.subr.mxu0 0.0
        %4583 = vmatpush1.xpose.msra.mxu0 0.0
        %4584 = vmatprep.subr.mxu0 0.0
        %4585 = vmatpush1.xpose.msra.mxu0 0.0
        %4586 = vmatprep.subr.mxu0 0.0
        %4587 = vmatpush1.xpose.msra.mxu0 0.0
        %4588 = vmatprep.subr.mxu0 0.0
        %4589 = vmatpush1.xpose.msra.mxu0 0.0
        %4590 = vmatprep.subr.mxu0 0.0
        %4591 = vmatpush1.xpose.msra.mxu0 0.0
        %4592 = vmatprep.subr.mxu0 0.0
        %4593 = vmatpush1.xpose.msra.mxu0 0.0
        %4594 = vmatprep.subr.mxu0 0.0
        %4595 = vmatpush1.xpose.msra.mxu0 0.0
        %4596 = vmatprep.subr.mxu0 0.0
        %4597 = vmatpush1.xpose.msra.mxu0 0.0
        %4598 = vmatprep.subr.mxu0 0.0
        %4599 = vmatpush1.xpose.msra.mxu0 0.0
        %4600 = vmatprep.subr.mxu0 0.0
        %4601 = vmatpush1.xpose.msra.mxu0 0.0
        %4602 = vmatprep.subr.mxu0 0.0
        %4603 = vmatpush1.xpose.msra.mxu0 0.0
        %4604 = vmatprep.subr.mxu0 0.0
        %4605 = vmatpush1.xpose.msra.mxu0 0.0
        %4606 = vmatprep.subr.mxu0 0.0
        %4607 = vmatpush1.xpose.msra.mxu0 0.0
        %4608 = vmatprep.subr.mxu0 0.0
        %4609 = vmatpush1.xpose.msra.mxu0 0.0
        %4610 = vmatprep.subr.mxu0 0.0
        %4611 = vmatpush1.xpose.msra.mxu0 0.0
        %4612 = vmatprep.subr.mxu0 0.0
        %4613 = vmatpush1.xpose.msra.mxu0 0.0
        %4614 = vmatprep.subr.mxu0 0.0
        %4615 = vmatpush1.xpose.msra.mxu0 0.0
        %4616 = vmatprep.mubr.f32.mxu0 0.0
        %v4617 = vand.u32 %v4447, 4294901760
        %4618 = vmatmul.mubr.f32.gmra.mrb[0].mxu0 %v4617
        %v4619 = vpop.f32.mrb[0].mxu0
        %v4620 = vadd.f32 %v4529, %v4619
        %v4621 = vpop.f32.mrb[0].mxu0
        %4622 = vmatprep.mubr.f32.mxu0 0.0
        %v4623 = vand.u32 %v4449, 4294901760
        %4624 = vmatmul.mubr.f32.gmra.mrb[0].mxu0 %v4623
        %v4625 = vpop.f32.mrb[0].mxu0
        %v4626 = vadd.f32 %v4539, %v4625
        %v4627 = vpop.f32.mrb[0].mxu0
        %4628 = vdwg.mxu0
        %4629 = vmatprep.subr.mxu0 0.0
        %v4630 = vand.u32 %v4451, 4294901760
        %v4631 = vsub.f32 %v4451, %v4630
        %4632 = vmatpush1.xpose.msra.mxu0 %v4631
        %4633 = vmatprep.subr.mxu0 0.0
        %v4634 = vand.u32 %v4453, 4294901760
        %v4635 = vsub.f32 %v4453, %v4634
        %4636 = vmatpush1.xpose.msra.mxu0 %v4635
        %4637 = vmatprep.subr.mxu0 0.0
        %4638 = vmatpush1.xpose.msra.mxu0 0.0
        %4639 = vmatprep.subr.mxu0 0.0
        %4640 = vmatpush1.xpose.msra.mxu0 0.0
        %4641 = vmatprep.subr.mxu0 0.0
        %4642 = vmatpush1.xpose.msra.mxu0 0.0
        %4643 = vmatprep.subr.mxu0 0.0
        %4644 = vmatpush1.xpose.msra.mxu0 0.0
        %4645 = vmatprep.subr.mxu0 0.0
        %4646 = vmatpush1.xpose.msra.mxu0 0.0
        %4647 = vmatprep.subr.mxu0 0.0
        %4648 = vmatpush1.xpose.msra.mxu0 0.0
        %4649 = vmatprep.subr.mxu0 0.0
        %4650 = vmatpush1.xpose.msra.mxu0 0.0
        %4651 = vmatprep.subr.mxu0 0.0
        %4652 = vmatpush1.xpose.msra.mxu0 0.0
        %4653 = vmatprep.subr.mxu0 0.0
        %4654 = vmatpush1.xpose.msra.mxu0 0.0
        %4655 = vmatprep.subr.mxu0 0.0
        %4656 = vmatpush1.xpose.msra.mxu0 0.0
        %4657 = vmatprep.subr.mxu0 0.0
        %4658 = vmatpush1.xpose.msra.mxu0 0.0
        %4659 = vmatprep.subr.mxu0 0.0
        %4660 = vmatpush1.xpose.msra.mxu0 0.0
        %4661 = vmatprep.subr.mxu0 0.0
        %4662 = vmatpush1.xpose.msra.mxu0 0.0
        %4663 = vmatprep.subr.mxu0 0.0
        %4664 = vmatpush1.xpose.msra.mxu0 0.0
        %4665 = vmatprep.subr.mxu0 0.0
        %4666 = vmatpush1.xpose.msra.mxu0 0.0
        %4667 = vmatprep.subr.mxu0 0.0
        %4668 = vmatpush1.xpose.msra.mxu0 0.0
        %4669 = vmatprep.subr.mxu0 0.0
        %4670 = vmatpush1.xpose.msra.mxu0 0.0
        %4671 = vmatprep.subr.mxu0 0.0
        %4672 = vmatpush1.xpose.msra.mxu0 0.0
        %4673 = vmatprep.subr.mxu0 0.0
        %4674 = vmatpush1.xpose.msra.mxu0 0.0
        %4675 = vmatprep.subr.mxu0 0.0
        %4676 = vmatpush1.xpose.msra.mxu0 0.0
        %4677 = vmatprep.subr.mxu0 0.0
        %4678 = vmatpush1.xpose.msra.mxu0 0.0
        %4679 = vmatprep.subr.mxu0 0.0
        %4680 = vmatpush1.xpose.msra.mxu0 0.0
        %4681 = vmatprep.subr.mxu0 0.0
        %4682 = vmatpush1.xpose.msra.mxu0 0.0
        %4683 = vmatprep.subr.mxu0 0.0
        %4684 = vmatpush1.xpose.msra.mxu0 0.0
        %4685 = vmatprep.subr.mxu0 0.0
        %4686 = vmatpush1.xpose.msra.mxu0 0.0
        %4687 = vmatprep.subr.mxu0 0.0
        %4688 = vmatpush1.xpose.msra.mxu0 0.0
        %4689 = vmatprep.subr.mxu0 0.0
        %4690 = vmatpush1.xpose.msra.mxu0 0.0
        %4691 = vmatprep.subr.mxu0 0.0
        %4692 = vmatpush1.xpose.msra.mxu0 0.0
        %4693 = vmatprep.subr.mxu0 0.0
        %4694 = vmatpush1.xpose.msra.mxu0 0.0
        %4695 = vmatprep.subr.mxu0 0.0
        %4696 = vmatpush1.xpose.msra.mxu0 0.0
        %4697 = vmatprep.mubr.f32.mxu0 0.0
        %v4698 = vand.u32 %v4447, 4294901760
        %v4699 = vsub.f32 %v4447, %v4698
        %4700 = vmatmul.mubr.f32.gmra.mrb[0].mxu0 %v4699
        %v4701 = vpop.f32.mrb[0].mxu0
        %v4702 = vadd.f32 %v4620, %v4701
        %v4703 = vpop.f32.mrb[0].mxu0
        %4704 = vmatprep.mubr.f32.mxu0 0.0
        %v4705 = vand.u32 %v4449, 4294901760
        %v4706 = vsub.f32 %v4449, %v4705
        %4707 = vmatmul.mubr.f32.gmra.mrb[0].mxu0 %v4706
        %v4708 = vpop.f32.mrb[0].mxu0
        %v4709 = vadd.f32 %v4626, %v4708
        %v4710 = vpop.f32.mrb[0].mxu0
        %4711 = vdwg.mxu0
        %4712 = vmatprep.subr.mxu0 0.0
        %v4713 = vand.u32 %v4451, 4294901760
        %4714 = vmatpush1.xpose.msra.mxu0 %v4713
        %4715 = vmatprep.subr.mxu0 0.0
        %v4716 = vand.u32 %v4453, 4294901760
        %4717 = vmatpush1.xpose.msra.mxu0 %v4716
        %4718 = vmatprep.subr.mxu0 0.0
        %4719 = vmatpush1.xpose.msra.mxu0 0.0
        %4720 = vmatprep.subr.mxu0 0.0
        %4721 = vmatpush1.xpose.msra.mxu0 0.0
        %4722 = vmatprep.subr.mxu0 0.0
        %4723 = vmatpush1.xpose.msra.mxu0 0.0
        %4724 = vmatprep.subr.mxu0 0.0
        %4725 = vmatpush1.xpose.msra.mxu0 0.0
        %4726 = vmatprep.subr.mxu0 0.0
        %4727 = vmatpush1.xpose.msra.mxu0 0.0
        %4728 = vmatprep.subr.mxu0 0.0
        %4729 = vmatpush1.xpose.msra.mxu0 0.0
        %4730 = vmatprep.subr.mxu0 0.0
        %4731 = vmatpush1.xpose.msra.mxu0 0.0
        %4732 = vmatprep.subr.mxu0 0.0
        %4733 = vmatpush1.xpose.msra.mxu0 0.0
        %4734 = vmatprep.subr.mxu0 0.0
        %4735 = vmatpush1.xpose.msra.mxu0 0.0
        %4736 = vmatprep.subr.mxu0 0.0
        %4737 = vmatpush1.xpose.msra.mxu0 0.0
        %4738 = vmatprep.subr.mxu0 0.0
        %4739 = vmatpush1.xpose.msra.mxu0 0.0
        %4740 = vmatprep.subr.mxu0 0.0
        %4741 = vmatpush1.xpose.msra.mxu0 0.0
        %4742 = vmatprep.subr.mxu0 0.0
        %4743 = vmatpush1.xpose.msra.mxu0 0.0
        %4744 = vmatprep.subr.mxu0 0.0
        %4745 = vmatpush1.xpose.msra.mxu0 0.0
        %4746 = vmatprep.subr.mxu0 0.0
        %4747 = vmatpush1.xpose.msra.mxu0 0.0
        %4748 = vmatprep.subr.mxu0 0.0
        %4749 = vmatpush1.xpose.msra.mxu0 0.0
        %4750 = vmatprep.subr.mxu0 0.0
        %4751 = vmatpush1.xpose.msra.mxu0 0.0
        %4752 = vmatprep.subr.mxu0 0.0
        %4753 = vmatpush1.xpose.msra.mxu0 0.0
        %4754 = vmatprep.subr.mxu0 0.0
        %4755 = vmatpush1.xpose.msra.mxu0 0.0
        %4756 = vmatprep.subr.mxu0 0.0
        %4757 = vmatpush1.xpose.msra.mxu0 0.0
        %4758 = vmatprep.subr.mxu0 0.0
        %4759 = vmatpush1.xpose.msra.mxu0 0.0
        %4760 = vmatprep.subr.mxu0 0.0
        %4761 = vmatpush1.xpose.msra.mxu0 0.0
        %4762 = vmatprep.subr.mxu0 0.0
        %4763 = vmatpush1.xpose.msra.mxu0 0.0
        %4764 = vmatprep.subr.mxu0 0.0
        %4765 = vmatpush1.xpose.msra.mxu0 0.0
        %4766 = vmatprep.subr.mxu0 0.0
        %4767 = vmatpush1.xpose.msra.mxu0 0.0
        %4768 = vmatprep.subr.mxu0 0.0
        %4769 = vmatpush1.xpose.msra.mxu0 0.0
        %4770 = vmatprep.subr.mxu0 0.0
        %4771 = vmatpush1.xpose.msra.mxu0 0.0
        %4772 = vmatprep.subr.mxu0 0.0
        %4773 = vmatpush1.xpose.msra.mxu0 0.0
        %4774 = vmatprep.subr.mxu0 0.0
        %4775 = vmatpush1.xpose.msra.mxu0 0.0
        %4776 = vmatprep.subr.mxu0 0.0
        %4777 = vmatpush1.xpose.msra.mxu0 0.0
        %4778 = vmatprep.mubr.f32.mxu0 0.0
        %v4779 = vand.u32 %v4447, 4294901760
        %v4780 = vsub.f32 %v4447, %v4779
        %v4781 = vand.u32 %v4780, 4294901760
        %4782 = vmatmul.mubr.f32.gmra.mrb[0].mxu0 %v4781
        %v4783 = vpop.f32.mrb[0].mxu0
        %v4784 = vadd.f32 %v4702, %v4783
        %v4785 = vpop.f32.mrb[0].mxu0
        %4786 = vmatprep.mubr.f32.mxu0 0.0
        %v4787 = vand.u32 %v4449, 4294901760
        %v4788 = vsub.f32 %v4449, %v4787
        %v4789 = vand.u32 %v4788, 4294901760
        %4790 = vmatmul.mubr.f32.gmra.mrb[0].mxu0 %v4789
        %v4791 = vpop.f32.mrb[0].mxu0
        %v4792 = vadd.f32 %v4709, %v4791
        %v4793 = vpop.f32.mrb[0].mxu0
        %4794 = vdwg.mxu0
        %4795 = vmatprep.subr.mxu0 0.0
        %v4796 = vand.u32 %v4451, 4294901760
        %v4797 = vsub.f32 %v4451, %v4796
        %v4798 = vand.u32 %v4797, 4294901760
        %4799 = vmatpush1.xpose.msra.mxu0 %v4798
        %4800 = vmatprep.subr.mxu0 0.0
        %v4801 = vand.u32 %v4453, 4294901760
        %v4802 = vsub.f32 %v4453, %v4801
        %v4803 = vand.u32 %v4802, 4294901760
        %4804 = vmatpush1.xpose.msra.mxu0 %v4803
        %4805 = vmatprep.subr.mxu0 0.0
        %4806 = vmatpush1.xpose.msra.mxu0 0.0
        %4807 = vmatprep.subr.mxu0 0.0
        %4808 = vmatpush1.xpose.msra.mxu0 0.0
        %4809 = vmatprep.subr.mxu0 0.0
        %4810 = vmatpush1.xpose.msra.mxu0 0.0
        %4811 = vmatprep.subr.mxu0 0.0
        %4812 = vmatpush1.xpose.msra.mxu0 0.0
        %4813 = vmatprep.subr.mxu0 0.0
        %4814 = vmatpush1.xpose.msra.mxu0 0.0
        %4815 = vmatprep.subr.mxu0 0.0
        %4816 = vmatpush1.xpose.msra.mxu0 0.0
        %4817 = vmatprep.subr.mxu0 0.0
        %4818 = vmatpush1.xpose.msra.mxu0 0.0
        %4819 = vmatprep.subr.mxu0 0.0
        %4820 = vmatpush1.xpose.msra.mxu0 0.0
        %4821 = vmatprep.subr.mxu0 0.0
        %4822 = vmatpush1.xpose.msra.mxu0 0.0
        %4823 = vmatprep.subr.mxu0 0.0
        %4824 = vmatpush1.xpose.msra.mxu0 0.0
        %4825 = vmatprep.subr.mxu0 0.0
        %4826 = vmatpush1.xpose.msra.mxu0 0.0
        %4827 = vmatprep.subr.mxu0 0.0
        %4828 = vmatpush1.xpose.msra.mxu0 0.0
        %4829 = vmatprep.subr.mxu0 0.0
        %4830 = vmatpush1.xpose.msra.mxu0 0.0
        %4831 = vmatprep.subr.mxu0 0.0
        %4832 = vmatpush1.xpose.msra.mxu0 0.0
        %4833 = vmatprep.subr.mxu0 0.0
        %4834 = vmatpush1.xpose.msra.mxu0 0.0
        %4835 = vmatprep.subr.mxu0 0.0
        %4836 = vmatpush1.xpose.msra.mxu0 0.0
        %4837 = vmatprep.subr.mxu0 0.0
        %4838 = vmatpush1.xpose.msra.mxu0 0.0
        %4839 = vmatprep.subr.mxu0 0.0
        %4840 = vmatpush1.xpose.msra.mxu0 0.0
        %4841 = vmatprep.subr.mxu0 0.0
        %4842 = vmatpush1.xpose.msra.mxu0 0.0
        %4843 = vmatprep.subr.mxu0 0.0
        %4844 = vmatpush1.xpose.msra.mxu0 0.0
        %4845 = vmatprep.subr.mxu0 0.0
        %4846 = vmatpush1.xpose.msra.mxu0 0.0
        %4847 = vmatprep.subr.mxu0 0.0
        %4848 = vmatpush1.xpose.msra.mxu0 0.0
        %4849 = vmatprep.subr.mxu0 0.0
        %4850 = vmatpush1.xpose.msra.mxu0 0.0
        %4851 = vmatprep.subr.mxu0 0.0
        %4852 = vmatpush1.xpose.msra.mxu0 0.0
        %4853 = vmatprep.subr.mxu0 0.0
        %4854 = vmatpush1.xpose.msra.mxu0 0.0
        %4855 = vmatprep.subr.mxu0 0.0
        %4856 = vmatpush1.xpose.msra.mxu0 0.0
        %4857 = vmatprep.subr.mxu0 0.0
        %4858 = vmatpush1.xpose.msra.mxu0 0.0
        %4859 = vmatprep.subr.mxu0 0.0
        %4860 = vmatpush1.xpose.msra.mxu0 0.0
        %4861 = vmatprep.subr.mxu0 0.0
        %4862 = vmatpush1.xpose.msra.mxu0 0.0
        %4863 = vmatprep.subr.mxu0 0.0
        %4864 = vmatpush1.xpose.msra.mxu0 0.0
        %4865 = vmatprep.mubr.f32.mxu0 0.0
        %v4866 = vand.u32 %v4447, 4294901760
        %4867 = vmatmul.mubr.f32.gmra.mrb[0].mxu0 %v4866
        %v4868 = vpop.f32.mrb[0].mxu0
        %v4869 = vadd.f32 %v4784, %v4868
        %v4870 = vpop.f32.mrb[0].mxu0
        %4871 = vmatprep.mubr.f32.mxu0 0.0
        %v4872 = vand.u32 %v4449, 4294901760
        %4873 = vmatmul.mubr.f32.gmra.mrb[0].mxu0 %v4872
        %v4874 = vpop.f32.mrb[0].mxu0
        %v4875 = vadd.f32 %v4792, %v4874
        %v4876 = vpop.f32.mrb[0].mxu0
        %4877 = vdwg.mxu0
        %4878 = vmatprep.subr.mxu0 0.0
        %v4879 = vand.u32 %v4451, 4294901760
        %4880 = vmatpush1.xpose.msra.mxu0 %v4879
        %4881 = vmatprep.subr.mxu0 0.0
        %v4882 = vand.u32 %v4453, 4294901760
        %4883 = vmatpush1.xpose.msra.mxu0 %v4882
        %4884 = vmatprep.subr.mxu0 0.0
        %4885 = vmatpush1.xpose.msra.mxu0 0.0
        %4886 = vmatprep.subr.mxu0 0.0
        %4887 = vmatpush1.xpose.msra.mxu0 0.0
        %4888 = vmatprep.subr.mxu0 0.0
        %4889 = vmatpush1.xpose.msra.mxu0 0.0
        %4890 = vmatprep.subr.mxu0 0.0
        %4891 = vmatpush1.xpose.msra.mxu0 0.0
        %4892 = vmatprep.subr.mxu0 0.0
        %4893 = vmatpush1.xpose.msra.mxu0 0.0
        %4894 = vmatprep.subr.mxu0 0.0
        %4895 = vmatpush1.xpose.msra.mxu0 0.0
        %4896 = vmatprep.subr.mxu0 0.0
        %4897 = vmatpush1.xpose.msra.mxu0 0.0
        %4898 = vmatprep.subr.mxu0 0.0
        %4899 = vmatpush1.xpose.msra.mxu0 0.0
        %4900 = vmatprep.subr.mxu0 0.0
        %4901 = vmatpush1.xpose.msra.mxu0 0.0
        %4902 = vmatprep.subr.mxu0 0.0
        %4903 = vmatpush1.xpose.msra.mxu0 0.0
        %4904 = vmatprep.subr.mxu0 0.0
        %4905 = vmatpush1.xpose.msra.mxu0 0.0
        %4906 = vmatprep.subr.mxu0 0.0
        %4907 = vmatpush1.xpose.msra.mxu0 0.0
        %4908 = vmatprep.subr.mxu0 0.0
        %4909 = vmatpush1.xpose.msra.mxu0 0.0
        %4910 = vmatprep.subr.mxu0 0.0
        %4911 = vmatpush1.xpose.msra.mxu0 0.0
        %4912 = vmatprep.subr.mxu0 0.0
        %4913 = vmatpush1.xpose.msra.mxu0 0.0
        %4914 = vmatprep.subr.mxu0 0.0
        %4915 = vmatpush1.xpose.msra.mxu0 0.0
        %4916 = vmatprep.subr.mxu0 0.0
        %4917 = vmatpush1.xpose.msra.mxu0 0.0
        %4918 = vmatprep.subr.mxu0 0.0
        %4919 = vmatpush1.xpose.msra.mxu0 0.0
        %4920 = vmatprep.subr.mxu0 0.0
        %4921 = vmatpush1.xpose.msra.mxu0 0.0
        %4922 = vmatprep.subr.mxu0 0.0
        %4923 = vmatpush1.xpose.msra.mxu0 0.0
        %4924 = vmatprep.subr.mxu0 0.0
        %4925 = vmatpush1.xpose.msra.mxu0 0.0
        %4926 = vmatprep.subr.mxu0 0.0
        %4927 = vmatpush1.xpose.msra.mxu0 0.0
        %4928 = vmatprep.subr.mxu0 0.0
        %4929 = vmatpush1.xpose.msra.mxu0 0.0
        %4930 = vmatprep.subr.mxu0 0.0
        %4931 = vmatpush1.xpose.msra.mxu0 0.0
        %4932 = vmatprep.subr.mxu0 0.0
        %4933 = vmatpush1.xpose.msra.mxu0 0.0
        %4934 = vmatprep.subr.mxu0 0.0
        %4935 = vmatpush1.xpose.msra.mxu0 0.0
        %4936 = vmatprep.subr.mxu0 0.0
        %4937 = vmatpush1.xpose.msra.mxu0 0.0
        %4938 = vmatprep.subr.mxu0 0.0
        %4939 = vmatpush1.xpose.msra.mxu0 0.0
        %4940 = vmatprep.subr.mxu0 0.0
        %4941 = vmatpush1.xpose.msra.mxu0 0.0
        %4942 = vmatprep.subr.mxu0 0.0
        %4943 = vmatpush1.xpose.msra.mxu0 0.0
        %4944 = vmatprep.mubr.f32.mxu0 0.0
        %v4945 = vand.u32 %v4447, 4294901760
        %4946 = vmatmul.mubr.f32.gmra.mrb[0].mxu0 %v4945
        %v4947 = vpop.f32.mrb[0].mxu0
        %v4948 = vadd.f32 %v4869, %v4947
        %v4949 = vpop.f32.mrb[0].mxu0
        %4950 = vmatprep.mubr.f32.mxu0 0.0
        %v4951 = vand.u32 %v4449, 4294901760
        %4952 = vmatmul.mubr.f32.gmra.mrb[0].mxu0 %v4951
        %v4953 = vpop.f32.mrb[0].mxu0
        %v4954 = vadd.f32 %v4875, %v4953
        %v4955 = vpop.f32.mrb[0].mxu0
        %4956 = vdwg.mxu0
        %4957 = vrot.lane.b32.xlu0 %v186, 112
        %v4958 = vpop.permute.xlu0 %4957
        %4959 = vrot.lane.b32.xlu0 %v187, 112
        %v4960 = vpop.permute.xlu0 %4959
        %4961 = vrot.lane.b32.xlu0 %v182, 80
        %v4962 = vpop.permute.xlu0 %4961
        %4963 = vrot.lane.b32.xlu0 %v183, 80
        %v4964 = vpop.permute.xlu0 %4963
        %v4965 = vsel %vm202, %v4958, 0
        %v4967 = vsel %vm202, %v4960, 0
        %v4969 = vsel %vm202, %v4962, 0
        %v4971 = vsel %vm202, %v4964, 0
        %4973 = vmatprep.subr.mxu0 0.0
        %v4974 = vand.u32 %v4969, 4294901760
        %4975 = vmatpush1.xpose.msra.mxu0 %v4974
        %4976 = vmatprep.subr.mxu0 0.0
        %v4977 = vand.u32 %v4971, 4294901760
        %4978 = vmatpush1.xpose.msra.mxu0 %v4977
        %4979 = vmatprep.subr.mxu0 0.0
        %4980 = vmatpush1.xpose.msra.mxu0 0.0
        %4981 = vmatprep.subr.mxu0 0.0
        %4982 = vmatpush1.xpose.msra.mxu0 0.0
        %4983 = vmatprep.subr.mxu0 0.0
        %4984 = vmatpush1.xpose.msra.mxu0 0.0
        %4985 = vmatprep.subr.mxu0 0.0
        %4986 = vmatpush1.xpose.msra.mxu0 0.0
        %4987 = vmatprep.subr.mxu0 0.0
        %4988 = vmatpush1.xpose.msra.mxu0 0.0
        %4989 = vmatprep.subr.mxu0 0.0
        %4990 = vmatpush1.xpose.msra.mxu0 0.0
        %4991 = vmatprep.subr.mxu0 0.0
        %4992 = vmatpush1.xpose.msra.mxu0 0.0
        %4993 = vmatprep.subr.mxu0 0.0
        %4994 = vmatpush1.xpose.msra.mxu0 0.0
        %4995 = vmatprep.subr.mxu0 0.0
        %4996 = vmatpush1.xpose.msra.mxu0 0.0
        %4997 = vmatprep.subr.mxu0 0.0
        %4998 = vmatpush1.xpose.msra.mxu0 0.0
        %4999 = vmatprep.subr.mxu0 0.0
        %5000 = vmatpush1.xpose.msra.mxu0 0.0
        %5001 = vmatprep.subr.mxu0 0.0
        %5002 = vmatpush1.xpose.msra.mxu0 0.0
        %5003 = vmatprep.subr.mxu0 0.0
        %5004 = vmatpush1.xpose.msra.mxu0 0.0
        %5005 = vmatprep.subr.mxu0 0.0
        %5006 = vmatpush1.xpose.msra.mxu0 0.0
        %5007 = vmatprep.subr.mxu0 0.0
        %5008 = vmatpush1.xpose.msra.mxu0 0.0
        %5009 = vmatprep.subr.mxu0 0.0
        %5010 = vmatpush1.xpose.msra.mxu0 0.0
        %5011 = vmatprep.subr.mxu0 0.0
        %5012 = vmatpush1.xpose.msra.mxu0 0.0
        %5013 = vmatprep.subr.mxu0 0.0
        %5014 = vmatpush1.xpose.msra.mxu0 0.0
        %5015 = vmatprep.subr.mxu0 0.0
        %5016 = vmatpush1.xpose.msra.mxu0 0.0
        %5017 = vmatprep.subr.mxu0 0.0
        %5018 = vmatpush1.xpose.msra.mxu0 0.0
        %5019 = vmatprep.subr.mxu0 0.0
        %5020 = vmatpush1.xpose.msra.mxu0 0.0
        %5021 = vmatprep.subr.mxu0 0.0
        %5022 = vmatpush1.xpose.msra.mxu0 0.0
        %5023 = vmatprep.subr.mxu0 0.0
        %5024 = vmatpush1.xpose.msra.mxu0 0.0
        %5025 = vmatprep.subr.mxu0 0.0
        %5026 = vmatpush1.xpose.msra.mxu0 0.0
        %5027 = vmatprep.subr.mxu0 0.0
        %5028 = vmatpush1.xpose.msra.mxu0 0.0
        %5029 = vmatprep.subr.mxu0 0.0
        %5030 = vmatpush1.xpose.msra.mxu0 0.0
        %5031 = vmatprep.subr.mxu0 0.0
        %5032 = vmatpush1.xpose.msra.mxu0 0.0
        %5033 = vmatprep.subr.mxu0 0.0
        %5034 = vmatpush1.xpose.msra.mxu0 0.0
        %5035 = vmatprep.subr.mxu0 0.0
        %5036 = vmatpush1.xpose.msra.mxu0 0.0
        %5037 = vmatprep.subr.mxu0 0.0
        %5038 = vmatpush1.xpose.msra.mxu0 0.0
        %5039 = vmatprep.mubr.f32.mxu0 0.0
        %v5040 = vand.u32 %v4965, 4294901760
        %v5041 = vsub.f32 %v4965, %v5040
        %v5042 = vand.u32 %v5041, 4294901760
        %v5043 = vsub.f32 %v5041, %v5042
        %v5044 = vand.u32 %v5043, 4294901760
        %5045 = vmatmul.mubr.f32.gmra.mrb[0].mxu0 %v5044
        %v5046 = vpop.f32.mrb[0].mxu0
        %v5047 = vadd.f32 %v192, %v5046
        %v5048 = vpop.f32.mrb[0].mxu0
        %5049 = vmatprep.mubr.f32.mxu0 0.0
        %v5050 = vand.u32 %v4967, 4294901760
        %v5051 = vsub.f32 %v4967, %v5050
        %v5052 = vand.u32 %v5051, 4294901760
        %v5053 = vsub.f32 %v5051, %v5052
        %v5054 = vand.u32 %v5053, 4294901760
        %5055 = vmatmul.mubr.f32.gmra.mrb[0].mxu0 %v5054
        %v5056 = vpop.f32.mrb[0].mxu0
        %v5057 = vadd.f32 %v193, %v5056
        %v5058 = vpop.f32.mrb[0].mxu0
        %5059 = vdwg.mxu0
        %5060 = vmatprep.subr.mxu0 0.0
        %v5061 = vand.u32 %v4969, 4294901760
        %v5062 = vsub.f32 %v4969, %v5061
        %v5063 = vand.u32 %v5062, 4294901760
        %v5064 = vsub.f32 %v5062, %v5063
        %v5065 = vand.u32 %v5064, 4294901760
        %5066 = vmatpush1.xpose.msra.mxu0 %v5065
        %5067 = vmatprep.subr.mxu0 0.0
        %v5068 = vand.u32 %v4971, 4294901760
        %v5069 = vsub.f32 %v4971, %v5068
        %v5070 = vand.u32 %v5069, 4294901760
        %v5071 = vsub.f32 %v5069, %v5070
        %v5072 = vand.u32 %v5071, 4294901760
        %5073 = vmatpush1.xpose.msra.mxu0 %v5072
        %5074 = vmatprep.subr.mxu0 0.0
        %5075 = vmatpush1.xpose.msra.mxu0 0.0
        %5076 = vmatprep.subr.mxu0 0.0
        %5077 = vmatpush1.xpose.msra.mxu0 0.0
        %5078 = vmatprep.subr.mxu0 0.0
        %5079 = vmatpush1.xpose.msra.mxu0 0.0
        %5080 = vmatprep.subr.mxu0 0.0
        %5081 = vmatpush1.xpose.msra.mxu0 0.0
        %5082 = vmatprep.subr.mxu0 0.0
        %5083 = vmatpush1.xpose.msra.mxu0 0.0
        %5084 = vmatprep.subr.mxu0 0.0
        %5085 = vmatpush1.xpose.msra.mxu0 0.0
        %5086 = vmatprep.subr.mxu0 0.0
        %5087 = vmatpush1.xpose.msra.mxu0 0.0
        %5088 = vmatprep.subr.mxu0 0.0
        %5089 = vmatpush1.xpose.msra.mxu0 0.0
        %5090 = vmatprep.subr.mxu0 0.0
        %5091 = vmatpush1.xpose.msra.mxu0 0.0
        %5092 = vmatprep.subr.mxu0 0.0
        %5093 = vmatpush1.xpose.msra.mxu0 0.0
        %5094 = vmatprep.subr.mxu0 0.0
        %5095 = vmatpush1.xpose.msra.mxu0 0.0
        %5096 = vmatprep.subr.mxu0 0.0
        %5097 = vmatpush1.xpose.msra.mxu0 0.0
        %5098 = vmatprep.subr.mxu0 0.0
        %5099 = vmatpush1.xpose.msra.mxu0 0.0
        %5100 = vmatprep.subr.mxu0 0.0
        %5101 = vmatpush1.xpose.msra.mxu0 0.0
        %5102 = vmatprep.subr.mxu0 0.0
        %5103 = vmatpush1.xpose.msra.mxu0 0.0
        %5104 = vmatprep.subr.mxu0 0.0
        %5105 = vmatpush1.xpose.msra.mxu0 0.0
        %5106 = vmatprep.subr.mxu0 0.0
        %5107 = vmatpush1.xpose.msra.mxu0 0.0
        %5108 = vmatprep.subr.mxu0 0.0
        %5109 = vmatpush1.xpose.msra.mxu0 0.0
        %5110 = vmatprep.subr.mxu0 0.0
        %5111 = vmatpush1.xpose.msra.mxu0 0.0
        %5112 = vmatprep.subr.mxu0 0.0
        %5113 = vmatpush1.xpose.msra.mxu0 0.0
        %5114 = vmatprep.subr.mxu0 0.0
        %5115 = vmatpush1.xpose.msra.mxu0 0.0
        %5116 = vmatprep.subr.mxu0 0.0
        %5117 = vmatpush1.xpose.msra.mxu0 0.0
        %5118 = vmatprep.subr.mxu0 0.0
        %5119 = vmatpush1.xpose.msra.mxu0 0.0
        %5120 = vmatprep.subr.mxu0 0.0
        %5121 = vmatpush1.xpose.msra.mxu0 0.0
        %5122 = vmatprep.subr.mxu0 0.0
        %5123 = vmatpush1.xpose.msra.mxu0 0.0
        %5124 = vmatprep.subr.mxu0 0.0
        %5125 = vmatpush1.xpose.msra.mxu0 0.0
        %5126 = vmatprep.subr.mxu0 0.0
        %5127 = vmatpush1.xpose.msra.mxu0 0.0
        %5128 = vmatprep.subr.mxu0 0.0
        %5129 = vmatpush1.xpose.msra.mxu0 0.0
        %5130 = vmatprep.subr.mxu0 0.0
        %5131 = vmatpush1.xpose.msra.mxu0 0.0
        %5132 = vmatprep.subr.mxu0 0.0
        %5133 = vmatpush1.xpose.msra.mxu0 0.0
        %5134 = vmatprep.mubr.f32.mxu0 0.0
        %v5135 = vand.u32 %v4965, 4294901760
        %5136 = vmatmul.mubr.f32.gmra.mrb[0].mxu0 %v5135
        %v5137 = vpop.f32.mrb[0].mxu0
        %v5138 = vadd.f32 %v5047, %v5137
        %v5139 = vpop.f32.mrb[0].mxu0
        %5140 = vmatprep.mubr.f32.mxu0 0.0
        %v5141 = vand.u32 %v4967, 4294901760
        %5142 = vmatmul.mubr.f32.gmra.mrb[0].mxu0 %v5141
        %v5143 = vpop.f32.mrb[0].mxu0
        %v5144 = vadd.f32 %v5057, %v5143
        %v5145 = vpop.f32.mrb[0].mxu0
        %5146 = vdwg.mxu0
        %5147 = vmatprep.subr.mxu0 0.0
        %v5148 = vand.u32 %v4969, 4294901760
        %v5149 = vsub.f32 %v4969, %v5148
        %5150 = vmatpush1.xpose.msra.mxu0 %v5149
        %5151 = vmatprep.subr.mxu0 0.0
        %v5152 = vand.u32 %v4971, 4294901760
        %v5153 = vsub.f32 %v4971, %v5152
        %5154 = vmatpush1.xpose.msra.mxu0 %v5153
        %5155 = vmatprep.subr.mxu0 0.0
        %5156 = vmatpush1.xpose.msra.mxu0 0.0
        %5157 = vmatprep.subr.mxu0 0.0
        %5158 = vmatpush1.xpose.msra.mxu0 0.0
        %5159 = vmatprep.subr.mxu0 0.0
        %5160 = vmatpush1.xpose.msra.mxu0 0.0
        %5161 = vmatprep.subr.mxu0 0.0
        %5162 = vmatpush1.xpose.msra.mxu0 0.0
        %5163 = vmatprep.subr.mxu0 0.0
        %5164 = vmatpush1.xpose.msra.mxu0 0.0
        %5165 = vmatprep.subr.mxu0 0.0
        %5166 = vmatpush1.xpose.msra.mxu0 0.0
        %5167 = vmatprep.subr.mxu0 0.0
        %5168 = vmatpush1.xpose.msra.mxu0 0.0
        %5169 = vmatprep.subr.mxu0 0.0
        %5170 = vmatpush1.xpose.msra.mxu0 0.0
        %5171 = vmatprep.subr.mxu0 0.0
        %5172 = vmatpush1.xpose.msra.mxu0 0.0
        %5173 = vmatprep.subr.mxu0 0.0
        %5174 = vmatpush1.xpose.msra.mxu0 0.0
        %5175 = vmatprep.subr.mxu0 0.0
        %5176 = vmatpush1.xpose.msra.mxu0 0.0
        %5177 = vmatprep.subr.mxu0 0.0
        %5178 = vmatpush1.xpose.msra.mxu0 0.0
        %5179 = vmatprep.subr.mxu0 0.0
        %5180 = vmatpush1.xpose.msra.mxu0 0.0
        %5181 = vmatprep.subr.mxu0 0.0
        %5182 = vmatpush1.xpose.msra.mxu0 0.0
        %5183 = vmatprep.subr.mxu0 0.0
        %5184 = vmatpush1.xpose.msra.mxu0 0.0
        %5185 = vmatprep.subr.mxu0 0.0
        %5186 = vmatpush1.xpose.msra.mxu0 0.0
        %5187 = vmatprep.subr.mxu0 0.0
        %5188 = vmatpush1.xpose.msra.mxu0 0.0
        %5189 = vmatprep.subr.mxu0 0.0
        %5190 = vmatpush1.xpose.msra.mxu0 0.0
        %5191 = vmatprep.subr.mxu0 0.0
        %5192 = vmatpush1.xpose.msra.mxu0 0.0
        %5193 = vmatprep.subr.mxu0 0.0
        %5194 = vmatpush1.xpose.msra.mxu0 0.0
        %5195 = vmatprep.subr.mxu0 0.0
        %5196 = vmatpush1.xpose.msra.mxu0 0.0
        %5197 = vmatprep.subr.mxu0 0.0
        %5198 = vmatpush1.xpose.msra.mxu0 0.0
        %5199 = vmatprep.subr.mxu0 0.0
        %5200 = vmatpush1.xpose.msra.mxu0 0.0
        %5201 = vmatprep.subr.mxu0 0.0
        %5202 = vmatpush1.xpose.msra.mxu0 0.0
        %5203 = vmatprep.subr.mxu0 0.0
        %5204 = vmatpush1.xpose.msra.mxu0 0.0
        %5205 = vmatprep.subr.mxu0 0.0
        %5206 = vmatpush1.xpose.msra.mxu0 0.0
        %5207 = vmatprep.subr.mxu0 0.0
        %5208 = vmatpush1.xpose.msra.mxu0 0.0
        %5209 = vmatprep.subr.mxu0 0.0
        %5210 = vmatpush1.xpose.msra.mxu0 0.0
        %5211 = vmatprep.subr.mxu0 0.0
        %5212 = vmatpush1.xpose.msra.mxu0 0.0
        %5213 = vmatprep.subr.mxu0 0.0
        %5214 = vmatpush1.xpose.msra.mxu0 0.0
        %5215 = vmatprep.mubr.f32.mxu0 0.0
        %v5216 = vand.u32 %v4965, 4294901760
        %v5217 = vsub.f32 %v4965, %v5216
        %5218 = vmatmul.mubr.f32.gmra.mrb[0].mxu0 %v5217
        %v5219 = vpop.f32.mrb[0].mxu0
        %v5220 = vadd.f32 %v5138, %v5219
        %v5221 = vpop.f32.mrb[0].mxu0
        %5222 = vmatprep.mubr.f32.mxu0 0.0
        %v5223 = vand.u32 %v4967, 4294901760
        %v5224 = vsub.f32 %v4967, %v5223
        %5225 = vmatmul.mubr.f32.gmra.mrb[0].mxu0 %v5224
        %v5226 = vpop.f32.mrb[0].mxu0
        %v5227 = vadd.f32 %v5144, %v5226
        %v5228 = vpop.f32.mrb[0].mxu0
        %5229 = vdwg.mxu0
        %5230 = vmatprep.subr.mxu0 0.0
        %v5231 = vand.u32 %v4969, 4294901760
        %5232 = vmatpush1.xpose.msra.mxu0 %v5231
        %5233 = vmatprep.subr.mxu0 0.0
        %v5234 = vand.u32 %v4971, 4294901760
        %5235 = vmatpush1.xpose.msra.mxu0 %v5234
        %5236 = vmatprep.subr.mxu0 0.0
        %5237 = vmatpush1.xpose.msra.mxu0 0.0
        %5238 = vmatprep.subr.mxu0 0.0
        %5239 = vmatpush1.xpose.msra.mxu0 0.0
        %5240 = vmatprep.subr.mxu0 0.0
        %5241 = vmatpush1.xpose.msra.mxu0 0.0
        %5242 = vmatprep.subr.mxu0 0.0
        %5243 = vmatpush1.xpose.msra.mxu0 0.0
        %5244 = vmatprep.subr.mxu0 0.0
        %5245 = vmatpush1.xpose.msra.mxu0 0.0
        %5246 = vmatprep.subr.mxu0 0.0
        %5247 = vmatpush1.xpose.msra.mxu0 0.0
        %5248 = vmatprep.subr.mxu0 0.0
        %5249 = vmatpush1.xpose.msra.mxu0 0.0
        %5250 = vmatprep.subr.mxu0 0.0
        %5251 = vmatpush1.xpose.msra.mxu0 0.0
        %5252 = vmatprep.subr.mxu0 0.0
        %5253 = vmatpush1.xpose.msra.mxu0 0.0
        %5254 = vmatprep.subr.mxu0 0.0
        %5255 = vmatpush1.xpose.msra.mxu0 0.0
        %5256 = vmatprep.subr.mxu0 0.0
        %5257 = vmatpush1.xpose.msra.mxu0 0.0
        %5258 = vmatprep.subr.mxu0 0.0
        %5259 = vmatpush1.xpose.msra.mxu0 0.0
        %5260 = vmatprep.subr.mxu0 0.0
        %5261 = vmatpush1.xpose.msra.mxu0 0.0
        %5262 = vmatprep.subr.mxu0 0.0
        %5263 = vmatpush1.xpose.msra.mxu0 0.0
        %5264 = vmatprep.subr.mxu0 0.0
        %5265 = vmatpush1.xpose.msra.mxu0 0.0
        %5266 = vmatprep.subr.mxu0 0.0
        %5267 = vmatpush1.xpose.msra.mxu0 0.0
        %5268 = vmatprep.subr.mxu0 0.0
        %5269 = vmatpush1.xpose.msra.mxu0 0.0
        %5270 = vmatprep.subr.mxu0 0.0
        %5271 = vmatpush1.xpose.msra.mxu0 0.0
        %5272 = vmatprep.subr.mxu0 0.0
        %5273 = vmatpush1.xpose.msra.mxu0 0.0
        %5274 = vmatprep.subr.mxu0 0.0
        %5275 = vmatpush1.xpose.msra.mxu0 0.0
        %5276 = vmatprep.subr.mxu0 0.0
        %5277 = vmatpush1.xpose.msra.mxu0 0.0
        %5278 = vmatprep.subr.mxu0 0.0
        %5279 = vmatpush1.xpose.msra.mxu0 0.0
        %5280 = vmatprep.subr.mxu0 0.0
        %5281 = vmatpush1.xpose.msra.mxu0 0.0
        %5282 = vmatprep.subr.mxu0 0.0
        %5283 = vmatpush1.xpose.msra.mxu0 0.0
        %5284 = vmatprep.subr.mxu0 0.0
        %5285 = vmatpush1.xpose.msra.mxu0 0.0
        %5286 = vmatprep.subr.mxu0 0.0
        %5287 = vmatpush1.xpose.msra.mxu0 0.0
        %5288 = vmatprep.subr.mxu0 0.0
        %5289 = vmatpush1.xpose.msra.mxu0 0.0
        %5290 = vmatprep.subr.mxu0 0.0
        %5291 = vmatpush1.xpose.msra.mxu0 0.0
        %5292 = vmatprep.subr.mxu0 0.0
        %5293 = vmatpush1.xpose.msra.mxu0 0.0
        %5294 = vmatprep.subr.mxu0 0.0
        %5295 = vmatpush1.xpose.msra.mxu0 0.0
        %5296 = vmatprep.mubr.f32.mxu0 0.0
        %v5297 = vand.u32 %v4965, 4294901760
        %v5298 = vsub.f32 %v4965, %v5297
        %v5299 = vand.u32 %v5298, 4294901760
        %5300 = vmatmul.mubr.f32.gmra.mrb[0].mxu0 %v5299
        %v5301 = vpop.f32.mrb[0].mxu0
        %v5302 = vadd.f32 %v5220, %v5301
        %v5303 = vpop.f32.mrb[0].mxu0
        %5304 = vmatprep.mubr.f32.mxu0 0.0
        %v5305 = vand.u32 %v4967, 4294901760
        %v5306 = vsub.f32 %v4967, %v5305
        %v5307 = vand.u32 %v5306, 4294901760
        %5308 = vmatmul.mubr.f32.gmra.mrb[0].mxu0 %v5307
        %v5309 = vpop.f32.mrb[0].mxu0
        %v5310 = vadd.f32 %v5227, %v5309
        %v5311 = vpop.f32.mrb[0].mxu0
        %5312 = vdwg.mxu0
        %5313 = vmatprep.subr.mxu0 0.0
        %v5314 = vand.u32 %v4969, 4294901760
        %v5315 = vsub.f32 %v4969, %v5314
        %v5316 = vand.u32 %v5315, 4294901760
        %5317 = vmatpush1.xpose.msra.mxu0 %v5316
        %5318 = vmatprep.subr.mxu0 0.0
        %v5319 = vand.u32 %v4971, 4294901760
        %v5320 = vsub.f32 %v4971, %v5319
        %v5321 = vand.u32 %v5320, 4294901760
        %5322 = vmatpush1.xpose.msra.mxu0 %v5321
        %5323 = vmatprep.subr.mxu0 0.0
        %5324 = vmatpush1.xpose.msra.mxu0 0.0
        %5325 = vmatprep.subr.mxu0 0.0
        %5326 = vmatpush1.xpose.msra.mxu0 0.0
        %5327 = vmatprep.subr.mxu0 0.0
        %5328 = vmatpush1.xpose.msra.mxu0 0.0
        %5329 = vmatprep.subr.mxu0 0.0
        %5330 = vmatpush1.xpose.msra.mxu0 0.0
        %5331 = vmatprep.subr.mxu0 0.0
        %5332 = vmatpush1.xpose.msra.mxu0 0.0
        %5333 = vmatprep.subr.mxu0 0.0
        %5334 = vmatpush1.xpose.msra.mxu0 0.0
        %5335 = vmatprep.subr.mxu0 0.0
        %5336 = vmatpush1.xpose.msra.mxu0 0.0
        %5337 = vmatprep.subr.mxu0 0.0
        %5338 = vmatpush1.xpose.msra.mxu0 0.0
        %5339 = vmatprep.subr.mxu0 0.0
        %5340 = vmatpush1.xpose.msra.mxu0 0.0
        %5341 = vmatprep.subr.mxu0 0.0
        %5342 = vmatpush1.xpose.msra.mxu0 0.0
        %5343 = vmatprep.subr.mxu0 0.0
        %5344 = vmatpush1.xpose.msra.mxu0 0.0
        %5345 = vmatprep.subr.mxu0 0.0
        %5346 = vmatpush1.xpose.msra.mxu0 0.0
        %5347 = vmatprep.subr.mxu0 0.0
        %5348 = vmatpush1.xpose.msra.mxu0 0.0
        %5349 = vmatprep.subr.mxu0 0.0
        %5350 = vmatpush1.xpose.msra.mxu0 0.0
        %5351 = vmatprep.subr.mxu0 0.0
        %5352 = vmatpush1.xpose.msra.mxu0 0.0
        %5353 = vmatprep.subr.mxu0 0.0
        %5354 = vmatpush1.xpose.msra.mxu0 0.0
        %5355 = vmatprep.subr.mxu0 0.0
        %5356 = vmatpush1.xpose.msra.mxu0 0.0
        %5357 = vmatprep.subr.mxu0 0.0
        %5358 = vmatpush1.xpose.msra.mxu0 0.0
        %5359 = vmatprep.subr.mxu0 0.0
        %5360 = vmatpush1.xpose.msra.mxu0 0.0
        %5361 = vmatprep.subr.mxu0 0.0
        %5362 = vmatpush1.xpose.msra.mxu0 0.0
        %5363 = vmatprep.subr.mxu0 0.0
        %5364 = vmatpush1.xpose.msra.mxu0 0.0
        %5365 = vmatprep.subr.mxu0 0.0
        %5366 = vmatpush1.xpose.msra.mxu0 0.0
        %5367 = vmatprep.subr.mxu0 0.0
        %5368 = vmatpush1.xpose.msra.mxu0 0.0
        %5369 = vmatprep.subr.mxu0 0.0
        %5370 = vmatpush1.xpose.msra.mxu0 0.0
        %5371 = vmatprep.subr.mxu0 0.0
        %5372 = vmatpush1.xpose.msra.mxu0 0.0
        %5373 = vmatprep.subr.mxu0 0.0
        %5374 = vmatpush1.xpose.msra.mxu0 0.0
        %5375 = vmatprep.subr.mxu0 0.0
        %5376 = vmatpush1.xpose.msra.mxu0 0.0
        %5377 = vmatprep.subr.mxu0 0.0
        %5378 = vmatpush1.xpose.msra.mxu0 0.0
        %5379 = vmatprep.subr.mxu0 0.0
        %5380 = vmatpush1.xpose.msra.mxu0 0.0
        %5381 = vmatprep.subr.mxu0 0.0
        %5382 = vmatpush1.xpose.msra.mxu0 0.0
        %5383 = vmatprep.mubr.f32.mxu0 0.0
        %v5384 = vand.u32 %v4965, 4294901760
        %5385 = vmatmul.mubr.f32.gmra.mrb[0].mxu0 %v5384
        %v5386 = vpop.f32.mrb[0].mxu0
        %v5387 = vadd.f32 %v5302, %v5386
        %v5388 = vpop.f32.mrb[0].mxu0
        %5389 = vmatprep.mubr.f32.mxu0 0.0
        %v5390 = vand.u32 %v4967, 4294901760
        %5391 = vmatmul.mubr.f32.gmra.mrb[0].mxu0 %v5390
        %v5392 = vpop.f32.mrb[0].mxu0
        %v5393 = vadd.f32 %v5310, %v5392
        %v5394 = vpop.f32.mrb[0].mxu0
        %5395 = vdwg.mxu0
        %5396 = vmatprep.subr.mxu0 0.0
        %v5397 = vand.u32 %v4969, 4294901760
        %5398 = vmatpush1.xpose.msra.mxu0 %v5397
        %5399 = vmatprep.subr.mxu0 0.0
        %v5400 = vand.u32 %v4971, 4294901760
        %5401 = vmatpush1.xpose.msra.mxu0 %v5400
        %5402 = vmatprep.subr.mxu0 0.0
        %5403 = vmatpush1.xpose.msra.mxu0 0.0
        %5404 = vmatprep.subr.mxu0 0.0
        %5405 = vmatpush1.xpose.msra.mxu0 0.0
        %5406 = vmatprep.subr.mxu0 0.0
        %5407 = vmatpush1.xpose.msra.mxu0 0.0
        %5408 = vmatprep.subr.mxu0 0.0
        %5409 = vmatpush1.xpose.msra.mxu0 0.0
        %5410 = vmatprep.subr.mxu0 0.0
        %5411 = vmatpush1.xpose.msra.mxu0 0.0
        %5412 = vmatprep.subr.mxu0 0.0
        %5413 = vmatpush1.xpose.msra.mxu0 0.0
        %5414 = vmatprep.subr.mxu0 0.0
        %5415 = vmatpush1.xpose.msra.mxu0 0.0
        %5416 = vmatprep.subr.mxu0 0.0
        %5417 = vmatpush1.xpose.msra.mxu0 0.0
        %5418 = vmatprep.subr.mxu0 0.0
        %5419 = vmatpush1.xpose.msra.mxu0 0.0
        %5420 = vmatprep.subr.mxu0 0.0
        %5421 = vmatpush1.xpose.msra.mxu0 0.0
        %5422 = vmatprep.subr.mxu0 0.0
        %5423 = vmatpush1.xpose.msra.mxu0 0.0
        %5424 = vmatprep.subr.mxu0 0.0
        %5425 = vmatpush1.xpose.msra.mxu0 0.0
        %5426 = vmatprep.subr.mxu0 0.0
        %5427 = vmatpush1.xpose.msra.mxu0 0.0
        %5428 = vmatprep.subr.mxu0 0.0
        %5429 = vmatpush1.xpose.msra.mxu0 0.0
        %5430 = vmatprep.subr.mxu0 0.0
        %5431 = vmatpush1.xpose.msra.mxu0 0.0
        %5432 = vmatprep.subr.mxu0 0.0
        %5433 = vmatpush1.xpose.msra.mxu0 0.0
        %5434 = vmatprep.subr.mxu0 0.0
        %5435 = vmatpush1.xpose.msra.mxu0 0.0
        %5436 = vmatprep.subr.mxu0 0.0
        %5437 = vmatpush1.xpose.msra.mxu0 0.0
        %5438 = vmatprep.subr.mxu0 0.0
        %5439 = vmatpush1.xpose.msra.mxu0 0.0
        %5440 = vmatprep.subr.mxu0 0.0
        %5441 = vmatpush1.xpose.msra.mxu0 0.0
        %5442 = vmatprep.subr.mxu0 0.0
        %5443 = vmatpush1.xpose.msra.mxu0 0.0
        %5444 = vmatprep.subr.mxu0 0.0
        %5445 = vmatpush1.xpose.msra.mxu0 0.0
        %5446 = vmatprep.subr.mxu0 0.0
        %5447 = vmatpush1.xpose.msra.mxu0 0.0
        %5448 = vmatprep.subr.mxu0 0.0
        %5449 = vmatpush1.xpose.msra.mxu0 0.0
        %5450 = vmatprep.subr.mxu0 0.0
        %5451 = vmatpush1.xpose.msra.mxu0 0.0
        %5452 = vmatprep.subr.mxu0 0.0
        %5453 = vmatpush1.xpose.msra.mxu0 0.0
        %5454 = vmatprep.subr.mxu0 0.0
        %5455 = vmatpush1.xpose.msra.mxu0 0.0
        %5456 = vmatprep.subr.mxu0 0.0
        %5457 = vmatpush1.xpose.msra.mxu0 0.0
        %5458 = vmatprep.subr.mxu0 0.0
        %5459 = vmatpush1.xpose.msra.mxu0 0.0
        %5460 = vmatprep.subr.mxu0 0.0
        %5461 = vmatpush1.xpose.msra.mxu0 0.0
        %5462 = vmatprep.mubr.f32.mxu0 0.0
        %v5463 = vand.u32 %v4965, 4294901760
        %5464 = vmatmul.mubr.f32.gmra.mrb[0].mxu0 %v5463
        %v5465 = vpop.f32.mrb[0].mxu0
        %v5466 = vadd.f32 %v5387, %v5465
        %v5467 = vpop.f32.mrb[0].mxu0
        %5468 = vmatprep.mubr.f32.mxu0 0.0
        %v5469 = vand.u32 %v4967, 4294901760
        %5470 = vmatmul.mubr.f32.gmra.mrb[0].mxu0 %v5469
        %v5471 = vpop.f32.mrb[0].mxu0
        %v5472 = vadd.f32 %v5393, %v5471
        %v5473 = vpop.f32.mrb[0].mxu0
        %5474 = vdwg.mxu0
        %v5475 = vsel %vm1233, %v4948, -inf
        %5476 = vmax.xlane.f32.xlu0 %v5475
        %v5477 = vpop.xlane.xlu0 %5476
        %v5478 = vsel %vm1233, %v4954, -inf
        %5479 = vmax.xlane.f32.xlu0 %v5478
        %v5480 = vpop.xlane.xlu0 %5479
        %v5481 = vsel %vm1233, %v5466, -inf
        %5482 = vmax.xlane.f32.xlu0 %v5481
        %v5483 = vpop.xlane.xlu0 %5482
        %v5484 = vsel %vm1233, %v5472, -inf
        %5485 = vmax.xlane.f32.xlu0 %v5484
        %v5486 = vpop.xlane.xlu0 %5485
        %v5487 = vsub.f32 %v4948, %v5477
        %v5488 = vsub.f32 %v4954, %v5480
        %v5489 = vsub.f32 %v5466, %v5483
        %v5490 = vsub.f32 %v5472, %v5486
        %v5491 = vmul.f32 %v5487, 1.442695
        %v5492 = vpow.pop %v5491
        %v5493 = vmul.f32 %v5488, 1.442695
        %v5494 = vpow.pop %v5493
        %v5495 = vmul.f32 %v5489, 1.442695
        %v5496 = vpow.pop %v5495
        %v5497 = vmul.f32 %v5490, 1.442695
        %v5498 = vpow.pop %v5497
        %v5499 = vsel %vm1233, %v5492, 0.0
        %5500 = vadd.xlane.f32.xlu0 %v5499
        %v5501 = vpop.xlane.xlu0 %5500
        %v5502 = vsel %vm1233, %v5494, 0.0
        %5503 = vadd.xlane.f32.xlu0 %v5502
        %v5504 = vpop.xlane.xlu0 %5503
        %v5505 = vsel %vm1233, %v5496, 0.0
        %5506 = vadd.xlane.f32.xlu0 %v5505
        %v5507 = vpop.xlane.xlu0 %5506
        %v5508 = vsel %vm1233, %v5498, 0.0
        %5509 = vadd.xlane.f32.xlu0 %v5508
        %v5510 = vpop.xlane.xlu0 %5509
        %v5511 = vrcp.pop %v5501
        %v5512 = vmul.f32 %v5492, %v5511
        %v5513 = vrcp.pop %v5504
        %v5514 = vmul.f32 %v5494, %v5513
        %v5515 = vrcp.pop %v5507
        %v5516 = vmul.f32 %v5496, %v5515
        %v5517 = vrcp.pop %v5510
        %v5518 = vmul.f32 %v5498, %v5517
        %5519 = vrot.lane.b32.xlu0 %v180, 48
        %v5520 = vpop.permute.xlu0 %5519
        %5521 = vrot.lane.b32.xlu0 %v181, 48
        %v5522 = vpop.permute.xlu0 %5521
        %v5526 = vsel %vm1233, %v5512, 0
        %v5529 = vsel %vm1233, %v5514, 0
        %5531 = vmatprep.subr.mxu0 0.0
        %v5532 = vand.u32 %v5520, 4294901760
        %5533 = vmatpush1.msra.mxu0 %v5532
        %5534 = vmatprep.subr.mxu0 0.0
        %v5535 = vand.u32 %v5522, 4294901760
        %5536 = vmatpush1.msra.mxu0 %v5535
        %5537 = vmatprep.subr.mxu0 0.0
        %5538 = vmatpush1.msra.mxu0 0.0
        %5539 = vmatprep.subr.mxu0 0.0
        %5540 = vmatpush1.msra.mxu0 0.0
        %5541 = vmatprep.subr.mxu0 0.0
        %5542 = vmatpush1.msra.mxu0 0.0
        %5543 = vmatprep.subr.mxu0 0.0
        %5544 = vmatpush1.msra.mxu0 0.0
        %5545 = vmatprep.subr.mxu0 0.0
        %5546 = vmatpush1.msra.mxu0 0.0
        %5547 = vmatprep.subr.mxu0 0.0
        %5548 = vmatpush1.msra.mxu0 0.0
        %5549 = vmatprep.subr.mxu0 0.0
        %5550 = vmatpush1.msra.mxu0 0.0
        %5551 = vmatprep.subr.mxu0 0.0
        %5552 = vmatpush1.msra.mxu0 0.0
        %5553 = vmatprep.subr.mxu0 0.0
        %5554 = vmatpush1.msra.mxu0 0.0
        %5555 = vmatprep.subr.mxu0 0.0
        %5556 = vmatpush1.msra.mxu0 0.0
        %5557 = vmatprep.subr.mxu0 0.0
        %5558 = vmatpush1.msra.mxu0 0.0
        %5559 = vmatprep.subr.mxu0 0.0
        %5560 = vmatpush1.msra.mxu0 0.0
        %5561 = vmatprep.subr.mxu0 0.0
        %5562 = vmatpush1.msra.mxu0 0.0
        %5563 = vmatprep.subr.mxu0 0.0
        %5564 = vmatpush1.msra.mxu0 0.0
        %5565 = vmatprep.subr.mxu0 0.0
        %5566 = vmatpush1.msra.mxu0 0.0
        %5567 = vmatprep.subr.mxu0 0.0
        %5568 = vmatpush1.msra.mxu0 0.0
        %5569 = vmatprep.subr.mxu0 0.0
        %5570 = vmatpush1.msra.mxu0 0.0
        %5571 = vmatprep.subr.mxu0 0.0
        %5572 = vmatpush1.msra.mxu0 0.0
        %5573 = vmatprep.subr.mxu0 0.0
        %5574 = vmatpush1.msra.mxu0 0.0
        %5575 = vmatprep.subr.mxu0 0.0
        %5576 = vmatpush1.msra.mxu0 0.0
        %5577 = vmatprep.subr.mxu0 0.0
        %5578 = vmatpush1.msra.mxu0 0.0
        %5579 = vmatprep.subr.mxu0 0.0
        %5580 = vmatpush1.msra.mxu0 0.0
        %5581 = vmatprep.subr.mxu0 0.0
        %5582 = vmatpush1.msra.mxu0 0.0
        %5583 = vmatprep.subr.mxu0 0.0
        %5584 = vmatpush1.msra.mxu0 0.0
        %5585 = vmatprep.subr.mxu0 0.0
        %5586 = vmatpush1.msra.mxu0 0.0
        %5587 = vmatprep.subr.mxu0 0.0
        %5588 = vmatpush1.msra.mxu0 0.0
        %5589 = vmatprep.subr.mxu0 0.0
        %5590 = vmatpush1.msra.mxu0 0.0
        %5591 = vmatprep.subr.mxu0 0.0
        %5592 = vmatpush1.msra.mxu0 0.0
        %5593 = vmatprep.subr.mxu0 0.0
        %5594 = vmatpush1.msra.mxu0 0.0
        %5595 = vmatprep.subr.mxu0 0.0
        %5596 = vmatpush1.msra.mxu0 0.0
        %5597 = vmatprep.mubr.f32.mxu0 0.0
        %v5598 = vand.u32 %v5526, 4294901760
        %v5599 = vsub.f32 %v5526, %v5598
        %v5600 = vand.u32 %v5599, 4294901760
        %v5601 = vsub.f32 %v5599, %v5600
        %v5602 = vand.u32 %v5601, 4294901760
        %5603 = vmatmul.mubr.f32.gmra.mrb[0].mxu0 %v5602
        %v5604 = vpop.f32.mrb[0].mxu0
        %v5605 = vadd.f32 0.0, %v5604
        %v5606 = vpop.f32.mrb[0].mxu0
        %5607 = vmatprep.mubr.f32.mxu0 0.0
        %v5608 = vand.u32 %v5529, 4294901760
        %v5609 = vsub.f32 %v5529, %v5608
        %v5610 = vand.u32 %v5609, 4294901760
        %v5611 = vsub.f32 %v5609, %v5610
        %v5612 = vand.u32 %v5611, 4294901760
        %5613 = vmatmul.mubr.f32.gmra.mrb[0].mxu0 %v5612
        %v5614 = vpop.f32.mrb[0].mxu0
        %v5615 = vadd.f32 0.0, %v5614
        %v5616 = vpop.f32.mrb[0].mxu0
        %5617 = vdwg.mxu0
        %5618 = vmatprep.subr.mxu0 0.0
        %v5619 = vand.u32 %v5520, 4294901760
        %v5620 = vsub.f32 %v5520, %v5619
        %v5621 = vand.u32 %v5620, 4294901760
        %v5622 = vsub.f32 %v5620, %v5621
        %v5623 = vand.u32 %v5622, 4294901760
        %5624 = vmatpush1.msra.mxu0 %v5623
        %5625 = vmatprep.subr.mxu0 0.0
        %v5626 = vand.u32 %v5522, 4294901760
        %v5627 = vsub.f32 %v5522, %v5626
        %v5628 = vand.u32 %v5627, 4294901760
        %v5629 = vsub.f32 %v5627, %v5628
        %v5630 = vand.u32 %v5629, 4294901760
        %5631 = vmatpush1.msra.mxu0 %v5630
        %5632 = vmatprep.subr.mxu0 0.0
        %5633 = vmatpush1.msra.mxu0 0.0
        %5634 = vmatprep.subr.mxu0 0.0
        %5635 = vmatpush1.msra.mxu0 0.0
        %5636 = vmatprep.subr.mxu0 0.0
        %5637 = vmatpush1.msra.mxu0 0.0
        %5638 = vmatprep.subr.mxu0 0.0
        %5639 = vmatpush1.msra.mxu0 0.0
        %5640 = vmatprep.subr.mxu0 0.0
        %5641 = vmatpush1.msra.mxu0 0.0
        %5642 = vmatprep.subr.mxu0 0.0
        %5643 = vmatpush1.msra.mxu0 0.0
        %5644 = vmatprep.subr.mxu0 0.0
        %5645 = vmatpush1.msra.mxu0 0.0
        %5646 = vmatprep.subr.mxu0 0.0
        %5647 = vmatpush1.msra.mxu0 0.0
        %5648 = vmatprep.subr.mxu0 0.0
        %5649 = vmatpush1.msra.mxu0 0.0
        %5650 = vmatprep.subr.mxu0 0.0
        %5651 = vmatpush1.msra.mxu0 0.0
        %5652 = vmatprep.subr.mxu0 0.0
        %5653 = vmatpush1.msra.mxu0 0.0
        %5654 = vmatprep.subr.mxu0 0.0
        %5655 = vmatpush1.msra.mxu0 0.0
        %5656 = vmatprep.subr.mxu0 0.0
        %5657 = vmatpush1.msra.mxu0 0.0
        %5658 = vmatprep.subr.mxu0 0.0
        %5659 = vmatpush1.msra.mxu0 0.0
        %5660 = vmatprep.subr.mxu0 0.0
        %5661 = vmatpush1.msra.mxu0 0.0
        %5662 = vmatprep.subr.mxu0 0.0
        %5663 = vmatpush1.msra.mxu0 0.0
        %5664 = vmatprep.subr.mxu0 0.0
        %5665 = vmatpush1.msra.mxu0 0.0
        %5666 = vmatprep.subr.mxu0 0.0
        %5667 = vmatpush1.msra.mxu0 0.0
        %5668 = vmatprep.subr.mxu0 0.0
        %5669 = vmatpush1.msra.mxu0 0.0
        %5670 = vmatprep.subr.mxu0 0.0
        %5671 = vmatpush1.msra.mxu0 0.0
        %5672 = vmatprep.subr.mxu0 0.0
        %5673 = vmatpush1.msra.mxu0 0.0
        %5674 = vmatprep.subr.mxu0 0.0
        %5675 = vmatpush1.msra.mxu0 0.0
        %5676 = vmatprep.subr.mxu0 0.0
        %5677 = vmatpush1.msra.mxu0 0.0
        %5678 = vmatprep.subr.mxu0 0.0
        %5679 = vmatpush1.msra.mxu0 0.0
        %5680 = vmatprep.subr.mxu0 0.0
        %5681 = vmatpush1.msra.mxu0 0.0
        %5682 = vmatprep.subr.mxu0 0.0
        %5683 = vmatpush1.msra.mxu0 0.0
        %5684 = vmatprep.subr.mxu0 0.0
        %5685 = vmatpush1.msra.mxu0 0.0
        %5686 = vmatprep.subr.mxu0 0.0
        %5687 = vmatpush1.msra.mxu0 0.0
        %5688 = vmatprep.subr.mxu0 0.0
        %5689 = vmatpush1.msra.mxu0 0.0
        %5690 = vmatprep.subr.mxu0 0.0
        %5691 = vmatpush1.msra.mxu0 0.0
        %5692 = vmatprep.mubr.f32.mxu0 0.0
        %v5693 = vand.u32 %v5526, 4294901760
        %5694 = vmatmul.mubr.f32.gmra.mrb[0].mxu0 %v5693
        %v5695 = vpop.f32.mrb[0].mxu0
        %v5696 = vadd.f32 %v5605, %v5695
        %v5697 = vpop.f32.mrb[0].mxu0
        %5698 = vmatprep.mubr.f32.mxu0 0.0
        %v5699 = vand.u32 %v5529, 4294901760
        %5700 = vmatmul.mubr.f32.gmra.mrb[0].mxu0 %v5699
        %v5701 = vpop.f32.mrb[0].mxu0
        %v5702 = vadd.f32 %v5615, %v5701
        %v5703 = vpop.f32.mrb[0].mxu0
        %5704 = vdwg.mxu0
        %5705 = vmatprep.subr.mxu0 0.0
        %v5706 = vand.u32 %v5520, 4294901760
        %v5707 = vsub.f32 %v5520, %v5706
        %5708 = vmatpush1.msra.mxu0 %v5707
        %5709 = vmatprep.subr.mxu0 0.0
        %v5710 = vand.u32 %v5522, 4294901760
        %v5711 = vsub.f32 %v5522, %v5710
        %5712 = vmatpush1.msra.mxu0 %v5711
        %5713 = vmatprep.subr.mxu0 0.0
        %5714 = vmatpush1.msra.mxu0 0.0
        %5715 = vmatprep.subr.mxu0 0.0
        %5716 = vmatpush1.msra.mxu0 0.0
        %5717 = vmatprep.subr.mxu0 0.0
        %5718 = vmatpush1.msra.mxu0 0.0
        %5719 = vmatprep.subr.mxu0 0.0
        %5720 = vmatpush1.msra.mxu0 0.0
        %5721 = vmatprep.subr.mxu0 0.0
        %5722 = vmatpush1.msra.mxu0 0.0
        %5723 = vmatprep.subr.mxu0 0.0
        %5724 = vmatpush1.msra.mxu0 0.0
        %5725 = vmatprep.subr.mxu0 0.0
        %5726 = vmatpush1.msra.mxu0 0.0
        %5727 = vmatprep.subr.mxu0 0.0
        %5728 = vmatpush1.msra.mxu0 0.0
        %5729 = vmatprep.subr.mxu0 0.0
        %5730 = vmatpush1.msra.mxu0 0.0
        %5731 = vmatprep.subr.mxu0 0.0
        %5732 = vmatpush1.msra.mxu0 0.0
        %5733 = vmatprep.subr.mxu0 0.0
        %5734 = vmatpush1.msra.mxu0 0.0
        %5735 = vmatprep.subr.mxu0 0.0
        %5736 = vmatpush1.msra.mxu0 0.0
        %5737 = vmatprep.subr.mxu0 0.0
        %5738 = vmatpush1.msra.mxu0 0.0
        %5739 = vmatprep.subr.mxu0 0.0
        %5740 = vmatpush1.msra.mxu0 0.0
        %5741 = vmatprep.subr.mxu0 0.0
        %5742 = vmatpush1.msra.mxu0 0.0
        %5743 = vmatprep.subr.mxu0 0.0
        %5744 = vmatpush1.msra.mxu0 0.0
        %5745 = vmatprep.subr.mxu0 0.0
        %5746 = vmatpush1.msra.mxu0 0.0
        %5747 = vmatprep.subr.mxu0 0.0
        %5748 = vmatpush1.msra.mxu0 0.0
        %5749 = vmatprep.subr.mxu0 0.0
        %5750 = vmatpush1.msra.mxu0 0.0
        %5751 = vmatprep.subr.mxu0 0.0
        %5752 = vmatpush1.msra.mxu0 0.0
        %5753 = vmatprep.subr.mxu0 0.0
        %5754 = vmatpush1.msra.mxu0 0.0
        %5755 = vmatprep.subr.mxu0 0.0
        %5756 = vmatpush1.msra.mxu0 0.0
        %5757 = vmatprep.subr.mxu0 0.0
        %5758 = vmatpush1.msra.mxu0 0.0
        %5759 = vmatprep.subr.mxu0 0.0
        %5760 = vmatpush1.msra.mxu0 0.0
        %5761 = vmatprep.subr.mxu0 0.0
        %5762 = vmatpush1.msra.mxu0 0.0
        %5763 = vmatprep.subr.mxu0 0.0
        %5764 = vmatpush1.msra.mxu0 0.0
        %5765 = vmatprep.subr.mxu0 0.0
        %5766 = vmatpush1.msra.mxu0 0.0
        %5767 = vmatprep.subr.mxu0 0.0
        %5768 = vmatpush1.msra.mxu0 0.0
        %5769 = vmatprep.subr.mxu0 0.0
        %5770 = vmatpush1.msra.mxu0 0.0
        %5771 = vmatprep.subr.mxu0 0.0
        %5772 = vmatpush1.msra.mxu0 0.0
        %5773 = vmatprep.mubr.f32.mxu0 0.0
        %v5774 = vand.u32 %v5526, 4294901760
        %v5775 = vsub.f32 %v5526, %v5774
        %5776 = vmatmul.mubr.f32.gmra.mrb[0].mxu0 %v5775
        %v5777 = vpop.f32.mrb[0].mxu0
        %v5778 = vadd.f32 %v5696, %v5777
        %v5779 = vpop.f32.mrb[0].mxu0
        %5780 = vmatprep.mubr.f32.mxu0 0.0
        %v5781 = vand.u32 %v5529, 4294901760
        %v5782 = vsub.f32 %v5529, %v5781
        %5783 = vmatmul.mubr.f32.gmra.mrb[0].mxu0 %v5782
        %v5784 = vpop.f32.mrb[0].mxu0
        %v5785 = vadd.f32 %v5702, %v5784
        %v5786 = vpop.f32.mrb[0].mxu0
        %5787 = vdwg.mxu0
        %5788 = vmatprep.subr.mxu0 0.0
        %v5789 = vand.u32 %v5520, 4294901760
        %5790 = vmatpush1.msra.mxu0 %v5789
        %5791 = vmatprep.subr.mxu0 0.0
        %v5792 = vand.u32 %v5522, 4294901760
        %5793 = vmatpush1.msra.mxu0 %v5792
        %5794 = vmatprep.subr.mxu0 0.0
        %5795 = vmatpush1.msra.mxu0 0.0
        %5796 = vmatprep.subr.mxu0 0.0
        %5797 = vmatpush1.msra.mxu0 0.0
        %5798 = vmatprep.subr.mxu0 0.0
        %5799 = vmatpush1.msra.mxu0 0.0
        %5800 = vmatprep.subr.mxu0 0.0
        %5801 = vmatpush1.msra.mxu0 0.0
        %5802 = vmatprep.subr.mxu0 0.0
        %5803 = vmatpush1.msra.mxu0 0.0
        %5804 = vmatprep.subr.mxu0 0.0
        %5805 = vmatpush1.msra.mxu0 0.0
        %5806 = vmatprep.subr.mxu0 0.0
        %5807 = vmatpush1.msra.mxu0 0.0
        %5808 = vmatprep.subr.mxu0 0.0
        %5809 = vmatpush1.msra.mxu0 0.0
        %5810 = vmatprep.subr.mxu0 0.0
        %5811 = vmatpush1.msra.mxu0 0.0
        %5812 = vmatprep.subr.mxu0 0.0
        %5813 = vmatpush1.msra.mxu0 0.0
        %5814 = vmatprep.subr.mxu0 0.0
        %5815 = vmatpush1.msra.mxu0 0.0
        %5816 = vmatprep.subr.mxu0 0.0
        %5817 = vmatpush1.msra.mxu0 0.0
        %5818 = vmatprep.subr.mxu0 0.0
        %5819 = vmatpush1.msra.mxu0 0.0
        %5820 = vmatprep.subr.mxu0 0.0
        %5821 = vmatpush1.msra.mxu0 0.0
        %5822 = vmatprep.subr.mxu0 0.0
        %5823 = vmatpush1.msra.mxu0 0.0
        %5824 = vmatprep.subr.mxu0 0.0
        %5825 = vmatpush1.msra.mxu0 0.0
        %5826 = vmatprep.subr.mxu0 0.0
        %5827 = vmatpush1.msra.mxu0 0.0
        %5828 = vmatprep.subr.mxu0 0.0
        %5829 = vmatpush1.msra.mxu0 0.0
        %5830 = vmatprep.subr.mxu0 0.0
        %5831 = vmatpush1.msra.mxu0 0.0
        %5832 = vmatprep.subr.mxu0 0.0
        %5833 = vmatpush1.msra.mxu0 0.0
        %5834 = vmatprep.subr.mxu0 0.0
        %5835 = vmatpush1.msra.mxu0 0.0
        %5836 = vmatprep.subr.mxu0 0.0
        %5837 = vmatpush1.msra.mxu0 0.0
        %5838 = vmatprep.subr.mxu0 0.0
        %5839 = vmatpush1.msra.mxu0 0.0
        %5840 = vmatprep.subr.mxu0 0.0
        %5841 = vmatpush1.msra.mxu0 0.0
        %5842 = vmatprep.subr.mxu0 0.0
        %5843 = vmatpush1.msra.mxu0 0.0
        %5844 = vmatprep.subr.mxu0 0.0
        %5845 = vmatpush1.msra.mxu0 0.0
        %5846 = vmatprep.subr.mxu0 0.0
        %5847 = vmatpush1.msra.mxu0 0.0
        %5848 = vmatprep.subr.mxu0 0.0
        %5849 = vmatpush1.msra.mxu0 0.0
        %5850 = vmatprep.subr.mxu0 0.0
        %5851 = vmatpush1.msra.mxu0 0.0
        %5852 = vmatprep.subr.mxu0 0.0
        %5853 = vmatpush1.msra.mxu0 0.0
        %5854 = vmatprep.mubr.f32.mxu0 0.0
        %v5855 = vand.u32 %v5526, 4294901760
        %v5856 = vsub.f32 %v5526, %v5855
        %v5857 = vand.u32 %v5856, 4294901760
        %5858 = vmatmul.mubr.f32.gmra.mrb[0].mxu0 %v5857
        %v5859 = vpop.f32.mrb[0].mxu0
        %v5860 = vadd.f32 %v5778, %v5859
        %v5861 = vpop.f32.mrb[0].mxu0
        %5862 = vmatprep.mubr.f32.mxu0 0.0
        %v5863 = vand.u32 %v5529, 4294901760
        %v5864 = vsub.f32 %v5529, %v5863
        %v5865 = vand.u32 %v5864, 4294901760
        %5866 = vmatmul.mubr.f32.gmra.mrb[0].mxu0 %v5865
        %v5867 = vpop.f32.mrb[0].mxu0
        %v5868 = vadd.f32 %v5785, %v5867
        %v5869 = vpop.f32.mrb[0].mxu0
        %5870 = vdwg.mxu0
        %5871 = vmatprep.subr.mxu0 0.0
        %v5872 = vand.u32 %v5520, 4294901760
        %v5873 = vsub.f32 %v5520, %v5872
        %v5874 = vand.u32 %v5873, 4294901760
        %5875 = vmatpush1.msra.mxu0 %v5874
        %5876 = vmatprep.subr.mxu0 0.0
        %v5877 = vand.u32 %v5522, 4294901760
        %v5878 = vsub.f32 %v5522, %v5877
        %v5879 = vand.u32 %v5878, 4294901760
        %5880 = vmatpush1.msra.mxu0 %v5879
        %5881 = vmatprep.subr.mxu0 0.0
        %5882 = vmatpush1.msra.mxu0 0.0
        %5883 = vmatprep.subr.mxu0 0.0
        %5884 = vmatpush1.msra.mxu0 0.0
        %5885 = vmatprep.subr.mxu0 0.0
        %5886 = vmatpush1.msra.mxu0 0.0
        %5887 = vmatprep.subr.mxu0 0.0
        %5888 = vmatpush1.msra.mxu0 0.0
        %5889 = vmatprep.subr.mxu0 0.0
        %5890 = vmatpush1.msra.mxu0 0.0
        %5891 = vmatprep.subr.mxu0 0.0
        %5892 = vmatpush1.msra.mxu0 0.0
        %5893 = vmatprep.subr.mxu0 0.0
        %5894 = vmatpush1.msra.mxu0 0.0
        %5895 = vmatprep.subr.mxu0 0.0
        %5896 = vmatpush1.msra.mxu0 0.0
        %5897 = vmatprep.subr.mxu0 0.0
        %5898 = vmatpush1.msra.mxu0 0.0
        %5899 = vmatprep.subr.mxu0 0.0
        %5900 = vmatpush1.msra.mxu0 0.0
        %5901 = vmatprep.subr.mxu0 0.0
        %5902 = vmatpush1.msra.mxu0 0.0
        %5903 = vmatprep.subr.mxu0 0.0
        %5904 = vmatpush1.msra.mxu0 0.0
        %5905 = vmatprep.subr.mxu0 0.0
        %5906 = vmatpush1.msra.mxu0 0.0
        %5907 = vmatprep.subr.mxu0 0.0
        %5908 = vmatpush1.msra.mxu0 0.0
        %5909 = vmatprep.subr.mxu0 0.0
        %5910 = vmatpush1.msra.mxu0 0.0
        %5911 = vmatprep.subr.mxu0 0.0
        %5912 = vmatpush1.msra.mxu0 0.0
        %5913 = vmatprep.subr.mxu0 0.0
        %5914 = vmatpush1.msra.mxu0 0.0
        %5915 = vmatprep.subr.mxu0 0.0
        %5916 = vmatpush1.msra.mxu0 0.0
        %5917 = vmatprep.subr.mxu0 0.0
        %5918 = vmatpush1.msra.mxu0 0.0
        %5919 = vmatprep.subr.mxu0 0.0
        %5920 = vmatpush1.msra.mxu0 0.0
        %5921 = vmatprep.subr.mxu0 0.0
        %5922 = vmatpush1.msra.mxu0 0.0
        %5923 = vmatprep.subr.mxu0 0.0
        %5924 = vmatpush1.msra.mxu0 0.0
        %5925 = vmatprep.subr.mxu0 0.0
        %5926 = vmatpush1.msra.mxu0 0.0
        %5927 = vmatprep.subr.mxu0 0.0
        %5928 = vmatpush1.msra.mxu0 0.0
        %5929 = vmatprep.subr.mxu0 0.0
        %5930 = vmatpush1.msra.mxu0 0.0
        %5931 = vmatprep.subr.mxu0 0.0
        %5932 = vmatpush1.msra.mxu0 0.0
        %5933 = vmatprep.subr.mxu0 0.0
        %5934 = vmatpush1.msra.mxu0 0.0
        %5935 = vmatprep.subr.mxu0 0.0
        %5936 = vmatpush1.msra.mxu0 0.0
        %5937 = vmatprep.subr.mxu0 0.0
        %5938 = vmatpush1.msra.mxu0 0.0
        %5939 = vmatprep.subr.mxu0 0.0
        %5940 = vmatpush1.msra.mxu0 0.0
        %5941 = vmatprep.mubr.f32.mxu0 0.0
        %v5942 = vand.u32 %v5526, 4294901760
        %5943 = vmatmul.mubr.f32.gmra.mrb[0].mxu0 %v5942
        %v5944 = vpop.f32.mrb[0].mxu0
        %v5945 = vadd.f32 %v5860, %v5944
        %v5946 = vpop.f32.mrb[0].mxu0
        %5947 = vmatprep.mubr.f32.mxu0 0.0
        %v5948 = vand.u32 %v5529, 4294901760
        %5949 = vmatmul.mubr.f32.gmra.mrb[0].mxu0 %v5948
        %v5950 = vpop.f32.mrb[0].mxu0
        %v5951 = vadd.f32 %v5868, %v5950
        %v5952 = vpop.f32.mrb[0].mxu0
        %5953 = vdwg.mxu0
        %5954 = vmatprep.subr.mxu0 0.0
        %v5955 = vand.u32 %v5520, 4294901760
        %5956 = vmatpush1.msra.mxu0 %v5955
        %5957 = vmatprep.subr.mxu0 0.0
        %v5958 = vand.u32 %v5522, 4294901760
        %5959 = vmatpush1.msra.mxu0 %v5958
        %5960 = vmatprep.subr.mxu0 0.0
        %5961 = vmatpush1.msra.mxu0 0.0
        %5962 = vmatprep.subr.mxu0 0.0
        %5963 = vmatpush1.msra.mxu0 0.0
        %5964 = vmatprep.subr.mxu0 0.0
        %5965 = vmatpush1.msra.mxu0 0.0
        %5966 = vmatprep.subr.mxu0 0.0
        %5967 = vmatpush1.msra.mxu0 0.0
        %5968 = vmatprep.subr.mxu0 0.0
        %5969 = vmatpush1.msra.mxu0 0.0
        %5970 = vmatprep.subr.mxu0 0.0
        %5971 = vmatpush1.msra.mxu0 0.0
        %5972 = vmatprep.subr.mxu0 0.0
        %5973 = vmatpush1.msra.mxu0 0.0
        %5974 = vmatprep.subr.mxu0 0.0
        %5975 = vmatpush1.msra.mxu0 0.0
        %5976 = vmatprep.subr.mxu0 0.0
        %5977 = vmatpush1.msra.mxu0 0.0
        %5978 = vmatprep.subr.mxu0 0.0
        %5979 = vmatpush1.msra.mxu0 0.0
        %5980 = vmatprep.subr.mxu0 0.0
        %5981 = vmatpush1.msra.mxu0 0.0
        %5982 = vmatprep.subr.mxu0 0.0
        %5983 = vmatpush1.msra.mxu0 0.0
        %5984 = vmatprep.subr.mxu0 0.0
        %5985 = vmatpush1.msra.mxu0 0.0
        %5986 = vmatprep.subr.mxu0 0.0
        %5987 = vmatpush1.msra.mxu0 0.0
        %5988 = vmatprep.subr.mxu0 0.0
        %5989 = vmatpush1.msra.mxu0 0.0
        %5990 = vmatprep.subr.mxu0 0.0
        %5991 = vmatpush1.msra.mxu0 0.0
        %5992 = vmatprep.subr.mxu0 0.0
        %5993 = vmatpush1.msra.mxu0 0.0
        %5994 = vmatprep.subr.mxu0 0.0
        %5995 = vmatpush1.msra.mxu0 0.0
        %5996 = vmatprep.subr.mxu0 0.0
        %5997 = vmatpush1.msra.mxu0 0.0
        %5998 = vmatprep.subr.mxu0 0.0
        %5999 = vmatpush1.msra.mxu0 0.0
        %6000 = vmatprep.subr.mxu0 0.0
        %6001 = vmatpush1.msra.mxu0 0.0
        %6002 = vmatprep.subr.mxu0 0.0
        %6003 = vmatpush1.msra.mxu0 0.0
        %6004 = vmatprep.subr.mxu0 0.0
        %6005 = vmatpush1.msra.mxu0 0.0
        %6006 = vmatprep.subr.mxu0 0.0
        %6007 = vmatpush1.msra.mxu0 0.0
        %6008 = vmatprep.subr.mxu0 0.0
        %6009 = vmatpush1.msra.mxu0 0.0
        %6010 = vmatprep.subr.mxu0 0.0
        %6011 = vmatpush1.msra.mxu0 0.0
        %6012 = vmatprep.subr.mxu0 0.0
        %6013 = vmatpush1.msra.mxu0 0.0
        %6014 = vmatprep.subr.mxu0 0.0
        %6015 = vmatpush1.msra.mxu0 0.0
        %6016 = vmatprep.subr.mxu0 0.0
        %6017 = vmatpush1.msra.mxu0 0.0
        %6018 = vmatprep.subr.mxu0 0.0
        %6019 = vmatpush1.msra.mxu0 0.0
        %6020 = vmatprep.mubr.f32.mxu0 0.0
        %v6021 = vand.u32 %v5526, 4294901760
        %6022 = vmatmul.mubr.f32.gmra.mrb[0].mxu0 %v6021
        %v6023 = vpop.f32.mrb[0].mxu0
        %v6024 = vadd.f32 %v5945, %v6023
        %v6025 = vpop.f32.mrb[0].mxu0
        %6026 = vmatprep.mubr.f32.mxu0 0.0
        %v6027 = vand.u32 %v5529, 4294901760
        %6028 = vmatmul.mubr.f32.gmra.mrb[0].mxu0 %v6027
        %v6029 = vpop.f32.mrb[0].mxu0
        %v6030 = vadd.f32 %v5951, %v6029
        %v6031 = vpop.f32.mrb[0].mxu0
        %6032 = vdwg.mxu0
        %6033 = vrot.lane.b32.xlu0 %v182, 48
        %v6034 = vpop.permute.xlu0 %6033
        %6035 = vrot.lane.b32.xlu0 %v183, 48
        %v6036 = vpop.permute.xlu0 %6035
        %v6040 = vsel %vm1233, %v5516, 0
        %v6043 = vsel %vm1233, %v5518, 0
        %6045 = vmatprep.subr.mxu0 0.0
        %v6046 = vand.u32 %v6034, 4294901760
        %6047 = vmatpush1.msra.mxu0 %v6046
        %6048 = vmatprep.subr.mxu0 0.0
        %v6049 = vand.u32 %v6036, 4294901760
        %6050 = vmatpush1.msra.mxu0 %v6049
        %6051 = vmatprep.subr.mxu0 0.0
        %6052 = vmatpush1.msra.mxu0 0.0
        %6053 = vmatprep.subr.mxu0 0.0
        %6054 = vmatpush1.msra.mxu0 0.0
        %6055 = vmatprep.subr.mxu0 0.0
        %6056 = vmatpush1.msra.mxu0 0.0
        %6057 = vmatprep.subr.mxu0 0.0
        %6058 = vmatpush1.msra.mxu0 0.0
        %6059 = vmatprep.subr.mxu0 0.0
        %6060 = vmatpush1.msra.mxu0 0.0
        %6061 = vmatprep.subr.mxu0 0.0
        %6062 = vmatpush1.msra.mxu0 0.0
        %6063 = vmatprep.subr.mxu0 0.0
        %6064 = vmatpush1.msra.mxu0 0.0
        %6065 = vmatprep.subr.mxu0 0.0
        %6066 = vmatpush1.msra.mxu0 0.0
        %6067 = vmatprep.subr.mxu0 0.0
        %6068 = vmatpush1.msra.mxu0 0.0
        %6069 = vmatprep.subr.mxu0 0.0
        %6070 = vmatpush1.msra.mxu0 0.0
        %6071 = vmatprep.subr.mxu0 0.0
        %6072 = vmatpush1.msra.mxu0 0.0
        %6073 = vmatprep.subr.mxu0 0.0
        %6074 = vmatpush1.msra.mxu0 0.0
        %6075 = vmatprep.subr.mxu0 0.0
        %6076 = vmatpush1.msra.mxu0 0.0
        %6077 = vmatprep.subr.mxu0 0.0
        %6078 = vmatpush1.msra.mxu0 0.0
        %6079 = vmatprep.subr.mxu0 0.0
        %6080 = vmatpush1.msra.mxu0 0.0
        %6081 = vmatprep.subr.mxu0 0.0
        %6082 = vmatpush1.msra.mxu0 0.0
        %6083 = vmatprep.subr.mxu0 0.0
        %6084 = vmatpush1.msra.mxu0 0.0
        %6085 = vmatprep.subr.mxu0 0.0
        %6086 = vmatpush1.msra.mxu0 0.0
        %6087 = vmatprep.subr.mxu0 0.0
        %6088 = vmatpush1.msra.mxu0 0.0
        %6089 = vmatprep.subr.mxu0 0.0
        %6090 = vmatpush1.msra.mxu0 0.0
        %6091 = vmatprep.subr.mxu0 0.0
        %6092 = vmatpush1.msra.mxu0 0.0
        %6093 = vmatprep.subr.mxu0 0.0
        %6094 = vmatpush1.msra.mxu0 0.0
        %6095 = vmatprep.subr.mxu0 0.0
        %6096 = vmatpush1.msra.mxu0 0.0
        %6097 = vmatprep.subr.mxu0 0.0
        %6098 = vmatpush1.msra.mxu0 0.0
        %6099 = vmatprep.subr.mxu0 0.0
        %6100 = vmatpush1.msra.mxu0 0.0
        %6101 = vmatprep.subr.mxu0 0.0
        %6102 = vmatpush1.msra.mxu0 0.0
        %6103 = vmatprep.subr.mxu0 0.0
        %6104 = vmatpush1.msra.mxu0 0.0
        %6105 = vmatprep.subr.mxu0 0.0
        %6106 = vmatpush1.msra.mxu0 0.0
        %6107 = vmatprep.subr.mxu0 0.0
        %6108 = vmatpush1.msra.mxu0 0.0
        %6109 = vmatprep.subr.mxu0 0.0
        %6110 = vmatpush1.msra.mxu0 0.0
        %6111 = vmatprep.mubr.f32.mxu0 0.0
        %v6112 = vand.u32 %v6040, 4294901760
        %v6113 = vsub.f32 %v6040, %v6112
        %v6114 = vand.u32 %v6113, 4294901760
        %v6115 = vsub.f32 %v6113, %v6114
        %v6116 = vand.u32 %v6115, 4294901760
        %6117 = vmatmul.mubr.f32.gmra.mrb[0].mxu0 %v6116
        %v6118 = vpop.f32.mrb[0].mxu0
        %v6119 = vadd.f32 0.0, %v6118
        %v6120 = vpop.f32.mrb[0].mxu0
        %6121 = vmatprep.mubr.f32.mxu0 0.0
        %v6122 = vand.u32 %v6043, 4294901760
        %v6123 = vsub.f32 %v6043, %v6122
        %v6124 = vand.u32 %v6123, 4294901760
        %v6125 = vsub.f32 %v6123, %v6124
        %v6126 = vand.u32 %v6125, 4294901760
        %6127 = vmatmul.mubr.f32.gmra.mrb[0].mxu0 %v6126
        %v6128 = vpop.f32.mrb[0].mxu0
        %v6129 = vadd.f32 0.0, %v6128
        %v6130 = vpop.f32.mrb[0].mxu0
        %6131 = vdwg.mxu0
        %6132 = vmatprep.subr.mxu0 0.0
        %v6133 = vand.u32 %v6034, 4294901760
        %v6134 = vsub.f32 %v6034, %v6133
        %v6135 = vand.u32 %v6134, 4294901760
        %v6136 = vsub.f32 %v6134, %v6135
        %v6137 = vand.u32 %v6136, 4294901760
        %6138 = vmatpush1.msra.mxu0 %v6137
        %6139 = vmatprep.subr.mxu0 0.0
        %v6140 = vand.u32 %v6036, 4294901760
        %v6141 = vsub.f32 %v6036, %v6140
        %v6142 = vand.u32 %v6141, 4294901760
        %v6143 = vsub.f32 %v6141, %v6142
        %v6144 = vand.u32 %v6143, 4294901760
        %6145 = vmatpush1.msra.mxu0 %v6144
        %6146 = vmatprep.subr.mxu0 0.0
        %6147 = vmatpush1.msra.mxu0 0.0
        %6148 = vmatprep.subr.mxu0 0.0
        %6149 = vmatpush1.msra.mxu0 0.0
        %6150 = vmatprep.subr.mxu0 0.0
        %6151 = vmatpush1.msra.mxu0 0.0
        %6152 = vmatprep.subr.mxu0 0.0
        %6153 = vmatpush1.msra.mxu0 0.0
        %6154 = vmatprep.subr.mxu0 0.0
        %6155 = vmatpush1.msra.mxu0 0.0
        %6156 = vmatprep.subr.mxu0 0.0
        %6157 = vmatpush1.msra.mxu0 0.0
        %6158 = vmatprep.subr.mxu0 0.0
        %6159 = vmatpush1.msra.mxu0 0.0
        %6160 = vmatprep.subr.mxu0 0.0
        %6161 = vmatpush1.msra.mxu0 0.0
        %6162 = vmatprep.subr.mxu0 0.0
        %6163 = vmatpush1.msra.mxu0 0.0
        %6164 = vmatprep.subr.mxu0 0.0
        %6165 = vmatpush1.msra.mxu0 0.0
        %6166 = vmatprep.subr.mxu0 0.0
        %6167 = vmatpush1.msra.mxu0 0.0
        %6168 = vmatprep.subr.mxu0 0.0
        %6169 = vmatpush1.msra.mxu0 0.0
        %6170 = vmatprep.subr.mxu0 0.0
        %6171 = vmatpush1.msra.mxu0 0.0
        %6172 = vmatprep.subr.mxu0 0.0
        %6173 = vmatpush1.msra.mxu0 0.0
        %6174 = vmatprep.subr.mxu0 0.0
        %6175 = vmatpush1.msra.mxu0 0.0
        %6176 = vmatprep.subr.mxu0 0.0
        %6177 = vmatpush1.msra.mxu0 0.0
        %6178 = vmatprep.subr.mxu0 0.0
        %6179 = vmatpush1.msra.mxu0 0.0
        %6180 = vmatprep.subr.mxu0 0.0
        %6181 = vmatpush1.msra.mxu0 0.0
        %6182 = vmatprep.subr.mxu0 0.0
        %6183 = vmatpush1.msra.mxu0 0.0
        %6184 = vmatprep.subr.mxu0 0.0
        %6185 = vmatpush1.msra.mxu0 0.0
        %6186 = vmatprep.subr.mxu0 0.0
        %6187 = vmatpush1.msra.mxu0 0.0
        %6188 = vmatprep.subr.mxu0 0.0
        %6189 = vmatpush1.msra.mxu0 0.0
        %6190 = vmatprep.subr.mxu0 0.0
        %6191 = vmatpush1.msra.mxu0 0.0
        %6192 = vmatprep.subr.mxu0 0.0
        %6193 = vmatpush1.msra.mxu0 0.0
        %6194 = vmatprep.subr.mxu0 0.0
        %6195 = vmatpush1.msra.mxu0 0.0
        %6196 = vmatprep.subr.mxu0 0.0
        %6197 = vmatpush1.msra.mxu0 0.0
        %6198 = vmatprep.subr.mxu0 0.0
        %6199 = vmatpush1.msra.mxu0 0.0
        %6200 = vmatprep.subr.mxu0 0.0
        %6201 = vmatpush1.msra.mxu0 0.0
        %6202 = vmatprep.subr.mxu0 0.0
        %6203 = vmatpush1.msra.mxu0 0.0
        %6204 = vmatprep.subr.mxu0 0.0
        %6205 = vmatpush1.msra.mxu0 0.0
        %6206 = vmatprep.mubr.f32.mxu0 0.0
        %v6207 = vand.u32 %v6040, 4294901760
        %6208 = vmatmul.mubr.f32.gmra.mrb[0].mxu0 %v6207
        %v6209 = vpop.f32.mrb[0].mxu0
        %v6210 = vadd.f32 %v6119, %v6209
        %v6211 = vpop.f32.mrb[0].mxu0
        %6212 = vmatprep.mubr.f32.mxu0 0.0
        %v6213 = vand.u32 %v6043, 4294901760
        %6214 = vmatmul.mubr.f32.gmra.mrb[0].mxu0 %v6213
        %v6215 = vpop.f32.mrb[0].mxu0
        %v6216 = vadd.f32 %v6129, %v6215
        %v6217 = vpop.f32.mrb[0].mxu0
        %6218 = vdwg.mxu0
        %6219 = vmatprep.subr.mxu0 0.0
        %v6220 = vand.u32 %v6034, 4294901760
        %v6221 = vsub.f32 %v6034, %v6220
        %6222 = vmatpush1.msra.mxu0 %v6221
        %6223 = vmatprep.subr.mxu0 0.0
        %v6224 = vand.u32 %v6036, 4294901760
        %v6225 = vsub.f32 %v6036, %v6224
        %6226 = vmatpush1.msra.mxu0 %v6225
        %6227 = vmatprep.subr.mxu0 0.0
        %6228 = vmatpush1.msra.mxu0 0.0
        %6229 = vmatprep.subr.mxu0 0.0
        %6230 = vmatpush1.msra.mxu0 0.0
        %6231 = vmatprep.subr.mxu0 0.0
        %6232 = vmatpush1.msra.mxu0 0.0
        %6233 = vmatprep.subr.mxu0 0.0
        %6234 = vmatpush1.msra.mxu0 0.0
        %6235 = vmatprep.subr.mxu0 0.0
        %6236 = vmatpush1.msra.mxu0 0.0
        %6237 = vmatprep.subr.mxu0 0.0
        %6238 = vmatpush1.msra.mxu0 0.0
        %6239 = vmatprep.subr.mxu0 0.0
        %6240 = vmatpush1.msra.mxu0 0.0
        %6241 = vmatprep.subr.mxu0 0.0
        %6242 = vmatpush1.msra.mxu0 0.0
        %6243 = vmatprep.subr.mxu0 0.0
        %6244 = vmatpush1.msra.mxu0 0.0
        %6245 = vmatprep.subr.mxu0 0.0
        %6246 = vmatpush1.msra.mxu0 0.0
        %6247 = vmatprep.subr.mxu0 0.0
        %6248 = vmatpush1.msra.mxu0 0.0
        %6249 = vmatprep.subr.mxu0 0.0
        %6250 = vmatpush1.msra.mxu0 0.0
        %6251 = vmatprep.subr.mxu0 0.0
        %6252 = vmatpush1.msra.mxu0 0.0
        %6253 = vmatprep.subr.mxu0 0.0
        %6254 = vmatpush1.msra.mxu0 0.0
        %6255 = vmatprep.subr.mxu0 0.0
        %6256 = vmatpush1.msra.mxu0 0.0
        %6257 = vmatprep.subr.mxu0 0.0
        %6258 = vmatpush1.msra.mxu0 0.0
        %6259 = vmatprep.subr.mxu0 0.0
        %6260 = vmatpush1.msra.mxu0 0.0
        %6261 = vmatprep.subr.mxu0 0.0
        %6262 = vmatpush1.msra.mxu0 0.0
        %6263 = vmatprep.subr.mxu0 0.0
        %6264 = vmatpush1.msra.mxu0 0.0
        %6265 = vmatprep.subr.mxu0 0.0
        %6266 = vmatpush1.msra.mxu0 0.0
        %6267 = vmatprep.subr.mxu0 0.0
        %6268 = vmatpush1.msra.mxu0 0.0
        %6269 = vmatprep.subr.mxu0 0.0
        %6270 = vmatpush1.msra.mxu0 0.0
        %6271 = vmatprep.subr.mxu0 0.0
        %6272 = vmatpush1.msra.mxu0 0.0
        %6273 = vmatprep.subr.mxu0 0.0
        %6274 = vmatpush1.msra.mxu0 0.0
        %6275 = vmatprep.subr.mxu0 0.0
        %6276 = vmatpush1.msra.mxu0 0.0
        %6277 = vmatprep.subr.mxu0 0.0
        %6278 = vmatpush1.msra.mxu0 0.0
        %6279 = vmatprep.subr.mxu0 0.0
        %6280 = vmatpush1.msra.mxu0 0.0
        %6281 = vmatprep.subr.mxu0 0.0
        %6282 = vmatpush1.msra.mxu0 0.0
        %6283 = vmatprep.subr.mxu0 0.0
        %6284 = vmatpush1.msra.mxu0 0.0
        %6285 = vmatprep.subr.mxu0 0.0
        %6286 = vmatpush1.msra.mxu0 0.0
        %6287 = vmatprep.mubr.f32.mxu0 0.0
        %v6288 = vand.u32 %v6040, 4294901760
        %v6289 = vsub.f32 %v6040, %v6288
        %6290 = vmatmul.mubr.f32.gmra.mrb[0].mxu0 %v6289
        %v6291 = vpop.f32.mrb[0].mxu0
        %v6292 = vadd.f32 %v6210, %v6291
        %v6293 = vpop.f32.mrb[0].mxu0
        %6294 = vmatprep.mubr.f32.mxu0 0.0
        %v6295 = vand.u32 %v6043, 4294901760
        %v6296 = vsub.f32 %v6043, %v6295
        %6297 = vmatmul.mubr.f32.gmra.mrb[0].mxu0 %v6296
        %v6298 = vpop.f32.mrb[0].mxu0
        %v6299 = vadd.f32 %v6216, %v6298
        %v6300 = vpop.f32.mrb[0].mxu0
        %6301 = vdwg.mxu0
        %6302 = vmatprep.subr.mxu0 0.0
        %v6303 = vand.u32 %v6034, 4294901760
        %6304 = vmatpush1.msra.mxu0 %v6303
        %6305 = vmatprep.subr.mxu0 0.0
        %v6306 = vand.u32 %v6036, 4294901760
        %6307 = vmatpush1.msra.mxu0 %v6306
        %6308 = vmatprep.subr.mxu0 0.0
        %6309 = vmatpush1.msra.mxu0 0.0
        %6310 = vmatprep.subr.mxu0 0.0
        %6311 = vmatpush1.msra.mxu0 0.0
        %6312 = vmatprep.subr.mxu0 0.0
        %6313 = vmatpush1.msra.mxu0 0.0
        %6314 = vmatprep.subr.mxu0 0.0
        %6315 = vmatpush1.msra.mxu0 0.0
        %6316 = vmatprep.subr.mxu0 0.0
        %6317 = vmatpush1.msra.mxu0 0.0
        %6318 = vmatprep.subr.mxu0 0.0
        %6319 = vmatpush1.msra.mxu0 0.0
        %6320 = vmatprep.subr.mxu0 0.0
        %6321 = vmatpush1.msra.mxu0 0.0
        %6322 = vmatprep.subr.mxu0 0.0
        %6323 = vmatpush1.msra.mxu0 0.0
        %6324 = vmatprep.subr.mxu0 0.0
        %6325 = vmatpush1.msra.mxu0 0.0
        %6326 = vmatprep.subr.mxu0 0.0
        %6327 = vmatpush1.msra.mxu0 0.0
        %6328 = vmatprep.subr.mxu0 0.0
        %6329 = vmatpush1.msra.mxu0 0.0
        %6330 = vmatprep.subr.mxu0 0.0
        %6331 = vmatpush1.msra.mxu0 0.0
        %6332 = vmatprep.subr.mxu0 0.0
        %6333 = vmatpush1.msra.mxu0 0.0
        %6334 = vmatprep.subr.mxu0 0.0
        %6335 = vmatpush1.msra.mxu0 0.0
        %6336 = vmatprep.subr.mxu0 0.0
        %6337 = vmatpush1.msra.mxu0 0.0
        %6338 = vmatprep.subr.mxu0 0.0
        %6339 = vmatpush1.msra.mxu0 0.0
        %6340 = vmatprep.subr.mxu0 0.0
        %6341 = vmatpush1.msra.mxu0 0.0
        %6342 = vmatprep.subr.mxu0 0.0
        %6343 = vmatpush1.msra.mxu0 0.0
        %6344 = vmatprep.subr.mxu0 0.0
        %6345 = vmatpush1.msra.mxu0 0.0
        %6346 = vmatprep.subr.mxu0 0.0
        %6347 = vmatpush1.msra.mxu0 0.0
        %6348 = vmatprep.subr.mxu0 0.0
        %6349 = vmatpush1.msra.mxu0 0.0
        %6350 = vmatprep.subr.mxu0 0.0
        %6351 = vmatpush1.msra.mxu0 0.0
        %6352 = vmatprep.subr.mxu0 0.0
        %6353 = vmatpush1.msra.mxu0 0.0
        %6354 = vmatprep.subr.mxu0 0.0
        %6355 = vmatpush1.msra.mxu0 0.0
        %6356 = vmatprep.subr.mxu0 0.0
        %6357 = vmatpush1.msra.mxu0 0.0
        %6358 = vmatprep.subr.mxu0 0.0
        %6359 = vmatpush1.msra.mxu0 0.0
        %6360 = vmatprep.subr.mxu0 0.0
        %6361 = vmatpush1.msra.mxu0 0.0
        %6362 = vmatprep.subr.mxu0 0.0
        %6363 = vmatpush1.msra.mxu0 0.0
        %6364 = vmatprep.subr.mxu0 0.0
        %6365 = vmatpush1.msra.mxu0 0.0
        %6366 = vmatprep.subr.mxu0 0.0
        %6367 = vmatpush1.msra.mxu0 0.0
        %6368 = vmatprep.mubr.f32.mxu0 0.0
        %v6369 = vand.u32 %v6040, 4294901760
        %v6370 = vsub.f32 %v6040, %v6369
        %v6371 = vand.u32 %v6370, 4294901760
        %6372 = vmatmul.mubr.f32.gmra.mrb[0].mxu0 %v6371
        %v6373 = vpop.f32.mrb[0].mxu0
        %v6374 = vadd.f32 %v6292, %v6373
        %v6375 = vpop.f32.mrb[0].mxu0
        %6376 = vmatprep.mubr.f32.mxu0 0.0
        %v6377 = vand.u32 %v6043, 4294901760
        %v6378 = vsub.f32 %v6043, %v6377
        %v6379 = vand.u32 %v6378, 4294901760
        %6380 = vmatmul.mubr.f32.gmra.mrb[0].mxu0 %v6379
        %v6381 = vpop.f32.mrb[0].mxu0
        %v6382 = vadd.f32 %v6299, %v6381
        %v6383 = vpop.f32.mrb[0].mxu0
        %6384 = vdwg.mxu0
        %6385 = vmatprep.subr.mxu0 0.0
        %v6386 = vand.u32 %v6034, 4294901760
        %v6387 = vsub.f32 %v6034, %v6386
        %v6388 = vand.u32 %v6387, 4294901760
        %6389 = vmatpush1.msra.mxu0 %v6388
        %6390 = vmatprep.subr.mxu0 0.0
        %v6391 = vand.u32 %v6036, 4294901760
        %v6392 = vsub.f32 %v6036, %v6391
        %v6393 = vand.u32 %v6392, 4294901760
        %6394 = vmatpush1.msra.mxu0 %v6393
        %6395 = vmatprep.subr.mxu0 0.0
        %6396 = vmatpush1.msra.mxu0 0.0
        %6397 = vmatprep.subr.mxu0 0.0
        %6398 = vmatpush1.msra.mxu0 0.0
        %6399 = vmatprep.subr.mxu0 0.0
        %6400 = vmatpush1.msra.mxu0 0.0
        %6401 = vmatprep.subr.mxu0 0.0
        %6402 = vmatpush1.msra.mxu0 0.0
        %6403 = vmatprep.subr.mxu0 0.0
        %6404 = vmatpush1.msra.mxu0 0.0
        %6405 = vmatprep.subr.mxu0 0.0
        %6406 = vmatpush1.msra.mxu0 0.0
        %6407 = vmatprep.subr.mxu0 0.0
        %6408 = vmatpush1.msra.mxu0 0.0
        %6409 = vmatprep.subr.mxu0 0.0
        %6410 = vmatpush1.msra.mxu0 0.0
        %6411 = vmatprep.subr.mxu0 0.0
        %6412 = vmatpush1.msra.mxu0 0.0
        %6413 = vmatprep.subr.mxu0 0.0
        %6414 = vmatpush1.msra.mxu0 0.0
        %6415 = vmatprep.subr.mxu0 0.0
        %6416 = vmatpush1.msra.mxu0 0.0
        %6417 = vmatprep.subr.mxu0 0.0
        %6418 = vmatpush1.msra.mxu0 0.0
        %6419 = vmatprep.subr.mxu0 0.0
        %6420 = vmatpush1.msra.mxu0 0.0
        %6421 = vmatprep.subr.mxu0 0.0
        %6422 = vmatpush1.msra.mxu0 0.0
        %6423 = vmatprep.subr.mxu0 0.0
        %6424 = vmatpush1.msra.mxu0 0.0
        %6425 = vmatprep.subr.mxu0 0.0
        %6426 = vmatpush1.msra.mxu0 0.0
        %6427 = vmatprep.subr.mxu0 0.0
        %6428 = vmatpush1.msra.mxu0 0.0
        %6429 = vmatprep.subr.mxu0 0.0
        %6430 = vmatpush1.msra.mxu0 0.0
        %6431 = vmatprep.subr.mxu0 0.0
        %6432 = vmatpush1.msra.mxu0 0.0
        %6433 = vmatprep.subr.mxu0 0.0
        %6434 = vmatpush1.msra.mxu0 0.0
        %6435 = vmatprep.subr.mxu0 0.0
        %6436 = vmatpush1.msra.mxu0 0.0
        %6437 = vmatprep.subr.mxu0 0.0
        %6438 = vmatpush1.msra.mxu0 0.0
        %6439 = vmatprep.subr.mxu0 0.0
        %6440 = vmatpush1.msra.mxu0 0.0
        %6441 = vmatprep.subr.mxu0 0.0
        %6442 = vmatpush1.msra.mxu0 0.0
        %6443 = vmatprep.subr.mxu0 0.0
        %6444 = vmatpush1.msra.mxu0 0.0
        %6445 = vmatprep.subr.mxu0 0.0
        %6446 = vmatpush1.msra.mxu0 0.0
        %6447 = vmatprep.subr.mxu0 0.0
        %6448 = vmatpush1.msra.mxu0 0.0
        %6449 = vmatprep.subr.mxu0 0.0
        %6450 = vmatpush1.msra.mxu0 0.0
        %6451 = vmatprep.subr.mxu0 0.0
        %6452 = vmatpush1.msra.mxu0 0.0
        %6453 = vmatprep.subr.mxu0 0.0
        %6454 = vmatpush1.msra.mxu0 0.0
        %6455 = vmatprep.mubr.f32.mxu0 0.0
        %v6456 = vand.u32 %v6040, 4294901760
        %6457 = vmatmul.mubr.f32.gmra.mrb[0].mxu0 %v6456
        %v6458 = vpop.f32.mrb[0].mxu0
        %v6459 = vadd.f32 %v6374, %v6458
        %v6460 = vpop.f32.mrb[0].mxu0
        %6461 = vmatprep.mubr.f32.mxu0 0.0
        %v6462 = vand.u32 %v6043, 4294901760
        %6463 = vmatmul.mubr.f32.gmra.mrb[0].mxu0 %v6462
        %v6464 = vpop.f32.mrb[0].mxu0
        %v6465 = vadd.f32 %v6382, %v6464
        %v6466 = vpop.f32.mrb[0].mxu0
        %6467 = vdwg.mxu0
        %6468 = vmatprep.subr.mxu0 0.0
        %v6469 = vand.u32 %v6034, 4294901760
        %6470 = vmatpush1.msra.mxu0 %v6469
        %6471 = vmatprep.subr.mxu0 0.0
        %v6472 = vand.u32 %v6036, 4294901760
        %6473 = vmatpush1.msra.mxu0 %v6472
        %6474 = vmatprep.subr.mxu0 0.0
        %6475 = vmatpush1.msra.mxu0 0.0
        %6476 = vmatprep.subr.mxu0 0.0
        %6477 = vmatpush1.msra.mxu0 0.0
        %6478 = vmatprep.subr.mxu0 0.0
        %6479 = vmatpush1.msra.mxu0 0.0
        %6480 = vmatprep.subr.mxu0 0.0
        %6481 = vmatpush1.msra.mxu0 0.0
        %6482 = vmatprep.subr.mxu0 0.0
        %6483 = vmatpush1.msra.mxu0 0.0
        %6484 = vmatprep.subr.mxu0 0.0
        %6485 = vmatpush1.msra.mxu0 0.0
        %6486 = vmatprep.subr.mxu0 0.0
        %6487 = vmatpush1.msra.mxu0 0.0
        %6488 = vmatprep.subr.mxu0 0.0
        %6489 = vmatpush1.msra.mxu0 0.0
        %6490 = vmatprep.subr.mxu0 0.0
        %6491 = vmatpush1.msra.mxu0 0.0
        %6492 = vmatprep.subr.mxu0 0.0
        %6493 = vmatpush1.msra.mxu0 0.0
        %6494 = vmatprep.subr.mxu0 0.0
        %6495 = vmatpush1.msra.mxu0 0.0
        %6496 = vmatprep.subr.mxu0 0.0
        %6497 = vmatpush1.msra.mxu0 0.0
        %6498 = vmatprep.subr.mxu0 0.0
        %6499 = vmatpush1.msra.mxu0 0.0
        %6500 = vmatprep.subr.mxu0 0.0
        %6501 = vmatpush1.msra.mxu0 0.0
        %6502 = vmatprep.subr.mxu0 0.0
        %6503 = vmatpush1.msra.mxu0 0.0
        %6504 = vmatprep.subr.mxu0 0.0
        %6505 = vmatpush1.msra.mxu0 0.0
        %6506 = vmatprep.subr.mxu0 0.0
        %6507 = vmatpush1.msra.mxu0 0.0
        %6508 = vmatprep.subr.mxu0 0.0
        %6509 = vmatpush1.msra.mxu0 0.0
        %6510 = vmatprep.subr.mxu0 0.0
        %6511 = vmatpush1.msra.mxu0 0.0
        %6512 = vmatprep.subr.mxu0 0.0
        %6513 = vmatpush1.msra.mxu0 0.0
        %6514 = vmatprep.subr.mxu0 0.0
        %6515 = vmatpush1.msra.mxu0 0.0
        %6516 = vmatprep.subr.mxu0 0.0
        %6517 = vmatpush1.msra.mxu0 0.0
        %6518 = vmatprep.subr.mxu0 0.0
        %6519 = vmatpush1.msra.mxu0 0.0
        %6520 = vmatprep.subr.mxu0 0.0
        %6521 = vmatpush1.msra.mxu0 0.0
        %6522 = vmatprep.subr.mxu0 0.0
        %6523 = vmatpush1.msra.mxu0 0.0
        %6524 = vmatprep.subr.mxu0 0.0
        %6525 = vmatpush1.msra.mxu0 0.0
        %6526 = vmatprep.subr.mxu0 0.0
        %6527 = vmatpush1.msra.mxu0 0.0
        %6528 = vmatprep.subr.mxu0 0.0
        %6529 = vmatpush1.msra.mxu0 0.0
        %6530 = vmatprep.subr.mxu0 0.0
        %6531 = vmatpush1.msra.mxu0 0.0
        %6532 = vmatprep.subr.mxu0 0.0
        %6533 = vmatpush1.msra.mxu0 0.0
        %6534 = vmatprep.mubr.f32.mxu0 0.0
        %v6535 = vand.u32 %v6040, 4294901760
        %6536 = vmatmul.mubr.f32.gmra.mrb[0].mxu0 %v6535
        %v6537 = vpop.f32.mrb[0].mxu0
        %v6538 = vadd.f32 %v6459, %v6537
        %v6539 = vpop.f32.mrb[0].mxu0
        %6540 = vmatprep.mubr.f32.mxu0 0.0
        %v6541 = vand.u32 %v6043, 4294901760
        %6542 = vmatmul.mubr.f32.gmra.mrb[0].mxu0 %v6541
        %v6543 = vpop.f32.mrb[0].mxu0
        %v6544 = vadd.f32 %v6465, %v6543
        %v6545 = vpop.f32.mrb[0].mxu0
        %6546 = vdwg.mxu0
        %6551 = vrot.lane.b32.xlu0 %v6024, 16
        %v6552 = vpop.permute.xlu0 %6551
        %6553 = vrot.lane.b32.xlu0 %v6030, 16
        %v6554 = vpop.permute.xlu0 %6553
        %6555 = vrot.lane.b32.xlu0 %v6538, 16
        %v6556 = vpop.permute.xlu0 %6555
        %6557 = vrot.lane.b32.xlu0 %v6544, 16
        %v6558 = vpop.permute.xlu0 %6557
        %vm6563 = vcmask 195712
        %6564 = vst.msk [vmem:[%s177] sm:$0xff] %vm6563, %v6552
        %6565 = vst.msk [vmem:[%s177 + $0x8] sm:$0xff] %vm6563, %v6554
        %6566 = vst.msk [vmem:[%s177 + $0x10] sm:$0xff] %vm6563, %v6556
        %6567 = vst.msk [vmem:[%s177 + $0x18] sm:$0xff] %vm6563, %v6558
        %6568 = vrot.lane.b32.xlu0 %v184, 104
        %v6569 = vpop.permute.xlu0 %6568
        %6570 = vrot.lane.b32.xlu0 %v185, 104
        %v6571 = vpop.permute.xlu0 %6570
        %6572 = vrot.lane.b32.xlu0 %v180, 72
        %v6573 = vpop.permute.xlu0 %6572
        %6574 = vrot.lane.b32.xlu0 %v181, 72
        %v6575 = vpop.permute.xlu0 %6574
        %v6576 = vsel %vm202, %v6569, 0
        %v6578 = vsel %vm202, %v6571, 0
        %v6580 = vsel %vm202, %v6573, 0
        %v6582 = vsel %vm202, %v6575, 0
        %6584 = vmatprep.subr.mxu0 0.0
        %v6585 = vand.u32 %v6580, 4294901760
        %6586 = vmatpush1.xpose.msra.mxu0 %v6585
        %6587 = vmatprep.subr.mxu0 0.0
        %v6588 = vand.u32 %v6582, 4294901760
        %6589 = vmatpush1.xpose.msra.mxu0 %v6588
        %6590 = vmatprep.subr.mxu0 0.0
        %6591 = vmatpush1.xpose.msra.mxu0 0.0
        %6592 = vmatprep.subr.mxu0 0.0
        %6593 = vmatpush1.xpose.msra.mxu0 0.0
        %6594 = vmatprep.subr.mxu0 0.0
        %6595 = vmatpush1.xpose.msra.mxu0 0.0
        %6596 = vmatprep.subr.mxu0 0.0
        %6597 = vmatpush1.xpose.msra.mxu0 0.0
        %6598 = vmatprep.subr.mxu0 0.0
        %6599 = vmatpush1.xpose.msra.mxu0 0.0
        %6600 = vmatprep.subr.mxu0 0.0
        %6601 = vmatpush1.xpose.msra.mxu0 0.0
        %6602 = vmatprep.subr.mxu0 0.0
        %6603 = vmatpush1.xpose.msra.mxu0 0.0
        %6604 = vmatprep.subr.mxu0 0.0
        %6605 = vmatpush1.xpose.msra.mxu0 0.0
        %6606 = vmatprep.subr.mxu0 0.0
        %6607 = vmatpush1.xpose.msra.mxu0 0.0
        %6608 = vmatprep.subr.mxu0 0.0
        %6609 = vmatpush1.xpose.msra.mxu0 0.0
        %6610 = vmatprep.subr.mxu0 0.0
        %6611 = vmatpush1.xpose.msra.mxu0 0.0
        %6612 = vmatprep.subr.mxu0 0.0
        %6613 = vmatpush1.xpose.msra.mxu0 0.0
        %6614 = vmatprep.subr.mxu0 0.0
        %6615 = vmatpush1.xpose.msra.mxu0 0.0
        %6616 = vmatprep.subr.mxu0 0.0
        %6617 = vmatpush1.xpose.msra.mxu0 0.0
        %6618 = vmatprep.subr.mxu0 0.0
        %6619 = vmatpush1.xpose.msra.mxu0 0.0
        %6620 = vmatprep.subr.mxu0 0.0
        %6621 = vmatpush1.xpose.msra.mxu0 0.0
        %6622 = vmatprep.subr.mxu0 0.0
        %6623 = vmatpush1.xpose.msra.mxu0 0.0
        %6624 = vmatprep.subr.mxu0 0.0
        %6625 = vmatpush1.xpose.msra.mxu0 0.0
        %6626 = vmatprep.subr.mxu0 0.0
        %6627 = vmatpush1.xpose.msra.mxu0 0.0
        %6628 = vmatprep.subr.mxu0 0.0
        %6629 = vmatpush1.xpose.msra.mxu0 0.0
        %6630 = vmatprep.subr.mxu0 0.0
        %6631 = vmatpush1.xpose.msra.mxu0 0.0
        %6632 = vmatprep.subr.mxu0 0.0
        %6633 = vmatpush1.xpose.msra.mxu0 0.0
        %6634 = vmatprep.subr.mxu0 0.0
        %6635 = vmatpush1.xpose.msra.mxu0 0.0
        %6636 = vmatprep.subr.mxu0 0.0
        %6637 = vmatpush1.xpose.msra.mxu0 0.0
        %6638 = vmatprep.subr.mxu0 0.0
        %6639 = vmatpush1.xpose.msra.mxu0 0.0
        %6640 = vmatprep.subr.mxu0 0.0
        %6641 = vmatpush1.xpose.msra.mxu0 0.0
        %6642 = vmatprep.subr.mxu0 0.0
        %6643 = vmatpush1.xpose.msra.mxu0 0.0
        %6644 = vmatprep.subr.mxu0 0.0
        %6645 = vmatpush1.xpose.msra.mxu0 0.0
        %6646 = vmatprep.subr.mxu0 0.0
        %6647 = vmatpush1.xpose.msra.mxu0 0.0
        %6648 = vmatprep.subr.mxu0 0.0
        %6649 = vmatpush1.xpose.msra.mxu0 0.0
        %6650 = vmatprep.mubr.f32.mxu0 0.0
        %v6651 = vand.u32 %v6576, 4294901760
        %v6652 = vsub.f32 %v6576, %v6651
        %v6653 = vand.u32 %v6652, 4294901760
        %v6654 = vsub.f32 %v6652, %v6653
        %v6655 = vand.u32 %v6654, 4294901760
        %6656 = vmatmul.mubr.f32.gmra.mrb[0].mxu0 %v6655
        %v6657 = vpop.f32.mrb[0].mxu0
        %v6658 = vadd.f32 %v194, %v6657
        %v6659 = vpop.f32.mrb[0].mxu0
        %6660 = vmatprep.mubr.f32.mxu0 0.0
        %v6661 = vand.u32 %v6578, 4294901760
        %v6662 = vsub.f32 %v6578, %v6661
        %v6663 = vand.u32 %v6662, 4294901760
        %v6664 = vsub.f32 %v6662, %v6663
        %v6665 = vand.u32 %v6664, 4294901760
        %6666 = vmatmul.mubr.f32.gmra.mrb[0].mxu0 %v6665
        %v6667 = vpop.f32.mrb[0].mxu0
        %v6668 = vadd.f32 %v195, %v6667
        %v6669 = vpop.f32.mrb[0].mxu0
        %6670 = vdwg.mxu0
        %6671 = vmatprep.subr.mxu0 0.0
        %v6672 = vand.u32 %v6580, 4294901760
        %v6673 = vsub.f32 %v6580, %v6672
        %v6674 = vand.u32 %v6673, 4294901760
        %v6675 = vsub.f32 %v6673, %v6674
        %v6676 = vand.u32 %v6675, 4294901760
        %6677 = vmatpush1.xpose.msra.mxu0 %v6676
        %6678 = vmatprep.subr.mxu0 0.0
        %v6679 = vand.u32 %v6582, 4294901760
        %v6680 = vsub.f32 %v6582, %v6679
        %v6681 = vand.u32 %v6680, 4294901760
        %v6682 = vsub.f32 %v6680, %v6681
        %v6683 = vand.u32 %v6682, 4294901760
        %6684 = vmatpush1.xpose.msra.mxu0 %v6683
        %6685 = vmatprep.subr.mxu0 0.0
        %6686 = vmatpush1.xpose.msra.mxu0 0.0
        %6687 = vmatprep.subr.mxu0 0.0
        %6688 = vmatpush1.xpose.msra.mxu0 0.0
        %6689 = vmatprep.subr.mxu0 0.0
        %6690 = vmatpush1.xpose.msra.mxu0 0.0
        %6691 = vmatprep.subr.mxu0 0.0
        %6692 = vmatpush1.xpose.msra.mxu0 0.0
        %6693 = vmatprep.subr.mxu0 0.0
        %6694 = vmatpush1.xpose.msra.mxu0 0.0
        %6695 = vmatprep.subr.mxu0 0.0
        %6696 = vmatpush1.xpose.msra.mxu0 0.0
        %6697 = vmatprep.subr.mxu0 0.0
        %6698 = vmatpush1.xpose.msra.mxu0 0.0
        %6699 = vmatprep.subr.mxu0 0.0
        %6700 = vmatpush1.xpose.msra.mxu0 0.0
        %6701 = vmatprep.subr.mxu0 0.0
        %6702 = vmatpush1.xpose.msra.mxu0 0.0
        %6703 = vmatprep.subr.mxu0 0.0
        %6704 = vmatpush1.xpose.msra.mxu0 0.0
        %6705 = vmatprep.subr.mxu0 0.0
        %6706 = vmatpush1.xpose.msra.mxu0 0.0
        %6707 = vmatprep.subr.mxu0 0.0
        %6708 = vmatpush1.xpose.msra.mxu0 0.0
        %6709 = vmatprep.subr.mxu0 0.0
        %6710 = vmatpush1.xpose.msra.mxu0 0.0
        %6711 = vmatprep.subr.mxu0 0.0
        %6712 = vmatpush1.xpose.msra.mxu0 0.0
        %6713 = vmatprep.subr.mxu0 0.0
        %6714 = vmatpush1.xpose.msra.mxu0 0.0
        %6715 = vmatprep.subr.mxu0 0.0
        %6716 = vmatpush1.xpose.msra.mxu0 0.0
        %6717 = vmatprep.subr.mxu0 0.0
        %6718 = vmatpush1.xpose.msra.mxu0 0.0
        %6719 = vmatprep.subr.mxu0 0.0
        %6720 = vmatpush1.xpose.msra.mxu0 0.0
        %6721 = vmatprep.subr.mxu0 0.0
        %6722 = vmatpush1.xpose.msra.mxu0 0.0
        %6723 = vmatprep.subr.mxu0 0.0
        %6724 = vmatpush1.xpose.msra.mxu0 0.0
        %6725 = vmatprep.subr.mxu0 0.0
        %6726 = vmatpush1.xpose.msra.mxu0 0.0
        %6727 = vmatprep.subr.mxu0 0.0
        %6728 = vmatpush1.xpose.msra.mxu0 0.0
        %6729 = vmatprep.subr.mxu0 0.0
        %6730 = vmatpush1.xpose.msra.mxu0 0.0
        %6731 = vmatprep.subr.mxu0 0.0
        %6732 = vmatpush1.xpose.msra.mxu0 0.0
        %6733 = vmatprep.subr.mxu0 0.0
        %6734 = vmatpush1.xpose.msra.mxu0 0.0
        %6735 = vmatprep.subr.mxu0 0.0
        %6736 = vmatpush1.xpose.msra.mxu0 0.0
        %6737 = vmatprep.subr.mxu0 0.0
        %6738 = vmatpush1.xpose.msra.mxu0 0.0
        %6739 = vmatprep.subr.mxu0 0.0
        %6740 = vmatpush1.xpose.msra.mxu0 0.0
        %6741 = vmatprep.subr.mxu0 0.0
        %6742 = vmatpush1.xpose.msra.mxu0 0.0
        %6743 = vmatprep.subr.mxu0 0.0
        %6744 = vmatpush1.xpose.msra.mxu0 0.0
        %6745 = vmatprep.mubr.f32.mxu0 0.0
        %v6746 = vand.u32 %v6576, 4294901760
        %6747 = vmatmul.mubr.f32.gmra.mrb[0].mxu0 %v6746
        %v6748 = vpop.f32.mrb[0].mxu0
        %v6749 = vadd.f32 %v6658, %v6748
        %v6750 = vpop.f32.mrb[0].mxu0
        %6751 = vmatprep.mubr.f32.mxu0 0.0
        %v6752 = vand.u32 %v6578, 4294901760
        %6753 = vmatmul.mubr.f32.gmra.mrb[0].mxu0 %v6752
        %v6754 = vpop.f32.mrb[0].mxu0
        %v6755 = vadd.f32 %v6668, %v6754
        %v6756 = vpop.f32.mrb[0].mxu0
        %6757 = vdwg.mxu0
        %6758 = vmatprep.subr.mxu0 0.0
        %v6759 = vand.u32 %v6580, 4294901760
        %v6760 = vsub.f32 %v6580, %v6759
        %6761 = vmatpush1.xpose.msra.mxu0 %v6760
        %6762 = vmatprep.subr.mxu0 0.0
        %v6763 = vand.u32 %v6582, 4294901760
        %v6764 = vsub.f32 %v6582, %v6763
        %6765 = vmatpush1.xpose.msra.mxu0 %v6764
        %6766 = vmatprep.subr.mxu0 0.0
        %6767 = vmatpush1.xpose.msra.mxu0 0.0
        %6768 = vmatprep.subr.mxu0 0.0
        %6769 = vmatpush1.xpose.msra.mxu0 0.0
        %6770 = vmatprep.subr.mxu0 0.0
        %6771 = vmatpush1.xpose.msra.mxu0 0.0
        %6772 = vmatprep.subr.mxu0 0.0
        %6773 = vmatpush1.xpose.msra.mxu0 0.0
        %6774 = vmatprep.subr.mxu0 0.0
        %6775 = vmatpush1.xpose.msra.mxu0 0.0
        %6776 = vmatprep.subr.mxu0 0.0
        %6777 = vmatpush1.xpose.msra.mxu0 0.0
        %6778 = vmatprep.subr.mxu0 0.0
        %6779 = vmatpush1.xpose.msra.mxu0 0.0
        %6780 = vmatprep.subr.mxu0 0.0
        %6781 = vmatpush1.xpose.msra.mxu0 0.0
        %6782 = vmatprep.subr.mxu0 0.0
        %6783 = vmatpush1.xpose.msra.mxu0 0.0
        %6784 = vmatprep.subr.mxu0 0.0
        %6785 = vmatpush1.xpose.msra.mxu0 0.0
        %6786 = vmatprep.subr.mxu0 0.0
        %6787 = vmatpush1.xpose.msra.mxu0 0.0
        %6788 = vmatprep.subr.mxu0 0.0
        %6789 = vmatpush1.xpose.msra.mxu0 0.0
        %6790 = vmatprep.subr.mxu0 0.0
        %6791 = vmatpush1.xpose.msra.mxu0 0.0
        %6792 = vmatprep.subr.mxu0 0.0
        %6793 = vmatpush1.xpose.msra.mxu0 0.0
        %6794 = vmatprep.subr.mxu0 0.0
        %6795 = vmatpush1.xpose.msra.mxu0 0.0
        %6796 = vmatprep.subr.mxu0 0.0
        %6797 = vmatpush1.xpose.msra.mxu0 0.0
        %6798 = vmatprep.subr.mxu0 0.0
        %6799 = vmatpush1.xpose.msra.mxu0 0.0
        %6800 = vmatprep.subr.mxu0 0.0
        %6801 = vmatpush1.xpose.msra.mxu0 0.0
        %6802 = vmatprep.subr.mxu0 0.0
        %6803 = vmatpush1.xpose.msra.mxu0 0.0
        %6804 = vmatprep.subr.mxu0 0.0
        %6805 = vmatpush1.xpose.msra.mxu0 0.0
        %6806 = vmatprep.subr.mxu0 0.0
        %6807 = vmatpush1.xpose.msra.mxu0 0.0
        %6808 = vmatprep.subr.mxu0 0.0
        %6809 = vmatpush1.xpose.msra.mxu0 0.0
        %6810 = vmatprep.subr.mxu0 0.0
        %6811 = vmatpush1.xpose.msra.mxu0 0.0
        %6812 = vmatprep.subr.mxu0 0.0
        %6813 = vmatpush1.xpose.msra.mxu0 0.0
        %6814 = vmatprep.subr.mxu0 0.0
        %6815 = vmatpush1.xpose.msra.mxu0 0.0
        %6816 = vmatprep.subr.mxu0 0.0
        %6817 = vmatpush1.xpose.msra.mxu0 0.0
        %6818 = vmatprep.subr.mxu0 0.0
        %6819 = vmatpush1.xpose.msra.mxu0 0.0
        %6820 = vmatprep.subr.mxu0 0.0
        %6821 = vmatpush1.xpose.msra.mxu0 0.0
        %6822 = vmatprep.subr.mxu0 0.0
        %6823 = vmatpush1.xpose.msra.mxu0 0.0
        %6824 = vmatprep.subr.mxu0 0.0
        %6825 = vmatpush1.xpose.msra.mxu0 0.0
        %6826 = vmatprep.mubr.f32.mxu0 0.0
        %v6827 = vand.u32 %v6576, 4294901760
        %v6828 = vsub.f32 %v6576, %v6827
        %6829 = vmatmul.mubr.f32.gmra.mrb[0].mxu0 %v6828
        %v6830 = vpop.f32.mrb[0].mxu0
        %v6831 = vadd.f32 %v6749, %v6830
        %v6832 = vpop.f32.mrb[0].mxu0
        %6833 = vmatprep.mubr.f32.mxu0 0.0
        %v6834 = vand.u32 %v6578, 4294901760
        %v6835 = vsub.f32 %v6578, %v6834
        %6836 = vmatmul.mubr.f32.gmra.mrb[0].mxu0 %v6835
        %v6837 = vpop.f32.mrb[0].mxu0
        %v6838 = vadd.f32 %v6755, %v6837
        %v6839 = vpop.f32.mrb[0].mxu0
        %6840 = vdwg.mxu0
        %6841 = vmatprep.subr.mxu0 0.0
        %v6842 = vand.u32 %v6580, 4294901760
        %6843 = vmatpush1.xpose.msra.mxu0 %v6842
        %6844 = vmatprep.subr.mxu0 0.0
        %v6845 = vand.u32 %v6582, 4294901760
        %6846 = vmatpush1.xpose.msra.mxu0 %v6845
        %6847 = vmatprep.subr.mxu0 0.0
        %6848 = vmatpush1.xpose.msra.mxu0 0.0
        %6849 = vmatprep.subr.mxu0 0.0
        %6850 = vmatpush1.xpose.msra.mxu0 0.0
        %6851 = vmatprep.subr.mxu0 0.0
        %6852 = vmatpush1.xpose.msra.mxu0 0.0
        %6853 = vmatprep.subr.mxu0 0.0
        %6854 = vmatpush1.xpose.msra.mxu0 0.0
        %6855 = vmatprep.subr.mxu0 0.0
        %6856 = vmatpush1.xpose.msra.mxu0 0.0
        %6857 = vmatprep.subr.mxu0 0.0
        %6858 = vmatpush1.xpose.msra.mxu0 0.0
        %6859 = vmatprep.subr.mxu0 0.0
        %6860 = vmatpush1.xpose.msra.mxu0 0.0
        %6861 = vmatprep.subr.mxu0 0.0
        %6862 = vmatpush1.xpose.msra.mxu0 0.0
        %6863 = vmatprep.subr.mxu0 0.0
        %6864 = vmatpush1.xpose.msra.mxu0 0.0
        %6865 = vmatprep.subr.mxu0 0.0
        %6866 = vmatpush1.xpose.msra.mxu0 0.0
        %6867 = vmatprep.subr.mxu0 0.0
        %6868 = vmatpush1.xpose.msra.mxu0 0.0
        %6869 = vmatprep.subr.mxu0 0.0
        %6870 = vmatpush1.xpose.msra.mxu0 0.0
        %6871 = vmatprep.subr.mxu0 0.0
        %6872 = vmatpush1.xpose.msra.mxu0 0.0
        %6873 = vmatprep.subr.mxu0 0.0
        %6874 = vmatpush1.xpose.msra.mxu0 0.0
        %6875 = vmatprep.subr.mxu0 0.0
        %6876 = vmatpush1.xpose.msra.mxu0 0.0
        %6877 = vmatprep.subr.mxu0 0.0
        %6878 = vmatpush1.xpose.msra.mxu0 0.0
        %6879 = vmatprep.subr.mxu0 0.0
        %6880 = vmatpush1.xpose.msra.mxu0 0.0
        %6881 = vmatprep.subr.mxu0 0.0
        %6882 = vmatpush1.xpose.msra.mxu0 0.0
        %6883 = vmatprep.subr.mxu0 0.0
        %6884 = vmatpush1.xpose.msra.mxu0 0.0
        %6885 = vmatprep.subr.mxu0 0.0
        %6886 = vmatpush1.xpose.msra.mxu0 0.0
        %6887 = vmatprep.subr.mxu0 0.0
        %6888 = vmatpush1.xpose.msra.mxu0 0.0
        %6889 = vmatprep.subr.mxu0 0.0
        %6890 = vmatpush1.xpose.msra.mxu0 0.0
        %6891 = vmatprep.subr.mxu0 0.0
        %6892 = vmatpush1.xpose.msra.mxu0 0.0
        %6893 = vmatprep.subr.mxu0 0.0
        %6894 = vmatpush1.xpose.msra.mxu0 0.0
        %6895 = vmatprep.subr.mxu0 0.0
        %6896 = vmatpush1.xpose.msra.mxu0 0.0
        %6897 = vmatprep.subr.mxu0 0.0
        %6898 = vmatpush1.xpose.msra.mxu0 0.0
        %6899 = vmatprep.subr.mxu0 0.0
        %6900 = vmatpush1.xpose.msra.mxu0 0.0
        %6901 = vmatprep.subr.mxu0 0.0
        %6902 = vmatpush1.xpose.msra.mxu0 0.0
        %6903 = vmatprep.subr.mxu0 0.0
        %6904 = vmatpush1.xpose.msra.mxu0 0.0
        %6905 = vmatprep.subr.mxu0 0.0
        %6906 = vmatpush1.xpose.msra.mxu0 0.0
        %6907 = vmatprep.mubr.f32.mxu0 0.0
        %v6908 = vand.u32 %v6576, 4294901760
        %v6909 = vsub.f32 %v6576, %v6908
        %v6910 = vand.u32 %v6909, 4294901760
        %6911 = vmatmul.mubr.f32.gmra.mrb[0].mxu0 %v6910
        %v6912 = vpop.f32.mrb[0].mxu0
        %v6913 = vadd.f32 %v6831, %v6912
        %v6914 = vpop.f32.mrb[0].mxu0
        %6915 = vmatprep.mubr.f32.mxu0 0.0
        %v6916 = vand.u32 %v6578, 4294901760
        %v6917 = vsub.f32 %v6578, %v6916
        %v6918 = vand.u32 %v6917, 4294901760
        %6919 = vmatmul.mubr.f32.gmra.mrb[0].mxu0 %v6918
        %v6920 = vpop.f32.mrb[0].mxu0
        %v6921 = vadd.f32 %v6838, %v6920
        %v6922 = vpop.f32.mrb[0].mxu0
        %6923 = vdwg.mxu0
        %6924 = vmatprep.subr.mxu0 0.0
        %v6925 = vand.u32 %v6580, 4294901760
        %v6926 = vsub.f32 %v6580, %v6925
        %v6927 = vand.u32 %v6926, 4294901760
        %6928 = vmatpush1.xpose.msra.mxu0 %v6927
        %6929 = vmatprep.subr.mxu0 0.0
        %v6930 = vand.u32 %v6582, 4294901760
        %v6931 = vsub.f32 %v6582, %v6930
        %v6932 = vand.u32 %v6931, 4294901760
        %6933 = vmatpush1.xpose.msra.mxu0 %v6932
        %6934 = vmatprep.subr.mxu0 0.0
        %6935 = vmatpush1.xpose.msra.mxu0 0.0
        %6936 = vmatprep.subr.mxu0 0.0
        %6937 = vmatpush1.xpose.msra.mxu0 0.0
        %6938 = vmatprep.subr.mxu0 0.0
        %6939 = vmatpush1.xpose.msra.mxu0 0.0
        %6940 = vmatprep.subr.mxu0 0.0
        %6941 = vmatpush1.xpose.msra.mxu0 0.0
        %6942 = vmatprep.subr.mxu0 0.0
        %6943 = vmatpush1.xpose.msra.mxu0 0.0
        %6944 = vmatprep.subr.mxu0 0.0
        %6945 = vmatpush1.xpose.msra.mxu0 0.0
        %6946 = vmatprep.subr.mxu0 0.0
        %6947 = vmatpush1.xpose.msra.mxu0 0.0
        %6948 = vmatprep.subr.mxu0 0.0
        %6949 = vmatpush1.xpose.msra.mxu0 0.0
        %6950 = vmatprep.subr.mxu0 0.0
        %6951 = vmatpush1.xpose.msra.mxu0 0.0
        %6952 = vmatprep.subr.mxu0 0.0
        %6953 = vmatpush1.xpose.msra.mxu0 0.0
        %6954 = vmatprep.subr.mxu0 0.0
        %6955 = vmatpush1.xpose.msra.mxu0 0.0
        %6956 = vmatprep.subr.mxu0 0.0
        %6957 = vmatpush1.xpose.msra.mxu0 0.0
        %6958 = vmatprep.subr.mxu0 0.0
        %6959 = vmatpush1.xpose.msra.mxu0 0.0
        %6960 = vmatprep.subr.mxu0 0.0
        %6961 = vmatpush1.xpose.msra.mxu0 0.0
        %6962 = vmatprep.subr.mxu0 0.0
        %6963 = vmatpush1.xpose.msra.mxu0 0.0
        %6964 = vmatprep.subr.mxu0 0.0
        %6965 = vmatpush1.xpose.msra.mxu0 0.0
        %6966 = vmatprep.subr.mxu0 0.0
        %6967 = vmatpush1.xpose.msra.mxu0 0.0
        %6968 = vmatprep.subr.mxu0 0.0
        %6969 = vmatpush1.xpose.msra.mxu0 0.0
        %6970 = vmatprep.subr.mxu0 0.0
        %6971 = vmatpush1.xpose.msra.mxu0 0.0
        %6972 = vmatprep.subr.mxu0 0.0
        %6973 = vmatpush1.xpose.msra.mxu0 0.0
        %6974 = vmatprep.subr.mxu0 0.0
        %6975 = vmatpush1.xpose.msra.mxu0 0.0
        %6976 = vmatprep.subr.mxu0 0.0
        %6977 = vmatpush1.xpose.msra.mxu0 0.0
        %6978 = vmatprep.subr.mxu0 0.0
        %6979 = vmatpush1.xpose.msra.mxu0 0.0
        %6980 = vmatprep.subr.mxu0 0.0
        %6981 = vmatpush1.xpose.msra.mxu0 0.0
        %6982 = vmatprep.subr.mxu0 0.0
        %6983 = vmatpush1.xpose.msra.mxu0 0.0
        %6984 = vmatprep.subr.mxu0 0.0
        %6985 = vmatpush1.xpose.msra.mxu0 0.0
        %6986 = vmatprep.subr.mxu0 0.0
        %6987 = vmatpush1.xpose.msra.mxu0 0.0
        %6988 = vmatprep.subr.mxu0 0.0
        %6989 = vmatpush1.xpose.msra.mxu0 0.0
        %6990 = vmatprep.subr.mxu0 0.0
        %6991 = vmatpush1.xpose.msra.mxu0 0.0
        %6992 = vmatprep.subr.mxu0 0.0
        %6993 = vmatpush1.xpose.msra.mxu0 0.0
        %6994 = vmatprep.mubr.f32.mxu0 0.0
        %v6995 = vand.u32 %v6576, 4294901760
        %6996 = vmatmul.mubr.f32.gmra.mrb[0].mxu0 %v6995
        %v6997 = vpop.f32.mrb[0].mxu0
        %v6998 = vadd.f32 %v6913, %v6997
        %v6999 = vpop.f32.mrb[0].mxu0
        %7000 = vmatprep.mubr.f32.mxu0 0.0
        %v7001 = vand.u32 %v6578, 4294901760
        %7002 = vmatmul.mubr.f32.gmra.mrb[0].mxu0 %v7001
        %v7003 = vpop.f32.mrb[0].mxu0
        %v7004 = vadd.f32 %v6921, %v7003
        %v7005 = vpop.f32.mrb[0].mxu0
        %7006 = vdwg.mxu0
        %7007 = vmatprep.subr.mxu0 0.0
        %v7008 = vand.u32 %v6580, 4294901760
        %7009 = vmatpush1.xpose.msra.mxu0 %v7008
        %7010 = vmatprep.subr.mxu0 0.0
        %v7011 = vand.u32 %v6582, 4294901760
        %7012 = vmatpush1.xpose.msra.mxu0 %v7011
        %7013 = vmatprep.subr.mxu0 0.0
        %7014 = vmatpush1.xpose.msra.mxu0 0.0
        %7015 = vmatprep.subr.mxu0 0.0
        %7016 = vmatpush1.xpose.msra.mxu0 0.0
        %7017 = vmatprep.subr.mxu0 0.0
        %7018 = vmatpush1.xpose.msra.mxu0 0.0
        %7019 = vmatprep.subr.mxu0 0.0
        %7020 = vmatpush1.xpose.msra.mxu0 0.0
        %7021 = vmatprep.subr.mxu0 0.0
        %7022 = vmatpush1.xpose.msra.mxu0 0.0
        %7023 = vmatprep.subr.mxu0 0.0
        %7024 = vmatpush1.xpose.msra.mxu0 0.0
        %7025 = vmatprep.subr.mxu0 0.0
        %7026 = vmatpush1.xpose.msra.mxu0 0.0
        %7027 = vmatprep.subr.mxu0 0.0
        %7028 = vmatpush1.xpose.msra.mxu0 0.0
        %7029 = vmatprep.subr.mxu0 0.0
        %7030 = vmatpush1.xpose.msra.mxu0 0.0
        %7031 = vmatprep.subr.mxu0 0.0
        %7032 = vmatpush1.xpose.msra.mxu0 0.0
        %7033 = vmatprep.subr.mxu0 0.0
        %7034 = vmatpush1.xpose.msra.mxu0 0.0
        %7035 = vmatprep.subr.mxu0 0.0
        %7036 = vmatpush1.xpose.msra.mxu0 0.0
        %7037 = vmatprep.subr.mxu0 0.0
        %7038 = vmatpush1.xpose.msra.mxu0 0.0
        %7039 = vmatprep.subr.mxu0 0.0
        %7040 = vmatpush1.xpose.msra.mxu0 0.0
        %7041 = vmatprep.subr.mxu0 0.0
        %7042 = vmatpush1.xpose.msra.mxu0 0.0
        %7043 = vmatprep.subr.mxu0 0.0
        %7044 = vmatpush1.xpose.msra.mxu0 0.0
        %7045 = vmatprep.subr.mxu0 0.0
        %7046 = vmatpush1.xpose.msra.mxu0 0.0
        %7047 = vmatprep.subr.mxu0 0.0
        %7048 = vmatpush1.xpose.msra.mxu0 0.0
        %7049 = vmatprep.subr.mxu0 0.0
        %7050 = vmatpush1.xpose.msra.mxu0 0.0
        %7051 = vmatprep.subr.mxu0 0.0
        %7052 = vmatpush1.xpose.msra.mxu0 0.0
        %7053 = vmatprep.subr.mxu0 0.0
        %7054 = vmatpush1.xpose.msra.mxu0 0.0
        %7055 = vmatprep.subr.mxu0 0.0
        %7056 = vmatpush1.xpose.msra.mxu0 0.0
        %7057 = vmatprep.subr.mxu0 0.0
        %7058 = vmatpush1.xpose.msra.mxu0 0.0
        %7059 = vmatprep.subr.mxu0 0.0
        %7060 = vmatpush1.xpose.msra.mxu0 0.0
        %7061 = vmatprep.subr.mxu0 0.0
        %7062 = vmatpush1.xpose.msra.mxu0 0.0
        %7063 = vmatprep.subr.mxu0 0.0
        %7064 = vmatpush1.xpose.msra.mxu0 0.0
        %7065 = vmatprep.subr.mxu0 0.0
        %7066 = vmatpush1.xpose.msra.mxu0 0.0
        %7067 = vmatprep.subr.mxu0 0.0
        %7068 = vmatpush1.xpose.msra.mxu0 0.0
        %7069 = vmatprep.subr.mxu0 0.0
        %7070 = vmatpush1.xpose.msra.mxu0 0.0
        %7071 = vmatprep.subr.mxu0 0.0
        %7072 = vmatpush1.xpose.msra.mxu0 0.0
        %7073 = vmatprep.mubr.f32.mxu0 0.0
        %v7074 = vand.u32 %v6576, 4294901760
        %7075 = vmatmul.mubr.f32.gmra.mrb[0].mxu0 %v7074
        %v7076 = vpop.f32.mrb[0].mxu0
        %v7077 = vadd.f32 %v6998, %v7076
        %v7078 = vpop.f32.mrb[0].mxu0
        %7079 = vmatprep.mubr.f32.mxu0 0.0
        %v7080 = vand.u32 %v6578, 4294901760
        %7081 = vmatmul.mubr.f32.gmra.mrb[0].mxu0 %v7080
        %v7082 = vpop.f32.mrb[0].mxu0
        %v7083 = vadd.f32 %v7004, %v7082
        %v7084 = vpop.f32.mrb[0].mxu0
        %7085 = vdwg.mxu0
        %7086 = vrot.lane.b32.xlu0 %v186, 104
        %v7087 = vpop.permute.xlu0 %7086
        %7088 = vrot.lane.b32.xlu0 %v187, 104
        %v7089 = vpop.permute.xlu0 %7088
        %7090 = vrot.lane.b32.xlu0 %v182, 72
        %v7091 = vpop.permute.xlu0 %7090
        %7092 = vrot.lane.b32.xlu0 %v183, 72
        %v7093 = vpop.permute.xlu0 %7092
        %v7094 = vsel %vm202, %v7087, 0
        %v7096 = vsel %vm202, %v7089, 0
        %v7098 = vsel %vm202, %v7091, 0
        %v7100 = vsel %vm202, %v7093, 0
        %7102 = vmatprep.subr.mxu0 0.0
        %v7103 = vand.u32 %v7098, 4294901760
        %7104 = vmatpush1.xpose.msra.mxu0 %v7103
        %7105 = vmatprep.subr.mxu0 0.0
        %v7106 = vand.u32 %v7100, 4294901760
        %7107 = vmatpush1.xpose.msra.mxu0 %v7106
        %7108 = vmatprep.subr.mxu0 0.0
        %7109 = vmatpush1.xpose.msra.mxu0 0.0
        %7110 = vmatprep.subr.mxu0 0.0
        %7111 = vmatpush1.xpose.msra.mxu0 0.0
        %7112 = vmatprep.subr.mxu0 0.0
        %7113 = vmatpush1.xpose.msra.mxu0 0.0
        %7114 = vmatprep.subr.mxu0 0.0
        %7115 = vmatpush1.xpose.msra.mxu0 0.0
        %7116 = vmatprep.subr.mxu0 0.0
        %7117 = vmatpush1.xpose.msra.mxu0 0.0
        %7118 = vmatprep.subr.mxu0 0.0
        %7119 = vmatpush1.xpose.msra.mxu0 0.0
        %7120 = vmatprep.subr.mxu0 0.0
        %7121 = vmatpush1.xpose.msra.mxu0 0.0
        %7122 = vmatprep.subr.mxu0 0.0
        %7123 = vmatpush1.xpose.msra.mxu0 0.0
        %7124 = vmatprep.subr.mxu0 0.0
        %7125 = vmatpush1.xpose.msra.mxu0 0.0
        %7126 = vmatprep.subr.mxu0 0.0
        %7127 = vmatpush1.xpose.msra.mxu0 0.0
        %7128 = vmatprep.subr.mxu0 0.0
        %7129 = vmatpush1.xpose.msra.mxu0 0.0
        %7130 = vmatprep.subr.mxu0 0.0
        %7131 = vmatpush1.xpose.msra.mxu0 0.0
        %7132 = vmatprep.subr.mxu0 0.0
        %7133 = vmatpush1.xpose.msra.mxu0 0.0
        %7134 = vmatprep.subr.mxu0 0.0
        %7135 = vmatpush1.xpose.msra.mxu0 0.0
        %7136 = vmatprep.subr.mxu0 0.0
        %7137 = vmatpush1.xpose.msra.mxu0 0.0
        %7138 = vmatprep.subr.mxu0 0.0
        %7139 = vmatpush1.xpose.msra.mxu0 0.0
        %7140 = vmatprep.subr.mxu0 0.0
        %7141 = vmatpush1.xpose.msra.mxu0 0.0
        %7142 = vmatprep.subr.mxu0 0.0
        %7143 = vmatpush1.xpose.msra.mxu0 0.0
        %7144 = vmatprep.subr.mxu0 0.0
        %7145 = vmatpush1.xpose.msra.mxu0 0.0
        %7146 = vmatprep.subr.mxu0 0.0
        %7147 = vmatpush1.xpose.msra.mxu0 0.0
        %7148 = vmatprep.subr.mxu0 0.0
        %7149 = vmatpush1.xpose.msra.mxu0 0.0
        %7150 = vmatprep.subr.mxu0 0.0
        %7151 = vmatpush1.xpose.msra.mxu0 0.0
        %7152 = vmatprep.subr.mxu0 0.0
        %7153 = vmatpush1.xpose.msra.mxu0 0.0
        %7154 = vmatprep.subr.mxu0 0.0
        %7155 = vmatpush1.xpose.msra.mxu0 0.0
        %7156 = vmatprep.subr.mxu0 0.0
        %7157 = vmatpush1.xpose.msra.mxu0 0.0
        %7158 = vmatprep.subr.mxu0 0.0
        %7159 = vmatpush1.xpose.msra.mxu0 0.0
        %7160 = vmatprep.subr.mxu0 0.0
        %7161 = vmatpush1.xpose.msra.mxu0 0.0
        %7162 = vmatprep.subr.mxu0 0.0
        %7163 = vmatpush1.xpose.msra.mxu0 0.0
        %7164 = vmatprep.subr.mxu0 0.0
        %7165 = vmatpush1.xpose.msra.mxu0 0.0
        %7166 = vmatprep.subr.mxu0 0.0
        %7167 = vmatpush1.xpose.msra.mxu0 0.0
        %7168 = vmatprep.mubr.f32.mxu0 0.0
        %v7169 = vand.u32 %v7094, 4294901760
        %v7170 = vsub.f32 %v7094, %v7169
        %v7171 = vand.u32 %v7170, 4294901760
        %v7172 = vsub.f32 %v7170, %v7171
        %v7173 = vand.u32 %v7172, 4294901760
        %7174 = vmatmul.mubr.f32.gmra.mrb[0].mxu0 %v7173
        %v7175 = vpop.f32.mrb[0].mxu0
        %v7176 = vadd.f32 %v194, %v7175
        %v7177 = vpop.f32.mrb[0].mxu0
        %7178 = vmatprep.mubr.f32.mxu0 0.0
        %v7179 = vand.u32 %v7096, 4294901760
        %v7180 = vsub.f32 %v7096, %v7179
        %v7181 = vand.u32 %v7180, 4294901760
        %v7182 = vsub.f32 %v7180, %v7181
        %v7183 = vand.u32 %v7182, 4294901760
        %7184 = vmatmul.mubr.f32.gmra.mrb[0].mxu0 %v7183
        %v7185 = vpop.f32.mrb[0].mxu0
        %v7186 = vadd.f32 %v195, %v7185
        %v7187 = vpop.f32.mrb[0].mxu0
        %7188 = vdwg.mxu0
        %7189 = vmatprep.subr.mxu0 0.0
        %v7190 = vand.u32 %v7098, 4294901760
        %v7191 = vsub.f32 %v7098, %v7190
        %v7192 = vand.u32 %v7191, 4294901760
        %v7193 = vsub.f32 %v7191, %v7192
        %v7194 = vand.u32 %v7193, 4294901760
        %7195 = vmatpush1.xpose.msra.mxu0 %v7194
        %7196 = vmatprep.subr.mxu0 0.0
        %v7197 = vand.u32 %v7100, 4294901760
        %v7198 = vsub.f32 %v7100, %v7197
        %v7199 = vand.u32 %v7198, 4294901760
        %v7200 = vsub.f32 %v7198, %v7199
        %v7201 = vand.u32 %v7200, 4294901760
        %7202 = vmatpush1.xpose.msra.mxu0 %v7201
        %7203 = vmatprep.subr.mxu0 0.0
        %7204 = vmatpush1.xpose.msra.mxu0 0.0
        %7205 = vmatprep.subr.mxu0 0.0
        %7206 = vmatpush1.xpose.msra.mxu0 0.0
        %7207 = vmatprep.subr.mxu0 0.0
        %7208 = vmatpush1.xpose.msra.mxu0 0.0
        %7209 = vmatprep.subr.mxu0 0.0
        %7210 = vmatpush1.xpose.msra.mxu0 0.0
        %7211 = vmatprep.subr.mxu0 0.0
        %7212 = vmatpush1.xpose.msra.mxu0 0.0
        %7213 = vmatprep.subr.mxu0 0.0
        %7214 = vmatpush1.xpose.msra.mxu0 0.0
        %7215 = vmatprep.subr.mxu0 0.0
        %7216 = vmatpush1.xpose.msra.mxu0 0.0
        %7217 = vmatprep.subr.mxu0 0.0
        %7218 = vmatpush1.xpose.msra.mxu0 0.0
        %7219 = vmatprep.subr.mxu0 0.0
        %7220 = vmatpush1.xpose.msra.mxu0 0.0
        %7221 = vmatprep.subr.mxu0 0.0
        %7222 = vmatpush1.xpose.msra.mxu0 0.0
        %7223 = vmatprep.subr.mxu0 0.0
        %7224 = vmatpush1.xpose.msra.mxu0 0.0
        %7225 = vmatprep.subr.mxu0 0.0
        %7226 = vmatpush1.xpose.msra.mxu0 0.0
        %7227 = vmatprep.subr.mxu0 0.0
        %7228 = vmatpush1.xpose.msra.mxu0 0.0
        %7229 = vmatprep.subr.mxu0 0.0
        %7230 = vmatpush1.xpose.msra.mxu0 0.0
        %7231 = vmatprep.subr.mxu0 0.0
        %7232 = vmatpush1.xpose.msra.mxu0 0.0
        %7233 = vmatprep.subr.mxu0 0.0
        %7234 = vmatpush1.xpose.msra.mxu0 0.0
        %7235 = vmatprep.subr.mxu0 0.0
        %7236 = vmatpush1.xpose.msra.mxu0 0.0
        %7237 = vmatprep.subr.mxu0 0.0
        %7238 = vmatpush1.xpose.msra.mxu0 0.0
        %7239 = vmatprep.subr.mxu0 0.0
        %7240 = vmatpush1.xpose.msra.mxu0 0.0
        %7241 = vmatprep.subr.mxu0 0.0
        %7242 = vmatpush1.xpose.msra.mxu0 0.0
        %7243 = vmatprep.subr.mxu0 0.0
        %7244 = vmatpush1.xpose.msra.mxu0 0.0
        %7245 = vmatprep.subr.mxu0 0.0
        %7246 = vmatpush1.xpose.msra.mxu0 0.0
        %7247 = vmatprep.subr.mxu0 0.0
        %7248 = vmatpush1.xpose.msra.mxu0 0.0
        %7249 = vmatprep.subr.mxu0 0.0
        %7250 = vmatpush1.xpose.msra.mxu0 0.0
        %7251 = vmatprep.subr.mxu0 0.0
        %7252 = vmatpush1.xpose.msra.mxu0 0.0
        %7253 = vmatprep.subr.mxu0 0.0
        %7254 = vmatpush1.xpose.msra.mxu0 0.0
        %7255 = vmatprep.subr.mxu0 0.0
        %7256 = vmatpush1.xpose.msra.mxu0 0.0
        %7257 = vmatprep.subr.mxu0 0.0
        %7258 = vmatpush1.xpose.msra.mxu0 0.0
        %7259 = vmatprep.subr.mxu0 0.0
        %7260 = vmatpush1.xpose.msra.mxu0 0.0
        %7261 = vmatprep.subr.mxu0 0.0
        %7262 = vmatpush1.xpose.msra.mxu0 0.0
        %7263 = vmatprep.mubr.f32.mxu0 0.0
        %v7264 = vand.u32 %v7094, 4294901760
        %7265 = vmatmul.mubr.f32.gmra.mrb[0].mxu0 %v7264
        %v7266 = vpop.f32.mrb[0].mxu0
        %v7267 = vadd.f32 %v7176, %v7266
        %v7268 = vpop.f32.mrb[0].mxu0
        %7269 = vmatprep.mubr.f32.mxu0 0.0
        %v7270 = vand.u32 %v7096, 4294901760
        %7271 = vmatmul.mubr.f32.gmra.mrb[0].mxu0 %v7270
        %v7272 = vpop.f32.mrb[0].mxu0
        %v7273 = vadd.f32 %v7186, %v7272
        %v7274 = vpop.f32.mrb[0].mxu0
        %7275 = vdwg.mxu0
        %7276 = vmatprep.subr.mxu0 0.0
        %v7277 = vand.u32 %v7098, 4294901760
        %v7278 = vsub.f32 %v7098, %v7277
        %7279 = vmatpush1.xpose.msra.mxu0 %v7278
        %7280 = vmatprep.subr.mxu0 0.0
        %v7281 = vand.u32 %v7100, 4294901760
        %v7282 = vsub.f32 %v7100, %v7281
        %7283 = vmatpush1.xpose.msra.mxu0 %v7282
        %7284 = vmatprep.subr.mxu0 0.0
        %7285 = vmatpush1.xpose.msra.mxu0 0.0
        %7286 = vmatprep.subr.mxu0 0.0
        %7287 = vmatpush1.xpose.msra.mxu0 0.0
        %7288 = vmatprep.subr.mxu0 0.0
        %7289 = vmatpush1.xpose.msra.mxu0 0.0
        %7290 = vmatprep.subr.mxu0 0.0
        %7291 = vmatpush1.xpose.msra.mxu0 0.0
        %7292 = vmatprep.subr.mxu0 0.0
        %7293 = vmatpush1.xpose.msra.mxu0 0.0
        %7294 = vmatprep.subr.mxu0 0.0
        %7295 = vmatpush1.xpose.msra.mxu0 0.0
        %7296 = vmatprep.subr.mxu0 0.0
        %7297 = vmatpush1.xpose.msra.mxu0 0.0
        %7298 = vmatprep.subr.mxu0 0.0
        %7299 = vmatpush1.xpose.msra.mxu0 0.0
        %7300 = vmatprep.subr.mxu0 0.0
        %7301 = vmatpush1.xpose.msra.mxu0 0.0
        %7302 = vmatprep.subr.mxu0 0.0
        %7303 = vmatpush1.xpose.msra.mxu0 0.0
        %7304 = vmatprep.subr.mxu0 0.0
        %7305 = vmatpush1.xpose.msra.mxu0 0.0
        %7306 = vmatprep.subr.mxu0 0.0
        %7307 = vmatpush1.xpose.msra.mxu0 0.0
        %7308 = vmatprep.subr.mxu0 0.0
        %7309 = vmatpush1.xpose.msra.mxu0 0.0
        %7310 = vmatprep.subr.mxu0 0.0
        %7311 = vmatpush1.xpose.msra.mxu0 0.0
        %7312 = vmatprep.subr.mxu0 0.0
        %7313 = vmatpush1.xpose.msra.mxu0 0.0
        %7314 = vmatprep.subr.mxu0 0.0
        %7315 = vmatpush1.xpose.msra.mxu0 0.0
        %7316 = vmatprep.subr.mxu0 0.0
        %7317 = vmatpush1.xpose.msra.mxu0 0.0
        %7318 = vmatprep.subr.mxu0 0.0
        %7319 = vmatpush1.xpose.msra.mxu0 0.0
        %7320 = vmatprep.subr.mxu0 0.0
        %7321 = vmatpush1.xpose.msra.mxu0 0.0
        %7322 = vmatprep.subr.mxu0 0.0
        %7323 = vmatpush1.xpose.msra.mxu0 0.0
        %7324 = vmatprep.subr.mxu0 0.0
        %7325 = vmatpush1.xpose.msra.mxu0 0.0
        %7326 = vmatprep.subr.mxu0 0.0
        %7327 = vmatpush1.xpose.msra.mxu0 0.0
        %7328 = vmatprep.subr.mxu0 0.0
        %7329 = vmatpush1.xpose.msra.mxu0 0.0
        %7330 = vmatprep.subr.mxu0 0.0
        %7331 = vmatpush1.xpose.msra.mxu0 0.0
        %7332 = vmatprep.subr.mxu0 0.0
        %7333 = vmatpush1.xpose.msra.mxu0 0.0
        %7334 = vmatprep.subr.mxu0 0.0
        %7335 = vmatpush1.xpose.msra.mxu0 0.0
        %7336 = vmatprep.subr.mxu0 0.0
        %7337 = vmatpush1.xpose.msra.mxu0 0.0
        %7338 = vmatprep.subr.mxu0 0.0
        %7339 = vmatpush1.xpose.msra.mxu0 0.0
        %7340 = vmatprep.subr.mxu0 0.0
        %7341 = vmatpush1.xpose.msra.mxu0 0.0
        %7342 = vmatprep.subr.mxu0 0.0
        %7343 = vmatpush1.xpose.msra.mxu0 0.0
        %7344 = vmatprep.mubr.f32.mxu0 0.0
        %v7345 = vand.u32 %v7094, 4294901760
        %v7346 = vsub.f32 %v7094, %v7345
        %7347 = vmatmul.mubr.f32.gmra.mrb[0].mxu0 %v7346
        %v7348 = vpop.f32.mrb[0].mxu0
        %v7349 = vadd.f32 %v7267, %v7348
        %v7350 = vpop.f32.mrb[0].mxu0
        %7351 = vmatprep.mubr.f32.mxu0 0.0
        %v7352 = vand.u32 %v7096, 4294901760
        %v7353 = vsub.f32 %v7096, %v7352
        %7354 = vmatmul.mubr.f32.gmra.mrb[0].mxu0 %v7353
        %v7355 = vpop.f32.mrb[0].mxu0
        %v7356 = vadd.f32 %v7273, %v7355
        %v7357 = vpop.f32.mrb[0].mxu0
        %7358 = vdwg.mxu0
        %7359 = vmatprep.subr.mxu0 0.0
        %v7360 = vand.u32 %v7098, 4294901760
        %7361 = vmatpush1.xpose.msra.mxu0 %v7360
        %7362 = vmatprep.subr.mxu0 0.0
        %v7363 = vand.u32 %v7100, 4294901760
        %7364 = vmatpush1.xpose.msra.mxu0 %v7363
        %7365 = vmatprep.subr.mxu0 0.0
        %7366 = vmatpush1.xpose.msra.mxu0 0.0
        %7367 = vmatprep.subr.mxu0 0.0
        %7368 = vmatpush1.xpose.msra.mxu0 0.0
        %7369 = vmatprep.subr.mxu0 0.0
        %7370 = vmatpush1.xpose.msra.mxu0 0.0
        %7371 = vmatprep.subr.mxu0 0.0
        %7372 = vmatpush1.xpose.msra.mxu0 0.0
        %7373 = vmatprep.subr.mxu0 0.0
        %7374 = vmatpush1.xpose.msra.mxu0 0.0
        %7375 = vmatprep.subr.mxu0 0.0
        %7376 = vmatpush1.xpose.msra.mxu0 0.0
        %7377 = vmatprep.subr.mxu0 0.0
        %7378 = vmatpush1.xpose.msra.mxu0 0.0
        %7379 = vmatprep.subr.mxu0 0.0
        %7380 = vmatpush1.xpose.msra.mxu0 0.0
        %7381 = vmatprep.subr.mxu0 0.0
        %7382 = vmatpush1.xpose.msra.mxu0 0.0
        %7383 = vmatprep.subr.mxu0 0.0
        %7384 = vmatpush1.xpose.msra.mxu0 0.0
        %7385 = vmatprep.subr.mxu0 0.0
        %7386 = vmatpush1.xpose.msra.mxu0 0.0
        %7387 = vmatprep.subr.mxu0 0.0
        %7388 = vmatpush1.xpose.msra.mxu0 0.0
        %7389 = vmatprep.subr.mxu0 0.0
        %7390 = vmatpush1.xpose.msra.mxu0 0.0
        %7391 = vmatprep.subr.mxu0 0.0
        %7392 = vmatpush1.xpose.msra.mxu0 0.0
        %7393 = vmatprep.subr.mxu0 0.0
        %7394 = vmatpush1.xpose.msra.mxu0 0.0
        %7395 = vmatprep.subr.mxu0 0.0
        %7396 = vmatpush1.xpose.msra.mxu0 0.0
        %7397 = vmatprep.subr.mxu0 0.0
        %7398 = vmatpush1.xpose.msra.mxu0 0.0
        %7399 = vmatprep.subr.mxu0 0.0
        %7400 = vmatpush1.xpose.msra.mxu0 0.0
        %7401 = vmatprep.subr.mxu0 0.0
        %7402 = vmatpush1.xpose.msra.mxu0 0.0
        %7403 = vmatprep.subr.mxu0 0.0
        %7404 = vmatpush1.xpose.msra.mxu0 0.0
        %7405 = vmatprep.subr.mxu0 0.0
        %7406 = vmatpush1.xpose.msra.mxu0 0.0
        %7407 = vmatprep.subr.mxu0 0.0
        %7408 = vmatpush1.xpose.msra.mxu0 0.0
        %7409 = vmatprep.subr.mxu0 0.0
        %7410 = vmatpush1.xpose.msra.mxu0 0.0
        %7411 = vmatprep.subr.mxu0 0.0
        %7412 = vmatpush1.xpose.msra.mxu0 0.0
        %7413 = vmatprep.subr.mxu0 0.0
        %7414 = vmatpush1.xpose.msra.mxu0 0.0
        %7415 = vmatprep.subr.mxu0 0.0
        %7416 = vmatpush1.xpose.msra.mxu0 0.0
        %7417 = vmatprep.subr.mxu0 0.0
        %7418 = vmatpush1.xpose.msra.mxu0 0.0
        %7419 = vmatprep.subr.mxu0 0.0
        %7420 = vmatpush1.xpose.msra.mxu0 0.0
        %7421 = vmatprep.subr.mxu0 0.0
        %7422 = vmatpush1.xpose.msra.mxu0 0.0
        %7423 = vmatprep.subr.mxu0 0.0
        %7424 = vmatpush1.xpose.msra.mxu0 0.0
        %7425 = vmatprep.mubr.f32.mxu0 0.0
        %v7426 = vand.u32 %v7094, 4294901760
        %v7427 = vsub.f32 %v7094, %v7426
        %v7428 = vand.u32 %v7427, 4294901760
        %7429 = vmatmul.mubr.f32.gmra.mrb[0].mxu0 %v7428
        %v7430 = vpop.f32.mrb[0].mxu0
        %v7431 = vadd.f32 %v7349, %v7430
        %v7432 = vpop.f32.mrb[0].mxu0
        %7433 = vmatprep.mubr.f32.mxu0 0.0
        %v7434 = vand.u32 %v7096, 4294901760
        %v7435 = vsub.f32 %v7096, %v7434
        %v7436 = vand.u32 %v7435, 4294901760
        %7437 = vmatmul.mubr.f32.gmra.mrb[0].mxu0 %v7436
        %v7438 = vpop.f32.mrb[0].mxu0
        %v7439 = vadd.f32 %v7356, %v7438
        %v7440 = vpop.f32.mrb[0].mxu0
        %7441 = vdwg.mxu0
        %7442 = vmatprep.subr.mxu0 0.0
        %v7443 = vand.u32 %v7098, 4294901760
        %v7444 = vsub.f32 %v7098, %v7443
        %v7445 = vand.u32 %v7444, 4294901760
        %7446 = vmatpush1.xpose.msra.mxu0 %v7445
        %7447 = vmatprep.subr.mxu0 0.0
        %v7448 = vand.u32 %v7100, 4294901760
        %v7449 = vsub.f32 %v7100, %v7448
        %v7450 = vand.u32 %v7449, 4294901760
        %7451 = vmatpush1.xpose.msra.mxu0 %v7450
        %7452 = vmatprep.subr.mxu0 0.0
        %7453 = vmatpush1.xpose.msra.mxu0 0.0
        %7454 = vmatprep.subr.mxu0 0.0
        %7455 = vmatpush1.xpose.msra.mxu0 0.0
        %7456 = vmatprep.subr.mxu0 0.0
        %7457 = vmatpush1.xpose.msra.mxu0 0.0
        %7458 = vmatprep.subr.mxu0 0.0
        %7459 = vmatpush1.xpose.msra.mxu0 0.0
        %7460 = vmatprep.subr.mxu0 0.0
        %7461 = vmatpush1.xpose.msra.mxu0 0.0
        %7462 = vmatprep.subr.mxu0 0.0
        %7463 = vmatpush1.xpose.msra.mxu0 0.0
        %7464 = vmatprep.subr.mxu0 0.0
        %7465 = vmatpush1.xpose.msra.mxu0 0.0
        %7466 = vmatprep.subr.mxu0 0.0
        %7467 = vmatpush1.xpose.msra.mxu0 0.0
        %7468 = vmatprep.subr.mxu0 0.0
        %7469 = vmatpush1.xpose.msra.mxu0 0.0
        %7470 = vmatprep.subr.mxu0 0.0
        %7471 = vmatpush1.xpose.msra.mxu0 0.0
        %7472 = vmatprep.subr.mxu0 0.0
        %7473 = vmatpush1.xpose.msra.mxu0 0.0
        %7474 = vmatprep.subr.mxu0 0.0
        %7475 = vmatpush1.xpose.msra.mxu0 0.0
        %7476 = vmatprep.subr.mxu0 0.0
        %7477 = vmatpush1.xpose.msra.mxu0 0.0
        %7478 = vmatprep.subr.mxu0 0.0
        %7479 = vmatpush1.xpose.msra.mxu0 0.0
        %7480 = vmatprep.subr.mxu0 0.0
        %7481 = vmatpush1.xpose.msra.mxu0 0.0
        %7482 = vmatprep.subr.mxu0 0.0
        %7483 = vmatpush1.xpose.msra.mxu0 0.0
        %7484 = vmatprep.subr.mxu0 0.0
        %7485 = vmatpush1.xpose.msra.mxu0 0.0
        %7486 = vmatprep.subr.mxu0 0.0
        %7487 = vmatpush1.xpose.msra.mxu0 0.0
        %7488 = vmatprep.subr.mxu0 0.0
        %7489 = vmatpush1.xpose.msra.mxu0 0.0
        %7490 = vmatprep.subr.mxu0 0.0
        %7491 = vmatpush1.xpose.msra.mxu0 0.0
        %7492 = vmatprep.subr.mxu0 0.0
        %7493 = vmatpush1.xpose.msra.mxu0 0.0
        %7494 = vmatprep.subr.mxu0 0.0
        %7495 = vmatpush1.xpose.msra.mxu0 0.0
        %7496 = vmatprep.subr.mxu0 0.0
        %7497 = vmatpush1.xpose.msra.mxu0 0.0
        %7498 = vmatprep.subr.mxu0 0.0
        %7499 = vmatpush1.xpose.msra.mxu0 0.0
        %7500 = vmatprep.subr.mxu0 0.0
        %7501 = vmatpush1.xpose.msra.mxu0 0.0
        %7502 = vmatprep.subr.mxu0 0.0
        %7503 = vmatpush1.xpose.msra.mxu0 0.0
        %7504 = vmatprep.subr.mxu0 0.0
        %7505 = vmatpush1.xpose.msra.mxu0 0.0
        %7506 = vmatprep.subr.mxu0 0.0
        %7507 = vmatpush1.xpose.msra.mxu0 0.0
        %7508 = vmatprep.subr.mxu0 0.0
        %7509 = vmatpush1.xpose.msra.mxu0 0.0
        %7510 = vmatprep.subr.mxu0 0.0
        %7511 = vmatpush1.xpose.msra.mxu0 0.0
        %7512 = vmatprep.mubr.f32.mxu0 0.0
        %v7513 = vand.u32 %v7094, 4294901760
        %7514 = vmatmul.mubr.f32.gmra.mrb[0].mxu0 %v7513
        %v7515 = vpop.f32.mrb[0].mxu0
        %v7516 = vadd.f32 %v7431, %v7515
        %v7517 = vpop.f32.mrb[0].mxu0
        %7518 = vmatprep.mubr.f32.mxu0 0.0
        %v7519 = vand.u32 %v7096, 4294901760
        %7520 = vmatmul.mubr.f32.gmra.mrb[0].mxu0 %v7519
        %v7521 = vpop.f32.mrb[0].mxu0
        %v7522 = vadd.f32 %v7439, %v7521
        %v7523 = vpop.f32.mrb[0].mxu0
        %7524 = vdwg.mxu0
        %7525 = vmatprep.subr.mxu0 0.0
        %v7526 = vand.u32 %v7098, 4294901760
        %7527 = vmatpush1.xpose.msra.mxu0 %v7526
        %7528 = vmatprep.subr.mxu0 0.0
        %v7529 = vand.u32 %v7100, 4294901760
        %7530 = vmatpush1.xpose.msra.mxu0 %v7529
        %7531 = vmatprep.subr.mxu0 0.0
        %7532 = vmatpush1.xpose.msra.mxu0 0.0
        %7533 = vmatprep.subr.mxu0 0.0
        %7534 = vmatpush1.xpose.msra.mxu0 0.0
        %7535 = vmatprep.subr.mxu0 0.0
        %7536 = vmatpush1.xpose.msra.mxu0 0.0
        %7537 = vmatprep.subr.mxu0 0.0
        %7538 = vmatpush1.xpose.msra.mxu0 0.0
        %7539 = vmatprep.subr.mxu0 0.0
        %7540 = vmatpush1.xpose.msra.mxu0 0.0
        %7541 = vmatprep.subr.mxu0 0.0
        %7542 = vmatpush1.xpose.msra.mxu0 0.0
        %7543 = vmatprep.subr.mxu0 0.0
        %7544 = vmatpush1.xpose.msra.mxu0 0.0
        %7545 = vmatprep.subr.mxu0 0.0
        %7546 = vmatpush1.xpose.msra.mxu0 0.0
        %7547 = vmatprep.subr.mxu0 0.0
        %7548 = vmatpush1.xpose.msra.mxu0 0.0
        %7549 = vmatprep.subr.mxu0 0.0
        %7550 = vmatpush1.xpose.msra.mxu0 0.0
        %7551 = vmatprep.subr.mxu0 0.0
        %7552 = vmatpush1.xpose.msra.mxu0 0.0
        %7553 = vmatprep.subr.mxu0 0.0
        %7554 = vmatpush1.xpose.msra.mxu0 0.0
        %7555 = vmatprep.subr.mxu0 0.0
        %7556 = vmatpush1.xpose.msra.mxu0 0.0
        %7557 = vmatprep.subr.mxu0 0.0
        %7558 = vmatpush1.xpose.msra.mxu0 0.0
        %7559 = vmatprep.subr.mxu0 0.0
        %7560 = vmatpush1.xpose.msra.mxu0 0.0
        %7561 = vmatprep.subr.mxu0 0.0
        %7562 = vmatpush1.xpose.msra.mxu0 0.0
        %7563 = vmatprep.subr.mxu0 0.0
        %7564 = vmatpush1.xpose.msra.mxu0 0.0
        %7565 = vmatprep.subr.mxu0 0.0
        %7566 = vmatpush1.xpose.msra.mxu0 0.0
        %7567 = vmatprep.subr.mxu0 0.0
        %7568 = vmatpush1.xpose.msra.mxu0 0.0
        %7569 = vmatprep.subr.mxu0 0.0
        %7570 = vmatpush1.xpose.msra.mxu0 0.0
        %7571 = vmatprep.subr.mxu0 0.0
        %7572 = vmatpush1.xpose.msra.mxu0 0.0
        %7573 = vmatprep.subr.mxu0 0.0
        %7574 = vmatpush1.xpose.msra.mxu0 0.0
        %7575 = vmatprep.subr.mxu0 0.0
        %7576 = vmatpush1.xpose.msra.mxu0 0.0
        %7577 = vmatprep.subr.mxu0 0.0
        %7578 = vmatpush1.xpose.msra.mxu0 0.0
        %7579 = vmatprep.subr.mxu0 0.0
        %7580 = vmatpush1.xpose.msra.mxu0 0.0
        %7581 = vmatprep.subr.mxu0 0.0
        %7582 = vmatpush1.xpose.msra.mxu0 0.0
        %7583 = vmatprep.subr.mxu0 0.0
        %7584 = vmatpush1.xpose.msra.mxu0 0.0
        %7585 = vmatprep.subr.mxu0 0.0
        %7586 = vmatpush1.xpose.msra.mxu0 0.0
        %7587 = vmatprep.subr.mxu0 0.0
        %7588 = vmatpush1.xpose.msra.mxu0 0.0
        %7589 = vmatprep.subr.mxu0 0.0
        %7590 = vmatpush1.xpose.msra.mxu0 0.0
        %7591 = vmatprep.mubr.f32.mxu0 0.0
        %v7592 = vand.u32 %v7094, 4294901760
        %7593 = vmatmul.mubr.f32.gmra.mrb[0].mxu0 %v7592
        %v7594 = vpop.f32.mrb[0].mxu0
        %v7595 = vadd.f32 %v7516, %v7594
        %v7596 = vpop.f32.mrb[0].mxu0
        %7597 = vmatprep.mubr.f32.mxu0 0.0
        %v7598 = vand.u32 %v7096, 4294901760
        %7599 = vmatmul.mubr.f32.gmra.mrb[0].mxu0 %v7598
        %v7600 = vpop.f32.mrb[0].mxu0
        %v7601 = vadd.f32 %v7522, %v7600
        %v7602 = vpop.f32.mrb[0].mxu0
        %7603 = vdwg.mxu0
        %v7604 = vsel %vm1233, %v7077, -inf
        %7605 = vmax.xlane.f32.xlu0 %v7604
        %v7606 = vpop.xlane.xlu0 %7605
        %v7607 = vsel %vm1233, %v7083, -inf
        %7608 = vmax.xlane.f32.xlu0 %v7607
        %v7609 = vpop.xlane.xlu0 %7608
        %v7610 = vsel %vm1233, %v7595, -inf
        %7611 = vmax.xlane.f32.xlu0 %v7610
        %v7612 = vpop.xlane.xlu0 %7611
        %v7613 = vsel %vm1233, %v7601, -inf
        %7614 = vmax.xlane.f32.xlu0 %v7613
        %v7615 = vpop.xlane.xlu0 %7614
        %v7616 = vsub.f32 %v7077, %v7606
        %v7617 = vsub.f32 %v7083, %v7609
        %v7618 = vsub.f32 %v7595, %v7612
        %v7619 = vsub.f32 %v7601, %v7615
        %v7620 = vmul.f32 %v7616, 1.442695
        %v7621 = vpow.pop %v7620
        %v7622 = vmul.f32 %v7617, 1.442695
        %v7623 = vpow.pop %v7622
        %v7624 = vmul.f32 %v7618, 1.442695
        %v7625 = vpow.pop %v7624
        %v7626 = vmul.f32 %v7619, 1.442695
        %v7627 = vpow.pop %v7626
        %v7628 = vsel %vm1233, %v7621, 0.0
        %7629 = vadd.xlane.f32.xlu0 %v7628
        %v7630 = vpop.xlane.xlu0 %7629
        %v7631 = vsel %vm1233, %v7623, 0.0
        %7632 = vadd.xlane.f32.xlu0 %v7631
        %v7633 = vpop.xlane.xlu0 %7632
        %v7634 = vsel %vm1233, %v7625, 0.0
        %7635 = vadd.xlane.f32.xlu0 %v7634
        %v7636 = vpop.xlane.xlu0 %7635
        %v7637 = vsel %vm1233, %v7627, 0.0
        %7638 = vadd.xlane.f32.xlu0 %v7637
        %v7639 = vpop.xlane.xlu0 %7638
        %v7640 = vrcp.pop %v7630
        %v7641 = vmul.f32 %v7621, %v7640
        %v7642 = vrcp.pop %v7633
        %v7643 = vmul.f32 %v7623, %v7642
        %v7644 = vrcp.pop %v7636
        %v7645 = vmul.f32 %v7625, %v7644
        %v7646 = vrcp.pop %v7639
        %v7647 = vmul.f32 %v7627, %v7646
        %7648 = vrot.lane.b32.xlu0 %v180, 40
        %v7649 = vpop.permute.xlu0 %7648
        %7650 = vrot.lane.b32.xlu0 %v181, 40
        %v7651 = vpop.permute.xlu0 %7650
        %v7655 = vsel %vm1233, %v7641, 0
        %v7658 = vsel %vm1233, %v7643, 0
        %7660 = vmatprep.subr.mxu0 0.0
        %v7661 = vand.u32 %v7649, 4294901760
        %7662 = vmatpush1.msra.mxu0 %v7661
        %7663 = vmatprep.subr.mxu0 0.0
        %v7664 = vand.u32 %v7651, 4294901760
        %7665 = vmatpush1.msra.mxu0 %v7664
        %7666 = vmatprep.subr.mxu0 0.0
        %7667 = vmatpush1.msra.mxu0 0.0
        %7668 = vmatprep.subr.mxu0 0.0
        %7669 = vmatpush1.msra.mxu0 0.0
        %7670 = vmatprep.subr.mxu0 0.0
        %7671 = vmatpush1.msra.mxu0 0.0
        %7672 = vmatprep.subr.mxu0 0.0
        %7673 = vmatpush1.msra.mxu0 0.0
        %7674 = vmatprep.subr.mxu0 0.0
        %7675 = vmatpush1.msra.mxu0 0.0
        %7676 = vmatprep.subr.mxu0 0.0
        %7677 = vmatpush1.msra.mxu0 0.0
        %7678 = vmatprep.subr.mxu0 0.0
        %7679 = vmatpush1.msra.mxu0 0.0
        %7680 = vmatprep.subr.mxu0 0.0
        %7681 = vmatpush1.msra.mxu0 0.0
        %7682 = vmatprep.subr.mxu0 0.0
        %7683 = vmatpush1.msra.mxu0 0.0
        %7684 = vmatprep.subr.mxu0 0.0
        %7685 = vmatpush1.msra.mxu0 0.0
        %7686 = vmatprep.subr.mxu0 0.0
        %7687 = vmatpush1.msra.mxu0 0.0
        %7688 = vmatprep.subr.mxu0 0.0
        %7689 = vmatpush1.msra.mxu0 0.0
        %7690 = vmatprep.subr.mxu0 0.0
        %7691 = vmatpush1.msra.mxu0 0.0
        %7692 = vmatprep.subr.mxu0 0.0
        %7693 = vmatpush1.msra.mxu0 0.0
        %7694 = vmatprep.subr.mxu0 0.0
        %7695 = vmatpush1.msra.mxu0 0.0
        %7696 = vmatprep.subr.mxu0 0.0
        %7697 = vmatpush1.msra.mxu0 0.0
        %7698 = vmatprep.subr.mxu0 0.0
        %7699 = vmatpush1.msra.mxu0 0.0
        %7700 = vmatprep.subr.mxu0 0.0
        %7701 = vmatpush1.msra.mxu0 0.0
        %7702 = vmatprep.subr.mxu0 0.0
        %7703 = vmatpush1.msra.mxu0 0.0
        %7704 = vmatprep.subr.mxu0 0.0
        %7705 = vmatpush1.msra.mxu0 0.0
        %7706 = vmatprep.subr.mxu0 0.0
        %7707 = vmatpush1.msra.mxu0 0.0
        %7708 = vmatprep.subr.mxu0 0.0
        %7709 = vmatpush1.msra.mxu0 0.0
        %7710 = vmatprep.subr.mxu0 0.0
        %7711 = vmatpush1.msra.mxu0 0.0
        %7712 = vmatprep.subr.mxu0 0.0
        %7713 = vmatpush1.msra.mxu0 0.0
        %7714 = vmatprep.subr.mxu0 0.0
        %7715 = vmatpush1.msra.mxu0 0.0
        %7716 = vmatprep.subr.mxu0 0.0
        %7717 = vmatpush1.msra.mxu0 0.0
        %7718 = vmatprep.subr.mxu0 0.0
        %7719 = vmatpush1.msra.mxu0 0.0
        %7720 = vmatprep.subr.mxu0 0.0
        %7721 = vmatpush1.msra.mxu0 0.0
        %7722 = vmatprep.subr.mxu0 0.0
        %7723 = vmatpush1.msra.mxu0 0.0
        %7724 = vmatprep.subr.mxu0 0.0
        %7725 = vmatpush1.msra.mxu0 0.0
        %7726 = vmatprep.mubr.f32.mxu0 0.0
        %v7727 = vand.u32 %v7655, 4294901760
        %v7728 = vsub.f32 %v7655, %v7727
        %v7729 = vand.u32 %v7728, 4294901760
        %v7730 = vsub.f32 %v7728, %v7729
        %v7731 = vand.u32 %v7730, 4294901760
        %7732 = vmatmul.mubr.f32.gmra.mrb[0].mxu0 %v7731
        %v7733 = vpop.f32.mrb[0].mxu0
        %v7734 = vadd.f32 0.0, %v7733
        %v7735 = vpop.f32.mrb[0].mxu0
        %7736 = vmatprep.mubr.f32.mxu0 0.0
        %v7737 = vand.u32 %v7658, 4294901760
        %v7738 = vsub.f32 %v7658, %v7737
        %v7739 = vand.u32 %v7738, 4294901760
        %v7740 = vsub.f32 %v7738, %v7739
        %v7741 = vand.u32 %v7740, 4294901760
        %7742 = vmatmul.mubr.f32.gmra.mrb[0].mxu0 %v7741
        %v7743 = vpop.f32.mrb[0].mxu0
        %v7744 = vadd.f32 0.0, %v7743
        %v7745 = vpop.f32.mrb[0].mxu0
        %7746 = vdwg.mxu0
        %7747 = vmatprep.subr.mxu0 0.0
        %v7748 = vand.u32 %v7649, 4294901760
        %v7749 = vsub.f32 %v7649, %v7748
        %v7750 = vand.u32 %v7749, 4294901760
        %v7751 = vsub.f32 %v7749, %v7750
        %v7752 = vand.u32 %v7751, 4294901760
        %7753 = vmatpush1.msra.mxu0 %v7752
        %7754 = vmatprep.subr.mxu0 0.0
        %v7755 = vand.u32 %v7651, 4294901760
        %v7756 = vsub.f32 %v7651, %v7755
        %v7757 = vand.u32 %v7756, 4294901760
        %v7758 = vsub.f32 %v7756, %v7757
        %v7759 = vand.u32 %v7758, 4294901760
        %7760 = vmatpush1.msra.mxu0 %v7759
        %7761 = vmatprep.subr.mxu0 0.0
        %7762 = vmatpush1.msra.mxu0 0.0
        %7763 = vmatprep.subr.mxu0 0.0
        %7764 = vmatpush1.msra.mxu0 0.0
        %7765 = vmatprep.subr.mxu0 0.0
        %7766 = vmatpush1.msra.mxu0 0.0
        %7767 = vmatprep.subr.mxu0 0.0
        %7768 = vmatpush1.msra.mxu0 0.0
        %7769 = vmatprep.subr.mxu0 0.0
        %7770 = vmatpush1.msra.mxu0 0.0
        %7771 = vmatprep.subr.mxu0 0.0
        %7772 = vmatpush1.msra.mxu0 0.0
        %7773 = vmatprep.subr.mxu0 0.0
        %7774 = vmatpush1.msra.mxu0 0.0
        %7775 = vmatprep.subr.mxu0 0.0
        %7776 = vmatpush1.msra.mxu0 0.0
        %7777 = vmatprep.subr.mxu0 0.0
        %7778 = vmatpush1.msra.mxu0 0.0
        %7779 = vmatprep.subr.mxu0 0.0
        %7780 = vmatpush1.msra.mxu0 0.0
        %7781 = vmatprep.subr.mxu0 0.0
        %7782 = vmatpush1.msra.mxu0 0.0
        %7783 = vmatprep.subr.mxu0 0.0
        %7784 = vmatpush1.msra.mxu0 0.0
        %7785 = vmatprep.subr.mxu0 0.0
        %7786 = vmatpush1.msra.mxu0 0.0
        %7787 = vmatprep.subr.mxu0 0.0
        %7788 = vmatpush1.msra.mxu0 0.0
        %7789 = vmatprep.subr.mxu0 0.0
        %7790 = vmatpush1.msra.mxu0 0.0
        %7791 = vmatprep.subr.mxu0 0.0
        %7792 = vmatpush1.msra.mxu0 0.0
        %7793 = vmatprep.subr.mxu0 0.0
        %7794 = vmatpush1.msra.mxu0 0.0
        %7795 = vmatprep.subr.mxu0 0.0
        %7796 = vmatpush1.msra.mxu0 0.0
        %7797 = vmatprep.subr.mxu0 0.0
        %7798 = vmatpush1.msra.mxu0 0.0
        %7799 = vmatprep.subr.mxu0 0.0
        %7800 = vmatpush1.msra.mxu0 0.0
        %7801 = vmatprep.subr.mxu0 0.0
        %7802 = vmatpush1.msra.mxu0 0.0
        %7803 = vmatprep.subr.mxu0 0.0
        %7804 = vmatpush1.msra.mxu0 0.0
        %7805 = vmatprep.subr.mxu0 0.0
        %7806 = vmatpush1.msra.mxu0 0.0
        %7807 = vmatprep.subr.mxu0 0.0
        %7808 = vmatpush1.msra.mxu0 0.0
        %7809 = vmatprep.subr.mxu0 0.0
        %7810 = vmatpush1.msra.mxu0 0.0
        %7811 = vmatprep.subr.mxu0 0.0
        %7812 = vmatpush1.msra.mxu0 0.0
        %7813 = vmatprep.subr.mxu0 0.0
        %7814 = vmatpush1.msra.mxu0 0.0
        %7815 = vmatprep.subr.mxu0 0.0
        %7816 = vmatpush1.msra.mxu0 0.0
        %7817 = vmatprep.subr.mxu0 0.0
        %7818 = vmatpush1.msra.mxu0 0.0
        %7819 = vmatprep.subr.mxu0 0.0
        %7820 = vmatpush1.msra.mxu0 0.0
        %7821 = vmatprep.mubr.f32.mxu0 0.0
        %v7822 = vand.u32 %v7655, 4294901760
        %7823 = vmatmul.mubr.f32.gmra.mrb[0].mxu0 %v7822
        %v7824 = vpop.f32.mrb[0].mxu0
        %v7825 = vadd.f32 %v7734, %v7824
        %v7826 = vpop.f32.mrb[0].mxu0
        %7827 = vmatprep.mubr.f32.mxu0 0.0
        %v7828 = vand.u32 %v7658, 4294901760
        %7829 = vmatmul.mubr.f32.gmra.mrb[0].mxu0 %v7828
        %v7830 = vpop.f32.mrb[0].mxu0
        %v7831 = vadd.f32 %v7744, %v7830
        %v7832 = vpop.f32.mrb[0].mxu0
        %7833 = vdwg.mxu0
        %7834 = vmatprep.subr.mxu0 0.0
        %v7835 = vand.u32 %v7649, 4294901760
        %v7836 = vsub.f32 %v7649, %v7835
        %7837 = vmatpush1.msra.mxu0 %v7836
        %7838 = vmatprep.subr.mxu0 0.0
        %v7839 = vand.u32 %v7651, 4294901760
        %v7840 = vsub.f32 %v7651, %v7839
        %7841 = vmatpush1.msra.mxu0 %v7840
        %7842 = vmatprep.subr.mxu0 0.0
        %7843 = vmatpush1.msra.mxu0 0.0
        %7844 = vmatprep.subr.mxu0 0.0
        %7845 = vmatpush1.msra.mxu0 0.0
        %7846 = vmatprep.subr.mxu0 0.0
        %7847 = vmatpush1.msra.mxu0 0.0
        %7848 = vmatprep.subr.mxu0 0.0
        %7849 = vmatpush1.msra.mxu0 0.0
        %7850 = vmatprep.subr.mxu0 0.0
        %7851 = vmatpush1.msra.mxu0 0.0
        %7852 = vmatprep.subr.mxu0 0.0
        %7853 = vmatpush1.msra.mxu0 0.0
        %7854 = vmatprep.subr.mxu0 0.0
        %7855 = vmatpush1.msra.mxu0 0.0
        %7856 = vmatprep.subr.mxu0 0.0
        %7857 = vmatpush1.msra.mxu0 0.0
        %7858 = vmatprep.subr.mxu0 0.0
        %7859 = vmatpush1.msra.mxu0 0.0
        %7860 = vmatprep.subr.mxu0 0.0
        %7861 = vmatpush1.msra.mxu0 0.0
        %7862 = vmatprep.subr.mxu0 0.0
        %7863 = vmatpush1.msra.mxu0 0.0
        %7864 = vmatprep.subr.mxu0 0.0
        %7865 = vmatpush1.msra.mxu0 0.0
        %7866 = vmatprep.subr.mxu0 0.0
        %7867 = vmatpush1.msra.mxu0 0.0
        %7868 = vmatprep.subr.mxu0 0.0
        %7869 = vmatpush1.msra.mxu0 0.0
        %7870 = vmatprep.subr.mxu0 0.0
        %7871 = vmatpush1.msra.mxu0 0.0
        %7872 = vmatprep.subr.mxu0 0.0
        %7873 = vmatpush1.msra.mxu0 0.0
        %7874 = vmatprep.subr.mxu0 0.0
        %7875 = vmatpush1.msra.mxu0 0.0
        %7876 = vmatprep.subr.mxu0 0.0
        %7877 = vmatpush1.msra.mxu0 0.0
        %7878 = vmatprep.subr.mxu0 0.0
        %7879 = vmatpush1.msra.mxu0 0.0
        %7880 = vmatprep.subr.mxu0 0.0
        %7881 = vmatpush1.msra.mxu0 0.0
        %7882 = vmatprep.subr.mxu0 0.0
        %7883 = vmatpush1.msra.mxu0 0.0
        %7884 = vmatprep.subr.mxu0 0.0
        %7885 = vmatpush1.msra.mxu0 0.0
        %7886 = vmatprep.subr.mxu0 0.0
        %7887 = vmatpush1.msra.mxu0 0.0
        %7888 = vmatprep.subr.mxu0 0.0
        %7889 = vmatpush1.msra.mxu0 0.0
        %7890 = vmatprep.subr.mxu0 0.0
        %7891 = vmatpush1.msra.mxu0 0.0
        %7892 = vmatprep.subr.mxu0 0.0
        %7893 = vmatpush1.msra.mxu0 0.0
        %7894 = vmatprep.subr.mxu0 0.0
        %7895 = vmatpush1.msra.mxu0 0.0
        %7896 = vmatprep.subr.mxu0 0.0
        %7897 = vmatpush1.msra.mxu0 0.0
        %7898 = vmatprep.subr.mxu0 0.0
        %7899 = vmatpush1.msra.mxu0 0.0
        %7900 = vmatprep.subr.mxu0 0.0
        %7901 = vmatpush1.msra.mxu0 0.0
        %7902 = vmatprep.mubr.f32.mxu0 0.0
        %v7903 = vand.u32 %v7655, 4294901760
        %v7904 = vsub.f32 %v7655, %v7903
        %7905 = vmatmul.mubr.f32.gmra.mrb[0].mxu0 %v7904
        %v7906 = vpop.f32.mrb[0].mxu0
        %v7907 = vadd.f32 %v7825, %v7906
        %v7908 = vpop.f32.mrb[0].mxu0
        %7909 = vmatprep.mubr.f32.mxu0 0.0
        %v7910 = vand.u32 %v7658, 4294901760
        %v7911 = vsub.f32 %v7658, %v7910
        %7912 = vmatmul.mubr.f32.gmra.mrb[0].mxu0 %v7911
        %v7913 = vpop.f32.mrb[0].mxu0
        %v7914 = vadd.f32 %v7831, %v7913
        %v7915 = vpop.f32.mrb[0].mxu0
        %7916 = vdwg.mxu0
        %7917 = vmatprep.subr.mxu0 0.0
        %v7918 = vand.u32 %v7649, 4294901760
        %7919 = vmatpush1.msra.mxu0 %v7918
        %7920 = vmatprep.subr.mxu0 0.0
        %v7921 = vand.u32 %v7651, 4294901760
        %7922 = vmatpush1.msra.mxu0 %v7921
        %7923 = vmatprep.subr.mxu0 0.0
        %7924 = vmatpush1.msra.mxu0 0.0
        %7925 = vmatprep.subr.mxu0 0.0
        %7926 = vmatpush1.msra.mxu0 0.0
        %7927 = vmatprep.subr.mxu0 0.0
        %7928 = vmatpush1.msra.mxu0 0.0
        %7929 = vmatprep.subr.mxu0 0.0
        %7930 = vmatpush1.msra.mxu0 0.0
        %7931 = vmatprep.subr.mxu0 0.0
        %7932 = vmatpush1.msra.mxu0 0.0
        %7933 = vmatprep.subr.mxu0 0.0
        %7934 = vmatpush1.msra.mxu0 0.0
        %7935 = vmatprep.subr.mxu0 0.0
        %7936 = vmatpush1.msra.mxu0 0.0
        %7937 = vmatprep.subr.mxu0 0.0
        %7938 = vmatpush1.msra.mxu0 0.0
        %7939 = vmatprep.subr.mxu0 0.0
        %7940 = vmatpush1.msra.mxu0 0.0
        %7941 = vmatprep.subr.mxu0 0.0
        %7942 = vmatpush1.msra.mxu0 0.0
        %7943 = vmatprep.subr.mxu0 0.0
        %7944 = vmatpush1.msra.mxu0 0.0
        %7945 = vmatprep.subr.mxu0 0.0
        %7946 = vmatpush1.msra.mxu0 0.0
        %7947 = vmatprep.subr.mxu0 0.0
        %7948 = vmatpush1.msra.mxu0 0.0
        %7949 = vmatprep.subr.mxu0 0.0
        %7950 = vmatpush1.msra.mxu0 0.0
        %7951 = vmatprep.subr.mxu0 0.0
        %7952 = vmatpush1.msra.mxu0 0.0
        %7953 = vmatprep.subr.mxu0 0.0
        %7954 = vmatpush1.msra.mxu0 0.0
        %7955 = vmatprep.subr.mxu0 0.0
        %7956 = vmatpush1.msra.mxu0 0.0
        %7957 = vmatprep.subr.mxu0 0.0
        %7958 = vmatpush1.msra.mxu0 0.0
        %7959 = vmatprep.subr.mxu0 0.0
        %7960 = vmatpush1.msra.mxu0 0.0
        %7961 = vmatprep.subr.mxu0 0.0
        %7962 = vmatpush1.msra.mxu0 0.0
        %7963 = vmatprep.subr.mxu0 0.0
        %7964 = vmatpush1.msra.mxu0 0.0
        %7965 = vmatprep.subr.mxu0 0.0
        %7966 = vmatpush1.msra.mxu0 0.0
        %7967 = vmatprep.subr.mxu0 0.0
        %7968 = vmatpush1.msra.mxu0 0.0
        %7969 = vmatprep.subr.mxu0 0.0
        %7970 = vmatpush1.msra.mxu0 0.0
        %7971 = vmatprep.subr.mxu0 0.0
        %7972 = vmatpush1.msra.mxu0 0.0
        %7973 = vmatprep.subr.mxu0 0.0
        %7974 = vmatpush1.msra.mxu0 0.0
        %7975 = vmatprep.subr.mxu0 0.0
        %7976 = vmatpush1.msra.mxu0 0.0
        %7977 = vmatprep.subr.mxu0 0.0
        %7978 = vmatpush1.msra.mxu0 0.0
        %7979 = vmatprep.subr.mxu0 0.0
        %7980 = vmatpush1.msra.mxu0 0.0
        %7981 = vmatprep.subr.mxu0 0.0
        %7982 = vmatpush1.msra.mxu0 0.0
        %7983 = vmatprep.mubr.f32.mxu0 0.0
        %v7984 = vand.u32 %v7655, 4294901760
        %v7985 = vsub.f32 %v7655, %v7984
        %v7986 = vand.u32 %v7985, 4294901760
        %7987 = vmatmul.mubr.f32.gmra.mrb[0].mxu0 %v7986
        %v7988 = vpop.f32.mrb[0].mxu0
        %v7989 = vadd.f32 %v7907, %v7988
        %v7990 = vpop.f32.mrb[0].mxu0
        %7991 = vmatprep.mubr.f32.mxu0 0.0
        %v7992 = vand.u32 %v7658, 4294901760
        %v7993 = vsub.f32 %v7658, %v7992
        %v7994 = vand.u32 %v7993, 4294901760
        %7995 = vmatmul.mubr.f32.gmra.mrb[0].mxu0 %v7994
        %v7996 = vpop.f32.mrb[0].mxu0
        %v7997 = vadd.f32 %v7914, %v7996
        %v7998 = vpop.f32.mrb[0].mxu0
        %7999 = vdwg.mxu0
        %8000 = vmatprep.subr.mxu0 0.0
        %v8001 = vand.u32 %v7649, 4294901760
        %v8002 = vsub.f32 %v7649, %v8001
        %v8003 = vand.u32 %v8002, 4294901760
        %8004 = vmatpush1.msra.mxu0 %v8003
        %8005 = vmatprep.subr.mxu0 0.0
        %v8006 = vand.u32 %v7651, 4294901760
        %v8007 = vsub.f32 %v7651, %v8006
        %v8008 = vand.u32 %v8007, 4294901760
        %8009 = vmatpush1.msra.mxu0 %v8008
        %8010 = vmatprep.subr.mxu0 0.0
        %8011 = vmatpush1.msra.mxu0 0.0
        %8012 = vmatprep.subr.mxu0 0.0
        %8013 = vmatpush1.msra.mxu0 0.0
        %8014 = vmatprep.subr.mxu0 0.0
        %8015 = vmatpush1.msra.mxu0 0.0
        %8016 = vmatprep.subr.mxu0 0.0
        %8017 = vmatpush1.msra.mxu0 0.0
        %8018 = vmatprep.subr.mxu0 0.0
        %8019 = vmatpush1.msra.mxu0 0.0
        %8020 = vmatprep.subr.mxu0 0.0
        %8021 = vmatpush1.msra.mxu0 0.0
        %8022 = vmatprep.subr.mxu0 0.0
        %8023 = vmatpush1.msra.mxu0 0.0
        %8024 = vmatprep.subr.mxu0 0.0
        %8025 = vmatpush1.msra.mxu0 0.0
        %8026 = vmatprep.subr.mxu0 0.0
        %8027 = vmatpush1.msra.mxu0 0.0
        %8028 = vmatprep.subr.mxu0 0.0
        %8029 = vmatpush1.msra.mxu0 0.0
        %8030 = vmatprep.subr.mxu0 0.0
        %8031 = vmatpush1.msra.mxu0 0.0
        %8032 = vmatprep.subr.mxu0 0.0
        %8033 = vmatpush1.msra.mxu0 0.0
        %8034 = vmatprep.subr.mxu0 0.0
        %8035 = vmatpush1.msra.mxu0 0.0
        %8036 = vmatprep.subr.mxu0 0.0
        %8037 = vmatpush1.msra.mxu0 0.0
        %8038 = vmatprep.subr.mxu0 0.0
        %8039 = vmatpush1.msra.mxu0 0.0
        %8040 = vmatprep.subr.mxu0 0.0
        %8041 = vmatpush1.msra.mxu0 0.0
        %8042 = vmatprep.subr.mxu0 0.0
        %8043 = vmatpush1.msra.mxu0 0.0
        %8044 = vmatprep.subr.mxu0 0.0
        %8045 = vmatpush1.msra.mxu0 0.0
        %8046 = vmatprep.subr.mxu0 0.0
        %8047 = vmatpush1.msra.mxu0 0.0
        %8048 = vmatprep.subr.mxu0 0.0
        %8049 = vmatpush1.msra.mxu0 0.0
        %8050 = vmatprep.subr.mxu0 0.0
        %8051 = vmatpush1.msra.mxu0 0.0
        %8052 = vmatprep.subr.mxu0 0.0
        %8053 = vmatpush1.msra.mxu0 0.0
        %8054 = vmatprep.subr.mxu0 0.0
        %8055 = vmatpush1.msra.mxu0 0.0
        %8056 = vmatprep.subr.mxu0 0.0
        %8057 = vmatpush1.msra.mxu0 0.0
        %8058 = vmatprep.subr.mxu0 0.0
        %8059 = vmatpush1.msra.mxu0 0.0
        %8060 = vmatprep.subr.mxu0 0.0
        %8061 = vmatpush1.msra.mxu0 0.0
        %8062 = vmatprep.subr.mxu0 0.0
        %8063 = vmatpush1.msra.mxu0 0.0
        %8064 = vmatprep.subr.mxu0 0.0
        %8065 = vmatpush1.msra.mxu0 0.0
        %8066 = vmatprep.subr.mxu0 0.0
        %8067 = vmatpush1.msra.mxu0 0.0
        %8068 = vmatprep.subr.mxu0 0.0
        %8069 = vmatpush1.msra.mxu0 0.0
        %8070 = vmatprep.mubr.f32.mxu0 0.0
        %v8071 = vand.u32 %v7655, 4294901760
        %8072 = vmatmul.mubr.f32.gmra.mrb[0].mxu0 %v8071
        %v8073 = vpop.f32.mrb[0].mxu0
        %v8074 = vadd.f32 %v7989, %v8073
        %v8075 = vpop.f32.mrb[0].mxu0
        %8076 = vmatprep.mubr.f32.mxu0 0.0
        %v8077 = vand.u32 %v7658, 4294901760
        %8078 = vmatmul.mubr.f32.gmra.mrb[0].mxu0 %v8077
        %v8079 = vpop.f32.mrb[0].mxu0
        %v8080 = vadd.f32 %v7997, %v8079
        %v8081 = vpop.f32.mrb[0].mxu0
        %8082 = vdwg.mxu0
        %8083 = vmatprep.subr.mxu0 0.0
        %v8084 = vand.u32 %v7649, 4294901760
        %8085 = vmatpush1.msra.mxu0 %v8084
        %8086 = vmatprep.subr.mxu0 0.0
        %v8087 = vand.u32 %v7651, 4294901760
        %8088 = vmatpush1.msra.mxu0 %v8087
        %8089 = vmatprep.subr.mxu0 0.0
        %8090 = vmatpush1.msra.mxu0 0.0
        %8091 = vmatprep.subr.mxu0 0.0
        %8092 = vmatpush1.msra.mxu0 0.0
        %8093 = vmatprep.subr.mxu0 0.0
        %8094 = vmatpush1.msra.mxu0 0.0
        %8095 = vmatprep.subr.mxu0 0.0
        %8096 = vmatpush1.msra.mxu0 0.0
        %8097 = vmatprep.subr.mxu0 0.0
        %8098 = vmatpush1.msra.mxu0 0.0
        %8099 = vmatprep.subr.mxu0 0.0
        %8100 = vmatpush1.msra.mxu0 0.0
        %8101 = vmatprep.subr.mxu0 0.0
        %8102 = vmatpush1.msra.mxu0 0.0
        %8103 = vmatprep.subr.mxu0 0.0
        %8104 = vmatpush1.msra.mxu0 0.0
        %8105 = vmatprep.subr.mxu0 0.0
        %8106 = vmatpush1.msra.mxu0 0.0
        %8107 = vmatprep.subr.mxu0 0.0
        %8108 = vmatpush1.msra.mxu0 0.0
        %8109 = vmatprep.subr.mxu0 0.0
        %8110 = vmatpush1.msra.mxu0 0.0
        %8111 = vmatprep.subr.mxu0 0.0
        %8112 = vmatpush1.msra.mxu0 0.0
        %8113 = vmatprep.subr.mxu0 0.0
        %8114 = vmatpush1.msra.mxu0 0.0
        %8115 = vmatprep.subr.mxu0 0.0
        %8116 = vmatpush1.msra.mxu0 0.0
        %8117 = vmatprep.subr.mxu0 0.0
        %8118 = vmatpush1.msra.mxu0 0.0
        %8119 = vmatprep.subr.mxu0 0.0
        %8120 = vmatpush1.msra.mxu0 0.0
        %8121 = vmatprep.subr.mxu0 0.0
        %8122 = vmatpush1.msra.mxu0 0.0
        %8123 = vmatprep.subr.mxu0 0.0
        %8124 = vmatpush1.msra.mxu0 0.0
        %8125 = vmatprep.subr.mxu0 0.0
        %8126 = vmatpush1.msra.mxu0 0.0
        %8127 = vmatprep.subr.mxu0 0.0
        %8128 = vmatpush1.msra.mxu0 0.0
        %8129 = vmatprep.subr.mxu0 0.0
        %8130 = vmatpush1.msra.mxu0 0.0
        %8131 = vmatprep.subr.mxu0 0.0
        %8132 = vmatpush1.msra.mxu0 0.0
        %8133 = vmatprep.subr.mxu0 0.0
        %8134 = vmatpush1.msra.mxu0 0.0
        %8135 = vmatprep.subr.mxu0 0.0
        %8136 = vmatpush1.msra.mxu0 0.0
        %8137 = vmatprep.subr.mxu0 0.0
        %8138 = vmatpush1.msra.mxu0 0.0
        %8139 = vmatprep.subr.mxu0 0.0
        %8140 = vmatpush1.msra.mxu0 0.0
        %8141 = vmatprep.subr.mxu0 0.0
        %8142 = vmatpush1.msra.mxu0 0.0
        %8143 = vmatprep.subr.mxu0 0.0
        %8144 = vmatpush1.msra.mxu0 0.0
        %8145 = vmatprep.subr.mxu0 0.0
        %8146 = vmatpush1.msra.mxu0 0.0
        %8147 = vmatprep.subr.mxu0 0.0
        %8148 = vmatpush1.msra.mxu0 0.0
        %8149 = vmatprep.mubr.f32.mxu0 0.0
        %v8150 = vand.u32 %v7655, 4294901760
        %8151 = vmatmul.mubr.f32.gmra.mrb[0].mxu0 %v8150
        %v8152 = vpop.f32.mrb[0].mxu0
        %v8153 = vadd.f32 %v8074, %v8152
        %v8154 = vpop.f32.mrb[0].mxu0
        %8155 = vmatprep.mubr.f32.mxu0 0.0
        %v8156 = vand.u32 %v7658, 4294901760
        %8157 = vmatmul.mubr.f32.gmra.mrb[0].mxu0 %v8156
        %v8158 = vpop.f32.mrb[0].mxu0
        %v8159 = vadd.f32 %v8080, %v8158
        %v8160 = vpop.f32.mrb[0].mxu0
        %8161 = vdwg.mxu0
        %8162 = vrot.lane.b32.xlu0 %v182, 40
        %v8163 = vpop.permute.xlu0 %8162
        %8164 = vrot.lane.b32.xlu0 %v183, 40
        %v8165 = vpop.permute.xlu0 %8164
        %v8169 = vsel %vm1233, %v7645, 0
        %v8172 = vsel %vm1233, %v7647, 0
        %8174 = vmatprep.subr.mxu0 0.0
        %v8175 = vand.u32 %v8163, 4294901760
        %8176 = vmatpush1.msra.mxu0 %v8175
        %8177 = vmatprep.subr.mxu0 0.0
        %v8178 = vand.u32 %v8165, 4294901760
        %8179 = vmatpush1.msra.mxu0 %v8178
        %8180 = vmatprep.subr.mxu0 0.0
        %8181 = vmatpush1.msra.mxu0 0.0
        %8182 = vmatprep.subr.mxu0 0.0
        %8183 = vmatpush1.msra.mxu0 0.0
        %8184 = vmatprep.subr.mxu0 0.0
        %8185 = vmatpush1.msra.mxu0 0.0
        %8186 = vmatprep.subr.mxu0 0.0
        %8187 = vmatpush1.msra.mxu0 0.0
        %8188 = vmatprep.subr.mxu0 0.0
        %8189 = vmatpush1.msra.mxu0 0.0
        %8190 = vmatprep.subr.mxu0 0.0
        %8191 = vmatpush1.msra.mxu0 0.0
        %8192 = vmatprep.subr.mxu0 0.0
        %8193 = vmatpush1.msra.mxu0 0.0
        %8194 = vmatprep.subr.mxu0 0.0
        %8195 = vmatpush1.msra.mxu0 0.0
        %8196 = vmatprep.subr.mxu0 0.0
        %8197 = vmatpush1.msra.mxu0 0.0
        %8198 = vmatprep.subr.mxu0 0.0
        %8199 = vmatpush1.msra.mxu0 0.0
        %8200 = vmatprep.subr.mxu0 0.0
        %8201 = vmatpush1.msra.mxu0 0.0
        %8202 = vmatprep.subr.mxu0 0.0
        %8203 = vmatpush1.msra.mxu0 0.0
        %8204 = vmatprep.subr.mxu0 0.0
        %8205 = vmatpush1.msra.mxu0 0.0
        %8206 = vmatprep.subr.mxu0 0.0
        %8207 = vmatpush1.msra.mxu0 0.0
        %8208 = vmatprep.subr.mxu0 0.0
        %8209 = vmatpush1.msra.mxu0 0.0
        %8210 = vmatprep.subr.mxu0 0.0
        %8211 = vmatpush1.msra.mxu0 0.0
        %8212 = vmatprep.subr.mxu0 0.0
        %8213 = vmatpush1.msra.mxu0 0.0
        %8214 = vmatprep.subr.mxu0 0.0
        %8215 = vmatpush1.msra.mxu0 0.0
        %8216 = vmatprep.subr.mxu0 0.0
        %8217 = vmatpush1.msra.mxu0 0.0
        %8218 = vmatprep.subr.mxu0 0.0
        %8219 = vmatpush1.msra.mxu0 0.0
        %8220 = vmatprep.subr.mxu0 0.0
        %8221 = vmatpush1.msra.mxu0 0.0
        %8222 = vmatprep.subr.mxu0 0.0
        %8223 = vmatpush1.msra.mxu0 0.0
        %8224 = vmatprep.subr.mxu0 0.0
        %8225 = vmatpush1.msra.mxu0 0.0
        %8226 = vmatprep.subr.mxu0 0.0
        %8227 = vmatpush1.msra.mxu0 0.0
        %8228 = vmatprep.subr.mxu0 0.0
        %8229 = vmatpush1.msra.mxu0 0.0
        %8230 = vmatprep.subr.mxu0 0.0
        %8231 = vmatpush1.msra.mxu0 0.0
        %8232 = vmatprep.subr.mxu0 0.0
        %8233 = vmatpush1.msra.mxu0 0.0
        %8234 = vmatprep.subr.mxu0 0.0
        %8235 = vmatpush1.msra.mxu0 0.0
        %8236 = vmatprep.subr.mxu0 0.0
        %8237 = vmatpush1.msra.mxu0 0.0
        %8238 = vmatprep.subr.mxu0 0.0
        %8239 = vmatpush1.msra.mxu0 0.0
        %8240 = vmatprep.mubr.f32.mxu0 0.0
        %v8241 = vand.u32 %v8169, 4294901760
        %v8242 = vsub.f32 %v8169, %v8241
        %v8243 = vand.u32 %v8242, 4294901760
        %v8244 = vsub.f32 %v8242, %v8243
        %v8245 = vand.u32 %v8244, 4294901760
        %8246 = vmatmul.mubr.f32.gmra.mrb[0].mxu0 %v8245
        %v8247 = vpop.f32.mrb[0].mxu0
        %v8248 = vadd.f32 0.0, %v8247
        %v8249 = vpop.f32.mrb[0].mxu0
        %8250 = vmatprep.mubr.f32.mxu0 0.0
        %v8251 = vand.u32 %v8172, 4294901760
        %v8252 = vsub.f32 %v8172, %v8251
        %v8253 = vand.u32 %v8252, 4294901760
        %v8254 = vsub.f32 %v8252, %v8253
        %v8255 = vand.u32 %v8254, 4294901760
        %8256 = vmatmul.mubr.f32.gmra.mrb[0].mxu0 %v8255
        %v8257 = vpop.f32.mrb[0].mxu0
        %v8258 = vadd.f32 0.0, %v8257
        %v8259 = vpop.f32.mrb[0].mxu0
        %8260 = vdwg.mxu0
        %8261 = vmatprep.subr.mxu0 0.0
        %v8262 = vand.u32 %v8163, 4294901760
        %v8263 = vsub.f32 %v8163, %v8262
        %v8264 = vand.u32 %v8263, 4294901760
        %v8265 = vsub.f32 %v8263, %v8264
        %v8266 = vand.u32 %v8265, 4294901760
        %8267 = vmatpush1.msra.mxu0 %v8266
        %8268 = vmatprep.subr.mxu0 0.0
        %v8269 = vand.u32 %v8165, 4294901760
        %v8270 = vsub.f32 %v8165, %v8269
        %v8271 = vand.u32 %v8270, 4294901760
        %v8272 = vsub.f32 %v8270, %v8271
        %v8273 = vand.u32 %v8272, 4294901760
        %8274 = vmatpush1.msra.mxu0 %v8273
        %8275 = vmatprep.subr.mxu0 0.0
        %8276 = vmatpush1.msra.mxu0 0.0
        %8277 = vmatprep.subr.mxu0 0.0
        %8278 = vmatpush1.msra.mxu0 0.0
        %8279 = vmatprep.subr.mxu0 0.0
        %8280 = vmatpush1.msra.mxu0 0.0
        %8281 = vmatprep.subr.mxu0 0.0
        %8282 = vmatpush1.msra.mxu0 0.0
        %8283 = vmatprep.subr.mxu0 0.0
        %8284 = vmatpush1.msra.mxu0 0.0
        %8285 = vmatprep.subr.mxu0 0.0
        %8286 = vmatpush1.msra.mxu0 0.0
        %8287 = vmatprep.subr.mxu0 0.0
        %8288 = vmatpush1.msra.mxu0 0.0
        %8289 = vmatprep.subr.mxu0 0.0
        %8290 = vmatpush1.msra.mxu0 0.0
        %8291 = vmatprep.subr.mxu0 0.0
        %8292 = vmatpush1.msra.mxu0 0.0
        %8293 = vmatprep.subr.mxu0 0.0
        %8294 = vmatpush1.msra.mxu0 0.0
        %8295 = vmatprep.subr.mxu0 0.0
        %8296 = vmatpush1.msra.mxu0 0.0
        %8297 = vmatprep.subr.mxu0 0.0
        %8298 = vmatpush1.msra.mxu0 0.0
        %8299 = vmatprep.subr.mxu0 0.0
        %8300 = vmatpush1.msra.mxu0 0.0
        %8301 = vmatprep.subr.mxu0 0.0
        %8302 = vmatpush1.msra.mxu0 0.0
        %8303 = vmatprep.subr.mxu0 0.0
        %8304 = vmatpush1.msra.mxu0 0.0
        %8305 = vmatprep.subr.mxu0 0.0
        %8306 = vmatpush1.msra.mxu0 0.0
        %8307 = vmatprep.subr.mxu0 0.0
        %8308 = vmatpush1.msra.mxu0 0.0
        %8309 = vmatprep.subr.mxu0 0.0
        %8310 = vmatpush1.msra.mxu0 0.0
        %8311 = vmatprep.subr.mxu0 0.0
        %8312 = vmatpush1.msra.mxu0 0.0
        %8313 = vmatprep.subr.mxu0 0.0
        %8314 = vmatpush1.msra.mxu0 0.0
        %8315 = vmatprep.subr.mxu0 0.0
        %8316 = vmatpush1.msra.mxu0 0.0
        %8317 = vmatprep.subr.mxu0 0.0
        %8318 = vmatpush1.msra.mxu0 0.0
        %8319 = vmatprep.subr.mxu0 0.0
        %8320 = vmatpush1.msra.mxu0 0.0
        %8321 = vmatprep.subr.mxu0 0.0
        %8322 = vmatpush1.msra.mxu0 0.0
        %8323 = vmatprep.subr.mxu0 0.0
        %8324 = vmatpush1.msra.mxu0 0.0
        %8325 = vmatprep.subr.mxu0 0.0
        %8326 = vmatpush1.msra.mxu0 0.0
        %8327 = vmatprep.subr.mxu0 0.0
        %8328 = vmatpush1.msra.mxu0 0.0
        %8329 = vmatprep.subr.mxu0 0.0
        %8330 = vmatpush1.msra.mxu0 0.0
        %8331 = vmatprep.subr.mxu0 0.0
        %8332 = vmatpush1.msra.mxu0 0.0
        %8333 = vmatprep.subr.mxu0 0.0
        %8334 = vmatpush1.msra.mxu0 0.0
        %8335 = vmatprep.mubr.f32.mxu0 0.0
        %v8336 = vand.u32 %v8169, 4294901760
        %8337 = vmatmul.mubr.f32.gmra.mrb[0].mxu0 %v8336
        %v8338 = vpop.f32.mrb[0].mxu0
        %v8339 = vadd.f32 %v8248, %v8338
        %v8340 = vpop.f32.mrb[0].mxu0
        %8341 = vmatprep.mubr.f32.mxu0 0.0
        %v8342 = vand.u32 %v8172, 4294901760
        %8343 = vmatmul.mubr.f32.gmra.mrb[0].mxu0 %v8342
        %v8344 = vpop.f32.mrb[0].mxu0
        %v8345 = vadd.f32 %v8258, %v8344
        %v8346 = vpop.f32.mrb[0].mxu0
        %8347 = vdwg.mxu0
        %8348 = vmatprep.subr.mxu0 0.0
        %v8349 = vand.u32 %v8163, 4294901760
        %v8350 = vsub.f32 %v8163, %v8349
        %8351 = vmatpush1.msra.mxu0 %v8350
        %8352 = vmatprep.subr.mxu0 0.0
        %v8353 = vand.u32 %v8165, 4294901760
        %v8354 = vsub.f32 %v8165, %v8353
        %8355 = vmatpush1.msra.mxu0 %v8354
        %8356 = vmatprep.subr.mxu0 0.0
        %8357 = vmatpush1.msra.mxu0 0.0
        %8358 = vmatprep.subr.mxu0 0.0
        %8359 = vmatpush1.msra.mxu0 0.0
        %8360 = vmatprep.subr.mxu0 0.0
        %8361 = vmatpush1.msra.mxu0 0.0
        %8362 = vmatprep.subr.mxu0 0.0
        %8363 = vmatpush1.msra.mxu0 0.0
        %8364 = vmatprep.subr.mxu0 0.0
        %8365 = vmatpush1.msra.mxu0 0.0
        %8366 = vmatprep.subr.mxu0 0.0
        %8367 = vmatpush1.msra.mxu0 0.0
        %8368 = vmatprep.subr.mxu0 0.0
        %8369 = vmatpush1.msra.mxu0 0.0
        %8370 = vmatprep.subr.mxu0 0.0
        %8371 = vmatpush1.msra.mxu0 0.0
        %8372 = vmatprep.subr.mxu0 0.0
        %8373 = vmatpush1.msra.mxu0 0.0
        %8374 = vmatprep.subr.mxu0 0.0
        %8375 = vmatpush1.msra.mxu0 0.0
        %8376 = vmatprep.subr.mxu0 0.0
        %8377 = vmatpush1.msra.mxu0 0.0
        %8378 = vmatprep.subr.mxu0 0.0
        %8379 = vmatpush1.msra.mxu0 0.0
        %8380 = vmatprep.subr.mxu0 0.0
        %8381 = vmatpush1.msra.mxu0 0.0
        %8382 = vmatprep.subr.mxu0 0.0
        %8383 = vmatpush1.msra.mxu0 0.0
        %8384 = vmatprep.subr.mxu0 0.0
        %8385 = vmatpush1.msra.mxu0 0.0
        %8386 = vmatprep.subr.mxu0 0.0
        %8387 = vmatpush1.msra.mxu0 0.0
        %8388 = vmatprep.subr.mxu0 0.0
        %8389 = vmatpush1.msra.mxu0 0.0
        %8390 = vmatprep.subr.mxu0 0.0
        %8391 = vmatpush1.msra.mxu0 0.0
        %8392 = vmatprep.subr.mxu0 0.0
        %8393 = vmatpush1.msra.mxu0 0.0
        %8394 = vmatprep.subr.mxu0 0.0
        %8395 = vmatpush1.msra.mxu0 0.0
        %8396 = vmatprep.subr.mxu0 0.0
        %8397 = vmatpush1.msra.mxu0 0.0
        %8398 = vmatprep.subr.mxu0 0.0
        %8399 = vmatpush1.msra.mxu0 0.0
        %8400 = vmatprep.subr.mxu0 0.0
        %8401 = vmatpush1.msra.mxu0 0.0
        %8402 = vmatprep.subr.mxu0 0.0
        %8403 = vmatpush1.msra.mxu0 0.0
        %8404 = vmatprep.subr.mxu0 0.0
        %8405 = vmatpush1.msra.mxu0 0.0
        %8406 = vmatprep.subr.mxu0 0.0
        %8407 = vmatpush1.msra.mxu0 0.0
        %8408 = vmatprep.subr.mxu0 0.0
        %8409 = vmatpush1.msra.mxu0 0.0
        %8410 = vmatprep.subr.mxu0 0.0
        %8411 = vmatpush1.msra.mxu0 0.0
        %8412 = vmatprep.subr.mxu0 0.0
        %8413 = vmatpush1.msra.mxu0 0.0
        %8414 = vmatprep.subr.mxu0 0.0
        %8415 = vmatpush1.msra.mxu0 0.0
        %8416 = vmatprep.mubr.f32.mxu0 0.0
        %v8417 = vand.u32 %v8169, 4294901760
        %v8418 = vsub.f32 %v8169, %v8417
        %8419 = vmatmul.mubr.f32.gmra.mrb[0].mxu0 %v8418
        %v8420 = vpop.f32.mrb[0].mxu0
        %v8421 = vadd.f32 %v8339, %v8420
        %v8422 = vpop.f32.mrb[0].mxu0
        %8423 = vmatprep.mubr.f32.mxu0 0.0
        %v8424 = vand.u32 %v8172, 4294901760
        %v8425 = vsub.f32 %v8172, %v8424
        %8426 = vmatmul.mubr.f32.gmra.mrb[0].mxu0 %v8425
        %v8427 = vpop.f32.mrb[0].mxu0
        %v8428 = vadd.f32 %v8345, %v8427
        %v8429 = vpop.f32.mrb[0].mxu0
        %8430 = vdwg.mxu0
        %8431 = vmatprep.subr.mxu0 0.0
        %v8432 = vand.u32 %v8163, 4294901760
        %8433 = vmatpush1.msra.mxu0 %v8432
        %8434 = vmatprep.subr.mxu0 0.0
        %v8435 = vand.u32 %v8165, 4294901760
        %8436 = vmatpush1.msra.mxu0 %v8435
        %8437 = vmatprep.subr.mxu0 0.0
        %8438 = vmatpush1.msra.mxu0 0.0
        %8439 = vmatprep.subr.mxu0 0.0
        %8440 = vmatpush1.msra.mxu0 0.0
        %8441 = vmatprep.subr.mxu0 0.0
        %8442 = vmatpush1.msra.mxu0 0.0
        %8443 = vmatprep.subr.mxu0 0.0
        %8444 = vmatpush1.msra.mxu0 0.0
        %8445 = vmatprep.subr.mxu0 0.0
        %8446 = vmatpush1.msra.mxu0 0.0
        %8447 = vmatprep.subr.mxu0 0.0
        %8448 = vmatpush1.msra.mxu0 0.0
        %8449 = vmatprep.subr.mxu0 0.0
        %8450 = vmatpush1.msra.mxu0 0.0
        %8451 = vmatprep.subr.mxu0 0.0
        %8452 = vmatpush1.msra.mxu0 0.0
        %8453 = vmatprep.subr.mxu0 0.0
        %8454 = vmatpush1.msra.mxu0 0.0
        %8455 = vmatprep.subr.mxu0 0.0
        %8456 = vmatpush1.msra.mxu0 0.0
        %8457 = vmatprep.subr.mxu0 0.0
        %8458 = vmatpush1.msra.mxu0 0.0
        %8459 = vmatprep.subr.mxu0 0.0
        %8460 = vmatpush1.msra.mxu0 0.0
        %8461 = vmatprep.subr.mxu0 0.0
        %8462 = vmatpush1.msra.mxu0 0.0
        %8463 = vmatprep.subr.mxu0 0.0
        %8464 = vmatpush1.msra.mxu0 0.0
        %8465 = vmatprep.subr.mxu0 0.0
        %8466 = vmatpush1.msra.mxu0 0.0
        %8467 = vmatprep.subr.mxu0 0.0
        %8468 = vmatpush1.msra.mxu0 0.0
        %8469 = vmatprep.subr.mxu0 0.0
        %8470 = vmatpush1.msra.mxu0 0.0
        %8471 = vmatprep.subr.mxu0 0.0
        %8472 = vmatpush1.msra.mxu0 0.0
        %8473 = vmatprep.subr.mxu0 0.0
        %8474 = vmatpush1.msra.mxu0 0.0
        %8475 = vmatprep.subr.mxu0 0.0
        %8476 = vmatpush1.msra.mxu0 0.0
        %8477 = vmatprep.subr.mxu0 0.0
        %8478 = vmatpush1.msra.mxu0 0.0
        %8479 = vmatprep.subr.mxu0 0.0
        %8480 = vmatpush1.msra.mxu0 0.0
        %8481 = vmatprep.subr.mxu0 0.0
        %8482 = vmatpush1.msra.mxu0 0.0
        %8483 = vmatprep.subr.mxu0 0.0
        %8484 = vmatpush1.msra.mxu0 0.0
        %8485 = vmatprep.subr.mxu0 0.0
        %8486 = vmatpush1.msra.mxu0 0.0
        %8487 = vmatprep.subr.mxu0 0.0
        %8488 = vmatpush1.msra.mxu0 0.0
        %8489 = vmatprep.subr.mxu0 0.0
        %8490 = vmatpush1.msra.mxu0 0.0
        %8491 = vmatprep.subr.mxu0 0.0
        %8492 = vmatpush1.msra.mxu0 0.0
        %8493 = vmatprep.subr.mxu0 0.0
        %8494 = vmatpush1.msra.mxu0 0.0
        %8495 = vmatprep.subr.mxu0 0.0
        %8496 = vmatpush1.msra.mxu0 0.0
        %8497 = vmatprep.mubr.f32.mxu0 0.0
        %v8498 = vand.u32 %v8169, 4294901760
        %v8499 = vsub.f32 %v8169, %v8498
        %v8500 = vand.u32 %v8499, 4294901760
        %8501 = vmatmul.mubr.f32.gmra.mrb[0].mxu0 %v8500
        %v8502 = vpop.f32.mrb[0].mxu0
        %v8503 = vadd.f32 %v8421, %v8502
        %v8504 = vpop.f32.mrb[0].mxu0
        %8505 = vmatprep.mubr.f32.mxu0 0.0
        %v8506 = vand.u32 %v8172, 4294901760
        %v8507 = vsub.f32 %v8172, %v8506
        %v8508 = vand.u32 %v8507, 4294901760
        %8509 = vmatmul.mubr.f32.gmra.mrb[0].mxu0 %v8508
        %v8510 = vpop.f32.mrb[0].mxu0
        %v8511 = vadd.f32 %v8428, %v8510
        %v8512 = vpop.f32.mrb[0].mxu0
        %8513 = vdwg.mxu0
        %8514 = vmatprep.subr.mxu0 0.0
        %v8515 = vand.u32 %v8163, 4294901760
        %v8516 = vsub.f32 %v8163, %v8515
        %v8517 = vand.u32 %v8516, 4294901760
        %8518 = vmatpush1.msra.mxu0 %v8517
        %8519 = vmatprep.subr.mxu0 0.0
        %v8520 = vand.u32 %v8165, 4294901760
        %v8521 = vsub.f32 %v8165, %v8520
        %v8522 = vand.u32 %v8521, 4294901760
        %8523 = vmatpush1.msra.mxu0 %v8522
        %8524 = vmatprep.subr.mxu0 0.0
        %8525 = vmatpush1.msra.mxu0 0.0
        %8526 = vmatprep.subr.mxu0 0.0
        %8527 = vmatpush1.msra.mxu0 0.0
        %8528 = vmatprep.subr.mxu0 0.0
        %8529 = vmatpush1.msra.mxu0 0.0
        %8530 = vmatprep.subr.mxu0 0.0
        %8531 = vmatpush1.msra.mxu0 0.0
        %8532 = vmatprep.subr.mxu0 0.0
        %8533 = vmatpush1.msra.mxu0 0.0
        %8534 = vmatprep.subr.mxu0 0.0
        %8535 = vmatpush1.msra.mxu0 0.0
        %8536 = vmatprep.subr.mxu0 0.0
        %8537 = vmatpush1.msra.mxu0 0.0
        %8538 = vmatprep.subr.mxu0 0.0
        %8539 = vmatpush1.msra.mxu0 0.0
        %8540 = vmatprep.subr.mxu0 0.0
        %8541 = vmatpush1.msra.mxu0 0.0
        %8542 = vmatprep.subr.mxu0 0.0
        %8543 = vmatpush1.msra.mxu0 0.0
        %8544 = vmatprep.subr.mxu0 0.0
        %8545 = vmatpush1.msra.mxu0 0.0
        %8546 = vmatprep.subr.mxu0 0.0
        %8547 = vmatpush1.msra.mxu0 0.0
        %8548 = vmatprep.subr.mxu0 0.0
        %8549 = vmatpush1.msra.mxu0 0.0
        %8550 = vmatprep.subr.mxu0 0.0
        %8551 = vmatpush1.msra.mxu0 0.0
        %8552 = vmatprep.subr.mxu0 0.0
        %8553 = vmatpush1.msra.mxu0 0.0
        %8554 = vmatprep.subr.mxu0 0.0
        %8555 = vmatpush1.msra.mxu0 0.0
        %8556 = vmatprep.subr.mxu0 0.0
        %8557 = vmatpush1.msra.mxu0 0.0
        %8558 = vmatprep.subr.mxu0 0.0
        %8559 = vmatpush1.msra.mxu0 0.0
        %8560 = vmatprep.subr.mxu0 0.0
        %8561 = vmatpush1.msra.mxu0 0.0
        %8562 = vmatprep.subr.mxu0 0.0
        %8563 = vmatpush1.msra.mxu0 0.0
        %8564 = vmatprep.subr.mxu0 0.0
        %8565 = vmatpush1.msra.mxu0 0.0
        %8566 = vmatprep.subr.mxu0 0.0
        %8567 = vmatpush1.msra.mxu0 0.0
        %8568 = vmatprep.subr.mxu0 0.0
        %8569 = vmatpush1.msra.mxu0 0.0
        %8570 = vmatprep.subr.mxu0 0.0
        %8571 = vmatpush1.msra.mxu0 0.0
        %8572 = vmatprep.subr.mxu0 0.0
        %8573 = vmatpush1.msra.mxu0 0.0
        %8574 = vmatprep.subr.mxu0 0.0
        %8575 = vmatpush1.msra.mxu0 0.0
        %8576 = vmatprep.subr.mxu0 0.0
        %8577 = vmatpush1.msra.mxu0 0.0
        %8578 = vmatprep.subr.mxu0 0.0
        %8579 = vmatpush1.msra.mxu0 0.0
        %8580 = vmatprep.subr.mxu0 0.0
        %8581 = vmatpush1.msra.mxu0 0.0
        %8582 = vmatprep.subr.mxu0 0.0
        %8583 = vmatpush1.msra.mxu0 0.0
        %8584 = vmatprep.mubr.f32.mxu0 0.0
        %v8585 = vand.u32 %v8169, 4294901760
        %8586 = vmatmul.mubr.f32.gmra.mrb[0].mxu0 %v8585
        %v8587 = vpop.f32.mrb[0].mxu0
        %v8588 = vadd.f32 %v8503, %v8587
        %v8589 = vpop.f32.mrb[0].mxu0
        %8590 = vmatprep.mubr.f32.mxu0 0.0
        %v8591 = vand.u32 %v8172, 4294901760
        %8592 = vmatmul.mubr.f32.gmra.mrb[0].mxu0 %v8591
        %v8593 = vpop.f32.mrb[0].mxu0
        %v8594 = vadd.f32 %v8511, %v8593
        %v8595 = vpop.f32.mrb[0].mxu0
        %8596 = vdwg.mxu0
        %8597 = vmatprep.subr.mxu0 0.0
        %v8598 = vand.u32 %v8163, 4294901760
        %8599 = vmatpush1.msra.mxu0 %v8598
        %8600 = vmatprep.subr.mxu0 0.0
        %v8601 = vand.u32 %v8165, 4294901760
        %8602 = vmatpush1.msra.mxu0 %v8601
        %8603 = vmatprep.subr.mxu0 0.0
        %8604 = vmatpush1.msra.mxu0 0.0
        %8605 = vmatprep.subr.mxu0 0.0
        %8606 = vmatpush1.msra.mxu0 0.0
        %8607 = vmatprep.subr.mxu0 0.0
        %8608 = vmatpush1.msra.mxu0 0.0
        %8609 = vmatprep.subr.mxu0 0.0
        %8610 = vmatpush1.msra.mxu0 0.0
        %8611 = vmatprep.subr.mxu0 0.0
        %8612 = vmatpush1.msra.mxu0 0.0
        %8613 = vmatprep.subr.mxu0 0.0
        %8614 = vmatpush1.msra.mxu0 0.0
        %8615 = vmatprep.subr.mxu0 0.0
        %8616 = vmatpush1.msra.mxu0 0.0
        %8617 = vmatprep.subr.mxu0 0.0
        %8618 = vmatpush1.msra.mxu0 0.0
        %8619 = vmatprep.subr.mxu0 0.0
        %8620 = vmatpush1.msra.mxu0 0.0
        %8621 = vmatprep.subr.mxu0 0.0
        %8622 = vmatpush1.msra.mxu0 0.0
        %8623 = vmatprep.subr.mxu0 0.0
        %8624 = vmatpush1.msra.mxu0 0.0
        %8625 = vmatprep.subr.mxu0 0.0
        %8626 = vmatpush1.msra.mxu0 0.0
        %8627 = vmatprep.subr.mxu0 0.0
        %8628 = vmatpush1.msra.mxu0 0.0
        %8629 = vmatprep.subr.mxu0 0.0
        %8630 = vmatpush1.msra.mxu0 0.0
        %8631 = vmatprep.subr.mxu0 0.0
        %8632 = vmatpush1.msra.mxu0 0.0
        %8633 = vmatprep.subr.mxu0 0.0
        %8634 = vmatpush1.msra.mxu0 0.0
        %8635 = vmatprep.subr.mxu0 0.0
        %8636 = vmatpush1.msra.mxu0 0.0
        %8637 = vmatprep.subr.mxu0 0.0
        %8638 = vmatpush1.msra.mxu0 0.0
        %8639 = vmatprep.subr.mxu0 0.0
        %8640 = vmatpush1.msra.mxu0 0.0
        %8641 = vmatprep.subr.mxu0 0.0
        %8642 = vmatpush1.msra.mxu0 0.0
        %8643 = vmatprep.subr.mxu0 0.0
        %8644 = vmatpush1.msra.mxu0 0.0
        %8645 = vmatprep.subr.mxu0 0.0
        %8646 = vmatpush1.msra.mxu0 0.0
        %8647 = vmatprep.subr.mxu0 0.0
        %8648 = vmatpush1.msra.mxu0 0.0
        %8649 = vmatprep.subr.mxu0 0.0
        %8650 = vmatpush1.msra.mxu0 0.0
        %8651 = vmatprep.subr.mxu0 0.0
        %8652 = vmatpush1.msra.mxu0 0.0
        %8653 = vmatprep.subr.mxu0 0.0
        %8654 = vmatpush1.msra.mxu0 0.0
        %8655 = vmatprep.subr.mxu0 0.0
        %8656 = vmatpush1.msra.mxu0 0.0
        %8657 = vmatprep.subr.mxu0 0.0
        %8658 = vmatpush1.msra.mxu0 0.0
        %8659 = vmatprep.subr.mxu0 0.0
        %8660 = vmatpush1.msra.mxu0 0.0
        %8661 = vmatprep.subr.mxu0 0.0
        %8662 = vmatpush1.msra.mxu0 0.0
        %8663 = vmatprep.mubr.f32.mxu0 0.0
        %v8664 = vand.u32 %v8169, 4294901760
        %8665 = vmatmul.mubr.f32.gmra.mrb[0].mxu0 %v8664
        %v8666 = vpop.f32.mrb[0].mxu0
        %v8667 = vadd.f32 %v8588, %v8666
        %v8668 = vpop.f32.mrb[0].mxu0
        %8669 = vmatprep.mubr.f32.mxu0 0.0
        %v8670 = vand.u32 %v8172, 4294901760
        %8671 = vmatmul.mubr.f32.gmra.mrb[0].mxu0 %v8670
        %v8672 = vpop.f32.mrb[0].mxu0
        %v8673 = vadd.f32 %v8594, %v8672
        %v8674 = vpop.f32.mrb[0].mxu0
        %8675 = vdwg.mxu0
        %8680 = vrot.lane.b32.xlu0 %v8153, 24
        %v8681 = vpop.permute.xlu0 %8680
        %8682 = vrot.lane.b32.xlu0 %v8159, 24
        %v8683 = vpop.permute.xlu0 %8682
        %8684 = vrot.lane.b32.xlu0 %v8667, 24
        %v8685 = vpop.permute.xlu0 %8684
        %8686 = vrot.lane.b32.xlu0 %v8673, 24
        %v8687 = vpop.permute.xlu0 %8686
        %vm8692 = vcmask 261312
        %8693 = vst.msk [vmem:[%s177] sm:$0xff] %vm8692, %v8681
        %8694 = vst.msk [vmem:[%s177 + $0x8] sm:$0xff] %vm8692, %v8683
        %8695 = vst.msk [vmem:[%s177 + $0x10] sm:$0xff] %vm8692, %v8685
        %8696 = vst.msk [vmem:[%s177 + $0x18] sm:$0xff] %vm8692, %v8687
        %s8697 = sand.u32 %s75, 1
        %s8698 = scalar_lea.sflag [#allocation4], %s8697
        %s8699 = sand.u32 %s75, 1
        %s8700 = smul.addr %s8699, 32
        %s8701 = scalar_lea.vmem [#allocation7], %s8700
        // Predicated region
        $region37: #{tpu_custom_call.1} parent=27 // pred_check
          %p8702 = pneg %p85
        $region38: #{tpu_custom_call.1} parent=27 // pred_check_branch
          %8704 = sbr.rel (%p8702) target = $region40
        $region39: #{tpu_custom_call.1} parent=27 // pred_region
          %s8705 = smul.u32 2, %s20
          %s8707 = ssub.s32 512, 512
          %8708 = vsyncadd %s8698, %s8707
          %s8709 = smul.addr %s8705, 2
          %s8710 = smul.addr %s8709, 128
          %s8711 = scalar_lea.hbm %s2, %s8710
          %s8712 = sshll.u32 %s8701, 4
          %s8713 = int_to_ptr.vmem [resolvable:$true] %s8712
          %8718 = dma.vmem_to_hbm [thread:$0]  %s8713, 512, %s8711, %s8698, 128, 128, 8
        $region40: #{tpu_custom_call.1} parent=27 // pred_fallthru
          _
      $region28: #{tpu_custom_call.1} parent=5 // pred_fallthru
        _
      %p8719 = scmp.le.s32.totalorder 2, %s15
      // Predicated region
      $region41: #{tpu_custom_call.1} parent=5 // pred_check
        %p8720 = pneg %p8719
      $region42: #{tpu_custom_call.1} parent=5 // pred_check_branch
        %8722 = sbr.rel (%p8720) target = $region44
      $region43: #{tpu_custom_call.1} parent=5 // pred_region
        %s8723 = ssub.s32 %s15, 2
        // Predicated region
        $region45: #{tpu_custom_call.1} parent=43 // pred_check
          %p8724 = pneg %p91
        $region46: #{tpu_custom_call.1} parent=43 // pred_check_branch
          %8726 = sbr.rel (%p8724) target = $region48
        $region47: #{tpu_custom_call.1} parent=43 // pred_region
          %s8727 = sand.u32 %s76, 1
          %s8728 = scalar_lea.sflag [#allocation4], %s8727
          %s8729 = sand.u32 %s76, 1
          %s8730 = smul.addr %s8729, 32
          %s8731 = scalar_lea.vmem [#allocation7], %s8730
          %8732 = dma.done %s8728, 512
        $region48: #{tpu_custom_call.1} parent=43 // pred_fallthru
          _
      $region44: #{tpu_custom_call.1} parent=5 // pred_fallthru
        _
    $region6: #{tpu_custom_call.1} parent=1 // loop_footer
      %s19 = sadd.s32 1, %s15
    $region7: #{tpu_custom_call.1} parent=1 // loop_footer_branch
      %14 = sbr.rel target = $region3
    $region8: #{tpu_custom_call.1} parent=1 // loop_exit
      _
    %8733 = vsyncpa [#allocation3], 1
    %s8734 = scalar_lea.sflag [#allocation3], 1
    %8735 = vsyncpa %s8734, 1
    %8736 = vsyncpa [#allocation6], 1
    %8737 = vsyncpa [#allocation4], 1
    %s8738 = scalar_lea.sflag [#allocation4], 1
    %8739 = vsyncpa %s8738, 1

</llo_original>
